<compile_context>
chip_gen: v6e
topology: v6e:2x2x1
jax: 0.10.0
libtpu: 0.0.40
codegen_flags: <defaults>
</compile_context>

<pallas_src>
import functools

import jax
import jax.numpy as jnp
from jax.experimental import pallas as pl
from jax.experimental.pallas import tpu as pltpu


def _ode_block_kernel(x_ref, w_ref, b_ref, y_ref, xpad_ref, *, Nt, dt):
    """Fused Nt-step explicit Euler solve for one batch block (NCHW).

    x_ref    : (Bb, C, H, W)      VMEM   initial state of this batch block
    w_ref    : (9*C*C,)           SMEM   conv weights, flat HWIO (row-major)
    b_ref    : (C,)               SMEM   conv bias
    y_ref    : (Bb, C, H, W)      VMEM   final state
    xpad_ref : (Bb, C, H+2, W+2)  VMEM   scratch: zero-padded state for the
                                         shifted 3x3 taps.
    """
    Bb, C, H, W = x_ref.shape

    # ---- prologue -----------------------------------------------------------
    # f32 working state lives in registers; the scratch only holds the padded
    # copy the shifted loads need.
    state = x_ref[...].astype(jnp.float32)                 # (Bb, C, H, W)

    # Zero the whole scratch, then one stacked interior store.  (Zeroing only
    # the halo would need lane-width-1 column stores and costs more vst.)
    xpad_ref[...] = jnp.zeros_like(xpad_ref)
    xpad_ref[:, :, 1:1 + H, 1:1 + W] = state

    # ---- pre-scale weights / bias by dt once (scalar unit, hoisted) ---------
    def widx(ky, kx, ci, co):
        return ((ky * 3 + kx) * C + ci) * C + co

    w_eff = [[[[w_ref[widx(ky, kx, ci, co)] * dt
                for co in range(C)]
               for ci in range(C)]
              for kx in range(3)]
             for ky in range(3)]
    b_eff = [b_ref[co] * dt for co in range(C)]

    # ---- Nt fused Euler steps (Nt tiny & static -> full unroll) -------------
    # 3x3 conv on the VPU via broadcast-scalar FMAs.  All loads of a step
    # happen before that step's single interior store, so the in-place update
    # never reads partially-updated state.
    for step in range(Nt):
        # acc[co] = x_prev[co] + dt*b[co]: Euler "x +" term and bias folded
        # into the init (scalar splat, no materialized zeros/broadcast array).
        acc = [state[:, co] + b_eff[co] for co in range(C)]
        for ci in range(C):
            for ky in range(3):
                # One row-slab load per (ci, ky); the three kx taps are static
                # lane slices of the already-loaded value.
                row = xpad_ref[:, ci, ky:ky + H, :]         # (Bb, H, W+2)
                for kx in range(3):
                    shifted = row[:, :, kx:kx + W]          # (Bb, H, W)
                    for co in range(C):
                        acc[co] = acc[co] + w_eff[ky][kx][ci][co] * shifted
        # New state = x + dt*(conv(x) + b); one stacked value, no per-channel
        # partial stores.
        state = jnp.stack(acc, axis=1)                      # (Bb, C, H, W)
        if step < Nt - 1:
            # Refresh the padded scratch for the next step's shifted loads.
            xpad_ref[:, :, 1:1 + H, 1:1 + W] = state

    # ---- epilogue ------------------------------------------------------------
    y_ref[...] = state.astype(y_ref.dtype)


def _default_num_batch_blocks(B):
    """2-way batch split only on 2-TensorCore chips (v7x); else one grid step."""
    try:
        kind = jax.devices()[0].device_kind.lower()
    except Exception:  # pragma: no cover - defensive
        kind = ""
    if "v7" in kind and B >= 2 and B % 2 == 0:
        return 2
    return 1


def ode_block_forward(x_nchw, w_hwio, bias, *, Nt=2, method="Euler",
                      num_batch_blocks=None):
    """ODEBlock.forward: Euler odesolver with Nt steps (default options)."""
    # TODO(synk): RK2/RK4 branches of odesolver not implemented.
    assert method == "Euler"
    B, C, H, W = x_nchw.shape
    kh, kw, cin, cout = w_hwio.shape
    assert (kh, kw) == (3, 3)
    assert cin == C and cout == C, (
        "ODEFunction conv must be channel-preserving (Cin == Cout)")
    dt = 1.0 / Nt

    if num_batch_blocks is None:
        num_batch_blocks = _default_num_batch_blocks(B)
    if B % num_batch_blocks != 0:
        num_batch_blocks = 1
    Bb = B // num_batch_blocks

    kernel = functools.partial(_ode_block_kernel, Nt=int(Nt), dt=float(dt))
    # Flatten HWIO weights row-major; matches widx() indexing in the kernel.
    w_flat = w_hwio.astype(jnp.float32).reshape(-1)
    b_flat = bias.astype(jnp.float32).reshape(-1)

    return pl.pallas_call(
        kernel,
        out_shape=jax.ShapeDtypeStruct((B, C, H, W), x_nchw.dtype),
        grid=(num_batch_blocks,),
        in_specs=[
            pl.BlockSpec((Bb, C, H, W), lambda i: (i, 0, 0, 0)),     # x (VMEM)
            pl.BlockSpec(memory_space=pltpu.MemorySpace.SMEM),       # weights
            pl.BlockSpec(memory_space=pltpu.MemorySpace.SMEM),       # bias
        ],
        out_specs=pl.BlockSpec((Bb, C, H, W), lambda i: (i, 0, 0, 0)),
        scratch_shapes=[pltpu.VMEM((Bb, C, H + 2, W + 2), jnp.float32)],
        compiler_params=pltpu.CompilerParams(
            dimension_semantics=("parallel",),   # 2-TC split when grid=(2,)
            vmem_limit_bytes=4 * 1024 * 1024,    # footprint < 100 KiB
        ),
    )(x_nchw, w_flat, b_flat)


def _ref_forward(x_nchw, w_hwio, bias, *, Nt=2):
    """Pure-JAX reference of the same Euler integration (NCHW conv)."""
    dt = 1.0 / Nt
    w_oihw = jnp.transpose(w_hwio, (3, 2, 0, 1))
    x = x_nchw
    for _ in range(Nt):
        f = jax.lax.conv_general_dilated(
            x, w_oihw, window_strides=(1, 1), padding="SAME",
            dimension_numbers=("NCHW", "OIHW", "NCHW"),
        ) + bias.reshape(1, -1, 1, 1)
        x = x + dt * f
    return x


if __name__ == "__main__":
    key = jax.random.PRNGKey(0)
    kx, kw, kb = jax.random.split(key, 3)

    B, C, H, W = 2, 4, 16, 16
    x = jax.random.normal(kx, (B, C, H, W), dtype=jnp.float32)
    # Deterministic synthetic parameters for the ODEFunction:
    # Conv2d(C, C, 3, padding=1) weights (HWIO) and bias.
    w = jax.random.normal(kw, (3, 3, C, C), dtype=jnp.float32) * 0.1
    b = jax.random.normal(kb, (C,), dtype=jnp.float32) * 0.1

    out = ode_block_forward(x, w, b, Nt=2, method="Euler")
    out = jax.block_until_ready(out)

    ref = _ref_forward(x, w, b, Nt=2)
    assert out.shape == (B, C, H, W)
    assert jnp.allclose(out, ref, atol=1e-4, rtol=1e-4), "mismatch vs pure-JAX reference"

    print("KERNEL_OK")
</pallas_src>

<mosaic_0001>
module attributes {stable_mosaic.version = 11 : i64} {
  func.func @_ode_block_kernel(%arg0: i32, %arg1: memref<2x4x16x16xf32, #tpu.memory_space<vmem>>, %arg2: memref<144xf32, #tpu.memory_space<smem>>, %arg3: memref<4xf32, #tpu.memory_space<smem>>, %arg4: memref<2x4x16x16xf32, #tpu.memory_space<vmem>>, %arg5: memref<2x4x18x18xf32, #tpu.memory_space<vmem>>) attributes {dimension_semantics = [#tpu.dimension_semantics<parallel>], iteration_bounds = array<i64: 1>, scalar_prefetch = 0 : i64, scratch_operands = 1 : i64, tpu.core_type = #tpu.core_type<tc>, window_params = [{transform_indices = @transform_0, window_bounds = array<i64: 2, 4, 16, 16>}, {transform_indices = @transform_1, window_bounds = array<i64: 144>}, {transform_indices = @transform_2, window_bounds = array<i64: 4>}, {transform_indices = @transform_3, window_bounds = array<i64: 2, 4, 16, 16>}]} {
    %c0 = arith.constant 0 : index
    %c0_0 = arith.constant 0 : index
    %c0_1 = arith.constant 0 : index
    %c0_2 = arith.constant 0 : index
    %0 = vector.load %arg1[%c0, %c0_0, %c0_1, %c0_2] : memref<2x4x16x16xf32, #tpu.memory_space<vmem>>, vector<2x4x16x16xf32>
    %cst = arith.constant 0.000000e+00 : f32
    %1 = vector.broadcast %cst : f32 to vector<2x4x18x18xf32>
    %c0_3 = arith.constant 0 : index
    %c0_4 = arith.constant 0 : index
    %c0_5 = arith.constant 0 : index
    %c0_6 = arith.constant 0 : index
    %2 = vector.load %arg5[%c0_3, %c0_4, %c0_5, %c0_6] : memref<2x4x18x18xf32, #tpu.memory_space<vmem>>, vector<2x4x18x18xf32>
    tpu.vector_store %arg5[%c0_3, %c0_4, %c0_5, %c0_6], %1 {strides = array<i32>} : memref<2x4x18x18xf32, #tpu.memory_space<vmem>>, vector<2x4x18x18xf32>,
    %c0_7 = arith.constant 0 : index
    %c0_8 = arith.constant 0 : index
    %c1 = arith.constant 1 : index
    %c1_9 = arith.constant 1 : index
    %3 = vector.load %arg5[%c0_7, %c0_8, %c1, %c1_9] : memref<2x4x18x18xf32, #tpu.memory_space<vmem>>, vector<2x4x16x16xf32>
    tpu.vector_store %arg5[%c0_7, %c0_8, %c1, %c1_9], %0 {strides = array<i32>} : memref<2x4x18x18xf32, #tpu.memory_space<vmem>>, vector<2x4x16x16xf32>,
    %c0_10 = arith.constant 0 : index
    %4 = memref.load %arg2[%c0_10] : memref<144xf32, #tpu.memory_space<smem>>
    %cst_11 = arith.constant 5.000000e-01 : f32
    %5 = arith.mulf %4, %cst_11 : f32
    %c1_12 = arith.constant 1 : index
    %6 = memref.load %arg2[%c1_12] : memref<144xf32, #tpu.memory_space<smem>>
    %cst_13 = arith.constant 5.000000e-01 : f32
    %7 = arith.mulf %6, %cst_13 : f32
    %c2 = arith.constant 2 : index
    %8 = memref.load %arg2[%c2] : memref<144xf32, #tpu.memory_space<smem>>
    %cst_14 = arith.constant 5.000000e-01 : f32
    %9 = arith.mulf %8, %cst_14 : f32
    %c3 = arith.constant 3 : index
    %10 = memref.load %arg2[%c3] : memref<144xf32, #tpu.memory_space<smem>>
    %cst_15 = arith.constant 5.000000e-01 : f32
    %11 = arith.mulf %10, %cst_15 : f32
    %c4 = arith.constant 4 : index
    %12 = memref.load %arg2[%c4] : memref<144xf32, #tpu.memory_space<smem>>
    %cst_16 = arith.constant 5.000000e-01 : f32
    %13 = arith.mulf %12, %cst_16 : f32
    %c5 = arith.constant 5 : index
    %14 = memref.load %arg2[%c5] : memref<144xf32, #tpu.memory_space<smem>>
    %cst_17 = arith.constant 5.000000e-01 : f32
    %15 = arith.mulf %14, %cst_17 : f32
    %c6 = arith.constant 6 : index
    %16 = memref.load %arg2[%c6] : memref<144xf32, #tpu.memory_space<smem>>
    %cst_18 = arith.constant 5.000000e-01 : f32
    %17 = arith.mulf %16, %cst_18 : f32
    %c7 = arith.constant 7 : index
    %18 = memref.load %arg2[%c7] : memref<144xf32, #tpu.memory_space<smem>>
    %cst_19 = arith.constant 5.000000e-01 : f32
    %19 = arith.mulf %18, %cst_19 : f32
    %c8 = arith.constant 8 : index
    %20 = memref.load %arg2[%c8] : memref<144xf32, #tpu.memory_space<smem>>
    %cst_20 = arith.constant 5.000000e-01 : f32
    %21 = arith.mulf %20, %cst_20 : f32
    %c9 = arith.constant 9 : index
    %22 = memref.load %arg2[%c9] : memref<144xf32, #tpu.memory_space<smem>>
    %cst_21 = arith.constant 5.000000e-01 : f32
    %23 = arith.mulf %22, %cst_21 : f32
    %c10 = arith.constant 10 : index
    %24 = memref.load %arg2[%c10] : memref<144xf32, #tpu.memory_space<smem>>
    %cst_22 = arith.constant 5.000000e-01 : f32
    %25 = arith.mulf %24, %cst_22 : f32
    %c11 = arith.constant 11 : index
    %26 = memref.load %arg2[%c11] : memref<144xf32, #tpu.memory_space<smem>>
    %cst_23 = arith.constant 5.000000e-01 : f32
    %27 = arith.mulf %26, %cst_23 : f32
    %c12 = arith.constant 12 : index
    %28 = memref.load %arg2[%c12] : memref<144xf32, #tpu.memory_space<smem>>
    %cst_24 = arith.constant 5.000000e-01 : f32
    %29 = arith.mulf %28, %cst_24 : f32
    %c13 = arith.constant 13 : index
    %30 = memref.load %arg2[%c13] : memref<144xf32, #tpu.memory_space<smem>>
    %cst_25 = arith.constant 5.000000e-01 : f32
    %31 = arith.mulf %30, %cst_25 : f32
    %c14 = arith.constant 14 : index
    %32 = memref.load %arg2[%c14] : memref<144xf32, #tpu.memory_space<smem>>
    %cst_26 = arith.constant 5.000000e-01 : f32
    %33 = arith.mulf %32, %cst_26 : f32
    %c15 = arith.constant 15 : index
    %34 = memref.load %arg2[%c15] : memref<144xf32, #tpu.memory_space<smem>>
    %cst_27 = arith.constant 5.000000e-01 : f32
    %35 = arith.mulf %34, %cst_27 : f32
    %c16 = arith.constant 16 : index
    %36 = memref.load %arg2[%c16] : memref<144xf32, #tpu.memory_space<smem>>
    %cst_28 = arith.constant 5.000000e-01 : f32
    %37 = arith.mulf %36, %cst_28 : f32
    %c17 = arith.constant 17 : index
    %38 = memref.load %arg2[%c17] : memref<144xf32, #tpu.memory_space<smem>>
    %cst_29 = arith.constant 5.000000e-01 : f32
    %39 = arith.mulf %38, %cst_29 : f32
    %c18 = arith.constant 18 : index
    %40 = memref.load %arg2[%c18] : memref<144xf32, #tpu.memory_space<smem>>
    %cst_30 = arith.constant 5.000000e-01 : f32
    %41 = arith.mulf %40, %cst_30 : f32
    %c19 = arith.constant 19 : index
    %42 = memref.load %arg2[%c19] : memref<144xf32, #tpu.memory_space<smem>>
    %cst_31 = arith.constant 5.000000e-01 : f32
    %43 = arith.mulf %42, %cst_31 : f32
    %c20 = arith.constant 20 : index
    %44 = memref.load %arg2[%c20] : memref<144xf32, #tpu.memory_space<smem>>
    %cst_32 = arith.constant 5.000000e-01 : f32
    %45 = arith.mulf %44, %cst_32 : f32
    %c21 = arith.constant 21 : index
    %46 = memref.load %arg2[%c21] : memref<144xf32, #tpu.memory_space<smem>>
    %cst_33 = arith.constant 5.000000e-01 : f32
    %47 = arith.mulf %46, %cst_33 : f32
    %c22 = arith.constant 22 : index
    %48 = memref.load %arg2[%c22] : memref<144xf32, #tpu.memory_space<smem>>
    %cst_34 = arith.constant 5.000000e-01 : f32
    %49 = arith.mulf %48, %cst_34 : f32
    %c23 = arith.constant 23 : index
    %50 = memref.load %arg2[%c23] : memref<144xf32, #tpu.memory_space<smem>>
    %cst_35 = arith.constant 5.000000e-01 : f32
    %51 = arith.mulf %50, %cst_35 : f32
    %c24 = arith.constant 24 : index
    %52 = memref.load %arg2[%c24] : memref<144xf32, #tpu.memory_space<smem>>
    %cst_36 = arith.constant 5.000000e-01 : f32
    %53 = arith.mulf %52, %cst_36 : f32
    %c25 = arith.constant 25 : index
    %54 = memref.load %arg2[%c25] : memref<144xf32, #tpu.memory_space<smem>>
    %cst_37 = arith.constant 5.000000e-01 : f32
    %55 = arith.mulf %54, %cst_37 : f32
    %c26 = arith.constant 26 : index
    %56 = memref.load %arg2[%c26] : memref<144xf32, #tpu.memory_space<smem>>
    %cst_38 = arith.constant 5.000000e-01 : f32
    %57 = arith.mulf %56, %cst_38 : f32
    %c27 = arith.constant 27 : index
    %58 = memref.load %arg2[%c27] : memref<144xf32, #tpu.memory_space<smem>>
    %cst_39 = arith.constant 5.000000e-01 : f32
    %59 = arith.mulf %58, %cst_39 : f32
    %c28 = arith.constant 28 : index
    %60 = memref.load %arg2[%c28] : memref<144xf32, #tpu.memory_space<smem>>
    %cst_40 = arith.constant 5.000000e-01 : f32
    %61 = arith.mulf %60, %cst_40 : f32
    %c29 = arith.constant 29 : index
    %62 = memref.load %arg2[%c29] : memref<144xf32, #tpu.memory_space<smem>>
    %cst_41 = arith.constant 5.000000e-01 : f32
    %63 = arith.mulf %62, %cst_41 : f32
    %c30 = arith.constant 30 : index
    %64 = memref.load %arg2[%c30] : memref<144xf32, #tpu.memory_space<smem>>
    %cst_42 = arith.constant 5.000000e-01 : f32
    %65 = arith.mulf %64, %cst_42 : f32
    %c31 = arith.constant 31 : index
    %66 = memref.load %arg2[%c31] : memref<144xf32, #tpu.memory_space<smem>>
    %cst_43 = arith.constant 5.000000e-01 : f32
    %67 = arith.mulf %66, %cst_43 : f32
    %c32 = arith.constant 32 : index
    %68 = memref.load %arg2[%c32] : memref<144xf32, #tpu.memory_space<smem>>
    %cst_44 = arith.constant 5.000000e-01 : f32
    %69 = arith.mulf %68, %cst_44 : f32
    %c33 = arith.constant 33 : index
    %70 = memref.load %arg2[%c33] : memref<144xf32, #tpu.memory_space<smem>>
    %cst_45 = arith.constant 5.000000e-01 : f32
    %71 = arith.mulf %70, %cst_45 : f32
    %c34 = arith.constant 34 : index
    %72 = memref.load %arg2[%c34] : memref<144xf32, #tpu.memory_space<smem>>
    %cst_46 = arith.constant 5.000000e-01 : f32
    %73 = arith.mulf %72, %cst_46 : f32
    %c35 = arith.constant 35 : index
    %74 = memref.load %arg2[%c35] : memref<144xf32, #tpu.memory_space<smem>>
    %cst_47 = arith.constant 5.000000e-01 : f32
    %75 = arith.mulf %74, %cst_47 : f32
    %c36 = arith.constant 36 : index
    %76 = memref.load %arg2[%c36] : memref<144xf32, #tpu.memory_space<smem>>
    %cst_48 = arith.constant 5.000000e-01 : f32
    %77 = arith.mulf %76, %cst_48 : f32
    %c37 = arith.constant 37 : index
    %78 = memref.load %arg2[%c37] : memref<144xf32, #tpu.memory_space<smem>>
    %cst_49 = arith.constant 5.000000e-01 : f32
    %79 = arith.mulf %78, %cst_49 : f32
    %c38 = arith.constant 38 : index
    %80 = memref.load %arg2[%c38] : memref<144xf32, #tpu.memory_space<smem>>
    %cst_50 = arith.constant 5.000000e-01 : f32
    %81 = arith.mulf %80, %cst_50 : f32
    %c39 = arith.constant 39 : index
    %82 = memref.load %arg2[%c39] : memref<144xf32, #tpu.memory_space<smem>>
    %cst_51 = arith.constant 5.000000e-01 : f32
    %83 = arith.mulf %82, %cst_51 : f32
    %c40 = arith.constant 40 : index
    %84 = memref.load %arg2[%c40] : memref<144xf32, #tpu.memory_space<smem>>
    %cst_52 = arith.constant 5.000000e-01 : f32
    %85 = arith.mulf %84, %cst_52 : f32
    %c41 = arith.constant 41 : index
    %86 = memref.load %arg2[%c41] : memref<144xf32, #tpu.memory_space<smem>>
    %cst_53 = arith.constant 5.000000e-01 : f32
    %87 = arith.mulf %86, %cst_53 : f32
    %c42 = arith.constant 42 : index
    %88 = memref.load %arg2[%c42] : memref<144xf32, #tpu.memory_space<smem>>
    %cst_54 = arith.constant 5.000000e-01 : f32
    %89 = arith.mulf %88, %cst_54 : f32
    %c43 = arith.constant 43 : index
    %90 = memref.load %arg2[%c43] : memref<144xf32, #tpu.memory_space<smem>>
    %cst_55 = arith.constant 5.000000e-01 : f32
    %91 = arith.mulf %90, %cst_55 : f32
    %c44 = arith.constant 44 : index
    %92 = memref.load %arg2[%c44] : memref<144xf32, #tpu.memory_space<smem>>
    %cst_56 = arith.constant 5.000000e-01 : f32
    %93 = arith.mulf %92, %cst_56 : f32
    %c45 = arith.constant 45 : index
    %94 = memref.load %arg2[%c45] : memref<144xf32, #tpu.memory_space<smem>>
    %cst_57 = arith.constant 5.000000e-01 : f32
    %95 = arith.mulf %94, %cst_57 : f32
    %c46 = arith.constant 46 : index
    %96 = memref.load %arg2[%c46] : memref<144xf32, #tpu.memory_space<smem>>
    %cst_58 = arith.constant 5.000000e-01 : f32
    %97 = arith.mulf %96, %cst_58 : f32
    %c47 = arith.constant 47 : index
    %98 = memref.load %arg2[%c47] : memref<144xf32, #tpu.memory_space<smem>>
    %cst_59 = arith.constant 5.000000e-01 : f32
    %99 = arith.mulf %98, %cst_59 : f32
    %c48 = arith.constant 48 : index
    %100 = memref.load %arg2[%c48] : memref<144xf32, #tpu.memory_space<smem>>
    %cst_60 = arith.constant 5.000000e-01 : f32
    %101 = arith.mulf %100, %cst_60 : f32
    %c49 = arith.constant 49 : index
    %102 = memref.load %arg2[%c49] : memref<144xf32, #tpu.memory_space<smem>>
    %cst_61 = arith.constant 5.000000e-01 : f32
    %103 = arith.mulf %102, %cst_61 : f32
    %c50 = arith.constant 50 : index
    %104 = memref.load %arg2[%c50] : memref<144xf32, #tpu.memory_space<smem>>
    %cst_62 = arith.constant 5.000000e-01 : f32
    %105 = arith.mulf %104, %cst_62 : f32
    %c51 = arith.constant 51 : index
    %106 = memref.load %arg2[%c51] : memref<144xf32, #tpu.memory_space<smem>>
    %cst_63 = arith.constant 5.000000e-01 : f32
    %107 = arith.mulf %106, %cst_63 : f32
    %c52 = arith.constant 52 : index
    %108 = memref.load %arg2[%c52] : memref<144xf32, #tpu.memory_space<smem>>
    %cst_64 = arith.constant 5.000000e-01 : f32
    %109 = arith.mulf %108, %cst_64 : f32
    %c53 = arith.constant 53 : index
    %110 = memref.load %arg2[%c53] : memref<144xf32, #tpu.memory_space<smem>>
    %cst_65 = arith.constant 5.000000e-01 : f32
    %111 = arith.mulf %110, %cst_65 : f32
    %c54 = arith.constant 54 : index
    %112 = memref.load %arg2[%c54] : memref<144xf32, #tpu.memory_space<smem>>
    %cst_66 = arith.constant 5.000000e-01 : f32
    %113 = arith.mulf %112, %cst_66 : f32
    %c55 = arith.constant 55 : index
    %114 = memref.load %arg2[%c55] : memref<144xf32, #tpu.memory_space<smem>>
    %cst_67 = arith.constant 5.000000e-01 : f32
    %115 = arith.mulf %114, %cst_67 : f32
    %c56 = arith.constant 56 : index
    %116 = memref.load %arg2[%c56] : memref<144xf32, #tpu.memory_space<smem>>
    %cst_68 = arith.constant 5.000000e-01 : f32
    %117 = arith.mulf %116, %cst_68 : f32
    %c57 = arith.constant 57 : index
    %118 = memref.load %arg2[%c57] : memref<144xf32, #tpu.memory_space<smem>>
    %cst_69 = arith.constant 5.000000e-01 : f32
    %119 = arith.mulf %118, %cst_69 : f32
    %c58 = arith.constant 58 : index
    %120 = memref.load %arg2[%c58] : memref<144xf32, #tpu.memory_space<smem>>
    %cst_70 = arith.constant 5.000000e-01 : f32
    %121 = arith.mulf %120, %cst_70 : f32
    %c59 = arith.constant 59 : index
    %122 = memref.load %arg2[%c59] : memref<144xf32, #tpu.memory_space<smem>>
    %cst_71 = arith.constant 5.000000e-01 : f32
    %123 = arith.mulf %122, %cst_71 : f32
    %c60 = arith.constant 60 : index
    %124 = memref.load %arg2[%c60] : memref<144xf32, #tpu.memory_space<smem>>
    %cst_72 = arith.constant 5.000000e-01 : f32
    %125 = arith.mulf %124, %cst_72 : f32
    %c61 = arith.constant 61 : index
    %126 = memref.load %arg2[%c61] : memref<144xf32, #tpu.memory_space<smem>>
    %cst_73 = arith.constant 5.000000e-01 : f32
    %127 = arith.mulf %126, %cst_73 : f32
    %c62 = arith.constant 62 : index
    %128 = memref.load %arg2[%c62] : memref<144xf32, #tpu.memory_space<smem>>
    %cst_74 = arith.constant 5.000000e-01 : f32
    %129 = arith.mulf %128, %cst_74 : f32
    %c63 = arith.constant 63 : index
    %130 = memref.load %arg2[%c63] : memref<144xf32, #tpu.memory_space<smem>>
    %cst_75 = arith.constant 5.000000e-01 : f32
    %131 = arith.mulf %130, %cst_75 : f32
    %c64 = arith.constant 64 : index
    %132 = memref.load %arg2[%c64] : memref<144xf32, #tpu.memory_space<smem>>
    %cst_76 = arith.constant 5.000000e-01 : f32
    %133 = arith.mulf %132, %cst_76 : f32
    %c65 = arith.constant 65 : index
    %134 = memref.load %arg2[%c65] : memref<144xf32, #tpu.memory_space<smem>>
    %cst_77 = arith.constant 5.000000e-01 : f32
    %135 = arith.mulf %134, %cst_77 : f32
    %c66 = arith.constant 66 : index
    %136 = memref.load %arg2[%c66] : memref<144xf32, #tpu.memory_space<smem>>
    %cst_78 = arith.constant 5.000000e-01 : f32
    %137 = arith.mulf %136, %cst_78 : f32
    %c67 = arith.constant 67 : index
    %138 = memref.load %arg2[%c67] : memref<144xf32, #tpu.memory_space<smem>>
    %cst_79 = arith.constant 5.000000e-01 : f32
    %139 = arith.mulf %138, %cst_79 : f32
    %c68 = arith.constant 68 : index
    %140 = memref.load %arg2[%c68] : memref<144xf32, #tpu.memory_space<smem>>
    %cst_80 = arith.constant 5.000000e-01 : f32
    %141 = arith.mulf %140, %cst_80 : f32
    %c69 = arith.constant 69 : index
    %142 = memref.load %arg2[%c69] : memref<144xf32, #tpu.memory_space<smem>>
    %cst_81 = arith.constant 5.000000e-01 : f32
    %143 = arith.mulf %142, %cst_81 : f32
    %c70 = arith.constant 70 : index
    %144 = memref.load %arg2[%c70] : memref<144xf32, #tpu.memory_space<smem>>
    %cst_82 = arith.constant 5.000000e-01 : f32
    %145 = arith.mulf %144, %cst_82 : f32
    %c71 = arith.constant 71 : index
    %146 = memref.load %arg2[%c71] : memref<144xf32, #tpu.memory_space<smem>>
    %cst_83 = arith.constant 5.000000e-01 : f32
    %147 = arith.mulf %146, %cst_83 : f32
    %c72 = arith.constant 72 : index
    %148 = memref.load %arg2[%c72] : memref<144xf32, #tpu.memory_space<smem>>
    %cst_84 = arith.constant 5.000000e-01 : f32
    %149 = arith.mulf %148, %cst_84 : f32
    %c73 = arith.constant 73 : index
    %150 = memref.load %arg2[%c73] : memref<144xf32, #tpu.memory_space<smem>>
    %cst_85 = arith.constant 5.000000e-01 : f32
    %151 = arith.mulf %150, %cst_85 : f32
    %c74 = arith.constant 74 : index
    %152 = memref.load %arg2[%c74] : memref<144xf32, #tpu.memory_space<smem>>
    %cst_86 = arith.constant 5.000000e-01 : f32
    %153 = arith.mulf %152, %cst_86 : f32
    %c75 = arith.constant 75 : index
    %154 = memref.load %arg2[%c75] : memref<144xf32, #tpu.memory_space<smem>>
    %cst_87 = arith.constant 5.000000e-01 : f32
    %155 = arith.mulf %154, %cst_87 : f32
    %c76 = arith.constant 76 : index
    %156 = memref.load %arg2[%c76] : memref<144xf32, #tpu.memory_space<smem>>
    %cst_88 = arith.constant 5.000000e-01 : f32
    %157 = arith.mulf %156, %cst_88 : f32
    %c77 = arith.constant 77 : index
    %158 = memref.load %arg2[%c77] : memref<144xf32, #tpu.memory_space<smem>>
    %cst_89 = arith.constant 5.000000e-01 : f32
    %159 = arith.mulf %158, %cst_89 : f32
    %c78 = arith.constant 78 : index
    %160 = memref.load %arg2[%c78] : memref<144xf32, #tpu.memory_space<smem>>
    %cst_90 = arith.constant 5.000000e-01 : f32
    %161 = arith.mulf %160, %cst_90 : f32
    %c79 = arith.constant 79 : index
    %162 = memref.load %arg2[%c79] : memref<144xf32, #tpu.memory_space<smem>>
    %cst_91 = arith.constant 5.000000e-01 : f32
    %163 = arith.mulf %162, %cst_91 : f32
    %c80 = arith.constant 80 : index
    %164 = memref.load %arg2[%c80] : memref<144xf32, #tpu.memory_space<smem>>
    %cst_92 = arith.constant 5.000000e-01 : f32
    %165 = arith.mulf %164, %cst_92 : f32
    %c81 = arith.constant 81 : index
    %166 = memref.load %arg2[%c81] : memref<144xf32, #tpu.memory_space<smem>>
    %cst_93 = arith.constant 5.000000e-01 : f32
    %167 = arith.mulf %166, %cst_93 : f32
    %c82 = arith.constant 82 : index
    %168 = memref.load %arg2[%c82] : memref<144xf32, #tpu.memory_space<smem>>
    %cst_94 = arith.constant 5.000000e-01 : f32
    %169 = arith.mulf %168, %cst_94 : f32
    %c83 = arith.constant 83 : index
    %170 = memref.load %arg2[%c83] : memref<144xf32, #tpu.memory_space<smem>>
    %cst_95 = arith.constant 5.000000e-01 : f32
    %171 = arith.mulf %170, %cst_95 : f32
    %c84 = arith.constant 84 : index
    %172 = memref.load %arg2[%c84] : memref<144xf32, #tpu.memory_space<smem>>
    %cst_96 = arith.constant 5.000000e-01 : f32
    %173 = arith.mulf %172, %cst_96 : f32
    %c85 = arith.constant 85 : index
    %174 = memref.load %arg2[%c85] : memref<144xf32, #tpu.memory_space<smem>>
    %cst_97 = arith.constant 5.000000e-01 : f32
    %175 = arith.mulf %174, %cst_97 : f32
    %c86 = arith.constant 86 : index
    %176 = memref.load %arg2[%c86] : memref<144xf32, #tpu.memory_space<smem>>
    %cst_98 = arith.constant 5.000000e-01 : f32
    %177 = arith.mulf %176, %cst_98 : f32
    %c87 = arith.constant 87 : index
    %178 = memref.load %arg2[%c87] : memref<144xf32, #tpu.memory_space<smem>>
    %cst_99 = arith.constant 5.000000e-01 : f32
    %179 = arith.mulf %178, %cst_99 : f32
    %c88 = arith.constant 88 : index
    %180 = memref.load %arg2[%c88] : memref<144xf32, #tpu.memory_space<smem>>
    %cst_100 = arith.constant 5.000000e-01 : f32
    %181 = arith.mulf %180, %cst_100 : f32
    %c89 = arith.constant 89 : index
    %182 = memref.load %arg2[%c89] : memref<144xf32, #tpu.memory_space<smem>>
    %cst_101 = arith.constant 5.000000e-01 : f32
    %183 = arith.mulf %182, %cst_101 : f32
    %c90 = arith.constant 90 : index
    %184 = memref.load %arg2[%c90] : memref<144xf32, #tpu.memory_space<smem>>
    %cst_102 = arith.constant 5.000000e-01 : f32
    %185 = arith.mulf %184, %cst_102 : f32
    %c91 = arith.constant 91 : index
    %186 = memref.load %arg2[%c91] : memref<144xf32, #tpu.memory_space<smem>>
    %cst_103 = arith.constant 5.000000e-01 : f32
    %187 = arith.mulf %186, %cst_103 : f32
    %c92 = arith.constant 92 : index
    %188 = memref.load %arg2[%c92] : memref<144xf32, #tpu.memory_space<smem>>
    %cst_104 = arith.constant 5.000000e-01 : f32
    %189 = arith.mulf %188, %cst_104 : f32
    %c93 = arith.constant 93 : index
    %190 = memref.load %arg2[%c93] : memref<144xf32, #tpu.memory_space<smem>>
    %cst_105 = arith.constant 5.000000e-01 : f32
    %191 = arith.mulf %190, %cst_105 : f32
    %c94 = arith.constant 94 : index
    %192 = memref.load %arg2[%c94] : memref<144xf32, #tpu.memory_space<smem>>
    %cst_106 = arith.constant 5.000000e-01 : f32
    %193 = arith.mulf %192, %cst_106 : f32
    %c95 = arith.constant 95 : index
    %194 = memref.load %arg2[%c95] : memref<144xf32, #tpu.memory_space<smem>>
    %cst_107 = arith.constant 5.000000e-01 : f32
    %195 = arith.mulf %194, %cst_107 : f32
    %c96 = arith.constant 96 : index
    %196 = memref.load %arg2[%c96] : memref<144xf32, #tpu.memory_space<smem>>
    %cst_108 = arith.constant 5.000000e-01 : f32
    %197 = arith.mulf %196, %cst_108 : f32
    %c97 = arith.constant 97 : index
    %198 = memref.load %arg2[%c97] : memref<144xf32, #tpu.memory_space<smem>>
    %cst_109 = arith.constant 5.000000e-01 : f32
    %199 = arith.mulf %198, %cst_109 : f32
    %c98 = arith.constant 98 : index
    %200 = memref.load %arg2[%c98] : memref<144xf32, #tpu.memory_space<smem>>
    %cst_110 = arith.constant 5.000000e-01 : f32
    %201 = arith.mulf %200, %cst_110 : f32
    %c99 = arith.constant 99 : index
    %202 = memref.load %arg2[%c99] : memref<144xf32, #tpu.memory_space<smem>>
    %cst_111 = arith.constant 5.000000e-01 : f32
    %203 = arith.mulf %202, %cst_111 : f32
    %c100 = arith.constant 100 : index
    %204 = memref.load %arg2[%c100] : memref<144xf32, #tpu.memory_space<smem>>
    %cst_112 = arith.constant 5.000000e-01 : f32
    %205 = arith.mulf %204, %cst_112 : f32
    %c101 = arith.constant 101 : index
    %206 = memref.load %arg2[%c101] : memref<144xf32, #tpu.memory_space<smem>>
    %cst_113 = arith.constant 5.000000e-01 : f32
    %207 = arith.mulf %206, %cst_113 : f32
    %c102 = arith.constant 102 : index
    %208 = memref.load %arg2[%c102] : memref<144xf32, #tpu.memory_space<smem>>
    %cst_114 = arith.constant 5.000000e-01 : f32
    %209 = arith.mulf %208, %cst_114 : f32
    %c103 = arith.constant 103 : index
    %210 = memref.load %arg2[%c103] : memref<144xf32, #tpu.memory_space<smem>>
    %cst_115 = arith.constant 5.000000e-01 : f32
    %211 = arith.mulf %210, %cst_115 : f32
    %c104 = arith.constant 104 : index
    %212 = memref.load %arg2[%c104] : memref<144xf32, #tpu.memory_space<smem>>
    %cst_116 = arith.constant 5.000000e-01 : f32
    %213 = arith.mulf %212, %cst_116 : f32
    %c105 = arith.constant 105 : index
    %214 = memref.load %arg2[%c105] : memref<144xf32, #tpu.memory_space<smem>>
    %cst_117 = arith.constant 5.000000e-01 : f32
    %215 = arith.mulf %214, %cst_117 : f32
    %c106 = arith.constant 106 : index
    %216 = memref.load %arg2[%c106] : memref<144xf32, #tpu.memory_space<smem>>
    %cst_118 = arith.constant 5.000000e-01 : f32
    %217 = arith.mulf %216, %cst_118 : f32
    %c107 = arith.constant 107 : index
    %218 = memref.load %arg2[%c107] : memref<144xf32, #tpu.memory_space<smem>>
    %cst_119 = arith.constant 5.000000e-01 : f32
    %219 = arith.mulf %218, %cst_119 : f32
    %c108 = arith.constant 108 : index
    %220 = memref.load %arg2[%c108] : memref<144xf32, #tpu.memory_space<smem>>
    %cst_120 = arith.constant 5.000000e-01 : f32
    %221 = arith.mulf %220, %cst_120 : f32
    %c109 = arith.constant 109 : index
    %222 = memref.load %arg2[%c109] : memref<144xf32, #tpu.memory_space<smem>>
    %cst_121 = arith.constant 5.000000e-01 : f32
    %223 = arith.mulf %222, %cst_121 : f32
    %c110 = arith.constant 110 : index
    %224 = memref.load %arg2[%c110] : memref<144xf32, #tpu.memory_space<smem>>
    %cst_122 = arith.constant 5.000000e-01 : f32
    %225 = arith.mulf %224, %cst_122 : f32
    %c111 = arith.constant 111 : index
    %226 = memref.load %arg2[%c111] : memref<144xf32, #tpu.memory_space<smem>>
    %cst_123 = arith.constant 5.000000e-01 : f32
    %227 = arith.mulf %226, %cst_123 : f32
    %c112 = arith.constant 112 : index
    %228 = memref.load %arg2[%c112] : memref<144xf32, #tpu.memory_space<smem>>
    %cst_124 = arith.constant 5.000000e-01 : f32
    %229 = arith.mulf %228, %cst_124 : f32
    %c113 = arith.constant 113 : index
    %230 = memref.load %arg2[%c113] : memref<144xf32, #tpu.memory_space<smem>>
    %cst_125 = arith.constant 5.000000e-01 : f32
    %231 = arith.mulf %230, %cst_125 : f32
    %c114 = arith.constant 114 : index
    %232 = memref.load %arg2[%c114] : memref<144xf32, #tpu.memory_space<smem>>
    %cst_126 = arith.constant 5.000000e-01 : f32
    %233 = arith.mulf %232, %cst_126 : f32
    %c115 = arith.constant 115 : index
    %234 = memref.load %arg2[%c115] : memref<144xf32, #tpu.memory_space<smem>>
    %cst_127 = arith.constant 5.000000e-01 : f32
    %235 = arith.mulf %234, %cst_127 : f32
    %c116 = arith.constant 116 : index
    %236 = memref.load %arg2[%c116] : memref<144xf32, #tpu.memory_space<smem>>
    %cst_128 = arith.constant 5.000000e-01 : f32
    %237 = arith.mulf %236, %cst_128 : f32
    %c117 = arith.constant 117 : index
    %238 = memref.load %arg2[%c117] : memref<144xf32, #tpu.memory_space<smem>>
    %cst_129 = arith.constant 5.000000e-01 : f32
    %239 = arith.mulf %238, %cst_129 : f32
    %c118 = arith.constant 118 : index
    %240 = memref.load %arg2[%c118] : memref<144xf32, #tpu.memory_space<smem>>
    %cst_130 = arith.constant 5.000000e-01 : f32
    %241 = arith.mulf %240, %cst_130 : f32
    %c119 = arith.constant 119 : index
    %242 = memref.load %arg2[%c119] : memref<144xf32, #tpu.memory_space<smem>>
    %cst_131 = arith.constant 5.000000e-01 : f32
    %243 = arith.mulf %242, %cst_131 : f32
    %c120 = arith.constant 120 : index
    %244 = memref.load %arg2[%c120] : memref<144xf32, #tpu.memory_space<smem>>
    %cst_132 = arith.constant 5.000000e-01 : f32
    %245 = arith.mulf %244, %cst_132 : f32
    %c121 = arith.constant 121 : index
    %246 = memref.load %arg2[%c121] : memref<144xf32, #tpu.memory_space<smem>>
    %cst_133 = arith.constant 5.000000e-01 : f32
    %247 = arith.mulf %246, %cst_133 : f32
    %c122 = arith.constant 122 : index
    %248 = memref.load %arg2[%c122] : memref<144xf32, #tpu.memory_space<smem>>
    %cst_134 = arith.constant 5.000000e-01 : f32
    %249 = arith.mulf %248, %cst_134 : f32
    %c123 = arith.constant 123 : index
    %250 = memref.load %arg2[%c123] : memref<144xf32, #tpu.memory_space<smem>>
    %cst_135 = arith.constant 5.000000e-01 : f32
    %251 = arith.mulf %250, %cst_135 : f32
    %c124 = arith.constant 124 : index
    %252 = memref.load %arg2[%c124] : memref<144xf32, #tpu.memory_space<smem>>
    %cst_136 = arith.constant 5.000000e-01 : f32
    %253 = arith.mulf %252, %cst_136 : f32
    %c125 = arith.constant 125 : index
    %254 = memref.load %arg2[%c125] : memref<144xf32, #tpu.memory_space<smem>>
    %cst_137 = arith.constant 5.000000e-01 : f32
    %255 = arith.mulf %254, %cst_137 : f32
    %c126 = arith.constant 126 : index
    %256 = memref.load %arg2[%c126] : memref<144xf32, #tpu.memory_space<smem>>
    %cst_138 = arith.constant 5.000000e-01 : f32
    %257 = arith.mulf %256, %cst_138 : f32
    %c127 = arith.constant 127 : index
    %258 = memref.load %arg2[%c127] : memref<144xf32, #tpu.memory_space<smem>>
    %cst_139 = arith.constant 5.000000e-01 : f32
    %259 = arith.mulf %258, %cst_139 : f32
    %c128 = arith.constant 128 : index
    %260 = memref.load %arg2[%c128] : memref<144xf32, #tpu.memory_space<smem>>
    %cst_140 = arith.constant 5.000000e-01 : f32
    %261 = arith.mulf %260, %cst_140 : f32
    %c129 = arith.constant 129 : index
    %262 = memref.load %arg2[%c129] : memref<144xf32, #tpu.memory_space<smem>>
    %cst_141 = arith.constant 5.000000e-01 : f32
    %263 = arith.mulf %262, %cst_141 : f32
    %c130 = arith.constant 130 : index
    %264 = memref.load %arg2[%c130] : memref<144xf32, #tpu.memory_space<smem>>
    %cst_142 = arith.constant 5.000000e-01 : f32
    %265 = arith.mulf %264, %cst_142 : f32
    %c131 = arith.constant 131 : index
    %266 = memref.load %arg2[%c131] : memref<144xf32, #tpu.memory_space<smem>>
    %cst_143 = arith.constant 5.000000e-01 : f32
    %267 = arith.mulf %266, %cst_143 : f32
    %c132 = arith.constant 132 : index
    %268 = memref.load %arg2[%c132] : memref<144xf32, #tpu.memory_space<smem>>
    %cst_144 = arith.constant 5.000000e-01 : f32
    %269 = arith.mulf %268, %cst_144 : f32
    %c133 = arith.constant 133 : index
    %270 = memref.load %arg2[%c133] : memref<144xf32, #tpu.memory_space<smem>>
    %cst_145 = arith.constant 5.000000e-01 : f32
    %271 = arith.mulf %270, %cst_145 : f32
    %c134 = arith.constant 134 : index
    %272 = memref.load %arg2[%c134] : memref<144xf32, #tpu.memory_space<smem>>
    %cst_146 = arith.constant 5.000000e-01 : f32
    %273 = arith.mulf %272, %cst_146 : f32
    %c135 = arith.constant 135 : index
    %274 = memref.load %arg2[%c135] : memref<144xf32, #tpu.memory_space<smem>>
    %cst_147 = arith.constant 5.000000e-01 : f32
    %275 = arith.mulf %274, %cst_147 : f32
    %c136 = arith.constant 136 : index
    %276 = memref.load %arg2[%c136] : memref<144xf32, #tpu.memory_space<smem>>
    %cst_148 = arith.constant 5.000000e-01 : f32
    %277 = arith.mulf %276, %cst_148 : f32
    %c137 = arith.constant 137 : index
    %278 = memref.load %arg2[%c137] : memref<144xf32, #tpu.memory_space<smem>>
    %cst_149 = arith.constant 5.000000e-01 : f32
    %279 = arith.mulf %278, %cst_149 : f32
    %c138 = arith.constant 138 : index
    %280 = memref.load %arg2[%c138] : memref<144xf32, #tpu.memory_space<smem>>
    %cst_150 = arith.constant 5.000000e-01 : f32
    %281 = arith.mulf %280, %cst_150 : f32
    %c139 = arith.constant 139 : index
    %282 = memref.load %arg2[%c139] : memref<144xf32, #tpu.memory_space<smem>>
    %cst_151 = arith.constant 5.000000e-01 : f32
    %283 = arith.mulf %282, %cst_151 : f32
    %c140 = arith.constant 140 : index
    %284 = memref.load %arg2[%c140] : memref<144xf32, #tpu.memory_space<smem>>
    %cst_152 = arith.constant 5.000000e-01 : f32
    %285 = arith.mulf %284, %cst_152 : f32
    %c141 = arith.constant 141 : index
    %286 = memref.load %arg2[%c141] : memref<144xf32, #tpu.memory_space<smem>>
    %cst_153 = arith.constant 5.000000e-01 : f32
    %287 = arith.mulf %286, %cst_153 : f32
    %c142 = arith.constant 142 : index
    %288 = memref.load %arg2[%c142] : memref<144xf32, #tpu.memory_space<smem>>
    %cst_154 = arith.constant 5.000000e-01 : f32
    %289 = arith.mulf %288, %cst_154 : f32
    %c143 = arith.constant 143 : index
    %290 = memref.load %arg2[%c143] : memref<144xf32, #tpu.memory_space<smem>>
    %cst_155 = arith.constant 5.000000e-01 : f32
    %291 = arith.mulf %290, %cst_155 : f32
    %c0_156 = arith.constant 0 : index
    %292 = memref.load %arg3[%c0_156] : memref<4xf32, #tpu.memory_space<smem>>
    %cst_157 = arith.constant 5.000000e-01 : f32
    %293 = arith.mulf %292, %cst_157 : f32
    %c1_158 = arith.constant 1 : index
    %294 = memref.load %arg3[%c1_158] : memref<4xf32, #tpu.memory_space<smem>>
    %cst_159 = arith.constant 5.000000e-01 : f32
    %295 = arith.mulf %294, %cst_159 : f32
    %c2_160 = arith.constant 2 : index
    %296 = memref.load %arg3[%c2_160] : memref<4xf32, #tpu.memory_space<smem>>
    %cst_161 = arith.constant 5.000000e-01 : f32
    %297 = arith.mulf %296, %cst_161 : f32
    %c3_162 = arith.constant 3 : index
    %298 = memref.load %arg3[%c3_162] : memref<4xf32, #tpu.memory_space<smem>>
    %cst_163 = arith.constant 5.000000e-01 : f32
    %299 = arith.mulf %298, %cst_163 : f32
    %300 = vector.extract_strided_slice %0 {offsets = [0, 0, 0, 0], sizes = [2, 1, 16, 16], strides = [1, 1, 1, 1]} : vector<2x4x16x16xf32> to vector<2x1x16x16xf32>
    %301 = vector.shape_cast %300 : vector<2x1x16x16xf32> to vector<2x16x16xf32>
    %302 = vector.broadcast %293 : f32 to vector<2x16x16xf32>
    %303 = arith.addf %301, %302 : vector<2x16x16xf32>
    %304 = vector.extract_strided_slice %0 {offsets = [0, 1, 0, 0], sizes = [2, 1, 16, 16], strides = [1, 1, 1, 1]} : vector<2x4x16x16xf32> to vector<2x1x16x16xf32>
    %305 = vector.shape_cast %304 : vector<2x1x16x16xf32> to vector<2x16x16xf32>
    %306 = vector.broadcast %295 : f32 to vector<2x16x16xf32>
    %307 = arith.addf %305, %306 : vector<2x16x16xf32>
    %308 = vector.extract_strided_slice %0 {offsets = [0, 2, 0, 0], sizes = [2, 1, 16, 16], strides = [1, 1, 1, 1]} : vector<2x4x16x16xf32> to vector<2x1x16x16xf32>
    %309 = vector.shape_cast %308 : vector<2x1x16x16xf32> to vector<2x16x16xf32>
    %310 = vector.broadcast %297 : f32 to vector<2x16x16xf32>
    %311 = arith.addf %309, %310 : vector<2x16x16xf32>
    %312 = vector.extract_strided_slice %0 {offsets = [0, 3, 0, 0], sizes = [2, 1, 16, 16], strides = [1, 1, 1, 1]} : vector<2x4x16x16xf32> to vector<2x1x16x16xf32>
    %313 = vector.shape_cast %312 : vector<2x1x16x16xf32> to vector<2x16x16xf32>
    %314 = vector.broadcast %299 : f32 to vector<2x16x16xf32>
    %315 = arith.addf %313, %314 : vector<2x16x16xf32>
    %c0_164 = arith.constant 0 : index
    %c0_165 = arith.constant 0 : index
    %c0_166 = arith.constant 0 : index
    %c0_167 = arith.constant 0 : index
    %316 = vector.load %arg5[%c0_164, %c0_165, %c0_166, %c0_167] : memref<2x4x18x18xf32, #tpu.memory_space<vmem>>, vector<2x1x16x18xf32>
    %317 = vector.shape_cast %316 : vector<2x1x16x18xf32> to vector<2x16x18xf32>
    %318 = vector.extract_strided_slice %317 {offsets = [0, 0, 0], sizes = [2, 16, 16], strides = [1, 1, 1]} : vector<2x16x18xf32> to vector<2x16x16xf32>
    %319 = vector.broadcast %5 : f32 to vector<2x16x16xf32>
    %320 = arith.mulf %319, %318 : vector<2x16x16xf32>
    %321 = arith.addf %303, %320 : vector<2x16x16xf32>
    %322 = vector.broadcast %7 : f32 to vector<2x16x16xf32>
    %323 = arith.mulf %322, %318 : vector<2x16x16xf32>
    %324 = arith.addf %307, %323 : vector<2x16x16xf32>
    %325 = vector.broadcast %9 : f32 to vector<2x16x16xf32>
    %326 = arith.mulf %325, %318 : vector<2x16x16xf32>
    %327 = arith.addf %311, %326 : vector<2x16x16xf32>
    %328 = vector.broadcast %11 : f32 to vector<2x16x16xf32>
    %329 = arith.mulf %328, %318 : vector<2x16x16xf32>
    %330 = arith.addf %315, %329 : vector<2x16x16xf32>
    %331 = vector.extract_strided_slice %317 {offsets = [0, 0, 1], sizes = [2, 16, 16], strides = [1, 1, 1]} : vector<2x16x18xf32> to vector<2x16x16xf32>
    %332 = vector.broadcast %37 : f32 to vector<2x16x16xf32>
    %333 = arith.mulf %332, %331 : vector<2x16x16xf32>
    %334 = arith.addf %321, %333 : vector<2x16x16xf32>
    %335 = vector.broadcast %39 : f32 to vector<2x16x16xf32>
    %336 = arith.mulf %335, %331 : vector<2x16x16xf32>
    %337 = arith.addf %324, %336 : vector<2x16x16xf32>
    %338 = vector.broadcast %41 : f32 to vector<2x16x16xf32>
    %339 = arith.mulf %338, %331 : vector<2x16x16xf32>
    %340 = arith.addf %327, %339 : vector<2x16x16xf32>
    %341 = vector.broadcast %43 : f32 to vector<2x16x16xf32>
    %342 = arith.mulf %341, %331 : vector<2x16x16xf32>
    %343 = arith.addf %330, %342 : vector<2x16x16xf32>
    %344 = vector.extract_strided_slice %317 {offsets = [0, 0, 2], sizes = [2, 16, 16], strides = [1, 1, 1]} : vector<2x16x18xf32> to vector<2x16x16xf32>
    %345 = vector.broadcast %69 : f32 to vector<2x16x16xf32>
    %346 = arith.mulf %345, %344 : vector<2x16x16xf32>
    %347 = arith.addf %334, %346 : vector<2x16x16xf32>
    %348 = vector.broadcast %71 : f32 to vector<2x16x16xf32>
    %349 = arith.mulf %348, %344 : vector<2x16x16xf32>
    %350 = arith.addf %337, %349 : vector<2x16x16xf32>
    %351 = vector.broadcast %73 : f32 to vector<2x16x16xf32>
    %352 = arith.mulf %351, %344 : vector<2x16x16xf32>
    %353 = arith.addf %340, %352 : vector<2x16x16xf32>
    %354 = vector.broadcast %75 : f32 to vector<2x16x16xf32>
    %355 = arith.mulf %354, %344 : vector<2x16x16xf32>
    %356 = arith.addf %343, %355 : vector<2x16x16xf32>
    %c0_168 = arith.constant 0 : index
    %c0_169 = arith.constant 0 : index
    %c1_170 = arith.constant 1 : index
    %c0_171 = arith.constant 0 : index
    %357 = vector.load %arg5[%c0_168, %c0_169, %c1_170, %c0_171] : memref<2x4x18x18xf32, #tpu.memory_space<vmem>>, vector<2x1x16x18xf32>
    %358 = vector.shape_cast %357 : vector<2x1x16x18xf32> to vector<2x16x18xf32>
    %359 = vector.extract_strided_slice %358 {offsets = [0, 0, 0], sizes = [2, 16, 16], strides = [1, 1, 1]} : vector<2x16x18xf32> to vector<2x16x16xf32>
    %360 = vector.broadcast %101 : f32 to vector<2x16x16xf32>
    %361 = arith.mulf %360, %359 : vector<2x16x16xf32>
    %362 = arith.addf %347, %361 : vector<2x16x16xf32>
    %363 = vector.broadcast %103 : f32 to vector<2x16x16xf32>
    %364 = arith.mulf %363, %359 : vector<2x16x16xf32>
    %365 = arith.addf %350, %364 : vector<2x16x16xf32>
    %366 = vector.broadcast %105 : f32 to vector<2x16x16xf32>
    %367 = arith.mulf %366, %359 : vector<2x16x16xf32>
    %368 = arith.addf %353, %367 : vector<2x16x16xf32>
    %369 = vector.broadcast %107 : f32 to vector<2x16x16xf32>
    %370 = arith.mulf %369, %359 : vector<2x16x16xf32>
    %371 = arith.addf %356, %370 : vector<2x16x16xf32>
    %372 = vector.extract_strided_slice %358 {offsets = [0, 0, 1], sizes = [2, 16, 16], strides = [1, 1, 1]} : vector<2x16x18xf32> to vector<2x16x16xf32>
    %373 = vector.broadcast %133 : f32 to vector<2x16x16xf32>
    %374 = arith.mulf %373, %372 : vector<2x16x16xf32>
    %375 = arith.addf %362, %374 : vector<2x16x16xf32>
    %376 = vector.broadcast %135 : f32 to vector<2x16x16xf32>
    %377 = arith.mulf %376, %372 : vector<2x16x16xf32>
    %378 = arith.addf %365, %377 : vector<2x16x16xf32>
    %379 = vector.broadcast %137 : f32 to vector<2x16x16xf32>
    %380 = arith.mulf %379, %372 : vector<2x16x16xf32>
    %381 = arith.addf %368, %380 : vector<2x16x16xf32>
    %382 = vector.broadcast %139 : f32 to vector<2x16x16xf32>
    %383 = arith.mulf %382, %372 : vector<2x16x16xf32>
    %384 = arith.addf %371, %383 : vector<2x16x16xf32>
    %385 = vector.extract_strided_slice %358 {offsets = [0, 0, 2], sizes = [2, 16, 16], strides = [1, 1, 1]} : vector<2x16x18xf32> to vector<2x16x16xf32>
    %386 = vector.broadcast %165 : f32 to vector<2x16x16xf32>
    %387 = arith.mulf %386, %385 : vector<2x16x16xf32>
    %388 = arith.addf %375, %387 : vector<2x16x16xf32>
    %389 = vector.broadcast %167 : f32 to vector<2x16x16xf32>
    %390 = arith.mulf %389, %385 : vector<2x16x16xf32>
    %391 = arith.addf %378, %390 : vector<2x16x16xf32>
    %392 = vector.broadcast %169 : f32 to vector<2x16x16xf32>
    %393 = arith.mulf %392, %385 : vector<2x16x16xf32>
    %394 = arith.addf %381, %393 : vector<2x16x16xf32>
    %395 = vector.broadcast %171 : f32 to vector<2x16x16xf32>
    %396 = arith.mulf %395, %385 : vector<2x16x16xf32>
    %397 = arith.addf %384, %396 : vector<2x16x16xf32>
    %c0_172 = arith.constant 0 : index
    %c0_173 = arith.constant 0 : index
    %c2_174 = arith.constant 2 : index
    %c0_175 = arith.constant 0 : index
    %398 = vector.load %arg5[%c0_172, %c0_173, %c2_174, %c0_175] : memref<2x4x18x18xf32, #tpu.memory_space<vmem>>, vector<2x1x16x18xf32>
    %399 = vector.shape_cast %398 : vector<2x1x16x18xf32> to vector<2x16x18xf32>
    %400 = vector.extract_strided_slice %399 {offsets = [0, 0, 0], sizes = [2, 16, 16], strides = [1, 1, 1]} : vector<2x16x18xf32> to vector<2x16x16xf32>
    %401 = vector.broadcast %197 : f32 to vector<2x16x16xf32>
    %402 = arith.mulf %401, %400 : vector<2x16x16xf32>
    %403 = arith.addf %388, %402 : vector<2x16x16xf32>
    %404 = vector.broadcast %199 : f32 to vector<2x16x16xf32>
    %405 = arith.mulf %404, %400 : vector<2x16x16xf32>
    %406 = arith.addf %391, %405 : vector<2x16x16xf32>
    %407 = vector.broadcast %201 : f32 to vector<2x16x16xf32>
    %408 = arith.mulf %407, %400 : vector<2x16x16xf32>
    %409 = arith.addf %394, %408 : vector<2x16x16xf32>
    %410 = vector.broadcast %203 : f32 to vector<2x16x16xf32>
    %411 = arith.mulf %410, %400 : vector<2x16x16xf32>
    %412 = arith.addf %397, %411 : vector<2x16x16xf32>
    %413 = vector.extract_strided_slice %399 {offsets = [0, 0, 1], sizes = [2, 16, 16], strides = [1, 1, 1]} : vector<2x16x18xf32> to vector<2x16x16xf32>
    %414 = vector.broadcast %229 : f32 to vector<2x16x16xf32>
    %415 = arith.mulf %414, %413 : vector<2x16x16xf32>
    %416 = arith.addf %403, %415 : vector<2x16x16xf32>
    %417 = vector.broadcast %231 : f32 to vector<2x16x16xf32>
    %418 = arith.mulf %417, %413 : vector<2x16x16xf32>
    %419 = arith.addf %406, %418 : vector<2x16x16xf32>
    %420 = vector.broadcast %233 : f32 to vector<2x16x16xf32>
    %421 = arith.mulf %420, %413 : vector<2x16x16xf32>
    %422 = arith.addf %409, %421 : vector<2x16x16xf32>
    %423 = vector.broadcast %235 : f32 to vector<2x16x16xf32>
    %424 = arith.mulf %423, %413 : vector<2x16x16xf32>
    %425 = arith.addf %412, %424 : vector<2x16x16xf32>
    %426 = vector.extract_strided_slice %399 {offsets = [0, 0, 2], sizes = [2, 16, 16], strides = [1, 1, 1]} : vector<2x16x18xf32> to vector<2x16x16xf32>
    %427 = vector.broadcast %261 : f32 to vector<2x16x16xf32>
    %428 = arith.mulf %427, %426 : vector<2x16x16xf32>
    %429 = arith.addf %416, %428 : vector<2x16x16xf32>
    %430 = vector.broadcast %263 : f32 to vector<2x16x16xf32>
    %431 = arith.mulf %430, %426 : vector<2x16x16xf32>
    %432 = arith.addf %419, %431 : vector<2x16x16xf32>
    %433 = vector.broadcast %265 : f32 to vector<2x16x16xf32>
    %434 = arith.mulf %433, %426 : vector<2x16x16xf32>
    %435 = arith.addf %422, %434 : vector<2x16x16xf32>
    %436 = vector.broadcast %267 : f32 to vector<2x16x16xf32>
    %437 = arith.mulf %436, %426 : vector<2x16x16xf32>
    %438 = arith.addf %425, %437 : vector<2x16x16xf32>
    %c0_176 = arith.constant 0 : index
    %c1_177 = arith.constant 1 : index
    %c0_178 = arith.constant 0 : index
    %c0_179 = arith.constant 0 : index
    %439 = vector.load %arg5[%c0_176, %c1_177, %c0_178, %c0_179] : memref<2x4x18x18xf32, #tpu.memory_space<vmem>>, vector<2x1x16x18xf32>
    %440 = vector.shape_cast %439 : vector<2x1x16x18xf32> to vector<2x16x18xf32>
    %441 = vector.extract_strided_slice %440 {offsets = [0, 0, 0], sizes = [2, 16, 16], strides = [1, 1, 1]} : vector<2x16x18xf32> to vector<2x16x16xf32>
    %442 = vector.broadcast %13 : f32 to vector<2x16x16xf32>
    %443 = arith.mulf %442, %441 : vector<2x16x16xf32>
    %444 = arith.addf %429, %443 : vector<2x16x16xf32>
    %445 = vector.broadcast %15 : f32 to vector<2x16x16xf32>
    %446 = arith.mulf %445, %441 : vector<2x16x16xf32>
    %447 = arith.addf %432, %446 : vector<2x16x16xf32>
    %448 = vector.broadcast %17 : f32 to vector<2x16x16xf32>
    %449 = arith.mulf %448, %441 : vector<2x16x16xf32>
    %450 = arith.addf %435, %449 : vector<2x16x16xf32>
    %451 = vector.broadcast %19 : f32 to vector<2x16x16xf32>
    %452 = arith.mulf %451, %441 : vector<2x16x16xf32>
    %453 = arith.addf %438, %452 : vector<2x16x16xf32>
    %454 = vector.extract_strided_slice %440 {offsets = [0, 0, 1], sizes = [2, 16, 16], strides = [1, 1, 1]} : vector<2x16x18xf32> to vector<2x16x16xf32>
    %455 = vector.broadcast %45 : f32 to vector<2x16x16xf32>
    %456 = arith.mulf %455, %454 : vector<2x16x16xf32>
    %457 = arith.addf %444, %456 : vector<2x16x16xf32>
    %458 = vector.broadcast %47 : f32 to vector<2x16x16xf32>
    %459 = arith.mulf %458, %454 : vector<2x16x16xf32>
    %460 = arith.addf %447, %459 : vector<2x16x16xf32>
    %461 = vector.broadcast %49 : f32 to vector<2x16x16xf32>
    %462 = arith.mulf %461, %454 : vector<2x16x16xf32>
    %463 = arith.addf %450, %462 : vector<2x16x16xf32>
    %464 = vector.broadcast %51 : f32 to vector<2x16x16xf32>
    %465 = arith.mulf %464, %454 : vector<2x16x16xf32>
    %466 = arith.addf %453, %465 : vector<2x16x16xf32>
    %467 = vector.extract_strided_slice %440 {offsets = [0, 0, 2], sizes = [2, 16, 16], strides = [1, 1, 1]} : vector<2x16x18xf32> to vector<2x16x16xf32>
    %468 = vector.broadcast %77 : f32 to vector<2x16x16xf32>
    %469 = arith.mulf %468, %467 : vector<2x16x16xf32>
    %470 = arith.addf %457, %469 : vector<2x16x16xf32>
    %471 = vector.broadcast %79 : f32 to vector<2x16x16xf32>
    %472 = arith.mulf %471, %467 : vector<2x16x16xf32>
    %473 = arith.addf %460, %472 : vector<2x16x16xf32>
    %474 = vector.broadcast %81 : f32 to vector<2x16x16xf32>
    %475 = arith.mulf %474, %467 : vector<2x16x16xf32>
    %476 = arith.addf %463, %475 : vector<2x16x16xf32>
    %477 = vector.broadcast %83 : f32 to vector<2x16x16xf32>
    %478 = arith.mulf %477, %467 : vector<2x16x16xf32>
    %479 = arith.addf %466, %478 : vector<2x16x16xf32>
    %c0_180 = arith.constant 0 : index
    %c1_181 = arith.constant 1 : index
    %c1_182 = arith.constant 1 : index
    %c0_183 = arith.constant 0 : index
    %480 = vector.load %arg5[%c0_180, %c1_181, %c1_182, %c0_183] : memref<2x4x18x18xf32, #tpu.memory_space<vmem>>, vector<2x1x16x18xf32>
    %481 = vector.shape_cast %480 : vector<2x1x16x18xf32> to vector<2x16x18xf32>
    %482 = vector.extract_strided_slice %481 {offsets = [0, 0, 0], sizes = [2, 16, 16], strides = [1, 1, 1]} : vector<2x16x18xf32> to vector<2x16x16xf32>
    %483 = vector.broadcast %109 : f32 to vector<2x16x16xf32>
    %484 = arith.mulf %483, %482 : vector<2x16x16xf32>
    %485 = arith.addf %470, %484 : vector<2x16x16xf32>
    %486 = vector.broadcast %111 : f32 to vector<2x16x16xf32>
    %487 = arith.mulf %486, %482 : vector<2x16x16xf32>
    %488 = arith.addf %473, %487 : vector<2x16x16xf32>
    %489 = vector.broadcast %113 : f32 to vector<2x16x16xf32>
    %490 = arith.mulf %489, %482 : vector<2x16x16xf32>
    %491 = arith.addf %476, %490 : vector<2x16x16xf32>
    %492 = vector.broadcast %115 : f32 to vector<2x16x16xf32>
    %493 = arith.mulf %492, %482 : vector<2x16x16xf32>
    %494 = arith.addf %479, %493 : vector<2x16x16xf32>
    %495 = vector.extract_strided_slice %481 {offsets = [0, 0, 1], sizes = [2, 16, 16], strides = [1, 1, 1]} : vector<2x16x18xf32> to vector<2x16x16xf32>
    %496 = vector.broadcast %141 : f32 to vector<2x16x16xf32>
    %497 = arith.mulf %496, %495 : vector<2x16x16xf32>
    %498 = arith.addf %485, %497 : vector<2x16x16xf32>
    %499 = vector.broadcast %143 : f32 to vector<2x16x16xf32>
    %500 = arith.mulf %499, %495 : vector<2x16x16xf32>
    %501 = arith.addf %488, %500 : vector<2x16x16xf32>
    %502 = vector.broadcast %145 : f32 to vector<2x16x16xf32>
    %503 = arith.mulf %502, %495 : vector<2x16x16xf32>
    %504 = arith.addf %491, %503 : vector<2x16x16xf32>
    %505 = vector.broadcast %147 : f32 to vector<2x16x16xf32>
    %506 = arith.mulf %505, %495 : vector<2x16x16xf32>
    %507 = arith.addf %494, %506 : vector<2x16x16xf32>
    %508 = vector.extract_strided_slice %481 {offsets = [0, 0, 2], sizes = [2, 16, 16], strides = [1, 1, 1]} : vector<2x16x18xf32> to vector<2x16x16xf32>
    %509 = vector.broadcast %173 : f32 to vector<2x16x16xf32>
    %510 = arith.mulf %509, %508 : vector<2x16x16xf32>
    %511 = arith.addf %498, %510 : vector<2x16x16xf32>
    %512 = vector.broadcast %175 : f32 to vector<2x16x16xf32>
    %513 = arith.mulf %512, %508 : vector<2x16x16xf32>
    %514 = arith.addf %501, %513 : vector<2x16x16xf32>
    %515 = vector.broadcast %177 : f32 to vector<2x16x16xf32>
    %516 = arith.mulf %515, %508 : vector<2x16x16xf32>
    %517 = arith.addf %504, %516 : vector<2x16x16xf32>
    %518 = vector.broadcast %179 : f32 to vector<2x16x16xf32>
    %519 = arith.mulf %518, %508 : vector<2x16x16xf32>
    %520 = arith.addf %507, %519 : vector<2x16x16xf32>
    %c0_184 = arith.constant 0 : index
    %c1_185 = arith.constant 1 : index
    %c2_186 = arith.constant 2 : index
    %c0_187 = arith.constant 0 : index
    %521 = vector.load %arg5[%c0_184, %c1_185, %c2_186, %c0_187] : memref<2x4x18x18xf32, #tpu.memory_space<vmem>>, vector<2x1x16x18xf32>
    %522 = vector.shape_cast %521 : vector<2x1x16x18xf32> to vector<2x16x18xf32>
    %523 = vector.extract_strided_slice %522 {offsets = [0, 0, 0], sizes = [2, 16, 16], strides = [1, 1, 1]} : vector<2x16x18xf32> to vector<2x16x16xf32>
    %524 = vector.broadcast %205 : f32 to vector<2x16x16xf32>
    %525 = arith.mulf %524, %523 : vector<2x16x16xf32>
    %526 = arith.addf %511, %525 : vector<2x16x16xf32>
    %527 = vector.broadcast %207 : f32 to vector<2x16x16xf32>
    %528 = arith.mulf %527, %523 : vector<2x16x16xf32>
    %529 = arith.addf %514, %528 : vector<2x16x16xf32>
    %530 = vector.broadcast %209 : f32 to vector<2x16x16xf32>
    %531 = arith.mulf %530, %523 : vector<2x16x16xf32>
    %532 = arith.addf %517, %531 : vector<2x16x16xf32>
    %533 = vector.broadcast %211 : f32 to vector<2x16x16xf32>
    %534 = arith.mulf %533, %523 : vector<2x16x16xf32>
    %535 = arith.addf %520, %534 : vector<2x16x16xf32>
    %536 = vector.extract_strided_slice %522 {offsets = [0, 0, 1], sizes = [2, 16, 16], strides = [1, 1, 1]} : vector<2x16x18xf32> to vector<2x16x16xf32>
    %537 = vector.broadcast %237 : f32 to vector<2x16x16xf32>
    %538 = arith.mulf %537, %536 : vector<2x16x16xf32>
    %539 = arith.addf %526, %538 : vector<2x16x16xf32>
    %540 = vector.broadcast %239 : f32 to vector<2x16x16xf32>
    %541 = arith.mulf %540, %536 : vector<2x16x16xf32>
    %542 = arith.addf %529, %541 : vector<2x16x16xf32>
    %543 = vector.broadcast %241 : f32 to vector<2x16x16xf32>
    %544 = arith.mulf %543, %536 : vector<2x16x16xf32>
    %545 = arith.addf %532, %544 : vector<2x16x16xf32>
    %546 = vector.broadcast %243 : f32 to vector<2x16x16xf32>
    %547 = arith.mulf %546, %536 : vector<2x16x16xf32>
    %548 = arith.addf %535, %547 : vector<2x16x16xf32>
    %549 = vector.extract_strided_slice %522 {offsets = [0, 0, 2], sizes = [2, 16, 16], strides = [1, 1, 1]} : vector<2x16x18xf32> to vector<2x16x16xf32>
    %550 = vector.broadcast %269 : f32 to vector<2x16x16xf32>
    %551 = arith.mulf %550, %549 : vector<2x16x16xf32>
    %552 = arith.addf %539, %551 : vector<2x16x16xf32>
    %553 = vector.broadcast %271 : f32 to vector<2x16x16xf32>
    %554 = arith.mulf %553, %549 : vector<2x16x16xf32>
    %555 = arith.addf %542, %554 : vector<2x16x16xf32>
    %556 = vector.broadcast %273 : f32 to vector<2x16x16xf32>
    %557 = arith.mulf %556, %549 : vector<2x16x16xf32>
    %558 = arith.addf %545, %557 : vector<2x16x16xf32>
    %559 = vector.broadcast %275 : f32 to vector<2x16x16xf32>
    %560 = arith.mulf %559, %549 : vector<2x16x16xf32>
    %561 = arith.addf %548, %560 : vector<2x16x16xf32>
    %c0_188 = arith.constant 0 : index
    %c2_189 = arith.constant 2 : index
    %c0_190 = arith.constant 0 : index
    %c0_191 = arith.constant 0 : index
    %562 = vector.load %arg5[%c0_188, %c2_189, %c0_190, %c0_191] : memref<2x4x18x18xf32, #tpu.memory_space<vmem>>, vector<2x1x16x18xf32>
    %563 = vector.shape_cast %562 : vector<2x1x16x18xf32> to vector<2x16x18xf32>
    %564 = vector.extract_strided_slice %563 {offsets = [0, 0, 0], sizes = [2, 16, 16], strides = [1, 1, 1]} : vector<2x16x18xf32> to vector<2x16x16xf32>
    %565 = vector.broadcast %21 : f32 to vector<2x16x16xf32>
    %566 = arith.mulf %565, %564 : vector<2x16x16xf32>
    %567 = arith.addf %552, %566 : vector<2x16x16xf32>
    %568 = vector.broadcast %23 : f32 to vector<2x16x16xf32>
    %569 = arith.mulf %568, %564 : vector<2x16x16xf32>
    %570 = arith.addf %555, %569 : vector<2x16x16xf32>
    %571 = vector.broadcast %25 : f32 to vector<2x16x16xf32>
    %572 = arith.mulf %571, %564 : vector<2x16x16xf32>
    %573 = arith.addf %558, %572 : vector<2x16x16xf32>
    %574 = vector.broadcast %27 : f32 to vector<2x16x16xf32>
    %575 = arith.mulf %574, %564 : vector<2x16x16xf32>
    %576 = arith.addf %561, %575 : vector<2x16x16xf32>
    %577 = vector.extract_strided_slice %563 {offsets = [0, 0, 1], sizes = [2, 16, 16], strides = [1, 1, 1]} : vector<2x16x18xf32> to vector<2x16x16xf32>
    %578 = vector.broadcast %53 : f32 to vector<2x16x16xf32>
    %579 = arith.mulf %578, %577 : vector<2x16x16xf32>
    %580 = arith.addf %567, %579 : vector<2x16x16xf32>
    %581 = vector.broadcast %55 : f32 to vector<2x16x16xf32>
    %582 = arith.mulf %581, %577 : vector<2x16x16xf32>
    %583 = arith.addf %570, %582 : vector<2x16x16xf32>
    %584 = vector.broadcast %57 : f32 to vector<2x16x16xf32>
    %585 = arith.mulf %584, %577 : vector<2x16x16xf32>
    %586 = arith.addf %573, %585 : vector<2x16x16xf32>
    %587 = vector.broadcast %59 : f32 to vector<2x16x16xf32>
    %588 = arith.mulf %587, %577 : vector<2x16x16xf32>
    %589 = arith.addf %576, %588 : vector<2x16x16xf32>
    %590 = vector.extract_strided_slice %563 {offsets = [0, 0, 2], sizes = [2, 16, 16], strides = [1, 1, 1]} : vector<2x16x18xf32> to vector<2x16x16xf32>
    %591 = vector.broadcast %85 : f32 to vector<2x16x16xf32>
    %592 = arith.mulf %591, %590 : vector<2x16x16xf32>
    %593 = arith.addf %580, %592 : vector<2x16x16xf32>
    %594 = vector.broadcast %87 : f32 to vector<2x16x16xf32>
    %595 = arith.mulf %594, %590 : vector<2x16x16xf32>
    %596 = arith.addf %583, %595 : vector<2x16x16xf32>
    %597 = vector.broadcast %89 : f32 to vector<2x16x16xf32>
    %598 = arith.mulf %597, %590 : vector<2x16x16xf32>
    %599 = arith.addf %586, %598 : vector<2x16x16xf32>
    %600 = vector.broadcast %91 : f32 to vector<2x16x16xf32>
    %601 = arith.mulf %600, %590 : vector<2x16x16xf32>
    %602 = arith.addf %589, %601 : vector<2x16x16xf32>
    %c0_192 = arith.constant 0 : index
    %c2_193 = arith.constant 2 : index
    %c1_194 = arith.constant 1 : index
    %c0_195 = arith.constant 0 : index
    %603 = vector.load %arg5[%c0_192, %c2_193, %c1_194, %c0_195] : memref<2x4x18x18xf32, #tpu.memory_space<vmem>>, vector<2x1x16x18xf32>
    %604 = vector.shape_cast %603 : vector<2x1x16x18xf32> to vector<2x16x18xf32>
    %605 = vector.extract_strided_slice %604 {offsets = [0, 0, 0], sizes = [2, 16, 16], strides = [1, 1, 1]} : vector<2x16x18xf32> to vector<2x16x16xf32>
    %606 = vector.broadcast %117 : f32 to vector<2x16x16xf32>
    %607 = arith.mulf %606, %605 : vector<2x16x16xf32>
    %608 = arith.addf %593, %607 : vector<2x16x16xf32>
    %609 = vector.broadcast %119 : f32 to vector<2x16x16xf32>
    %610 = arith.mulf %609, %605 : vector<2x16x16xf32>
    %611 = arith.addf %596, %610 : vector<2x16x16xf32>
    %612 = vector.broadcast %121 : f32 to vector<2x16x16xf32>
    %613 = arith.mulf %612, %605 : vector<2x16x16xf32>
    %614 = arith.addf %599, %613 : vector<2x16x16xf32>
    %615 = vector.broadcast %123 : f32 to vector<2x16x16xf32>
    %616 = arith.mulf %615, %605 : vector<2x16x16xf32>
    %617 = arith.addf %602, %616 : vector<2x16x16xf32>
    %618 = vector.extract_strided_slice %604 {offsets = [0, 0, 1], sizes = [2, 16, 16], strides = [1, 1, 1]} : vector<2x16x18xf32> to vector<2x16x16xf32>
    %619 = vector.broadcast %149 : f32 to vector<2x16x16xf32>
    %620 = arith.mulf %619, %618 : vector<2x16x16xf32>
    %621 = arith.addf %608, %620 : vector<2x16x16xf32>
    %622 = vector.broadcast %151 : f32 to vector<2x16x16xf32>
    %623 = arith.mulf %622, %618 : vector<2x16x16xf32>
    %624 = arith.addf %611, %623 : vector<2x16x16xf32>
    %625 = vector.broadcast %153 : f32 to vector<2x16x16xf32>
    %626 = arith.mulf %625, %618 : vector<2x16x16xf32>
    %627 = arith.addf %614, %626 : vector<2x16x16xf32>
    %628 = vector.broadcast %155 : f32 to vector<2x16x16xf32>
    %629 = arith.mulf %628, %618 : vector<2x16x16xf32>
    %630 = arith.addf %617, %629 : vector<2x16x16xf32>
    %631 = vector.extract_strided_slice %604 {offsets = [0, 0, 2], sizes = [2, 16, 16], strides = [1, 1, 1]} : vector<2x16x18xf32> to vector<2x16x16xf32>
    %632 = vector.broadcast %181 : f32 to vector<2x16x16xf32>
    %633 = arith.mulf %632, %631 : vector<2x16x16xf32>
    %634 = arith.addf %621, %633 : vector<2x16x16xf32>
    %635 = vector.broadcast %183 : f32 to vector<2x16x16xf32>
    %636 = arith.mulf %635, %631 : vector<2x16x16xf32>
    %637 = arith.addf %624, %636 : vector<2x16x16xf32>
    %638 = vector.broadcast %185 : f32 to vector<2x16x16xf32>
    %639 = arith.mulf %638, %631 : vector<2x16x16xf32>
    %640 = arith.addf %627, %639 : vector<2x16x16xf32>
    %641 = vector.broadcast %187 : f32 to vector<2x16x16xf32>
    %642 = arith.mulf %641, %631 : vector<2x16x16xf32>
    %643 = arith.addf %630, %642 : vector<2x16x16xf32>
    %c0_196 = arith.constant 0 : index
    %c2_197 = arith.constant 2 : index
    %c2_198 = arith.constant 2 : index
    %c0_199 = arith.constant 0 : index
    %644 = vector.load %arg5[%c0_196, %c2_197, %c2_198, %c0_199] : memref<2x4x18x18xf32, #tpu.memory_space<vmem>>, vector<2x1x16x18xf32>
    %645 = vector.shape_cast %644 : vector<2x1x16x18xf32> to vector<2x16x18xf32>
    %646 = vector.extract_strided_slice %645 {offsets = [0, 0, 0], sizes = [2, 16, 16], strides = [1, 1, 1]} : vector<2x16x18xf32> to vector<2x16x16xf32>
    %647 = vector.broadcast %213 : f32 to vector<2x16x16xf32>
    %648 = arith.mulf %647, %646 : vector<2x16x16xf32>
    %649 = arith.addf %634, %648 : vector<2x16x16xf32>
    %650 = vector.broadcast %215 : f32 to vector<2x16x16xf32>
    %651 = arith.mulf %650, %646 : vector<2x16x16xf32>
    %652 = arith.addf %637, %651 : vector<2x16x16xf32>
    %653 = vector.broadcast %217 : f32 to vector<2x16x16xf32>
    %654 = arith.mulf %653, %646 : vector<2x16x16xf32>
    %655 = arith.addf %640, %654 : vector<2x16x16xf32>
    %656 = vector.broadcast %219 : f32 to vector<2x16x16xf32>
    %657 = arith.mulf %656, %646 : vector<2x16x16xf32>
    %658 = arith.addf %643, %657 : vector<2x16x16xf32>
    %659 = vector.extract_strided_slice %645 {offsets = [0, 0, 1], sizes = [2, 16, 16], strides = [1, 1, 1]} : vector<2x16x18xf32> to vector<2x16x16xf32>
    %660 = vector.broadcast %245 : f32 to vector<2x16x16xf32>
    %661 = arith.mulf %660, %659 : vector<2x16x16xf32>
    %662 = arith.addf %649, %661 : vector<2x16x16xf32>
    %663 = vector.broadcast %247 : f32 to vector<2x16x16xf32>
    %664 = arith.mulf %663, %659 : vector<2x16x16xf32>
    %665 = arith.addf %652, %664 : vector<2x16x16xf32>
    %666 = vector.broadcast %249 : f32 to vector<2x16x16xf32>
    %667 = arith.mulf %666, %659 : vector<2x16x16xf32>
    %668 = arith.addf %655, %667 : vector<2x16x16xf32>
    %669 = vector.broadcast %251 : f32 to vector<2x16x16xf32>
    %670 = arith.mulf %669, %659 : vector<2x16x16xf32>
    %671 = arith.addf %658, %670 : vector<2x16x16xf32>
    %672 = vector.extract_strided_slice %645 {offsets = [0, 0, 2], sizes = [2, 16, 16], strides = [1, 1, 1]} : vector<2x16x18xf32> to vector<2x16x16xf32>
    %673 = vector.broadcast %277 : f32 to vector<2x16x16xf32>
    %674 = arith.mulf %673, %672 : vector<2x16x16xf32>
    %675 = arith.addf %662, %674 : vector<2x16x16xf32>
    %676 = vector.broadcast %279 : f32 to vector<2x16x16xf32>
    %677 = arith.mulf %676, %672 : vector<2x16x16xf32>
    %678 = arith.addf %665, %677 : vector<2x16x16xf32>
    %679 = vector.broadcast %281 : f32 to vector<2x16x16xf32>
    %680 = arith.mulf %679, %672 : vector<2x16x16xf32>
    %681 = arith.addf %668, %680 : vector<2x16x16xf32>
    %682 = vector.broadcast %283 : f32 to vector<2x16x16xf32>
    %683 = arith.mulf %682, %672 : vector<2x16x16xf32>
    %684 = arith.addf %671, %683 : vector<2x16x16xf32>
    %c0_200 = arith.constant 0 : index
    %c3_201 = arith.constant 3 : index
    %c0_202 = arith.constant 0 : index
    %c0_203 = arith.constant 0 : index
    %685 = vector.load %arg5[%c0_200, %c3_201, %c0_202, %c0_203] : memref<2x4x18x18xf32, #tpu.memory_space<vmem>>, vector<2x1x16x18xf32>
    %686 = vector.shape_cast %685 : vector<2x1x16x18xf32> to vector<2x16x18xf32>
    %687 = vector.extract_strided_slice %686 {offsets = [0, 0, 0], sizes = [2, 16, 16], strides = [1, 1, 1]} : vector<2x16x18xf32> to vector<2x16x16xf32>
    %688 = vector.broadcast %29 : f32 to vector<2x16x16xf32>
    %689 = arith.mulf %688, %687 : vector<2x16x16xf32>
    %690 = arith.addf %675, %689 : vector<2x16x16xf32>
    %691 = vector.broadcast %31 : f32 to vector<2x16x16xf32>
    %692 = arith.mulf %691, %687 : vector<2x16x16xf32>
    %693 = arith.addf %678, %692 : vector<2x16x16xf32>
    %694 = vector.broadcast %33 : f32 to vector<2x16x16xf32>
    %695 = arith.mulf %694, %687 : vector<2x16x16xf32>
    %696 = arith.addf %681, %695 : vector<2x16x16xf32>
    %697 = vector.broadcast %35 : f32 to vector<2x16x16xf32>
    %698 = arith.mulf %697, %687 : vector<2x16x16xf32>
    %699 = arith.addf %684, %698 : vector<2x16x16xf32>
    %700 = vector.extract_strided_slice %686 {offsets = [0, 0, 1], sizes = [2, 16, 16], strides = [1, 1, 1]} : vector<2x16x18xf32> to vector<2x16x16xf32>
    %701 = vector.broadcast %61 : f32 to vector<2x16x16xf32>
    %702 = arith.mulf %701, %700 : vector<2x16x16xf32>
    %703 = arith.addf %690, %702 : vector<2x16x16xf32>
    %704 = vector.broadcast %63 : f32 to vector<2x16x16xf32>
    %705 = arith.mulf %704, %700 : vector<2x16x16xf32>
    %706 = arith.addf %693, %705 : vector<2x16x16xf32>
    %707 = vector.broadcast %65 : f32 to vector<2x16x16xf32>
    %708 = arith.mulf %707, %700 : vector<2x16x16xf32>
    %709 = arith.addf %696, %708 : vector<2x16x16xf32>
    %710 = vector.broadcast %67 : f32 to vector<2x16x16xf32>
    %711 = arith.mulf %710, %700 : vector<2x16x16xf32>
    %712 = arith.addf %699, %711 : vector<2x16x16xf32>
    %713 = vector.extract_strided_slice %686 {offsets = [0, 0, 2], sizes = [2, 16, 16], strides = [1, 1, 1]} : vector<2x16x18xf32> to vector<2x16x16xf32>
    %714 = vector.broadcast %93 : f32 to vector<2x16x16xf32>
    %715 = arith.mulf %714, %713 : vector<2x16x16xf32>
    %716 = arith.addf %703, %715 : vector<2x16x16xf32>
    %717 = vector.broadcast %95 : f32 to vector<2x16x16xf32>
    %718 = arith.mulf %717, %713 : vector<2x16x16xf32>
    %719 = arith.addf %706, %718 : vector<2x16x16xf32>
    %720 = vector.broadcast %97 : f32 to vector<2x16x16xf32>
    %721 = arith.mulf %720, %713 : vector<2x16x16xf32>
    %722 = arith.addf %709, %721 : vector<2x16x16xf32>
    %723 = vector.broadcast %99 : f32 to vector<2x16x16xf32>
    %724 = arith.mulf %723, %713 : vector<2x16x16xf32>
    %725 = arith.addf %712, %724 : vector<2x16x16xf32>
    %c0_204 = arith.constant 0 : index
    %c3_205 = arith.constant 3 : index
    %c1_206 = arith.constant 1 : index
    %c0_207 = arith.constant 0 : index
    %726 = vector.load %arg5[%c0_204, %c3_205, %c1_206, %c0_207] : memref<2x4x18x18xf32, #tpu.memory_space<vmem>>, vector<2x1x16x18xf32>
    %727 = vector.shape_cast %726 : vector<2x1x16x18xf32> to vector<2x16x18xf32>
    %728 = vector.extract_strided_slice %727 {offsets = [0, 0, 0], sizes = [2, 16, 16], strides = [1, 1, 1]} : vector<2x16x18xf32> to vector<2x16x16xf32>
    %729 = vector.broadcast %125 : f32 to vector<2x16x16xf32>
    %730 = arith.mulf %729, %728 : vector<2x16x16xf32>
    %731 = arith.addf %716, %730 : vector<2x16x16xf32>
    %732 = vector.broadcast %127 : f32 to vector<2x16x16xf32>
    %733 = arith.mulf %732, %728 : vector<2x16x16xf32>
    %734 = arith.addf %719, %733 : vector<2x16x16xf32>
    %735 = vector.broadcast %129 : f32 to vector<2x16x16xf32>
    %736 = arith.mulf %735, %728 : vector<2x16x16xf32>
    %737 = arith.addf %722, %736 : vector<2x16x16xf32>
    %738 = vector.broadcast %131 : f32 to vector<2x16x16xf32>
    %739 = arith.mulf %738, %728 : vector<2x16x16xf32>
    %740 = arith.addf %725, %739 : vector<2x16x16xf32>
    %741 = vector.extract_strided_slice %727 {offsets = [0, 0, 1], sizes = [2, 16, 16], strides = [1, 1, 1]} : vector<2x16x18xf32> to vector<2x16x16xf32>
    %742 = vector.broadcast %157 : f32 to vector<2x16x16xf32>
    %743 = arith.mulf %742, %741 : vector<2x16x16xf32>
    %744 = arith.addf %731, %743 : vector<2x16x16xf32>
    %745 = vector.broadcast %159 : f32 to vector<2x16x16xf32>
    %746 = arith.mulf %745, %741 : vector<2x16x16xf32>
    %747 = arith.addf %734, %746 : vector<2x16x16xf32>
    %748 = vector.broadcast %161 : f32 to vector<2x16x16xf32>
    %749 = arith.mulf %748, %741 : vector<2x16x16xf32>
    %750 = arith.addf %737, %749 : vector<2x16x16xf32>
    %751 = vector.broadcast %163 : f32 to vector<2x16x16xf32>
    %752 = arith.mulf %751, %741 : vector<2x16x16xf32>
    %753 = arith.addf %740, %752 : vector<2x16x16xf32>
    %754 = vector.extract_strided_slice %727 {offsets = [0, 0, 2], sizes = [2, 16, 16], strides = [1, 1, 1]} : vector<2x16x18xf32> to vector<2x16x16xf32>
    %755 = vector.broadcast %189 : f32 to vector<2x16x16xf32>
    %756 = arith.mulf %755, %754 : vector<2x16x16xf32>
    %757 = arith.addf %744, %756 : vector<2x16x16xf32>
    %758 = vector.broadcast %191 : f32 to vector<2x16x16xf32>
    %759 = arith.mulf %758, %754 : vector<2x16x16xf32>
    %760 = arith.addf %747, %759 : vector<2x16x16xf32>
    %761 = vector.broadcast %193 : f32 to vector<2x16x16xf32>
    %762 = arith.mulf %761, %754 : vector<2x16x16xf32>
    %763 = arith.addf %750, %762 : vector<2x16x16xf32>
    %764 = vector.broadcast %195 : f32 to vector<2x16x16xf32>
    %765 = arith.mulf %764, %754 : vector<2x16x16xf32>
    %766 = arith.addf %753, %765 : vector<2x16x16xf32>
    %c0_208 = arith.constant 0 : index
    %c3_209 = arith.constant 3 : index
    %c2_210 = arith.constant 2 : index
    %c0_211 = arith.constant 0 : index
    %767 = vector.load %arg5[%c0_208, %c3_209, %c2_210, %c0_211] : memref<2x4x18x18xf32, #tpu.memory_space<vmem>>, vector<2x1x16x18xf32>
    %768 = vector.shape_cast %767 : vector<2x1x16x18xf32> to vector<2x16x18xf32>
    %769 = vector.extract_strided_slice %768 {offsets = [0, 0, 0], sizes = [2, 16, 16], strides = [1, 1, 1]} : vector<2x16x18xf32> to vector<2x16x16xf32>
    %770 = vector.broadcast %221 : f32 to vector<2x16x16xf32>
    %771 = arith.mulf %770, %769 : vector<2x16x16xf32>
    %772 = arith.addf %757, %771 : vector<2x16x16xf32>
    %773 = vector.broadcast %223 : f32 to vector<2x16x16xf32>
    %774 = arith.mulf %773, %769 : vector<2x16x16xf32>
    %775 = arith.addf %760, %774 : vector<2x16x16xf32>
    %776 = vector.broadcast %225 : f32 to vector<2x16x16xf32>
    %777 = arith.mulf %776, %769 : vector<2x16x16xf32>
    %778 = arith.addf %763, %777 : vector<2x16x16xf32>
    %779 = vector.broadcast %227 : f32 to vector<2x16x16xf32>
    %780 = arith.mulf %779, %769 : vector<2x16x16xf32>
    %781 = arith.addf %766, %780 : vector<2x16x16xf32>
    %782 = vector.extract_strided_slice %768 {offsets = [0, 0, 1], sizes = [2, 16, 16], strides = [1, 1, 1]} : vector<2x16x18xf32> to vector<2x16x16xf32>
    %783 = vector.broadcast %253 : f32 to vector<2x16x16xf32>
    %784 = arith.mulf %783, %782 : vector<2x16x16xf32>
    %785 = arith.addf %772, %784 : vector<2x16x16xf32>
    %786 = vector.broadcast %255 : f32 to vector<2x16x16xf32>
    %787 = arith.mulf %786, %782 : vector<2x16x16xf32>
    %788 = arith.addf %775, %787 : vector<2x16x16xf32>
    %789 = vector.broadcast %257 : f32 to vector<2x16x16xf32>
    %790 = arith.mulf %789, %782 : vector<2x16x16xf32>
    %791 = arith.addf %778, %790 : vector<2x16x16xf32>
    %792 = vector.broadcast %259 : f32 to vector<2x16x16xf32>
    %793 = arith.mulf %792, %782 : vector<2x16x16xf32>
    %794 = arith.addf %781, %793 : vector<2x16x16xf32>
    %795 = vector.extract_strided_slice %768 {offsets = [0, 0, 2], sizes = [2, 16, 16], strides = [1, 1, 1]} : vector<2x16x18xf32> to vector<2x16x16xf32>
    %796 = vector.broadcast %285 : f32 to vector<2x16x16xf32>
    %797 = arith.mulf %796, %795 : vector<2x16x16xf32>
    %798 = arith.addf %785, %797 : vector<2x16x16xf32>
    %799 = vector.broadcast %287 : f32 to vector<2x16x16xf32>
    %800 = arith.mulf %799, %795 : vector<2x16x16xf32>
    %801 = arith.addf %788, %800 : vector<2x16x16xf32>
    %802 = vector.broadcast %289 : f32 to vector<2x16x16xf32>
    %803 = arith.mulf %802, %795 : vector<2x16x16xf32>
    %804 = arith.addf %791, %803 : vector<2x16x16xf32>
    %805 = vector.broadcast %291 : f32 to vector<2x16x16xf32>
    %806 = arith.mulf %805, %795 : vector<2x16x16xf32>
    %807 = arith.addf %794, %806 : vector<2x16x16xf32>
    %808 = vector.shape_cast %798 : vector<2x16x16xf32> to vector<2x1x16x16xf32>
    %809 = vector.shape_cast %801 : vector<2x16x16xf32> to vector<2x1x16x16xf32>
    %810 = vector.shape_cast %804 : vector<2x16x16xf32> to vector<2x1x16x16xf32>
    %811 = vector.shape_cast %807 : vector<2x16x16xf32> to vector<2x1x16x16xf32>
    %812 = tpu.concatenate %808, %809, %810, %811 in 1 : vector<2x1x16x16xf32>, vector<2x1x16x16xf32>, vector<2x1x16x16xf32>, vector<2x1x16x16xf32> -> vector<2x4x16x16xf32>
    %c0_212 = arith.constant 0 : index
    %c0_213 = arith.constant 0 : index
    %c1_214 = arith.constant 1 : index
    %c1_215 = arith.constant 1 : index
    %813 = vector.load %arg5[%c0_212, %c0_213, %c1_214, %c1_215] : memref<2x4x18x18xf32, #tpu.memory_space<vmem>>, vector<2x4x16x16xf32>
    tpu.vector_store %arg5[%c0_212, %c0_213, %c1_214, %c1_215], %812 {strides = array<i32>} : memref<2x4x18x18xf32, #tpu.memory_space<vmem>>, vector<2x4x16x16xf32>,
    %814 = vector.extract_strided_slice %812 {offsets = [0, 0, 0, 0], sizes = [2, 1, 16, 16], strides = [1, 1, 1, 1]} : vector<2x4x16x16xf32> to vector<2x1x16x16xf32>
    %815 = vector.shape_cast %814 : vector<2x1x16x16xf32> to vector<2x16x16xf32>
    %816 = vector.broadcast %293 : f32 to vector<2x16x16xf32>
    %817 = arith.addf %815, %816 : vector<2x16x16xf32>
    %818 = vector.extract_strided_slice %812 {offsets = [0, 1, 0, 0], sizes = [2, 1, 16, 16], strides = [1, 1, 1, 1]} : vector<2x4x16x16xf32> to vector<2x1x16x16xf32>
    %819 = vector.shape_cast %818 : vector<2x1x16x16xf32> to vector<2x16x16xf32>
    %820 = vector.broadcast %295 : f32 to vector<2x16x16xf32>
    %821 = arith.addf %819, %820 : vector<2x16x16xf32>
    %822 = vector.extract_strided_slice %812 {offsets = [0, 2, 0, 0], sizes = [2, 1, 16, 16], strides = [1, 1, 1, 1]} : vector<2x4x16x16xf32> to vector<2x1x16x16xf32>
    %823 = vector.shape_cast %822 : vector<2x1x16x16xf32> to vector<2x16x16xf32>
    %824 = vector.broadcast %297 : f32 to vector<2x16x16xf32>
    %825 = arith.addf %823, %824 : vector<2x16x16xf32>
    %826 = vector.extract_strided_slice %812 {offsets = [0, 3, 0, 0], sizes = [2, 1, 16, 16], strides = [1, 1, 1, 1]} : vector<2x4x16x16xf32> to vector<2x1x16x16xf32>
    %827 = vector.shape_cast %826 : vector<2x1x16x16xf32> to vector<2x16x16xf32>
    %828 = vector.broadcast %299 : f32 to vector<2x16x16xf32>
    %829 = arith.addf %827, %828 : vector<2x16x16xf32>
    %c0_216 = arith.constant 0 : index
    %c0_217 = arith.constant 0 : index
    %c0_218 = arith.constant 0 : index
    %c0_219 = arith.constant 0 : index
    %830 = vector.load %arg5[%c0_216, %c0_217, %c0_218, %c0_219] : memref<2x4x18x18xf32, #tpu.memory_space<vmem>>, vector<2x1x16x18xf32>
    %831 = vector.shape_cast %830 : vector<2x1x16x18xf32> to vector<2x16x18xf32>
    %832 = vector.extract_strided_slice %831 {offsets = [0, 0, 0], sizes = [2, 16, 16], strides = [1, 1, 1]} : vector<2x16x18xf32> to vector<2x16x16xf32>
    %833 = vector.broadcast %5 : f32 to vector<2x16x16xf32>
    %834 = arith.mulf %833, %832 : vector<2x16x16xf32>
    %835 = arith.addf %817, %834 : vector<2x16x16xf32>
    %836 = vector.broadcast %7 : f32 to vector<2x16x16xf32>
    %837 = arith.mulf %836, %832 : vector<2x16x16xf32>
    %838 = arith.addf %821, %837 : vector<2x16x16xf32>
    %839 = vector.broadcast %9 : f32 to vector<2x16x16xf32>
    %840 = arith.mulf %839, %832 : vector<2x16x16xf32>
    %841 = arith.addf %825, %840 : vector<2x16x16xf32>
    %842 = vector.broadcast %11 : f32 to vector<2x16x16xf32>
    %843 = arith.mulf %842, %832 : vector<2x16x16xf32>
    %844 = arith.addf %829, %843 : vector<2x16x16xf32>
    %845 = vector.extract_strided_slice %831 {offsets = [0, 0, 1], sizes = [2, 16, 16], strides = [1, 1, 1]} : vector<2x16x18xf32> to vector<2x16x16xf32>
    %846 = vector.broadcast %37 : f32 to vector<2x16x16xf32>
    %847 = arith.mulf %846, %845 : vector<2x16x16xf32>
    %848 = arith.addf %835, %847 : vector<2x16x16xf32>
    %849 = vector.broadcast %39 : f32 to vector<2x16x16xf32>
    %850 = arith.mulf %849, %845 : vector<2x16x16xf32>
    %851 = arith.addf %838, %850 : vector<2x16x16xf32>
    %852 = vector.broadcast %41 : f32 to vector<2x16x16xf32>
    %853 = arith.mulf %852, %845 : vector<2x16x16xf32>
    %854 = arith.addf %841, %853 : vector<2x16x16xf32>
    %855 = vector.broadcast %43 : f32 to vector<2x16x16xf32>
    %856 = arith.mulf %855, %845 : vector<2x16x16xf32>
    %857 = arith.addf %844, %856 : vector<2x16x16xf32>
    %858 = vector.extract_strided_slice %831 {offsets = [0, 0, 2], sizes = [2, 16, 16], strides = [1, 1, 1]} : vector<2x16x18xf32> to vector<2x16x16xf32>
    %859 = vector.broadcast %69 : f32 to vector<2x16x16xf32>
    %860 = arith.mulf %859, %858 : vector<2x16x16xf32>
    %861 = arith.addf %848, %860 : vector<2x16x16xf32>
    %862 = vector.broadcast %71 : f32 to vector<2x16x16xf32>
    %863 = arith.mulf %862, %858 : vector<2x16x16xf32>
    %864 = arith.addf %851, %863 : vector<2x16x16xf32>
    %865 = vector.broadcast %73 : f32 to vector<2x16x16xf32>
    %866 = arith.mulf %865, %858 : vector<2x16x16xf32>
    %867 = arith.addf %854, %866 : vector<2x16x16xf32>
    %868 = vector.broadcast %75 : f32 to vector<2x16x16xf32>
    %869 = arith.mulf %868, %858 : vector<2x16x16xf32>
    %870 = arith.addf %857, %869 : vector<2x16x16xf32>
    %c0_220 = arith.constant 0 : index
    %c0_221 = arith.constant 0 : index
    %c1_222 = arith.constant 1 : index
    %c0_223 = arith.constant 0 : index
    %871 = vector.load %arg5[%c0_220, %c0_221, %c1_222, %c0_223] : memref<2x4x18x18xf32, #tpu.memory_space<vmem>>, vector<2x1x16x18xf32>
    %872 = vector.shape_cast %871 : vector<2x1x16x18xf32> to vector<2x16x18xf32>
    %873 = vector.extract_strided_slice %872 {offsets = [0, 0, 0], sizes = [2, 16, 16], strides = [1, 1, 1]} : vector<2x16x18xf32> to vector<2x16x16xf32>
    %874 = vector.broadcast %101 : f32 to vector<2x16x16xf32>
    %875 = arith.mulf %874, %873 : vector<2x16x16xf32>
    %876 = arith.addf %861, %875 : vector<2x16x16xf32>
    %877 = vector.broadcast %103 : f32 to vector<2x16x16xf32>
    %878 = arith.mulf %877, %873 : vector<2x16x16xf32>
    %879 = arith.addf %864, %878 : vector<2x16x16xf32>
    %880 = vector.broadcast %105 : f32 to vector<2x16x16xf32>
    %881 = arith.mulf %880, %873 : vector<2x16x16xf32>
    %882 = arith.addf %867, %881 : vector<2x16x16xf32>
    %883 = vector.broadcast %107 : f32 to vector<2x16x16xf32>
    %884 = arith.mulf %883, %873 : vector<2x16x16xf32>
    %885 = arith.addf %870, %884 : vector<2x16x16xf32>
    %886 = vector.extract_strided_slice %872 {offsets = [0, 0, 1], sizes = [2, 16, 16], strides = [1, 1, 1]} : vector<2x16x18xf32> to vector<2x16x16xf32>
    %887 = vector.broadcast %133 : f32 to vector<2x16x16xf32>
    %888 = arith.mulf %887, %886 : vector<2x16x16xf32>
    %889 = arith.addf %876, %888 : vector<2x16x16xf32>
    %890 = vector.broadcast %135 : f32 to vector<2x16x16xf32>
    %891 = arith.mulf %890, %886 : vector<2x16x16xf32>
    %892 = arith.addf %879, %891 : vector<2x16x16xf32>
    %893 = vector.broadcast %137 : f32 to vector<2x16x16xf32>
    %894 = arith.mulf %893, %886 : vector<2x16x16xf32>
    %895 = arith.addf %882, %894 : vector<2x16x16xf32>
    %896 = vector.broadcast %139 : f32 to vector<2x16x16xf32>
    %897 = arith.mulf %896, %886 : vector<2x16x16xf32>
    %898 = arith.addf %885, %897 : vector<2x16x16xf32>
    %899 = vector.extract_strided_slice %872 {offsets = [0, 0, 2], sizes = [2, 16, 16], strides = [1, 1, 1]} : vector<2x16x18xf32> to vector<2x16x16xf32>
    %900 = vector.broadcast %165 : f32 to vector<2x16x16xf32>
    %901 = arith.mulf %900, %899 : vector<2x16x16xf32>
    %902 = arith.addf %889, %901 : vector<2x16x16xf32>
    %903 = vector.broadcast %167 : f32 to vector<2x16x16xf32>
    %904 = arith.mulf %903, %899 : vector<2x16x16xf32>
    %905 = arith.addf %892, %904 : vector<2x16x16xf32>
    %906 = vector.broadcast %169 : f32 to vector<2x16x16xf32>
    %907 = arith.mulf %906, %899 : vector<2x16x16xf32>
    %908 = arith.addf %895, %907 : vector<2x16x16xf32>
    %909 = vector.broadcast %171 : f32 to vector<2x16x16xf32>
    %910 = arith.mulf %909, %899 : vector<2x16x16xf32>
    %911 = arith.addf %898, %910 : vector<2x16x16xf32>
    %c0_224 = arith.constant 0 : index
    %c0_225 = arith.constant 0 : index
    %c2_226 = arith.constant 2 : index
    %c0_227 = arith.constant 0 : index
    %912 = vector.load %arg5[%c0_224, %c0_225, %c2_226, %c0_227] : memref<2x4x18x18xf32, #tpu.memory_space<vmem>>, vector<2x1x16x18xf32>
    %913 = vector.shape_cast %912 : vector<2x1x16x18xf32> to vector<2x16x18xf32>
    %914 = vector.extract_strided_slice %913 {offsets = [0, 0, 0], sizes = [2, 16, 16], strides = [1, 1, 1]} : vector<2x16x18xf32> to vector<2x16x16xf32>
    %915 = vector.broadcast %197 : f32 to vector<2x16x16xf32>
    %916 = arith.mulf %915, %914 : vector<2x16x16xf32>
    %917 = arith.addf %902, %916 : vector<2x16x16xf32>
    %918 = vector.broadcast %199 : f32 to vector<2x16x16xf32>
    %919 = arith.mulf %918, %914 : vector<2x16x16xf32>
    %920 = arith.addf %905, %919 : vector<2x16x16xf32>
    %921 = vector.broadcast %201 : f32 to vector<2x16x16xf32>
    %922 = arith.mulf %921, %914 : vector<2x16x16xf32>
    %923 = arith.addf %908, %922 : vector<2x16x16xf32>
    %924 = vector.broadcast %203 : f32 to vector<2x16x16xf32>
    %925 = arith.mulf %924, %914 : vector<2x16x16xf32>
    %926 = arith.addf %911, %925 : vector<2x16x16xf32>
    %927 = vector.extract_strided_slice %913 {offsets = [0, 0, 1], sizes = [2, 16, 16], strides = [1, 1, 1]} : vector<2x16x18xf32> to vector<2x16x16xf32>
    %928 = vector.broadcast %229 : f32 to vector<2x16x16xf32>
    %929 = arith.mulf %928, %927 : vector<2x16x16xf32>
    %930 = arith.addf %917, %929 : vector<2x16x16xf32>
    %931 = vector.broadcast %231 : f32 to vector<2x16x16xf32>
    %932 = arith.mulf %931, %927 : vector<2x16x16xf32>
    %933 = arith.addf %920, %932 : vector<2x16x16xf32>
    %934 = vector.broadcast %233 : f32 to vector<2x16x16xf32>
    %935 = arith.mulf %934, %927 : vector<2x16x16xf32>
    %936 = arith.addf %923, %935 : vector<2x16x16xf32>
    %937 = vector.broadcast %235 : f32 to vector<2x16x16xf32>
    %938 = arith.mulf %937, %927 : vector<2x16x16xf32>
    %939 = arith.addf %926, %938 : vector<2x16x16xf32>
    %940 = vector.extract_strided_slice %913 {offsets = [0, 0, 2], sizes = [2, 16, 16], strides = [1, 1, 1]} : vector<2x16x18xf32> to vector<2x16x16xf32>
    %941 = vector.broadcast %261 : f32 to vector<2x16x16xf32>
    %942 = arith.mulf %941, %940 : vector<2x16x16xf32>
    %943 = arith.addf %930, %942 : vector<2x16x16xf32>
    %944 = vector.broadcast %263 : f32 to vector<2x16x16xf32>
    %945 = arith.mulf %944, %940 : vector<2x16x16xf32>
    %946 = arith.addf %933, %945 : vector<2x16x16xf32>
    %947 = vector.broadcast %265 : f32 to vector<2x16x16xf32>
    %948 = arith.mulf %947, %940 : vector<2x16x16xf32>
    %949 = arith.addf %936, %948 : vector<2x16x16xf32>
    %950 = vector.broadcast %267 : f32 to vector<2x16x16xf32>
    %951 = arith.mulf %950, %940 : vector<2x16x16xf32>
    %952 = arith.addf %939, %951 : vector<2x16x16xf32>
    %c0_228 = arith.constant 0 : index
    %c1_229 = arith.constant 1 : index
    %c0_230 = arith.constant 0 : index
    %c0_231 = arith.constant 0 : index
    %953 = vector.load %arg5[%c0_228, %c1_229, %c0_230, %c0_231] : memref<2x4x18x18xf32, #tpu.memory_space<vmem>>, vector<2x1x16x18xf32>
    %954 = vector.shape_cast %953 : vector<2x1x16x18xf32> to vector<2x16x18xf32>
    %955 = vector.extract_strided_slice %954 {offsets = [0, 0, 0], sizes = [2, 16, 16], strides = [1, 1, 1]} : vector<2x16x18xf32> to vector<2x16x16xf32>
    %956 = vector.broadcast %13 : f32 to vector<2x16x16xf32>
    %957 = arith.mulf %956, %955 : vector<2x16x16xf32>
    %958 = arith.addf %943, %957 : vector<2x16x16xf32>
    %959 = vector.broadcast %15 : f32 to vector<2x16x16xf32>
    %960 = arith.mulf %959, %955 : vector<2x16x16xf32>
    %961 = arith.addf %946, %960 : vector<2x16x16xf32>
    %962 = vector.broadcast %17 : f32 to vector<2x16x16xf32>
    %963 = arith.mulf %962, %955 : vector<2x16x16xf32>
    %964 = arith.addf %949, %963 : vector<2x16x16xf32>
    %965 = vector.broadcast %19 : f32 to vector<2x16x16xf32>
    %966 = arith.mulf %965, %955 : vector<2x16x16xf32>
    %967 = arith.addf %952, %966 : vector<2x16x16xf32>
    %968 = vector.extract_strided_slice %954 {offsets = [0, 0, 1], sizes = [2, 16, 16], strides = [1, 1, 1]} : vector<2x16x18xf32> to vector<2x16x16xf32>
    %969 = vector.broadcast %45 : f32 to vector<2x16x16xf32>
    %970 = arith.mulf %969, %968 : vector<2x16x16xf32>
    %971 = arith.addf %958, %970 : vector<2x16x16xf32>
    %972 = vector.broadcast %47 : f32 to vector<2x16x16xf32>
    %973 = arith.mulf %972, %968 : vector<2x16x16xf32>
    %974 = arith.addf %961, %973 : vector<2x16x16xf32>
    %975 = vector.broadcast %49 : f32 to vector<2x16x16xf32>
    %976 = arith.mulf %975, %968 : vector<2x16x16xf32>
    %977 = arith.addf %964, %976 : vector<2x16x16xf32>
    %978 = vector.broadcast %51 : f32 to vector<2x16x16xf32>
    %979 = arith.mulf %978, %968 : vector<2x16x16xf32>
    %980 = arith.addf %967, %979 : vector<2x16x16xf32>
    %981 = vector.extract_strided_slice %954 {offsets = [0, 0, 2], sizes = [2, 16, 16], strides = [1, 1, 1]} : vector<2x16x18xf32> to vector<2x16x16xf32>
    %982 = vector.broadcast %77 : f32 to vector<2x16x16xf32>
    %983 = arith.mulf %982, %981 : vector<2x16x16xf32>
    %984 = arith.addf %971, %983 : vector<2x16x16xf32>
    %985 = vector.broadcast %79 : f32 to vector<2x16x16xf32>
    %986 = arith.mulf %985, %981 : vector<2x16x16xf32>
    %987 = arith.addf %974, %986 : vector<2x16x16xf32>
    %988 = vector.broadcast %81 : f32 to vector<2x16x16xf32>
    %989 = arith.mulf %988, %981 : vector<2x16x16xf32>
    %990 = arith.addf %977, %989 : vector<2x16x16xf32>
    %991 = vector.broadcast %83 : f32 to vector<2x16x16xf32>
    %992 = arith.mulf %991, %981 : vector<2x16x16xf32>
    %993 = arith.addf %980, %992 : vector<2x16x16xf32>
    %c0_232 = arith.constant 0 : index
    %c1_233 = arith.constant 1 : index
    %c1_234 = arith.constant 1 : index
    %c0_235 = arith.constant 0 : index
    %994 = vector.load %arg5[%c0_232, %c1_233, %c1_234, %c0_235] : memref<2x4x18x18xf32, #tpu.memory_space<vmem>>, vector<2x1x16x18xf32>
    %995 = vector.shape_cast %994 : vector<2x1x16x18xf32> to vector<2x16x18xf32>
    %996 = vector.extract_strided_slice %995 {offsets = [0, 0, 0], sizes = [2, 16, 16], strides = [1, 1, 1]} : vector<2x16x18xf32> to vector<2x16x16xf32>
    %997 = vector.broadcast %109 : f32 to vector<2x16x16xf32>
    %998 = arith.mulf %997, %996 : vector<2x16x16xf32>
    %999 = arith.addf %984, %998 : vector<2x16x16xf32>
    %1000 = vector.broadcast %111 : f32 to vector<2x16x16xf32>
    %1001 = arith.mulf %1000, %996 : vector<2x16x16xf32>
    %1002 = arith.addf %987, %1001 : vector<2x16x16xf32>
    %1003 = vector.broadcast %113 : f32 to vector<2x16x16xf32>
    %1004 = arith.mulf %1003, %996 : vector<2x16x16xf32>
    %1005 = arith.addf %990, %1004 : vector<2x16x16xf32>
    %1006 = vector.broadcast %115 : f32 to vector<2x16x16xf32>
    %1007 = arith.mulf %1006, %996 : vector<2x16x16xf32>
    %1008 = arith.addf %993, %1007 : vector<2x16x16xf32>
    %1009 = vector.extract_strided_slice %995 {offsets = [0, 0, 1], sizes = [2, 16, 16], strides = [1, 1, 1]} : vector<2x16x18xf32> to vector<2x16x16xf32>
    %1010 = vector.broadcast %141 : f32 to vector<2x16x16xf32>
    %1011 = arith.mulf %1010, %1009 : vector<2x16x16xf32>
    %1012 = arith.addf %999, %1011 : vector<2x16x16xf32>
    %1013 = vector.broadcast %143 : f32 to vector<2x16x16xf32>
    %1014 = arith.mulf %1013, %1009 : vector<2x16x16xf32>
    %1015 = arith.addf %1002, %1014 : vector<2x16x16xf32>
    %1016 = vector.broadcast %145 : f32 to vector<2x16x16xf32>
    %1017 = arith.mulf %1016, %1009 : vector<2x16x16xf32>
    %1018 = arith.addf %1005, %1017 : vector<2x16x16xf32>
    %1019 = vector.broadcast %147 : f32 to vector<2x16x16xf32>
    %1020 = arith.mulf %1019, %1009 : vector<2x16x16xf32>
    %1021 = arith.addf %1008, %1020 : vector<2x16x16xf32>
    %1022 = vector.extract_strided_slice %995 {offsets = [0, 0, 2], sizes = [2, 16, 16], strides = [1, 1, 1]} : vector<2x16x18xf32> to vector<2x16x16xf32>
    %1023 = vector.broadcast %173 : f32 to vector<2x16x16xf32>
    %1024 = arith.mulf %1023, %1022 : vector<2x16x16xf32>
    %1025 = arith.addf %1012, %1024 : vector<2x16x16xf32>
    %1026 = vector.broadcast %175 : f32 to vector<2x16x16xf32>
    %1027 = arith.mulf %1026, %1022 : vector<2x16x16xf32>
    %1028 = arith.addf %1015, %1027 : vector<2x16x16xf32>
    %1029 = vector.broadcast %177 : f32 to vector<2x16x16xf32>
    %1030 = arith.mulf %1029, %1022 : vector<2x16x16xf32>
    %1031 = arith.addf %1018, %1030 : vector<2x16x16xf32>
    %1032 = vector.broadcast %179 : f32 to vector<2x16x16xf32>
    %1033 = arith.mulf %1032, %1022 : vector<2x16x16xf32>
    %1034 = arith.addf %1021, %1033 : vector<2x16x16xf32>
    %c0_236 = arith.constant 0 : index
    %c1_237 = arith.constant 1 : index
    %c2_238 = arith.constant 2 : index
    %c0_239 = arith.constant 0 : index
    %1035 = vector.load %arg5[%c0_236, %c1_237, %c2_238, %c0_239] : memref<2x4x18x18xf32, #tpu.memory_space<vmem>>, vector<2x1x16x18xf32>
    %1036 = vector.shape_cast %1035 : vector<2x1x16x18xf32> to vector<2x16x18xf32>
    %1037 = vector.extract_strided_slice %1036 {offsets = [0, 0, 0], sizes = [2, 16, 16], strides = [1, 1, 1]} : vector<2x16x18xf32> to vector<2x16x16xf32>
    %1038 = vector.broadcast %205 : f32 to vector<2x16x16xf32>
    %1039 = arith.mulf %1038, %1037 : vector<2x16x16xf32>
    %1040 = arith.addf %1025, %1039 : vector<2x16x16xf32>
    %1041 = vector.broadcast %207 : f32 to vector<2x16x16xf32>
    %1042 = arith.mulf %1041, %1037 : vector<2x16x16xf32>
    %1043 = arith.addf %1028, %1042 : vector<2x16x16xf32>
    %1044 = vector.broadcast %209 : f32 to vector<2x16x16xf32>
    %1045 = arith.mulf %1044, %1037 : vector<2x16x16xf32>
    %1046 = arith.addf %1031, %1045 : vector<2x16x16xf32>
    %1047 = vector.broadcast %211 : f32 to vector<2x16x16xf32>
    %1048 = arith.mulf %1047, %1037 : vector<2x16x16xf32>
    %1049 = arith.addf %1034, %1048 : vector<2x16x16xf32>
    %1050 = vector.extract_strided_slice %1036 {offsets = [0, 0, 1], sizes = [2, 16, 16], strides = [1, 1, 1]} : vector<2x16x18xf32> to vector<2x16x16xf32>
    %1051 = vector.broadcast %237 : f32 to vector<2x16x16xf32>
    %1052 = arith.mulf %1051, %1050 : vector<2x16x16xf32>
    %1053 = arith.addf %1040, %1052 : vector<2x16x16xf32>
    %1054 = vector.broadcast %239 : f32 to vector<2x16x16xf32>
    %1055 = arith.mulf %1054, %1050 : vector<2x16x16xf32>
    %1056 = arith.addf %1043, %1055 : vector<2x16x16xf32>
    %1057 = vector.broadcast %241 : f32 to vector<2x16x16xf32>
    %1058 = arith.mulf %1057, %1050 : vector<2x16x16xf32>
    %1059 = arith.addf %1046, %1058 : vector<2x16x16xf32>
    %1060 = vector.broadcast %243 : f32 to vector<2x16x16xf32>
    %1061 = arith.mulf %1060, %1050 : vector<2x16x16xf32>
    %1062 = arith.addf %1049, %1061 : vector<2x16x16xf32>
    %1063 = vector.extract_strided_slice %1036 {offsets = [0, 0, 2], sizes = [2, 16, 16], strides = [1, 1, 1]} : vector<2x16x18xf32> to vector<2x16x16xf32>
    %1064 = vector.broadcast %269 : f32 to vector<2x16x16xf32>
    %1065 = arith.mulf %1064, %1063 : vector<2x16x16xf32>
    %1066 = arith.addf %1053, %1065 : vector<2x16x16xf32>
    %1067 = vector.broadcast %271 : f32 to vector<2x16x16xf32>
    %1068 = arith.mulf %1067, %1063 : vector<2x16x16xf32>
    %1069 = arith.addf %1056, %1068 : vector<2x16x16xf32>
    %1070 = vector.broadcast %273 : f32 to vector<2x16x16xf32>
    %1071 = arith.mulf %1070, %1063 : vector<2x16x16xf32>
    %1072 = arith.addf %1059, %1071 : vector<2x16x16xf32>
    %1073 = vector.broadcast %275 : f32 to vector<2x16x16xf32>
    %1074 = arith.mulf %1073, %1063 : vector<2x16x16xf32>
    %1075 = arith.addf %1062, %1074 : vector<2x16x16xf32>
    %c0_240 = arith.constant 0 : index
    %c2_241 = arith.constant 2 : index
    %c0_242 = arith.constant 0 : index
    %c0_243 = arith.constant 0 : index
    %1076 = vector.load %arg5[%c0_240, %c2_241, %c0_242, %c0_243] : memref<2x4x18x18xf32, #tpu.memory_space<vmem>>, vector<2x1x16x18xf32>
    %1077 = vector.shape_cast %1076 : vector<2x1x16x18xf32> to vector<2x16x18xf32>
    %1078 = vector.extract_strided_slice %1077 {offsets = [0, 0, 0], sizes = [2, 16, 16], strides = [1, 1, 1]} : vector<2x16x18xf32> to vector<2x16x16xf32>
    %1079 = vector.broadcast %21 : f32 to vector<2x16x16xf32>
    %1080 = arith.mulf %1079, %1078 : vector<2x16x16xf32>
    %1081 = arith.addf %1066, %1080 : vector<2x16x16xf32>
    %1082 = vector.broadcast %23 : f32 to vector<2x16x16xf32>
    %1083 = arith.mulf %1082, %1078 : vector<2x16x16xf32>
    %1084 = arith.addf %1069, %1083 : vector<2x16x16xf32>
    %1085 = vector.broadcast %25 : f32 to vector<2x16x16xf32>
    %1086 = arith.mulf %1085, %1078 : vector<2x16x16xf32>
    %1087 = arith.addf %1072, %1086 : vector<2x16x16xf32>
    %1088 = vector.broadcast %27 : f32 to vector<2x16x16xf32>
    %1089 = arith.mulf %1088, %1078 : vector<2x16x16xf32>
    %1090 = arith.addf %1075, %1089 : vector<2x16x16xf32>
    %1091 = vector.extract_strided_slice %1077 {offsets = [0, 0, 1], sizes = [2, 16, 16], strides = [1, 1, 1]} : vector<2x16x18xf32> to vector<2x16x16xf32>
    %1092 = vector.broadcast %53 : f32 to vector<2x16x16xf32>
    %1093 = arith.mulf %1092, %1091 : vector<2x16x16xf32>
    %1094 = arith.addf %1081, %1093 : vector<2x16x16xf32>
    %1095 = vector.broadcast %55 : f32 to vector<2x16x16xf32>
    %1096 = arith.mulf %1095, %1091 : vector<2x16x16xf32>
    %1097 = arith.addf %1084, %1096 : vector<2x16x16xf32>
    %1098 = vector.broadcast %57 : f32 to vector<2x16x16xf32>
    %1099 = arith.mulf %1098, %1091 : vector<2x16x16xf32>
    %1100 = arith.addf %1087, %1099 : vector<2x16x16xf32>
    %1101 = vector.broadcast %59 : f32 to vector<2x16x16xf32>
    %1102 = arith.mulf %1101, %1091 : vector<2x16x16xf32>
    %1103 = arith.addf %1090, %1102 : vector<2x16x16xf32>
    %1104 = vector.extract_strided_slice %1077 {offsets = [0, 0, 2], sizes = [2, 16, 16], strides = [1, 1, 1]} : vector<2x16x18xf32> to vector<2x16x16xf32>
    %1105 = vector.broadcast %85 : f32 to vector<2x16x16xf32>
    %1106 = arith.mulf %1105, %1104 : vector<2x16x16xf32>
    %1107 = arith.addf %1094, %1106 : vector<2x16x16xf32>
    %1108 = vector.broadcast %87 : f32 to vector<2x16x16xf32>
    %1109 = arith.mulf %1108, %1104 : vector<2x16x16xf32>
    %1110 = arith.addf %1097, %1109 : vector<2x16x16xf32>
    %1111 = vector.broadcast %89 : f32 to vector<2x16x16xf32>
    %1112 = arith.mulf %1111, %1104 : vector<2x16x16xf32>
    %1113 = arith.addf %1100, %1112 : vector<2x16x16xf32>
    %1114 = vector.broadcast %91 : f32 to vector<2x16x16xf32>
    %1115 = arith.mulf %1114, %1104 : vector<2x16x16xf32>
    %1116 = arith.addf %1103, %1115 : vector<2x16x16xf32>
    %c0_244 = arith.constant 0 : index
    %c2_245 = arith.constant 2 : index
    %c1_246 = arith.constant 1 : index
    %c0_247 = arith.constant 0 : index
    %1117 = vector.load %arg5[%c0_244, %c2_245, %c1_246, %c0_247] : memref<2x4x18x18xf32, #tpu.memory_space<vmem>>, vector<2x1x16x18xf32>
    %1118 = vector.shape_cast %1117 : vector<2x1x16x18xf32> to vector<2x16x18xf32>
    %1119 = vector.extract_strided_slice %1118 {offsets = [0, 0, 0], sizes = [2, 16, 16], strides = [1, 1, 1]} : vector<2x16x18xf32> to vector<2x16x16xf32>
    %1120 = vector.broadcast %117 : f32 to vector<2x16x16xf32>
    %1121 = arith.mulf %1120, %1119 : vector<2x16x16xf32>
    %1122 = arith.addf %1107, %1121 : vector<2x16x16xf32>
    %1123 = vector.broadcast %119 : f32 to vector<2x16x16xf32>
    %1124 = arith.mulf %1123, %1119 : vector<2x16x16xf32>
    %1125 = arith.addf %1110, %1124 : vector<2x16x16xf32>
    %1126 = vector.broadcast %121 : f32 to vector<2x16x16xf32>
    %1127 = arith.mulf %1126, %1119 : vector<2x16x16xf32>
    %1128 = arith.addf %1113, %1127 : vector<2x16x16xf32>
    %1129 = vector.broadcast %123 : f32 to vector<2x16x16xf32>
    %1130 = arith.mulf %1129, %1119 : vector<2x16x16xf32>
    %1131 = arith.addf %1116, %1130 : vector<2x16x16xf32>
    %1132 = vector.extract_strided_slice %1118 {offsets = [0, 0, 1], sizes = [2, 16, 16], strides = [1, 1, 1]} : vector<2x16x18xf32> to vector<2x16x16xf32>
    %1133 = vector.broadcast %149 : f32 to vector<2x16x16xf32>
    %1134 = arith.mulf %1133, %1132 : vector<2x16x16xf32>
    %1135 = arith.addf %1122, %1134 : vector<2x16x16xf32>
    %1136 = vector.broadcast %151 : f32 to vector<2x16x16xf32>
    %1137 = arith.mulf %1136, %1132 : vector<2x16x16xf32>
    %1138 = arith.addf %1125, %1137 : vector<2x16x16xf32>
    %1139 = vector.broadcast %153 : f32 to vector<2x16x16xf32>
    %1140 = arith.mulf %1139, %1132 : vector<2x16x16xf32>
    %1141 = arith.addf %1128, %1140 : vector<2x16x16xf32>
    %1142 = vector.broadcast %155 : f32 to vector<2x16x16xf32>
    %1143 = arith.mulf %1142, %1132 : vector<2x16x16xf32>
    %1144 = arith.addf %1131, %1143 : vector<2x16x16xf32>
    %1145 = vector.extract_strided_slice %1118 {offsets = [0, 0, 2], sizes = [2, 16, 16], strides = [1, 1, 1]} : vector<2x16x18xf32> to vector<2x16x16xf32>
    %1146 = vector.broadcast %181 : f32 to vector<2x16x16xf32>
    %1147 = arith.mulf %1146, %1145 : vector<2x16x16xf32>
    %1148 = arith.addf %1135, %1147 : vector<2x16x16xf32>
    %1149 = vector.broadcast %183 : f32 to vector<2x16x16xf32>
    %1150 = arith.mulf %1149, %1145 : vector<2x16x16xf32>
    %1151 = arith.addf %1138, %1150 : vector<2x16x16xf32>
    %1152 = vector.broadcast %185 : f32 to vector<2x16x16xf32>
    %1153 = arith.mulf %1152, %1145 : vector<2x16x16xf32>
    %1154 = arith.addf %1141, %1153 : vector<2x16x16xf32>
    %1155 = vector.broadcast %187 : f32 to vector<2x16x16xf32>
    %1156 = arith.mulf %1155, %1145 : vector<2x16x16xf32>
    %1157 = arith.addf %1144, %1156 : vector<2x16x16xf32>
    %c0_248 = arith.constant 0 : index
    %c2_249 = arith.constant 2 : index
    %c2_250 = arith.constant 2 : index
    %c0_251 = arith.constant 0 : index
    %1158 = vector.load %arg5[%c0_248, %c2_249, %c2_250, %c0_251] : memref<2x4x18x18xf32, #tpu.memory_space<vmem>>, vector<2x1x16x18xf32>
    %1159 = vector.shape_cast %1158 : vector<2x1x16x18xf32> to vector<2x16x18xf32>
    %1160 = vector.extract_strided_slice %1159 {offsets = [0, 0, 0], sizes = [2, 16, 16], strides = [1, 1, 1]} : vector<2x16x18xf32> to vector<2x16x16xf32>
    %1161 = vector.broadcast %213 : f32 to vector<2x16x16xf32>
    %1162 = arith.mulf %1161, %1160 : vector<2x16x16xf32>
    %1163 = arith.addf %1148, %1162 : vector<2x16x16xf32>
    %1164 = vector.broadcast %215 : f32 to vector<2x16x16xf32>
    %1165 = arith.mulf %1164, %1160 : vector<2x16x16xf32>
    %1166 = arith.addf %1151, %1165 : vector<2x16x16xf32>
    %1167 = vector.broadcast %217 : f32 to vector<2x16x16xf32>
    %1168 = arith.mulf %1167, %1160 : vector<2x16x16xf32>
    %1169 = arith.addf %1154, %1168 : vector<2x16x16xf32>
    %1170 = vector.broadcast %219 : f32 to vector<2x16x16xf32>
    %1171 = arith.mulf %1170, %1160 : vector<2x16x16xf32>
    %1172 = arith.addf %1157, %1171 : vector<2x16x16xf32>
    %1173 = vector.extract_strided_slice %1159 {offsets = [0, 0, 1], sizes = [2, 16, 16], strides = [1, 1, 1]} : vector<2x16x18xf32> to vector<2x16x16xf32>
    %1174 = vector.broadcast %245 : f32 to vector<2x16x16xf32>
    %1175 = arith.mulf %1174, %1173 : vector<2x16x16xf32>
    %1176 = arith.addf %1163, %1175 : vector<2x16x16xf32>
    %1177 = vector.broadcast %247 : f32 to vector<2x16x16xf32>
    %1178 = arith.mulf %1177, %1173 : vector<2x16x16xf32>
    %1179 = arith.addf %1166, %1178 : vector<2x16x16xf32>
    %1180 = vector.broadcast %249 : f32 to vector<2x16x16xf32>
    %1181 = arith.mulf %1180, %1173 : vector<2x16x16xf32>
    %1182 = arith.addf %1169, %1181 : vector<2x16x16xf32>
    %1183 = vector.broadcast %251 : f32 to vector<2x16x16xf32>
    %1184 = arith.mulf %1183, %1173 : vector<2x16x16xf32>
    %1185 = arith.addf %1172, %1184 : vector<2x16x16xf32>
    %1186 = vector.extract_strided_slice %1159 {offsets = [0, 0, 2], sizes = [2, 16, 16], strides = [1, 1, 1]} : vector<2x16x18xf32> to vector<2x16x16xf32>
    %1187 = vector.broadcast %277 : f32 to vector<2x16x16xf32>
    %1188 = arith.mulf %1187, %1186 : vector<2x16x16xf32>
    %1189 = arith.addf %1176, %1188 : vector<2x16x16xf32>
    %1190 = vector.broadcast %279 : f32 to vector<2x16x16xf32>
    %1191 = arith.mulf %1190, %1186 : vector<2x16x16xf32>
    %1192 = arith.addf %1179, %1191 : vector<2x16x16xf32>
    %1193 = vector.broadcast %281 : f32 to vector<2x16x16xf32>
    %1194 = arith.mulf %1193, %1186 : vector<2x16x16xf32>
    %1195 = arith.addf %1182, %1194 : vector<2x16x16xf32>
    %1196 = vector.broadcast %283 : f32 to vector<2x16x16xf32>
    %1197 = arith.mulf %1196, %1186 : vector<2x16x16xf32>
    %1198 = arith.addf %1185, %1197 : vector<2x16x16xf32>
    %c0_252 = arith.constant 0 : index
    %c3_253 = arith.constant 3 : index
    %c0_254 = arith.constant 0 : index
    %c0_255 = arith.constant 0 : index
    %1199 = vector.load %arg5[%c0_252, %c3_253, %c0_254, %c0_255] : memref<2x4x18x18xf32, #tpu.memory_space<vmem>>, vector<2x1x16x18xf32>
    %1200 = vector.shape_cast %1199 : vector<2x1x16x18xf32> to vector<2x16x18xf32>
    %1201 = vector.extract_strided_slice %1200 {offsets = [0, 0, 0], sizes = [2, 16, 16], strides = [1, 1, 1]} : vector<2x16x18xf32> to vector<2x16x16xf32>
    %1202 = vector.broadcast %29 : f32 to vector<2x16x16xf32>
    %1203 = arith.mulf %1202, %1201 : vector<2x16x16xf32>
    %1204 = arith.addf %1189, %1203 : vector<2x16x16xf32>
    %1205 = vector.broadcast %31 : f32 to vector<2x16x16xf32>
    %1206 = arith.mulf %1205, %1201 : vector<2x16x16xf32>
    %1207 = arith.addf %1192, %1206 : vector<2x16x16xf32>
    %1208 = vector.broadcast %33 : f32 to vector<2x16x16xf32>
    %1209 = arith.mulf %1208, %1201 : vector<2x16x16xf32>
    %1210 = arith.addf %1195, %1209 : vector<2x16x16xf32>
    %1211 = vector.broadcast %35 : f32 to vector<2x16x16xf32>
    %1212 = arith.mulf %1211, %1201 : vector<2x16x16xf32>
    %1213 = arith.addf %1198, %1212 : vector<2x16x16xf32>
    %1214 = vector.extract_strided_slice %1200 {offsets = [0, 0, 1], sizes = [2, 16, 16], strides = [1, 1, 1]} : vector<2x16x18xf32> to vector<2x16x16xf32>
    %1215 = vector.broadcast %61 : f32 to vector<2x16x16xf32>
    %1216 = arith.mulf %1215, %1214 : vector<2x16x16xf32>
    %1217 = arith.addf %1204, %1216 : vector<2x16x16xf32>
    %1218 = vector.broadcast %63 : f32 to vector<2x16x16xf32>
    %1219 = arith.mulf %1218, %1214 : vector<2x16x16xf32>
    %1220 = arith.addf %1207, %1219 : vector<2x16x16xf32>
    %1221 = vector.broadcast %65 : f32 to vector<2x16x16xf32>
    %1222 = arith.mulf %1221, %1214 : vector<2x16x16xf32>
    %1223 = arith.addf %1210, %1222 : vector<2x16x16xf32>
    %1224 = vector.broadcast %67 : f32 to vector<2x16x16xf32>
    %1225 = arith.mulf %1224, %1214 : vector<2x16x16xf32>
    %1226 = arith.addf %1213, %1225 : vector<2x16x16xf32>
    %1227 = vector.extract_strided_slice %1200 {offsets = [0, 0, 2], sizes = [2, 16, 16], strides = [1, 1, 1]} : vector<2x16x18xf32> to vector<2x16x16xf32>
    %1228 = vector.broadcast %93 : f32 to vector<2x16x16xf32>
    %1229 = arith.mulf %1228, %1227 : vector<2x16x16xf32>
    %1230 = arith.addf %1217, %1229 : vector<2x16x16xf32>
    %1231 = vector.broadcast %95 : f32 to vector<2x16x16xf32>
    %1232 = arith.mulf %1231, %1227 : vector<2x16x16xf32>
    %1233 = arith.addf %1220, %1232 : vector<2x16x16xf32>
    %1234 = vector.broadcast %97 : f32 to vector<2x16x16xf32>
    %1235 = arith.mulf %1234, %1227 : vector<2x16x16xf32>
    %1236 = arith.addf %1223, %1235 : vector<2x16x16xf32>
    %1237 = vector.broadcast %99 : f32 to vector<2x16x16xf32>
    %1238 = arith.mulf %1237, %1227 : vector<2x16x16xf32>
    %1239 = arith.addf %1226, %1238 : vector<2x16x16xf32>
    %c0_256 = arith.constant 0 : index
    %c3_257 = arith.constant 3 : index
    %c1_258 = arith.constant 1 : index
    %c0_259 = arith.constant 0 : index
    %1240 = vector.load %arg5[%c0_256, %c3_257, %c1_258, %c0_259] : memref<2x4x18x18xf32, #tpu.memory_space<vmem>>, vector<2x1x16x18xf32>
    %1241 = vector.shape_cast %1240 : vector<2x1x16x18xf32> to vector<2x16x18xf32>
    %1242 = vector.extract_strided_slice %1241 {offsets = [0, 0, 0], sizes = [2, 16, 16], strides = [1, 1, 1]} : vector<2x16x18xf32> to vector<2x16x16xf32>
    %1243 = vector.broadcast %125 : f32 to vector<2x16x16xf32>
    %1244 = arith.mulf %1243, %1242 : vector<2x16x16xf32>
    %1245 = arith.addf %1230, %1244 : vector<2x16x16xf32>
    %1246 = vector.broadcast %127 : f32 to vector<2x16x16xf32>
    %1247 = arith.mulf %1246, %1242 : vector<2x16x16xf32>
    %1248 = arith.addf %1233, %1247 : vector<2x16x16xf32>
    %1249 = vector.broadcast %129 : f32 to vector<2x16x16xf32>
    %1250 = arith.mulf %1249, %1242 : vector<2x16x16xf32>
    %1251 = arith.addf %1236, %1250 : vector<2x16x16xf32>
    %1252 = vector.broadcast %131 : f32 to vector<2x16x16xf32>
    %1253 = arith.mulf %1252, %1242 : vector<2x16x16xf32>
    %1254 = arith.addf %1239, %1253 : vector<2x16x16xf32>
    %1255 = vector.extract_strided_slice %1241 {offsets = [0, 0, 1], sizes = [2, 16, 16], strides = [1, 1, 1]} : vector<2x16x18xf32> to vector<2x16x16xf32>
    %1256 = vector.broadcast %157 : f32 to vector<2x16x16xf32>
    %1257 = arith.mulf %1256, %1255 : vector<2x16x16xf32>
    %1258 = arith.addf %1245, %1257 : vector<2x16x16xf32>
    %1259 = vector.broadcast %159 : f32 to vector<2x16x16xf32>
    %1260 = arith.mulf %1259, %1255 : vector<2x16x16xf32>
    %1261 = arith.addf %1248, %1260 : vector<2x16x16xf32>
    %1262 = vector.broadcast %161 : f32 to vector<2x16x16xf32>
    %1263 = arith.mulf %1262, %1255 : vector<2x16x16xf32>
    %1264 = arith.addf %1251, %1263 : vector<2x16x16xf32>
    %1265 = vector.broadcast %163 : f32 to vector<2x16x16xf32>
    %1266 = arith.mulf %1265, %1255 : vector<2x16x16xf32>
    %1267 = arith.addf %1254, %1266 : vector<2x16x16xf32>
    %1268 = vector.extract_strided_slice %1241 {offsets = [0, 0, 2], sizes = [2, 16, 16], strides = [1, 1, 1]} : vector<2x16x18xf32> to vector<2x16x16xf32>
    %1269 = vector.broadcast %189 : f32 to vector<2x16x16xf32>
    %1270 = arith.mulf %1269, %1268 : vector<2x16x16xf32>
    %1271 = arith.addf %1258, %1270 : vector<2x16x16xf32>
    %1272 = vector.broadcast %191 : f32 to vector<2x16x16xf32>
    %1273 = arith.mulf %1272, %1268 : vector<2x16x16xf32>
    %1274 = arith.addf %1261, %1273 : vector<2x16x16xf32>
    %1275 = vector.broadcast %193 : f32 to vector<2x16x16xf32>
    %1276 = arith.mulf %1275, %1268 : vector<2x16x16xf32>
    %1277 = arith.addf %1264, %1276 : vector<2x16x16xf32>
    %1278 = vector.broadcast %195 : f32 to vector<2x16x16xf32>
    %1279 = arith.mulf %1278, %1268 : vector<2x16x16xf32>
    %1280 = arith.addf %1267, %1279 : vector<2x16x16xf32>
    %c0_260 = arith.constant 0 : index
    %c3_261 = arith.constant 3 : index
    %c2_262 = arith.constant 2 : index
    %c0_263 = arith.constant 0 : index
    %1281 = vector.load %arg5[%c0_260, %c3_261, %c2_262, %c0_263] : memref<2x4x18x18xf32, #tpu.memory_space<vmem>>, vector<2x1x16x18xf32>
    %1282 = vector.shape_cast %1281 : vector<2x1x16x18xf32> to vector<2x16x18xf32>
    %1283 = vector.extract_strided_slice %1282 {offsets = [0, 0, 0], sizes = [2, 16, 16], strides = [1, 1, 1]} : vector<2x16x18xf32> to vector<2x16x16xf32>
    %1284 = vector.broadcast %221 : f32 to vector<2x16x16xf32>
    %1285 = arith.mulf %1284, %1283 : vector<2x16x16xf32>
    %1286 = arith.addf %1271, %1285 : vector<2x16x16xf32>
    %1287 = vector.broadcast %223 : f32 to vector<2x16x16xf32>
    %1288 = arith.mulf %1287, %1283 : vector<2x16x16xf32>
    %1289 = arith.addf %1274, %1288 : vector<2x16x16xf32>
    %1290 = vector.broadcast %225 : f32 to vector<2x16x16xf32>
    %1291 = arith.mulf %1290, %1283 : vector<2x16x16xf32>
    %1292 = arith.addf %1277, %1291 : vector<2x16x16xf32>
    %1293 = vector.broadcast %227 : f32 to vector<2x16x16xf32>
    %1294 = arith.mulf %1293, %1283 : vector<2x16x16xf32>
    %1295 = arith.addf %1280, %1294 : vector<2x16x16xf32>
    %1296 = vector.extract_strided_slice %1282 {offsets = [0, 0, 1], sizes = [2, 16, 16], strides = [1, 1, 1]} : vector<2x16x18xf32> to vector<2x16x16xf32>
    %1297 = vector.broadcast %253 : f32 to vector<2x16x16xf32>
    %1298 = arith.mulf %1297, %1296 : vector<2x16x16xf32>
    %1299 = arith.addf %1286, %1298 : vector<2x16x16xf32>
    %1300 = vector.broadcast %255 : f32 to vector<2x16x16xf32>
    %1301 = arith.mulf %1300, %1296 : vector<2x16x16xf32>
    %1302 = arith.addf %1289, %1301 : vector<2x16x16xf32>
    %1303 = vector.broadcast %257 : f32 to vector<2x16x16xf32>
    %1304 = arith.mulf %1303, %1296 : vector<2x16x16xf32>
    %1305 = arith.addf %1292, %1304 : vector<2x16x16xf32>
    %1306 = vector.broadcast %259 : f32 to vector<2x16x16xf32>
    %1307 = arith.mulf %1306, %1296 : vector<2x16x16xf32>
    %1308 = arith.addf %1295, %1307 : vector<2x16x16xf32>
    %1309 = vector.extract_strided_slice %1282 {offsets = [0, 0, 2], sizes = [2, 16, 16], strides = [1, 1, 1]} : vector<2x16x18xf32> to vector<2x16x16xf32>
    %1310 = vector.broadcast %285 : f32 to vector<2x16x16xf32>
    %1311 = arith.mulf %1310, %1309 : vector<2x16x16xf32>
    %1312 = arith.addf %1299, %1311 : vector<2x16x16xf32>
    %1313 = vector.broadcast %287 : f32 to vector<2x16x16xf32>
    %1314 = arith.mulf %1313, %1309 : vector<2x16x16xf32>
    %1315 = arith.addf %1302, %1314 : vector<2x16x16xf32>
    %1316 = vector.broadcast %289 : f32 to vector<2x16x16xf32>
    %1317 = arith.mulf %1316, %1309 : vector<2x16x16xf32>
    %1318 = arith.addf %1305, %1317 : vector<2x16x16xf32>
    %1319 = vector.broadcast %291 : f32 to vector<2x16x16xf32>
    %1320 = arith.mulf %1319, %1309 : vector<2x16x16xf32>
    %1321 = arith.addf %1308, %1320 : vector<2x16x16xf32>
    %1322 = vector.shape_cast %1312 : vector<2x16x16xf32> to vector<2x1x16x16xf32>
    %1323 = vector.shape_cast %1315 : vector<2x16x16xf32> to vector<2x1x16x16xf32>
    %1324 = vector.shape_cast %1318 : vector<2x16x16xf32> to vector<2x1x16x16xf32>
    %1325 = vector.shape_cast %1321 : vector<2x16x16xf32> to vector<2x1x16x16xf32>
    %1326 = tpu.concatenate %1322, %1323, %1324, %1325 in 1 : vector<2x1x16x16xf32>, vector<2x1x16x16xf32>, vector<2x1x16x16xf32>, vector<2x1x16x16xf32> -> vector<2x4x16x16xf32>
    %c0_264 = arith.constant 0 : index
    %c0_265 = arith.constant 0 : index
    %c0_266 = arith.constant 0 : index
    %c0_267 = arith.constant 0 : index
    %1327 = vector.load %arg4[%c0_264, %c0_265, %c0_266, %c0_267] : memref<2x4x16x16xf32, #tpu.memory_space<vmem>>, vector<2x4x16x16xf32>
    tpu.vector_store %arg4[%c0_264, %c0_265, %c0_266, %c0_267], %1326 {strides = array<i32>} : memref<2x4x16x16xf32, #tpu.memory_space<vmem>>, vector<2x4x16x16xf32>,
    return
  }
  func.func @transform_0(%arg0: i32) -> (i32, i32, i32, i32) {
    %c0_i32 = arith.constant 0 : i32
    %c0_i32_0 = arith.constant 0 : i32
    %c0_i32_1 = arith.constant 0 : i32
    %c0_i32_2 = arith.constant 0 : i32
    return %arg0, %c0_i32, %c0_i32_0, %c0_i32_1 : i32, i32, i32, i32
  }
  func.func @transform_1(%arg0: i32) -> i32 {
    %c0_i32 = arith.constant 0 : i32
    %c0_i32_0 = arith.constant 0 : i32
    return %c0_i32 : i32
  }
  func.func @transform_2(%arg0: i32) -> i32 {
    %c0_i32 = arith.constant 0 : i32
    %c0_i32_0 = arith.constant 0 : i32
    return %c0_i32 : i32
  }
  func.func @transform_3(%arg0: i32) -> (i32, i32, i32, i32) {
    %c0_i32 = arith.constant 0 : i32
    %c0_i32_0 = arith.constant 0 : i32
    %c0_i32_1 = arith.constant 0 : i32
    %c0_i32_2 = arith.constant 0 : i32
    return %arg0, %c0_i32, %c0_i32_0, %c0_i32_1 : i32, i32, i32, i32
  }
}

</mosaic_0001>

<llo_original>
// kernel: tpu_custom_call.1
$region0: #{tpu_custom_call.1}
  #allocation0 [shape = 'u32[]', space=smem, size = 0x4, offset = 0x4, fixed_abs, tag = 'smem constant byte address 0x4 - core index']
  #allocation1 [shape = 'u32[144,128]{1,0:T(1,128)}', space=vmem, size = 0x12000, scoped, tag = 'internal scratch']
  #allocation2 [shape = 'f32[2,4,18,18]{3,2,1,0:T(8,128)}', space=vmem, size = 0x18000, scoped, tag = 'scratch operand']
  %s0 = inlined_call_operand.hbm [shape: f32[2,4,16,16], index: 0, kind: input, shape index: {}]
  %s1 = inlined_call_operand.hbm [shape: f32[144], index: 1, kind: input, shape index: {}]
  %s2 = inlined_call_operand.vmem [shape: f32[4], index: 2, kind: input, shape index: {}]
  %s3 = inlined_call_operand.hbm [shape: f32[2,4,16,16], index: 3, kind: output, shape index: {}]
  %s4 = sld [smem:[#allocation0]]
  $region34: #{tpu_custom_call.1} parent=0
    _
  %s6 = ssub.s32 1, %s4
  %s7 = scalar_select 0, %s6, %s4
  $region1: #{tpu_custom_call.1} parent=0
    #allocation3 [shape = 'u8[65536]{0}', space=vmem, size = 0x10000, scoped, tag = 'input window, operand 0, single buffered']
    #allocation4 [shape = 's32[1]{0}', space=sflag, size = 0x4, scoped, tag = 'scoped memory for tpu_custom_call.1']
    #allocation5 [shape = 's32[1]{0}', space=sflag, size = 0x4, scoped, tag = 'scoped memory for tpu_custom_call.1']
    #allocation6 [shape = 's32[1]{0}', space=sflag, size = 0x4, scoped, tag = 'scoped memory for tpu_custom_call.1']
    #allocation7 [shape = 's32[1]{0}', space=sflag, size = 0x4, scoped, tag = 'scoped memory for tpu_custom_call.1']
    #allocation8 [shape = 'u8[1024]{0}', space=smem, size = 0x400, scoped, tag = 'input window, operand 1, single buffered']
    #allocation9 [shape = 'u8[512]{0}', space=smem, size = 0x200, scoped, tag = 'input window, operand 2, single buffered']
    #allocation10 [shape = 'u8[65536]{0}', space=vmem, size = 0x10000, scoped, tag = 'output window, operand 0, single buffered']
    %8 = vsyncpa [#allocation4], 0
    %9 = vsyncpa [#allocation6], 0
    %10 = vsyncpa [#allocation7], 0
    %11 = vsyncpa [#allocation5], 0
    // Predicated region
    $region2: #{tpu_custom_call.1} parent=1 // pred_check
      _
    $region3: #{tpu_custom_call.1} parent=1 // pred_check_branch
      %13 = sbr.rel (0) target = $region5
    $region4: #{tpu_custom_call.1} parent=1 // pred_region
      %s15 = ssub.s32 2048, 2048
      %16 = vsyncadd [#allocation4], %s15
      %s17 = sshll.u32 [#allocation3], 4
      %s18 = int_to_ptr.vmem [resolvable:$true] %s17
      %23 = dma.hbm_to_vmem [thread:$0]  %s0, 2048, %s18, [#allocation4], 128, 128, 8
    $region5: #{tpu_custom_call.1} parent=1 // pred_fallthru
      _
    // Predicated region
    $region6: #{tpu_custom_call.1} parent=1 // pred_check
      _
    $region7: #{tpu_custom_call.1} parent=1 // pred_check_branch
      %25 = sbr.rel (0) target = $region9
    $region8: #{tpu_custom_call.1} parent=1 // pred_region
      %s27 = ssub.s32 32, 32
      %28 = vsyncadd [#allocation6], %s27
      %31 = dma.hbm_to_smem %s1, 32, [#allocation8], [#allocation6]
    $region9: #{tpu_custom_call.1} parent=1 // pred_fallthru
      _
    // Predicated region
    $region10: #{tpu_custom_call.1} parent=1 // pred_check
      _
    $region11: #{tpu_custom_call.1} parent=1 // pred_check_branch
      %33 = sbr.rel (0) target = $region13
    $region12: #{tpu_custom_call.1} parent=1 // pred_region
      %s35 = ssub.s32 16, 16
      %36 = vsyncadd [#allocation7], %s35
      %s38 = sshll.u32 %s2, 4
      %s39 = int_to_ptr.vmem [resolvable:$true] %s38
      %41 = dma.vmem_to_smem %s39, 16, [#allocation9], [#allocation7]
    $region13: #{tpu_custom_call.1} parent=1 // pred_fallthru
      _
    // Predicated region
    $region14: #{tpu_custom_call.1} parent=1 // pred_check
      _
    $region15: #{tpu_custom_call.1} parent=1 // pred_check_branch
      %43 = sbr.rel (0) target = $region17
    $region16: #{tpu_custom_call.1} parent=1 // pred_region
      %44 = dma.done [#allocation4], 2048
    $region17: #{tpu_custom_call.1} parent=1 // pred_fallthru
      _
    // Predicated region
    $region18: #{tpu_custom_call.1} parent=1 // pred_check
      _
    $region19: #{tpu_custom_call.1} parent=1 // pred_check_branch
      %46 = sbr.rel (0) target = $region21
    $region20: #{tpu_custom_call.1} parent=1 // pred_region
      %47 = dma.done [#allocation6], 32
    $region21: #{tpu_custom_call.1} parent=1 // pred_fallthru
      _
    // Predicated region
    $region22: #{tpu_custom_call.1} parent=1 // pred_check
      _
    $region23: #{tpu_custom_call.1} parent=1 // pred_check_branch
      %49 = sbr.rel (0) target = $region25
    $region24: #{tpu_custom_call.1} parent=1 // pred_region
      %50 = dma.done [#allocation7], 16
    $region25: #{tpu_custom_call.1} parent=1 // pred_fallthru
      _
    %51 = sfence
    %v52 = vld [vmem:[#allocation3] sm:$0xff]
    %v53 = vld [vmem:[#allocation3 + $0x8] sm:$0xff]
    %v54 = vld [vmem:[#allocation3 + $0x10] sm:$0xff]
    %v55 = vld [vmem:[#allocation3 + $0x18] sm:$0xff]
    %v56 = vld [vmem:[#allocation3 + $0x20] sm:$0xff]
    %v57 = vld [vmem:[#allocation3 + $0x28] sm:$0xff]
    %v58 = vld [vmem:[#allocation3 + $0x30] sm:$0xff]
    %v59 = vld [vmem:[#allocation3 + $0x38] sm:$0xff]
    %v60 = vld [vmem:[#allocation3 + $0x40] sm:$0xff]
    %v61 = vld [vmem:[#allocation3 + $0x48] sm:$0xff]
    %v62 = vld [vmem:[#allocation3 + $0x50] sm:$0xff]
    %v63 = vld [vmem:[#allocation3 + $0x58] sm:$0xff]
    %v64 = vld [vmem:[#allocation3 + $0x60] sm:$0xff]
    %v65 = vld [vmem:[#allocation3 + $0x68] sm:$0xff]
    %v66 = vld [vmem:[#allocation3 + $0x70] sm:$0xff]
    %v67 = vld [vmem:[#allocation3 + $0x78] sm:$0xff]
    %vm68 = vcmask 146432
    %69 = vst.msk [vmem:[#allocation2] sm:$0xff] %vm68, 0.0
    %70 = vst.msk [vmem:[#allocation2 + $0x8] sm:$0xff] %vm68, 0.0
    %vm71 = vcmask 140288
    %72 = vst.msk [vmem:[#allocation2 + $0x10] sm:$0x3] %vm71, 0.0
    %73 = vst.msk [vmem:[#allocation2 + $0x18] sm:$0xff] %vm68, 0.0
    %74 = vst.msk [vmem:[#allocation2 + $0x20] sm:$0xff] %vm68, 0.0
    %75 = vst.msk [vmem:[#allocation2 + $0x28] sm:$0x3] %vm71, 0.0
    %76 = vst.msk [vmem:[#allocation2 + $0x30] sm:$0xff] %vm68, 0.0
    %77 = vst.msk [vmem:[#allocation2 + $0x38] sm:$0xff] %vm68, 0.0
    %78 = vst.msk [vmem:[#allocation2 + $0x40] sm:$0x3] %vm71, 0.0
    %79 = vst.msk [vmem:[#allocation2 + $0x48] sm:$0xff] %vm68, 0.0
    %80 = vst.msk [vmem:[#allocation2 + $0x50] sm:$0xff] %vm68, 0.0
    %81 = vst.msk [vmem:[#allocation2 + $0x58] sm:$0x3] %vm71, 0.0
    %82 = vst.msk [vmem:[#allocation2 + $0x60] sm:$0xff] %vm68, 0.0
    %83 = vst.msk [vmem:[#allocation2 + $0x68] sm:$0xff] %vm68, 0.0
    %84 = vst.msk [vmem:[#allocation2 + $0x70] sm:$0x3] %vm71, 0.0
    %85 = vst.msk [vmem:[#allocation2 + $0x78] sm:$0xff] %vm68, 0.0
    %86 = vst.msk [vmem:[#allocation2 + $0x80] sm:$0xff] %vm68, 0.0
    %87 = vst.msk [vmem:[#allocation2 + $0x88] sm:$0x3] %vm71, 0.0
    %88 = vst.msk [vmem:[#allocation2 + $0x90] sm:$0xff] %vm68, 0.0
    %89 = vst.msk [vmem:[#allocation2 + $0x98] sm:$0xff] %vm68, 0.0
    %90 = vst.msk [vmem:[#allocation2 + $0xa0] sm:$0x3] %vm71, 0.0
    %91 = vst.msk [vmem:[#allocation2 + $0xa8] sm:$0xff] %vm68, 0.0
    %92 = vst.msk [vmem:[#allocation2 + $0xb0] sm:$0xff] %vm68, 0.0
    %93 = vst.msk [vmem:[#allocation2 + $0xb8] sm:$0x3] %vm71, 0.0
    %110 = vrot.lane.b32.xlu0 %v52, 1
    %v111 = vpop.permute.xlu0 %110
    %112 = vrot.lane.b32.xlu0 %v53, 1
    %v113 = vpop.permute.xlu0 %112
    %114 = vrot.lane.b32.xlu0 %v54, 1
    %v115 = vpop.permute.xlu0 %114
    %116 = vrot.lane.b32.xlu0 %v55, 1
    %v117 = vpop.permute.xlu0 %116
    %118 = vrot.lane.b32.xlu0 %v56, 1
    %v119 = vpop.permute.xlu0 %118
    %120 = vrot.lane.b32.xlu0 %v57, 1
    %v121 = vpop.permute.xlu0 %120
    %122 = vrot.lane.b32.xlu0 %v58, 1
    %v123 = vpop.permute.xlu0 %122
    %124 = vrot.lane.b32.xlu0 %v59, 1
    %v125 = vpop.permute.xlu0 %124
    %126 = vrot.lane.b32.xlu0 %v60, 1
    %v127 = vpop.permute.xlu0 %126
    %128 = vrot.lane.b32.xlu0 %v61, 1
    %v129 = vpop.permute.xlu0 %128
    %130 = vrot.lane.b32.xlu0 %v62, 1
    %v131 = vpop.permute.xlu0 %130
    %132 = vrot.lane.b32.xlu0 %v63, 1
    %v133 = vpop.permute.xlu0 %132
    %134 = vrot.lane.b32.xlu0 %v64, 1
    %v135 = vpop.permute.xlu0 %134
    %136 = vrot.lane.b32.xlu0 %v65, 1
    %v137 = vpop.permute.xlu0 %136
    %138 = vrot.lane.b32.xlu0 %v66, 1
    %v139 = vpop.permute.xlu0 %138
    %140 = vrot.lane.b32.xlu0 %v67, 1
    %v141 = vpop.permute.xlu0 %140
    %vm158 = vcmask 138248
    %159 = vst.msk [vmem:[#allocation2 + $0x1] sm:$0xff] %vm158, %v111
    %160 = vst.msk [vmem:[#allocation2 + $0x9] sm:$0xff] %vm158, %v113
    %161 = vst.msk [vmem:[#allocation2 + $0x19] sm:$0xff] %vm158, %v115
    %162 = vst.msk [vmem:[#allocation2 + $0x21] sm:$0xff] %vm158, %v117
    %163 = vst.msk [vmem:[#allocation2 + $0x31] sm:$0xff] %vm158, %v119
    %164 = vst.msk [vmem:[#allocation2 + $0x39] sm:$0xff] %vm158, %v121
    %165 = vst.msk [vmem:[#allocation2 + $0x49] sm:$0xff] %vm158, %v123
    %166 = vst.msk [vmem:[#allocation2 + $0x51] sm:$0xff] %vm158, %v125
    %167 = vst.msk [vmem:[#allocation2 + $0x61] sm:$0xff] %vm158, %v127
    %168 = vst.msk [vmem:[#allocation2 + $0x69] sm:$0xff] %vm158, %v129
    %169 = vst.msk [vmem:[#allocation2 + $0x79] sm:$0xff] %vm158, %v131
    %170 = vst.msk [vmem:[#allocation2 + $0x81] sm:$0xff] %vm158, %v133
    %171 = vst.msk [vmem:[#allocation2 + $0x91] sm:$0xff] %vm158, %v135
    %172 = vst.msk [vmem:[#allocation2 + $0x99] sm:$0xff] %vm158, %v137
    %173 = vst.msk [vmem:[#allocation2 + $0xa9] sm:$0xff] %vm158, %v139
    %174 = vst.msk [vmem:[#allocation2 + $0xb1] sm:$0xff] %vm158, %v141
    %s175 = sld [smem:[#allocation8]]
    %s176 = smul.f32 %s175, 0.5
    %s177 = sld [smem:[#allocation8 + $0x1]]
    %s178 = smul.f32 %s177, 0.5
    %s179 = sld [smem:[#allocation8 + $0x2]]
    %s180 = smul.f32 %s179, 0.5
    %s181 = sld [smem:[#allocation8 + $0x3]]
    %s182 = smul.f32 %s181, 0.5
    %s183 = sld [smem:[#allocation8 + $0x4]]
    %s184 = smul.f32 %s183, 0.5
    %s185 = sld [smem:[#allocation8 + $0x5]]
    %s186 = smul.f32 %s185, 0.5
    %s187 = sld [smem:[#allocation8 + $0x6]]
    %s188 = smul.f32 %s187, 0.5
    %s189 = sld [smem:[#allocation8 + $0x7]]
    %s190 = smul.f32 %s189, 0.5
    %s191 = sld [smem:[#allocation8 + $0x8]]
    %s192 = smul.f32 %s191, 0.5
    %s193 = sld [smem:[#allocation8 + $0x9]]
    %s194 = smul.f32 %s193, 0.5
    %s195 = sld [smem:[#allocation8 + $0xa]]
    %s196 = smul.f32 %s195, 0.5
    %s197 = sld [smem:[#allocation8 + $0xb]]
    %s198 = smul.f32 %s197, 0.5
    %s199 = sld [smem:[#allocation8 + $0xc]]
    %s200 = smul.f32 %s199, 0.5
    %s201 = sld [smem:[#allocation8 + $0xd]]
    %s202 = smul.f32 %s201, 0.5
    %s203 = sld [smem:[#allocation8 + $0xe]]
    %s204 = smul.f32 %s203, 0.5
    %s205 = sld [smem:[#allocation8 + $0xf]]
    %s206 = smul.f32 %s205, 0.5
    %s207 = sld [smem:[#allocation8 + $0x10]]
    %s208 = smul.f32 %s207, 0.5
    %s209 = sld [smem:[#allocation8 + $0x11]]
    %s210 = smul.f32 %s209, 0.5
    %s211 = sld [smem:[#allocation8 + $0x12]]
    %s212 = smul.f32 %s211, 0.5
    %s213 = sld [smem:[#allocation8 + $0x13]]
    %s214 = smul.f32 %s213, 0.5
    %s215 = sld [smem:[#allocation8 + $0x14]]
    %s216 = smul.f32 %s215, 0.5
    %s217 = sld [smem:[#allocation8 + $0x15]]
    %s218 = smul.f32 %s217, 0.5
    %s219 = sld [smem:[#allocation8 + $0x16]]
    %s220 = smul.f32 %s219, 0.5
    %s221 = sld [smem:[#allocation8 + $0x17]]
    %s222 = smul.f32 %s221, 0.5
    %s223 = sld [smem:[#allocation8 + $0x18]]
    %s224 = smul.f32 %s223, 0.5
    %s225 = sld [smem:[#allocation8 + $0x19]]
    %s226 = smul.f32 %s225, 0.5
    %s227 = sld [smem:[#allocation8 + $0x1a]]
    %s228 = smul.f32 %s227, 0.5
    %s229 = sld [smem:[#allocation8 + $0x1b]]
    %s230 = smul.f32 %s229, 0.5
    %s231 = sld [smem:[#allocation8 + $0x1c]]
    %s232 = smul.f32 %s231, 0.5
    %s233 = sld [smem:[#allocation8 + $0x1d]]
    %s234 = smul.f32 %s233, 0.5
    %s235 = sld [smem:[#allocation8 + $0x1e]]
    %s236 = smul.f32 %s235, 0.5
    %s237 = sld [smem:[#allocation8 + $0x1f]]
    %s238 = smul.f32 %s237, 0.5
    %s239 = sld [smem:[#allocation8 + $0x20]]
    %s240 = smul.f32 %s239, 0.5
    %s241 = sld [smem:[#allocation8 + $0x21]]
    %s242 = smul.f32 %s241, 0.5
    %s243 = sld [smem:[#allocation8 + $0x22]]
    %s244 = smul.f32 %s243, 0.5
    %s245 = sld [smem:[#allocation8 + $0x23]]
    %s246 = smul.f32 %s245, 0.5
    %s247 = sld [smem:[#allocation8 + $0x24]]
    %s248 = smul.f32 %s247, 0.5
    %s249 = sld [smem:[#allocation8 + $0x25]]
    %s250 = smul.f32 %s249, 0.5
    %s251 = sld [smem:[#allocation8 + $0x26]]
    %s252 = smul.f32 %s251, 0.5
    %s253 = sld [smem:[#allocation8 + $0x27]]
    %s254 = smul.f32 %s253, 0.5
    %s255 = sld [smem:[#allocation8 + $0x28]]
    %s256 = smul.f32 %s255, 0.5
    %s257 = sld [smem:[#allocation8 + $0x29]]
    %s258 = smul.f32 %s257, 0.5
    %s259 = sld [smem:[#allocation8 + $0x2a]]
    %s260 = smul.f32 %s259, 0.5
    %s261 = sld [smem:[#allocation8 + $0x2b]]
    %s262 = smul.f32 %s261, 0.5
    %s263 = sld [smem:[#allocation8 + $0x2c]]
    %s264 = smul.f32 %s263, 0.5
    %s265 = sld [smem:[#allocation8 + $0x2d]]
    %s266 = smul.f32 %s265, 0.5
    %s267 = sld [smem:[#allocation8 + $0x2e]]
    %s268 = smul.f32 %s267, 0.5
    %s269 = sld [smem:[#allocation8 + $0x2f]]
    %s270 = smul.f32 %s269, 0.5
    %s271 = sld [smem:[#allocation8 + $0x30]]
    %s272 = smul.f32 %s271, 0.5
    %s273 = sld [smem:[#allocation8 + $0x31]]
    %s274 = smul.f32 %s273, 0.5
    %s275 = sld [smem:[#allocation8 + $0x32]]
    %s276 = smul.f32 %s275, 0.5
    %s277 = sld [smem:[#allocation8 + $0x33]]
    %s278 = smul.f32 %s277, 0.5
    %s279 = sld [smem:[#allocation8 + $0x34]]
    %s280 = smul.f32 %s279, 0.5
    %s281 = sld [smem:[#allocation8 + $0x35]]
    %s282 = smul.f32 %s281, 0.5
    %s283 = sld [smem:[#allocation8 + $0x36]]
    %s284 = smul.f32 %s283, 0.5
    %s285 = sld [smem:[#allocation8 + $0x37]]
    %s286 = smul.f32 %s285, 0.5
    %s287 = sld [smem:[#allocation8 + $0x38]]
    %s288 = smul.f32 %s287, 0.5
    %s289 = sld [smem:[#allocation8 + $0x39]]
    %s290 = smul.f32 %s289, 0.5
    %s291 = sld [smem:[#allocation8 + $0x3a]]
    %s292 = smul.f32 %s291, 0.5
    %s293 = sld [smem:[#allocation8 + $0x3b]]
    %s294 = smul.f32 %s293, 0.5
    %s295 = sld [smem:[#allocation8 + $0x3c]]
    %s296 = smul.f32 %s295, 0.5
    %s297 = sld [smem:[#allocation8 + $0x3d]]
    %s298 = smul.f32 %s297, 0.5
    %s299 = sld [smem:[#allocation8 + $0x3e]]
    %s300 = smul.f32 %s299, 0.5
    %s301 = sld [smem:[#allocation8 + $0x3f]]
    %s302 = smul.f32 %s301, 0.5
    %s303 = sld [smem:[#allocation8 + $0x40]]
    %s304 = smul.f32 %s303, 0.5
    %s305 = sld [smem:[#allocation8 + $0x41]]
    %s306 = smul.f32 %s305, 0.5
    %s307 = sld [smem:[#allocation8 + $0x42]]
    %s308 = smul.f32 %s307, 0.5
    %s309 = sld [smem:[#allocation8 + $0x43]]
    %s310 = smul.f32 %s309, 0.5
    %s311 = sld [smem:[#allocation8 + $0x44]]
    %s312 = smul.f32 %s311, 0.5
    %s313 = sld [smem:[#allocation8 + $0x45]]
    %s314 = smul.f32 %s313, 0.5
    %s315 = sld [smem:[#allocation8 + $0x46]]
    %s316 = smul.f32 %s315, 0.5
    %s317 = sld [smem:[#allocation8 + $0x47]]
    %s318 = smul.f32 %s317, 0.5
    %s319 = sld [smem:[#allocation8 + $0x48]]
    %s320 = smul.f32 %s319, 0.5
    %s321 = sld [smem:[#allocation8 + $0x49]]
    %s322 = smul.f32 %s321, 0.5
    %s323 = sld [smem:[#allocation8 + $0x4a]]
    %s324 = smul.f32 %s323, 0.5
    %s325 = sld [smem:[#allocation8 + $0x4b]]
    %s326 = smul.f32 %s325, 0.5
    %s327 = sld [smem:[#allocation8 + $0x4c]]
    %s328 = smul.f32 %s327, 0.5
    %s329 = sld [smem:[#allocation8 + $0x4d]]
    %s330 = smul.f32 %s329, 0.5
    %s331 = sld [smem:[#allocation8 + $0x4e]]
    %s332 = smul.f32 %s331, 0.5
    %s333 = sld [smem:[#allocation8 + $0x4f]]
    %s334 = smul.f32 %s333, 0.5
    %s335 = sld [smem:[#allocation8 + $0x50]]
    %s336 = smul.f32 %s335, 0.5
    %s337 = sld [smem:[#allocation8 + $0x51]]
    %s338 = smul.f32 %s337, 0.5
    %s339 = sld [smem:[#allocation8 + $0x52]]
    %s340 = smul.f32 %s339, 0.5
    %s341 = sld [smem:[#allocation8 + $0x53]]
    %s342 = smul.f32 %s341, 0.5
    %s343 = sld [smem:[#allocation8 + $0x54]]
    %s344 = smul.f32 %s343, 0.5
    %s345 = sld [smem:[#allocation8 + $0x55]]
    %s346 = smul.f32 %s345, 0.5
    %s347 = sld [smem:[#allocation8 + $0x56]]
    %s348 = smul.f32 %s347, 0.5
    %s349 = sld [smem:[#allocation8 + $0x57]]
    %s350 = smul.f32 %s349, 0.5
    %s351 = sld [smem:[#allocation8 + $0x58]]
    %s352 = smul.f32 %s351, 0.5
    %s353 = sld [smem:[#allocation8 + $0x59]]
    %s354 = smul.f32 %s353, 0.5
    %s355 = sld [smem:[#allocation8 + $0x5a]]
    %s356 = smul.f32 %s355, 0.5
    %s357 = sld [smem:[#allocation8 + $0x5b]]
    %s358 = smul.f32 %s357, 0.5
    %s359 = sld [smem:[#allocation8 + $0x5c]]
    %s360 = smul.f32 %s359, 0.5
    %s361 = sld [smem:[#allocation8 + $0x5d]]
    %s362 = smul.f32 %s361, 0.5
    %s363 = sld [smem:[#allocation8 + $0x5e]]
    %s364 = smul.f32 %s363, 0.5
    %s365 = sld [smem:[#allocation8 + $0x5f]]
    %s366 = smul.f32 %s365, 0.5
    %s367 = sld [smem:[#allocation8 + $0x60]]
    %s368 = smul.f32 %s367, 0.5
    %s369 = sld [smem:[#allocation8 + $0x61]]
    %s370 = smul.f32 %s369, 0.5
    %s371 = sld [smem:[#allocation8 + $0x62]]
    %s372 = smul.f32 %s371, 0.5
    %s373 = sld [smem:[#allocation8 + $0x63]]
    %s374 = smul.f32 %s373, 0.5
    %s375 = sld [smem:[#allocation8 + $0x64]]
    %s376 = smul.f32 %s375, 0.5
    %s377 = sld [smem:[#allocation8 + $0x65]]
    %s378 = smul.f32 %s377, 0.5
    %s379 = sld [smem:[#allocation8 + $0x66]]
    %s380 = smul.f32 %s379, 0.5
    %s381 = sld [smem:[#allocation8 + $0x67]]
    %s382 = smul.f32 %s381, 0.5
    %s383 = sld [smem:[#allocation8 + $0x68]]
    %s384 = smul.f32 %s383, 0.5
    %s385 = sld [smem:[#allocation8 + $0x69]]
    %s386 = smul.f32 %s385, 0.5
    %s387 = sld [smem:[#allocation8 + $0x6a]]
    %s388 = smul.f32 %s387, 0.5
    %s389 = sld [smem:[#allocation8 + $0x6b]]
    %s390 = smul.f32 %s389, 0.5
    %s391 = sld [smem:[#allocation8 + $0x6c]]
    %s392 = smul.f32 %s391, 0.5
    %s393 = sld [smem:[#allocation8 + $0x6d]]
    %s394 = smul.f32 %s393, 0.5
    %s395 = sld [smem:[#allocation8 + $0x6e]]
    %s396 = smul.f32 %s395, 0.5
    %s397 = sld [smem:[#allocation8 + $0x6f]]
    %s398 = smul.f32 %s397, 0.5
    %s399 = sld [smem:[#allocation8 + $0x70]]
    %s400 = smul.f32 %s399, 0.5
    %s401 = sld [smem:[#allocation8 + $0x71]]
    %s402 = smul.f32 %s401, 0.5
    %s403 = sld [smem:[#allocation8 + $0x72]]
    %s404 = smul.f32 %s403, 0.5
    %s405 = sld [smem:[#allocation8 + $0x73]]
    %s406 = smul.f32 %s405, 0.5
    %s407 = sld [smem:[#allocation8 + $0x74]]
    %s408 = smul.f32 %s407, 0.5
    %s409 = sld [smem:[#allocation8 + $0x75]]
    %s410 = smul.f32 %s409, 0.5
    %s411 = sld [smem:[#allocation8 + $0x76]]
    %s412 = smul.f32 %s411, 0.5
    %s413 = sld [smem:[#allocation8 + $0x77]]
    %s414 = smul.f32 %s413, 0.5
    %s415 = sld [smem:[#allocation8 + $0x78]]
    %s416 = smul.f32 %s415, 0.5
    %s417 = sld [smem:[#allocation8 + $0x79]]
    %s418 = smul.f32 %s417, 0.5
    %s419 = sld [smem:[#allocation8 + $0x7a]]
    %s420 = smul.f32 %s419, 0.5
    %s421 = sld [smem:[#allocation8 + $0x7b]]
    %s422 = smul.f32 %s421, 0.5
    %s423 = sld [smem:[#allocation8 + $0x7c]]
    %s424 = smul.f32 %s423, 0.5
    %s425 = sld [smem:[#allocation8 + $0x7d]]
    %s426 = smul.f32 %s425, 0.5
    %s427 = sld [smem:[#allocation8 + $0x7e]]
    %s428 = smul.f32 %s427, 0.5
    %s429 = sld [smem:[#allocation8 + $0x7f]]
    %s430 = smul.f32 %s429, 0.5
    %s431 = sld [smem:[#allocation8 + $0x80]]
    %s432 = smul.f32 %s431, 0.5
    %s433 = sld [smem:[#allocation8 + $0x81]]
    %s434 = smul.f32 %s433, 0.5
    %s435 = sld [smem:[#allocation8 + $0x82]]
    %s436 = smul.f32 %s435, 0.5
    %s437 = sld [smem:[#allocation8 + $0x83]]
    %s438 = smul.f32 %s437, 0.5
    %s439 = sld [smem:[#allocation8 + $0x84]]
    %s440 = smul.f32 %s439, 0.5
    %s441 = sld [smem:[#allocation8 + $0x85]]
    %s442 = smul.f32 %s441, 0.5
    %s443 = sld [smem:[#allocation8 + $0x86]]
    %s444 = smul.f32 %s443, 0.5
    %s445 = sld [smem:[#allocation8 + $0x87]]
    %s446 = smul.f32 %s445, 0.5
    %s447 = sld [smem:[#allocation8 + $0x88]]
    %s448 = smul.f32 %s447, 0.5
    %s449 = sld [smem:[#allocation8 + $0x89]]
    %s450 = smul.f32 %s449, 0.5
    %s451 = sld [smem:[#allocation8 + $0x8a]]
    %s452 = smul.f32 %s451, 0.5
    %s453 = sld [smem:[#allocation8 + $0x8b]]
    %s454 = smul.f32 %s453, 0.5
    %s455 = sld [smem:[#allocation8 + $0x8c]]
    %s456 = smul.f32 %s455, 0.5
    %s457 = sld [smem:[#allocation8 + $0x8d]]
    %s458 = smul.f32 %s457, 0.5
    %s459 = sld [smem:[#allocation8 + $0x8e]]
    %s460 = smul.f32 %s459, 0.5
    %s461 = sld [smem:[#allocation8 + $0x8f]]
    %s462 = smul.f32 %s461, 0.5
    %s463 = sld [smem:[#allocation9]]
    %s464 = smul.f32 %s463, 0.5
    %s465 = sld [smem:[#allocation9 + $0x1]]
    %s466 = smul.f32 %s465, 0.5
    %s467 = sld [smem:[#allocation9 + $0x2]]
    %s468 = smul.f32 %s467, 0.5
    %s469 = sld [smem:[#allocation9 + $0x3]]
    %s470 = smul.f32 %s469, 0.5
    %v471 = vstv %s464
    %v472 = vadd.f32 %v52, %v471
    %v473 = vadd.f32 %v53, %v471
    %v474 = vadd.f32 %v60, %v471
    %v475 = vadd.f32 %v61, %v471
    %v476 = vstv %s466
    %v477 = vadd.f32 %v54, %v476
    %v478 = vadd.f32 %v55, %v476
    %v479 = vadd.f32 %v62, %v476
    %v480 = vadd.f32 %v63, %v476
    %v481 = vstv %s468
    %v482 = vadd.f32 %v56, %v481
    %v483 = vadd.f32 %v57, %v481
    %v484 = vadd.f32 %v64, %v481
    %v485 = vadd.f32 %v65, %v481
    %v486 = vstv %s470
    %v487 = vadd.f32 %v58, %v486
    %v488 = vadd.f32 %v59, %v486
    %v489 = vadd.f32 %v66, %v486
    %v490 = vadd.f32 %v67, %v486
    %v491 = vld [vmem:[#allocation2] sm:$0xff]
    %v492 = vld [vmem:[#allocation2 + $0x8] sm:$0xff]
    %v493 = vld [vmem:[#allocation2 + $0x60] sm:$0xff]
    %v494 = vld [vmem:[#allocation2 + $0x68] sm:$0xff]
    %v495 = vstv %s176
    %v496 = vmul.f32 %v495, %v491
    %v497 = vmul.f32 %v495, %v492
    %v498 = vmul.f32 %v495, %v493
    %v499 = vmul.f32 %v495, %v494
    %v500 = vadd.f32 %v472, %v496
    %v501 = vadd.f32 %v473, %v497
    %v502 = vadd.f32 %v474, %v498
    %v503 = vadd.f32 %v475, %v499
    %v504 = vstv %s178
    %v505 = vmul.f32 %v504, %v491
    %v506 = vmul.f32 %v504, %v492
    %v507 = vmul.f32 %v504, %v493
    %v508 = vmul.f32 %v504, %v494
    %v509 = vadd.f32 %v477, %v505
    %v510 = vadd.f32 %v478, %v506
    %v511 = vadd.f32 %v479, %v507
    %v512 = vadd.f32 %v480, %v508
    %v513 = vstv %s180
    %v514 = vmul.f32 %v513, %v491
    %v515 = vmul.f32 %v513, %v492
    %v516 = vmul.f32 %v513, %v493
    %v517 = vmul.f32 %v513, %v494
    %v518 = vadd.f32 %v482, %v514
    %v519 = vadd.f32 %v483, %v515
    %v520 = vadd.f32 %v484, %v516
    %v521 = vadd.f32 %v485, %v517
    %v522 = vstv %s182
    %v523 = vmul.f32 %v522, %v491
    %v524 = vmul.f32 %v522, %v492
    %v525 = vmul.f32 %v522, %v493
    %v526 = vmul.f32 %v522, %v494
    %v527 = vadd.f32 %v487, %v523
    %v528 = vadd.f32 %v488, %v524
    %v529 = vadd.f32 %v489, %v525
    %v530 = vadd.f32 %v490, %v526
    %v531 = vstv %s208
    %v532 = vmul.f32 %v531, %v491
    %v533 = vmul.f32 %v531, %v492
    %v534 = vmul.f32 %v531, %v493
    %v535 = vmul.f32 %v531, %v494
    %540 = vrot.lane.b32.xlu0 %v532, 127
    %v541 = vpop.permute.xlu0 %540
    %542 = vrot.lane.b32.xlu0 %v533, 127
    %v543 = vpop.permute.xlu0 %542
    %544 = vrot.lane.b32.xlu0 %v534, 127
    %v545 = vpop.permute.xlu0 %544
    %546 = vrot.lane.b32.xlu0 %v535, 127
    %v547 = vpop.permute.xlu0 %546
    %v552 = vadd.f32 %v500, %v541
    %v553 = vadd.f32 %v501, %v543
    %v554 = vadd.f32 %v502, %v545
    %v555 = vadd.f32 %v503, %v547
    %v556 = vstv %s210
    %v557 = vmul.f32 %v556, %v491
    %v558 = vmul.f32 %v556, %v492
    %v559 = vmul.f32 %v556, %v493
    %v560 = vmul.f32 %v556, %v494
    %565 = vrot.lane.b32.xlu0 %v557, 127
    %v566 = vpop.permute.xlu0 %565
    %567 = vrot.lane.b32.xlu0 %v558, 127
    %v568 = vpop.permute.xlu0 %567
    %569 = vrot.lane.b32.xlu0 %v559, 127
    %v570 = vpop.permute.xlu0 %569
    %571 = vrot.lane.b32.xlu0 %v560, 127
    %v572 = vpop.permute.xlu0 %571
    %v577 = vadd.f32 %v509, %v566
    %v578 = vadd.f32 %v510, %v568
    %v579 = vadd.f32 %v511, %v570
    %v580 = vadd.f32 %v512, %v572
    %v581 = vstv %s212
    %v582 = vmul.f32 %v581, %v491
    %v583 = vmul.f32 %v581, %v492
    %v584 = vmul.f32 %v581, %v493
    %v585 = vmul.f32 %v581, %v494
    %590 = vrot.lane.b32.xlu0 %v582, 127
    %v591 = vpop.permute.xlu0 %590
    %592 = vrot.lane.b32.xlu0 %v583, 127
    %v593 = vpop.permute.xlu0 %592
    %594 = vrot.lane.b32.xlu0 %v584, 127
    %v595 = vpop.permute.xlu0 %594
    %596 = vrot.lane.b32.xlu0 %v585, 127
    %v597 = vpop.permute.xlu0 %596
    %v602 = vadd.f32 %v518, %v591
    %v603 = vadd.f32 %v519, %v593
    %v604 = vadd.f32 %v520, %v595
    %v605 = vadd.f32 %v521, %v597
    %v606 = vstv %s214
    %v607 = vmul.f32 %v606, %v491
    %v608 = vmul.f32 %v606, %v492
    %v609 = vmul.f32 %v606, %v493
    %v610 = vmul.f32 %v606, %v494
    %615 = vrot.lane.b32.xlu0 %v607, 127
    %v616 = vpop.permute.xlu0 %615
    %617 = vrot.lane.b32.xlu0 %v608, 127
    %v618 = vpop.permute.xlu0 %617
    %619 = vrot.lane.b32.xlu0 %v609, 127
    %v620 = vpop.permute.xlu0 %619
    %621 = vrot.lane.b32.xlu0 %v610, 127
    %v622 = vpop.permute.xlu0 %621
    %v627 = vadd.f32 %v527, %v616
    %v628 = vadd.f32 %v528, %v618
    %v629 = vadd.f32 %v529, %v620
    %v630 = vadd.f32 %v530, %v622
    %v631 = vstv %s240
    %v632 = vmul.f32 %v631, %v491
    %v633 = vmul.f32 %v631, %v492
    %v634 = vmul.f32 %v631, %v493
    %v635 = vmul.f32 %v631, %v494
    %640 = vrot.lane.b32.xlu0 %v632, 126
    %v641 = vpop.permute.xlu0 %640
    %642 = vrot.lane.b32.xlu0 %v633, 126
    %v643 = vpop.permute.xlu0 %642
    %644 = vrot.lane.b32.xlu0 %v634, 126
    %v645 = vpop.permute.xlu0 %644
    %646 = vrot.lane.b32.xlu0 %v635, 126
    %v647 = vpop.permute.xlu0 %646
    %v652 = vadd.f32 %v552, %v641
    %v653 = vadd.f32 %v553, %v643
    %v654 = vadd.f32 %v554, %v645
    %v655 = vadd.f32 %v555, %v647
    %v656 = vstv %s242
    %v657 = vmul.f32 %v656, %v491
    %v658 = vmul.f32 %v656, %v492
    %v659 = vmul.f32 %v656, %v493
    %v660 = vmul.f32 %v656, %v494
    %665 = vrot.lane.b32.xlu0 %v657, 126
    %v666 = vpop.permute.xlu0 %665
    %667 = vrot.lane.b32.xlu0 %v658, 126
    %v668 = vpop.permute.xlu0 %667
    %669 = vrot.lane.b32.xlu0 %v659, 126
    %v670 = vpop.permute.xlu0 %669
    %671 = vrot.lane.b32.xlu0 %v660, 126
    %v672 = vpop.permute.xlu0 %671
    %v677 = vadd.f32 %v577, %v666
    %v678 = vadd.f32 %v578, %v668
    %v679 = vadd.f32 %v579, %v670
    %v680 = vadd.f32 %v580, %v672
    %v681 = vstv %s244
    %v682 = vmul.f32 %v681, %v491
    %v683 = vmul.f32 %v681, %v492
    %v684 = vmul.f32 %v681, %v493
    %v685 = vmul.f32 %v681, %v494
    %690 = vrot.lane.b32.xlu0 %v682, 126
    %v691 = vpop.permute.xlu0 %690
    %692 = vrot.lane.b32.xlu0 %v683, 126
    %v693 = vpop.permute.xlu0 %692
    %694 = vrot.lane.b32.xlu0 %v684, 126
    %v695 = vpop.permute.xlu0 %694
    %696 = vrot.lane.b32.xlu0 %v685, 126
    %v697 = vpop.permute.xlu0 %696
    %v702 = vadd.f32 %v602, %v691
    %v703 = vadd.f32 %v603, %v693
    %v704 = vadd.f32 %v604, %v695
    %v705 = vadd.f32 %v605, %v697
    %v706 = vstv %s246
    %v707 = vmul.f32 %v706, %v491
    %v708 = vmul.f32 %v706, %v492
    %v709 = vmul.f32 %v706, %v493
    %v710 = vmul.f32 %v706, %v494
    %715 = vrot.lane.b32.xlu0 %v707, 126
    %v716 = vpop.permute.xlu0 %715
    %717 = vrot.lane.b32.xlu0 %v708, 126
    %v718 = vpop.permute.xlu0 %717
    %719 = vrot.lane.b32.xlu0 %v709, 126
    %v720 = vpop.permute.xlu0 %719
    %721 = vrot.lane.b32.xlu0 %v710, 126
    %v722 = vpop.permute.xlu0 %721
    %v727 = vadd.f32 %v627, %v716
    %v728 = vadd.f32 %v628, %v718
    %v729 = vadd.f32 %v629, %v720
    %v730 = vadd.f32 %v630, %v722
    %v731 = vld [vmem:[#allocation2 + $0x1] sm:$0xff]
    %v732 = vld [vmem:[#allocation2 + $0x9] sm:$0xff]
    %v733 = vld [vmem:[#allocation2 + $0x61] sm:$0xff]
    %v734 = vld [vmem:[#allocation2 + $0x69] sm:$0xff]
    %v735 = vstv %s272
    %v736 = vmul.f32 %v735, %v731
    %v737 = vmul.f32 %v735, %v732
    %v738 = vmul.f32 %v735, %v733
    %v739 = vmul.f32 %v735, %v734
    %v740 = vadd.f32 %v652, %v736
    %v741 = vadd.f32 %v653, %v737
    %v742 = vadd.f32 %v654, %v738
    %v743 = vadd.f32 %v655, %v739
    %v744 = vstv %s274
    %v745 = vmul.f32 %v744, %v731
    %v746 = vmul.f32 %v744, %v732
    %v747 = vmul.f32 %v744, %v733
    %v748 = vmul.f32 %v744, %v734
    %v749 = vadd.f32 %v677, %v745
    %v750 = vadd.f32 %v678, %v746
    %v751 = vadd.f32 %v679, %v747
    %v752 = vadd.f32 %v680, %v748
    %v753 = vstv %s276
    %v754 = vmul.f32 %v753, %v731
    %v755 = vmul.f32 %v753, %v732
    %v756 = vmul.f32 %v753, %v733
    %v757 = vmul.f32 %v753, %v734
    %v758 = vadd.f32 %v702, %v754
    %v759 = vadd.f32 %v703, %v755
    %v760 = vadd.f32 %v704, %v756
    %v761 = vadd.f32 %v705, %v757
    %v762 = vstv %s278
    %v763 = vmul.f32 %v762, %v731
    %v764 = vmul.f32 %v762, %v732
    %v765 = vmul.f32 %v762, %v733
    %v766 = vmul.f32 %v762, %v734
    %v767 = vadd.f32 %v727, %v763
    %v768 = vadd.f32 %v728, %v764
    %v769 = vadd.f32 %v729, %v765
    %v770 = vadd.f32 %v730, %v766
    %v771 = vstv %s304
    %v772 = vmul.f32 %v771, %v731
    %v773 = vmul.f32 %v771, %v732
    %v774 = vmul.f32 %v771, %v733
    %v775 = vmul.f32 %v771, %v734
    %780 = vrot.lane.b32.xlu0 %v772, 127
    %v781 = vpop.permute.xlu0 %780
    %782 = vrot.lane.b32.xlu0 %v773, 127
    %v783 = vpop.permute.xlu0 %782
    %784 = vrot.lane.b32.xlu0 %v774, 127
    %v785 = vpop.permute.xlu0 %784
    %786 = vrot.lane.b32.xlu0 %v775, 127
    %v787 = vpop.permute.xlu0 %786
    %v792 = vadd.f32 %v740, %v781
    %v793 = vadd.f32 %v741, %v783
    %v794 = vadd.f32 %v742, %v785
    %v795 = vadd.f32 %v743, %v787
    %v796 = vstv %s306
    %v797 = vmul.f32 %v796, %v731
    %v798 = vmul.f32 %v796, %v732
    %v799 = vmul.f32 %v796, %v733
    %v800 = vmul.f32 %v796, %v734
    %805 = vrot.lane.b32.xlu0 %v797, 127
    %v806 = vpop.permute.xlu0 %805
    %807 = vrot.lane.b32.xlu0 %v798, 127
    %v808 = vpop.permute.xlu0 %807
    %809 = vrot.lane.b32.xlu0 %v799, 127
    %v810 = vpop.permute.xlu0 %809
    %811 = vrot.lane.b32.xlu0 %v800, 127
    %v812 = vpop.permute.xlu0 %811
    %v817 = vadd.f32 %v749, %v806
    %v818 = vadd.f32 %v750, %v808
    %v819 = vadd.f32 %v751, %v810
    %v820 = vadd.f32 %v752, %v812
    %v821 = vstv %s308
    %v822 = vmul.f32 %v821, %v731
    %v823 = vmul.f32 %v821, %v732
    %v824 = vmul.f32 %v821, %v733
    %v825 = vmul.f32 %v821, %v734
    %830 = vrot.lane.b32.xlu0 %v822, 127
    %v831 = vpop.permute.xlu0 %830
    %832 = vrot.lane.b32.xlu0 %v823, 127
    %v833 = vpop.permute.xlu0 %832
    %834 = vrot.lane.b32.xlu0 %v824, 127
    %v835 = vpop.permute.xlu0 %834
    %836 = vrot.lane.b32.xlu0 %v825, 127
    %v837 = vpop.permute.xlu0 %836
    %v842 = vadd.f32 %v758, %v831
    %v843 = vadd.f32 %v759, %v833
    %v844 = vadd.f32 %v760, %v835
    %v845 = vadd.f32 %v761, %v837
    %v846 = vstv %s310
    %v847 = vmul.f32 %v846, %v731
    %v848 = vmul.f32 %v846, %v732
    %v849 = vmul.f32 %v846, %v733
    %v850 = vmul.f32 %v846, %v734
    %855 = vrot.lane.b32.xlu0 %v847, 127
    %v856 = vpop.permute.xlu0 %855
    %857 = vrot.lane.b32.xlu0 %v848, 127
    %v858 = vpop.permute.xlu0 %857
    %859 = vrot.lane.b32.xlu0 %v849, 127
    %v860 = vpop.permute.xlu0 %859
    %861 = vrot.lane.b32.xlu0 %v850, 127
    %v862 = vpop.permute.xlu0 %861
    %v867 = vadd.f32 %v767, %v856
    %v868 = vadd.f32 %v768, %v858
    %v869 = vadd.f32 %v769, %v860
    %v870 = vadd.f32 %v770, %v862
    %v871 = vstv %s336
    %v872 = vmul.f32 %v871, %v731
    %v873 = vmul.f32 %v871, %v732
    %v874 = vmul.f32 %v871, %v733
    %v875 = vmul.f32 %v871, %v734
    %880 = vrot.lane.b32.xlu0 %v872, 126
    %v881 = vpop.permute.xlu0 %880
    %882 = vrot.lane.b32.xlu0 %v873, 126
    %v883 = vpop.permute.xlu0 %882
    %884 = vrot.lane.b32.xlu0 %v874, 126
    %v885 = vpop.permute.xlu0 %884
    %886 = vrot.lane.b32.xlu0 %v875, 126
    %v887 = vpop.permute.xlu0 %886
    %v892 = vadd.f32 %v792, %v881
    %v893 = vadd.f32 %v793, %v883
    %v894 = vadd.f32 %v794, %v885
    %v895 = vadd.f32 %v795, %v887
    %v896 = vstv %s338
    %v897 = vmul.f32 %v896, %v731
    %v898 = vmul.f32 %v896, %v732
    %v899 = vmul.f32 %v896, %v733
    %v900 = vmul.f32 %v896, %v734
    %905 = vrot.lane.b32.xlu0 %v897, 126
    %v906 = vpop.permute.xlu0 %905
    %907 = vrot.lane.b32.xlu0 %v898, 126
    %v908 = vpop.permute.xlu0 %907
    %909 = vrot.lane.b32.xlu0 %v899, 126
    %v910 = vpop.permute.xlu0 %909
    %911 = vrot.lane.b32.xlu0 %v900, 126
    %v912 = vpop.permute.xlu0 %911
    %v917 = vadd.f32 %v817, %v906
    %v918 = vadd.f32 %v818, %v908
    %v919 = vadd.f32 %v819, %v910
    %v920 = vadd.f32 %v820, %v912
    %v921 = vstv %s340
    %v922 = vmul.f32 %v921, %v731
    %v923 = vmul.f32 %v921, %v732
    %v924 = vmul.f32 %v921, %v733
    %v925 = vmul.f32 %v921, %v734
    %930 = vrot.lane.b32.xlu0 %v922, 126
    %v931 = vpop.permute.xlu0 %930
    %932 = vrot.lane.b32.xlu0 %v923, 126
    %v933 = vpop.permute.xlu0 %932
    %934 = vrot.lane.b32.xlu0 %v924, 126
    %v935 = vpop.permute.xlu0 %934
    %936 = vrot.lane.b32.xlu0 %v925, 126
    %v937 = vpop.permute.xlu0 %936
    %v942 = vadd.f32 %v842, %v931
    %v943 = vadd.f32 %v843, %v933
    %v944 = vadd.f32 %v844, %v935
    %v945 = vadd.f32 %v845, %v937
    %v946 = vstv %s342
    %v947 = vmul.f32 %v946, %v731
    %v948 = vmul.f32 %v946, %v732
    %v949 = vmul.f32 %v946, %v733
    %v950 = vmul.f32 %v946, %v734
    %955 = vrot.lane.b32.xlu0 %v947, 126
    %v956 = vpop.permute.xlu0 %955
    %957 = vrot.lane.b32.xlu0 %v948, 126
    %v958 = vpop.permute.xlu0 %957
    %959 = vrot.lane.b32.xlu0 %v949, 126
    %v960 = vpop.permute.xlu0 %959
    %961 = vrot.lane.b32.xlu0 %v950, 126
    %v962 = vpop.permute.xlu0 %961
    %v967 = vadd.f32 %v867, %v956
    %v968 = vadd.f32 %v868, %v958
    %v969 = vadd.f32 %v869, %v960
    %v970 = vadd.f32 %v870, %v962
    %v971 = vld [vmem:[#allocation2 + $0x2] sm:$0xff]
    %v972 = vld [vmem:[#allocation2 + $0xa] sm:$0xff]
    %v973 = vld [vmem:[#allocation2 + $0x62] sm:$0xff]
    %v974 = vld [vmem:[#allocation2 + $0x6a] sm:$0xff]
    %v975 = vstv %s368
    %v976 = vmul.f32 %v975, %v971
    %v977 = vmul.f32 %v975, %v972
    %v978 = vmul.f32 %v975, %v973
    %v979 = vmul.f32 %v975, %v974
    %v980 = vadd.f32 %v892, %v976
    %v981 = vadd.f32 %v893, %v977
    %v982 = vadd.f32 %v894, %v978
    %v983 = vadd.f32 %v895, %v979
    %v984 = vstv %s370
    %v985 = vmul.f32 %v984, %v971
    %v986 = vmul.f32 %v984, %v972
    %v987 = vmul.f32 %v984, %v973
    %v988 = vmul.f32 %v984, %v974
    %v989 = vadd.f32 %v917, %v985
    %v990 = vadd.f32 %v918, %v986
    %v991 = vadd.f32 %v919, %v987
    %v992 = vadd.f32 %v920, %v988
    %v993 = vstv %s372
    %v994 = vmul.f32 %v993, %v971
    %v995 = vmul.f32 %v993, %v972
    %v996 = vmul.f32 %v993, %v973
    %v997 = vmul.f32 %v993, %v974
    %v998 = vadd.f32 %v942, %v994
    %v999 = vadd.f32 %v943, %v995
    %v1000 = vadd.f32 %v944, %v996
    %v1001 = vadd.f32 %v945, %v997
    %v1002 = vstv %s374
    %v1003 = vmul.f32 %v1002, %v971
    %v1004 = vmul.f32 %v1002, %v972
    %v1005 = vmul.f32 %v1002, %v973
    %v1006 = vmul.f32 %v1002, %v974
    %v1007 = vadd.f32 %v967, %v1003
    %v1008 = vadd.f32 %v968, %v1004
    %v1009 = vadd.f32 %v969, %v1005
    %v1010 = vadd.f32 %v970, %v1006
    %v1011 = vstv %s400
    %v1012 = vmul.f32 %v1011, %v971
    %v1013 = vmul.f32 %v1011, %v972
    %v1014 = vmul.f32 %v1011, %v973
    %v1015 = vmul.f32 %v1011, %v974
    %1020 = vrot.lane.b32.xlu0 %v1012, 127
    %v1021 = vpop.permute.xlu0 %1020
    %1022 = vrot.lane.b32.xlu0 %v1013, 127
    %v1023 = vpop.permute.xlu0 %1022
    %1024 = vrot.lane.b32.xlu0 %v1014, 127
    %v1025 = vpop.permute.xlu0 %1024
    %1026 = vrot.lane.b32.xlu0 %v1015, 127
    %v1027 = vpop.permute.xlu0 %1026
    %v1032 = vadd.f32 %v980, %v1021
    %v1033 = vadd.f32 %v981, %v1023
    %v1034 = vadd.f32 %v982, %v1025
    %v1035 = vadd.f32 %v983, %v1027
    %v1036 = vstv %s402
    %v1037 = vmul.f32 %v1036, %v971
    %v1038 = vmul.f32 %v1036, %v972
    %v1039 = vmul.f32 %v1036, %v973
    %v1040 = vmul.f32 %v1036, %v974
    %1045 = vrot.lane.b32.xlu0 %v1037, 127
    %v1046 = vpop.permute.xlu0 %1045
    %1047 = vrot.lane.b32.xlu0 %v1038, 127
    %v1048 = vpop.permute.xlu0 %1047
    %1049 = vrot.lane.b32.xlu0 %v1039, 127
    %v1050 = vpop.permute.xlu0 %1049
    %1051 = vrot.lane.b32.xlu0 %v1040, 127
    %v1052 = vpop.permute.xlu0 %1051
    %v1057 = vadd.f32 %v989, %v1046
    %v1058 = vadd.f32 %v990, %v1048
    %v1059 = vadd.f32 %v991, %v1050
    %v1060 = vadd.f32 %v992, %v1052
    %v1061 = vstv %s404
    %v1062 = vmul.f32 %v1061, %v971
    %v1063 = vmul.f32 %v1061, %v972
    %v1064 = vmul.f32 %v1061, %v973
    %v1065 = vmul.f32 %v1061, %v974
    %1070 = vrot.lane.b32.xlu0 %v1062, 127
    %v1071 = vpop.permute.xlu0 %1070
    %1072 = vrot.lane.b32.xlu0 %v1063, 127
    %v1073 = vpop.permute.xlu0 %1072
    %1074 = vrot.lane.b32.xlu0 %v1064, 127
    %v1075 = vpop.permute.xlu0 %1074
    %1076 = vrot.lane.b32.xlu0 %v1065, 127
    %v1077 = vpop.permute.xlu0 %1076
    %v1082 = vadd.f32 %v998, %v1071
    %v1083 = vadd.f32 %v999, %v1073
    %v1084 = vadd.f32 %v1000, %v1075
    %v1085 = vadd.f32 %v1001, %v1077
    %v1086 = vstv %s406
    %v1087 = vmul.f32 %v1086, %v971
    %v1088 = vmul.f32 %v1086, %v972
    %v1089 = vmul.f32 %v1086, %v973
    %v1090 = vmul.f32 %v1086, %v974
    %1095 = vrot.lane.b32.xlu0 %v1087, 127
    %v1096 = vpop.permute.xlu0 %1095
    %1097 = vrot.lane.b32.xlu0 %v1088, 127
    %v1098 = vpop.permute.xlu0 %1097
    %1099 = vrot.lane.b32.xlu0 %v1089, 127
    %v1100 = vpop.permute.xlu0 %1099
    %1101 = vrot.lane.b32.xlu0 %v1090, 127
    %v1102 = vpop.permute.xlu0 %1101
    %v1107 = vadd.f32 %v1007, %v1096
    %v1108 = vadd.f32 %v1008, %v1098
    %v1109 = vadd.f32 %v1009, %v1100
    %v1110 = vadd.f32 %v1010, %v1102
    %v1111 = vstv %s432
    %v1112 = vmul.f32 %v1111, %v971
    %v1113 = vmul.f32 %v1111, %v972
    %v1114 = vmul.f32 %v1111, %v973
    %v1115 = vmul.f32 %v1111, %v974
    %1120 = vrot.lane.b32.xlu0 %v1112, 126
    %v1121 = vpop.permute.xlu0 %1120
    %1122 = vrot.lane.b32.xlu0 %v1113, 126
    %v1123 = vpop.permute.xlu0 %1122
    %1124 = vrot.lane.b32.xlu0 %v1114, 126
    %v1125 = vpop.permute.xlu0 %1124
    %1126 = vrot.lane.b32.xlu0 %v1115, 126
    %v1127 = vpop.permute.xlu0 %1126
    %v1132 = vadd.f32 %v1032, %v1121
    %v1133 = vadd.f32 %v1033, %v1123
    %v1134 = vadd.f32 %v1034, %v1125
    %v1135 = vadd.f32 %v1035, %v1127
    %v1136 = vstv %s434
    %v1137 = vmul.f32 %v1136, %v971
    %v1138 = vmul.f32 %v1136, %v972
    %v1139 = vmul.f32 %v1136, %v973
    %v1140 = vmul.f32 %v1136, %v974
    %1145 = vrot.lane.b32.xlu0 %v1137, 126
    %v1146 = vpop.permute.xlu0 %1145
    %1147 = vrot.lane.b32.xlu0 %v1138, 126
    %v1148 = vpop.permute.xlu0 %1147
    %1149 = vrot.lane.b32.xlu0 %v1139, 126
    %v1150 = vpop.permute.xlu0 %1149
    %1151 = vrot.lane.b32.xlu0 %v1140, 126
    %v1152 = vpop.permute.xlu0 %1151
    %v1157 = vadd.f32 %v1057, %v1146
    %v1158 = vadd.f32 %v1058, %v1148
    %v1159 = vadd.f32 %v1059, %v1150
    %v1160 = vadd.f32 %v1060, %v1152
    %v1161 = vstv %s436
    %v1162 = vmul.f32 %v1161, %v971
    %v1163 = vmul.f32 %v1161, %v972
    %v1164 = vmul.f32 %v1161, %v973
    %v1165 = vmul.f32 %v1161, %v974
    %1170 = vrot.lane.b32.xlu0 %v1162, 126
    %v1171 = vpop.permute.xlu0 %1170
    %1172 = vrot.lane.b32.xlu0 %v1163, 126
    %v1173 = vpop.permute.xlu0 %1172
    %1174 = vrot.lane.b32.xlu0 %v1164, 126
    %v1175 = vpop.permute.xlu0 %1174
    %1176 = vrot.lane.b32.xlu0 %v1165, 126
    %v1177 = vpop.permute.xlu0 %1176
    %v1182 = vadd.f32 %v1082, %v1171
    %v1183 = vadd.f32 %v1083, %v1173
    %v1184 = vadd.f32 %v1084, %v1175
    %v1185 = vadd.f32 %v1085, %v1177
    %v1186 = vstv %s438
    %v1187 = vmul.f32 %v1186, %v971
    %v1188 = vmul.f32 %v1186, %v972
    %v1189 = vmul.f32 %v1186, %v973
    %v1190 = vmul.f32 %v1186, %v974
    %1195 = vrot.lane.b32.xlu0 %v1187, 126
    %v1196 = vpop.permute.xlu0 %1195
    %1197 = vrot.lane.b32.xlu0 %v1188, 126
    %v1198 = vpop.permute.xlu0 %1197
    %1199 = vrot.lane.b32.xlu0 %v1189, 126
    %v1200 = vpop.permute.xlu0 %1199
    %1201 = vrot.lane.b32.xlu0 %v1190, 126
    %v1202 = vpop.permute.xlu0 %1201
    %v1207 = vadd.f32 %v1107, %v1196
    %v1208 = vadd.f32 %v1108, %v1198
    %v1209 = vadd.f32 %v1109, %v1200
    %v1210 = vadd.f32 %v1110, %v1202
    %s1211 = scalar_lea.vmem [#allocation2], 24
    %v1212 = vld [vmem:[%s1211] sm:$0xff]
    %v1213 = vld [vmem:[%s1211 + $0x8] sm:$0xff]
    %v1214 = vld [vmem:[%s1211 + $0x60] sm:$0xff]
    %v1215 = vld [vmem:[%s1211 + $0x68] sm:$0xff]
    %v1216 = vstv %s184
    %v1217 = vmul.f32 %v1216, %v1212
    %v1218 = vmul.f32 %v1216, %v1213
    %v1219 = vmul.f32 %v1216, %v1214
    %v1220 = vmul.f32 %v1216, %v1215
    %v1221 = vadd.f32 %v1132, %v1217
    %v1222 = vadd.f32 %v1133, %v1218
    %v1223 = vadd.f32 %v1134, %v1219
    %v1224 = vadd.f32 %v1135, %v1220
    %v1225 = vstv %s186
    %v1226 = vmul.f32 %v1225, %v1212
    %v1227 = vmul.f32 %v1225, %v1213
    %v1228 = vmul.f32 %v1225, %v1214
    %v1229 = vmul.f32 %v1225, %v1215
    %v1230 = vadd.f32 %v1157, %v1226
    %v1231 = vadd.f32 %v1158, %v1227
    %v1232 = vadd.f32 %v1159, %v1228
    %v1233 = vadd.f32 %v1160, %v1229
    %v1234 = vstv %s188
    %v1235 = vmul.f32 %v1234, %v1212
    %v1236 = vmul.f32 %v1234, %v1213
    %v1237 = vmul.f32 %v1234, %v1214
    %v1238 = vmul.f32 %v1234, %v1215
    %v1239 = vadd.f32 %v1182, %v1235
    %v1240 = vadd.f32 %v1183, %v1236
    %v1241 = vadd.f32 %v1184, %v1237
    %v1242 = vadd.f32 %v1185, %v1238
    %v1243 = vstv %s190
    %v1244 = vmul.f32 %v1243, %v1212
    %v1245 = vmul.f32 %v1243, %v1213
    %v1246 = vmul.f32 %v1243, %v1214
    %v1247 = vmul.f32 %v1243, %v1215
    %v1248 = vadd.f32 %v1207, %v1244
    %v1249 = vadd.f32 %v1208, %v1245
    %v1250 = vadd.f32 %v1209, %v1246
    %v1251 = vadd.f32 %v1210, %v1247
    %v1252 = vstv %s216
    %v1253 = vmul.f32 %v1252, %v1212
    %v1254 = vmul.f32 %v1252, %v1213
    %v1255 = vmul.f32 %v1252, %v1214
    %v1256 = vmul.f32 %v1252, %v1215
    %1261 = vrot.lane.b32.xlu0 %v1253, 127
    %v1262 = vpop.permute.xlu0 %1261
    %1263 = vrot.lane.b32.xlu0 %v1254, 127
    %v1264 = vpop.permute.xlu0 %1263
    %1265 = vrot.lane.b32.xlu0 %v1255, 127
    %v1266 = vpop.permute.xlu0 %1265
    %1267 = vrot.lane.b32.xlu0 %v1256, 127
    %v1268 = vpop.permute.xlu0 %1267
    %v1273 = vadd.f32 %v1221, %v1262
    %v1274 = vadd.f32 %v1222, %v1264
    %v1275 = vadd.f32 %v1223, %v1266
    %v1276 = vadd.f32 %v1224, %v1268
    %v1277 = vstv %s218
    %v1278 = vmul.f32 %v1277, %v1212
    %v1279 = vmul.f32 %v1277, %v1213
    %v1280 = vmul.f32 %v1277, %v1214
    %v1281 = vmul.f32 %v1277, %v1215
    %1286 = vrot.lane.b32.xlu0 %v1278, 127
    %v1287 = vpop.permute.xlu0 %1286
    %1288 = vrot.lane.b32.xlu0 %v1279, 127
    %v1289 = vpop.permute.xlu0 %1288
    %1290 = vrot.lane.b32.xlu0 %v1280, 127
    %v1291 = vpop.permute.xlu0 %1290
    %1292 = vrot.lane.b32.xlu0 %v1281, 127
    %v1293 = vpop.permute.xlu0 %1292
    %v1298 = vadd.f32 %v1230, %v1287
    %v1299 = vadd.f32 %v1231, %v1289
    %v1300 = vadd.f32 %v1232, %v1291
    %v1301 = vadd.f32 %v1233, %v1293
    %v1302 = vstv %s220
    %v1303 = vmul.f32 %v1302, %v1212
    %v1304 = vmul.f32 %v1302, %v1213
    %v1305 = vmul.f32 %v1302, %v1214
    %v1306 = vmul.f32 %v1302, %v1215
    %1311 = vrot.lane.b32.xlu0 %v1303, 127
    %v1312 = vpop.permute.xlu0 %1311
    %1313 = vrot.lane.b32.xlu0 %v1304, 127
    %v1314 = vpop.permute.xlu0 %1313
    %1315 = vrot.lane.b32.xlu0 %v1305, 127
    %v1316 = vpop.permute.xlu0 %1315
    %1317 = vrot.lane.b32.xlu0 %v1306, 127
    %v1318 = vpop.permute.xlu0 %1317
    %v1323 = vadd.f32 %v1239, %v1312
    %v1324 = vadd.f32 %v1240, %v1314
    %v1325 = vadd.f32 %v1241, %v1316
    %v1326 = vadd.f32 %v1242, %v1318
    %v1327 = vstv %s222
    %v1328 = vmul.f32 %v1327, %v1212
    %v1329 = vmul.f32 %v1327, %v1213
    %v1330 = vmul.f32 %v1327, %v1214
    %v1331 = vmul.f32 %v1327, %v1215
    %1336 = vrot.lane.b32.xlu0 %v1328, 127
    %v1337 = vpop.permute.xlu0 %1336
    %1338 = vrot.lane.b32.xlu0 %v1329, 127
    %v1339 = vpop.permute.xlu0 %1338
    %1340 = vrot.lane.b32.xlu0 %v1330, 127
    %v1341 = vpop.permute.xlu0 %1340
    %1342 = vrot.lane.b32.xlu0 %v1331, 127
    %v1343 = vpop.permute.xlu0 %1342
    %v1348 = vadd.f32 %v1248, %v1337
    %v1349 = vadd.f32 %v1249, %v1339
    %v1350 = vadd.f32 %v1250, %v1341
    %v1351 = vadd.f32 %v1251, %v1343
    %v1352 = vstv %s248
    %v1353 = vmul.f32 %v1352, %v1212
    %v1354 = vmul.f32 %v1352, %v1213
    %v1355 = vmul.f32 %v1352, %v1214
    %v1356 = vmul.f32 %v1352, %v1215
    %1361 = vrot.lane.b32.xlu0 %v1353, 126
    %v1362 = vpop.permute.xlu0 %1361
    %1363 = vrot.lane.b32.xlu0 %v1354, 126
    %v1364 = vpop.permute.xlu0 %1363
    %1365 = vrot.lane.b32.xlu0 %v1355, 126
    %v1366 = vpop.permute.xlu0 %1365
    %1367 = vrot.lane.b32.xlu0 %v1356, 126
    %v1368 = vpop.permute.xlu0 %1367
    %v1373 = vadd.f32 %v1273, %v1362
    %v1374 = vadd.f32 %v1274, %v1364
    %v1375 = vadd.f32 %v1275, %v1366
    %v1376 = vadd.f32 %v1276, %v1368
    %v1377 = vstv %s250
    %v1378 = vmul.f32 %v1377, %v1212
    %v1379 = vmul.f32 %v1377, %v1213
    %v1380 = vmul.f32 %v1377, %v1214
    %v1381 = vmul.f32 %v1377, %v1215
    %1386 = vrot.lane.b32.xlu0 %v1378, 126
    %v1387 = vpop.permute.xlu0 %1386
    %1388 = vrot.lane.b32.xlu0 %v1379, 126
    %v1389 = vpop.permute.xlu0 %1388
    %1390 = vrot.lane.b32.xlu0 %v1380, 126
    %v1391 = vpop.permute.xlu0 %1390
    %1392 = vrot.lane.b32.xlu0 %v1381, 126
    %v1393 = vpop.permute.xlu0 %1392
    %v1398 = vadd.f32 %v1298, %v1387
    %v1399 = vadd.f32 %v1299, %v1389
    %v1400 = vadd.f32 %v1300, %v1391
    %v1401 = vadd.f32 %v1301, %v1393
    %v1402 = vstv %s252
    %v1403 = vmul.f32 %v1402, %v1212
    %v1404 = vmul.f32 %v1402, %v1213
    %v1405 = vmul.f32 %v1402, %v1214
    %v1406 = vmul.f32 %v1402, %v1215
    %1411 = vrot.lane.b32.xlu0 %v1403, 126
    %v1412 = vpop.permute.xlu0 %1411
    %1413 = vrot.lane.b32.xlu0 %v1404, 126
    %v1414 = vpop.permute.xlu0 %1413
    %1415 = vrot.lane.b32.xlu0 %v1405, 126
    %v1416 = vpop.permute.xlu0 %1415
    %1417 = vrot.lane.b32.xlu0 %v1406, 126
    %v1418 = vpop.permute.xlu0 %1417
    %v1423 = vadd.f32 %v1323, %v1412
    %v1424 = vadd.f32 %v1324, %v1414
    %v1425 = vadd.f32 %v1325, %v1416
    %v1426 = vadd.f32 %v1326, %v1418
    %v1427 = vstv %s254
    %v1428 = vmul.f32 %v1427, %v1212
    %v1429 = vmul.f32 %v1427, %v1213
    %v1430 = vmul.f32 %v1427, %v1214
    %v1431 = vmul.f32 %v1427, %v1215
    %1436 = vrot.lane.b32.xlu0 %v1428, 126
    %v1437 = vpop.permute.xlu0 %1436
    %1438 = vrot.lane.b32.xlu0 %v1429, 126
    %v1439 = vpop.permute.xlu0 %1438
    %1440 = vrot.lane.b32.xlu0 %v1430, 126
    %v1441 = vpop.permute.xlu0 %1440
    %1442 = vrot.lane.b32.xlu0 %v1431, 126
    %v1443 = vpop.permute.xlu0 %1442
    %v1448 = vadd.f32 %v1348, %v1437
    %v1449 = vadd.f32 %v1349, %v1439
    %v1450 = vadd.f32 %v1350, %v1441
    %v1451 = vadd.f32 %v1351, %v1443
    %v1452 = vld [vmem:[%s1211 + $0x1] sm:$0xff]
    %v1453 = vld [vmem:[%s1211 + $0x9] sm:$0xff]
    %v1454 = vld [vmem:[%s1211 + $0x61] sm:$0xff]
    %v1455 = vld [vmem:[%s1211 + $0x69] sm:$0xff]
    %v1456 = vstv %s280
    %v1457 = vmul.f32 %v1456, %v1452
    %v1458 = vmul.f32 %v1456, %v1453
    %v1459 = vmul.f32 %v1456, %v1454
    %v1460 = vmul.f32 %v1456, %v1455
    %v1461 = vadd.f32 %v1373, %v1457
    %v1462 = vadd.f32 %v1374, %v1458
    %v1463 = vadd.f32 %v1375, %v1459
    %v1464 = vadd.f32 %v1376, %v1460
    %v1465 = vstv %s282
    %v1466 = vmul.f32 %v1465, %v1452
    %v1467 = vmul.f32 %v1465, %v1453
    %v1468 = vmul.f32 %v1465, %v1454
    %v1469 = vmul.f32 %v1465, %v1455
    %v1470 = vadd.f32 %v1398, %v1466
    %v1471 = vadd.f32 %v1399, %v1467
    %v1472 = vadd.f32 %v1400, %v1468
    %v1473 = vadd.f32 %v1401, %v1469
    %v1474 = vstv %s284
    %v1475 = vmul.f32 %v1474, %v1452
    %v1476 = vmul.f32 %v1474, %v1453
    %v1477 = vmul.f32 %v1474, %v1454
    %v1478 = vmul.f32 %v1474, %v1455
    %v1479 = vadd.f32 %v1423, %v1475
    %v1480 = vadd.f32 %v1424, %v1476
    %v1481 = vadd.f32 %v1425, %v1477
    %v1482 = vadd.f32 %v1426, %v1478
    %v1483 = vstv %s286
    %v1484 = vmul.f32 %v1483, %v1452
    %v1485 = vmul.f32 %v1483, %v1453
    %v1486 = vmul.f32 %v1483, %v1454
    %v1487 = vmul.f32 %v1483, %v1455
    %v1488 = vadd.f32 %v1448, %v1484
    %v1489 = vadd.f32 %v1449, %v1485
    %v1490 = vadd.f32 %v1450, %v1486
    %v1491 = vadd.f32 %v1451, %v1487
    %v1492 = vstv %s312
    %v1493 = vmul.f32 %v1492, %v1452
    %v1494 = vmul.f32 %v1492, %v1453
    %v1495 = vmul.f32 %v1492, %v1454
    %v1496 = vmul.f32 %v1492, %v1455
    %1501 = vrot.lane.b32.xlu0 %v1493, 127
    %v1502 = vpop.permute.xlu0 %1501
    %1503 = vrot.lane.b32.xlu0 %v1494, 127
    %v1504 = vpop.permute.xlu0 %1503
    %1505 = vrot.lane.b32.xlu0 %v1495, 127
    %v1506 = vpop.permute.xlu0 %1505
    %1507 = vrot.lane.b32.xlu0 %v1496, 127
    %v1508 = vpop.permute.xlu0 %1507
    %v1513 = vadd.f32 %v1461, %v1502
    %v1514 = vadd.f32 %v1462, %v1504
    %v1515 = vadd.f32 %v1463, %v1506
    %v1516 = vadd.f32 %v1464, %v1508
    %v1517 = vstv %s314
    %v1518 = vmul.f32 %v1517, %v1452
    %v1519 = vmul.f32 %v1517, %v1453
    %v1520 = vmul.f32 %v1517, %v1454
    %v1521 = vmul.f32 %v1517, %v1455
    %1526 = vrot.lane.b32.xlu0 %v1518, 127
    %v1527 = vpop.permute.xlu0 %1526
    %1528 = vrot.lane.b32.xlu0 %v1519, 127
    %v1529 = vpop.permute.xlu0 %1528
    %1530 = vrot.lane.b32.xlu0 %v1520, 127
    %v1531 = vpop.permute.xlu0 %1530
    %1532 = vrot.lane.b32.xlu0 %v1521, 127
    %v1533 = vpop.permute.xlu0 %1532
    %v1538 = vadd.f32 %v1470, %v1527
    %v1539 = vadd.f32 %v1471, %v1529
    %v1540 = vadd.f32 %v1472, %v1531
    %v1541 = vadd.f32 %v1473, %v1533
    %v1542 = vstv %s316
    %v1543 = vmul.f32 %v1542, %v1452
    %v1544 = vmul.f32 %v1542, %v1453
    %v1545 = vmul.f32 %v1542, %v1454
    %v1546 = vmul.f32 %v1542, %v1455
    %1551 = vrot.lane.b32.xlu0 %v1543, 127
    %v1552 = vpop.permute.xlu0 %1551
    %1553 = vrot.lane.b32.xlu0 %v1544, 127
    %v1554 = vpop.permute.xlu0 %1553
    %1555 = vrot.lane.b32.xlu0 %v1545, 127
    %v1556 = vpop.permute.xlu0 %1555
    %1557 = vrot.lane.b32.xlu0 %v1546, 127
    %v1558 = vpop.permute.xlu0 %1557
    %v1563 = vadd.f32 %v1479, %v1552
    %v1564 = vadd.f32 %v1480, %v1554
    %v1565 = vadd.f32 %v1481, %v1556
    %v1566 = vadd.f32 %v1482, %v1558
    %v1567 = vstv %s318
    %v1568 = vmul.f32 %v1567, %v1452
    %v1569 = vmul.f32 %v1567, %v1453
    %v1570 = vmul.f32 %v1567, %v1454
    %v1571 = vmul.f32 %v1567, %v1455
    %1576 = vrot.lane.b32.xlu0 %v1568, 127
    %v1577 = vpop.permute.xlu0 %1576
    %1578 = vrot.lane.b32.xlu0 %v1569, 127
    %v1579 = vpop.permute.xlu0 %1578
    %1580 = vrot.lane.b32.xlu0 %v1570, 127
    %v1581 = vpop.permute.xlu0 %1580
    %1582 = vrot.lane.b32.xlu0 %v1571, 127
    %v1583 = vpop.permute.xlu0 %1582
    %v1588 = vadd.f32 %v1488, %v1577
    %v1589 = vadd.f32 %v1489, %v1579
    %v1590 = vadd.f32 %v1490, %v1581
    %v1591 = vadd.f32 %v1491, %v1583
    %v1592 = vstv %s344
    %v1593 = vmul.f32 %v1592, %v1452
    %v1594 = vmul.f32 %v1592, %v1453
    %v1595 = vmul.f32 %v1592, %v1454
    %v1596 = vmul.f32 %v1592, %v1455
    %1601 = vrot.lane.b32.xlu0 %v1593, 126
    %v1602 = vpop.permute.xlu0 %1601
    %1603 = vrot.lane.b32.xlu0 %v1594, 126
    %v1604 = vpop.permute.xlu0 %1603
    %1605 = vrot.lane.b32.xlu0 %v1595, 126
    %v1606 = vpop.permute.xlu0 %1605
    %1607 = vrot.lane.b32.xlu0 %v1596, 126
    %v1608 = vpop.permute.xlu0 %1607
    %v1613 = vadd.f32 %v1513, %v1602
    %v1614 = vadd.f32 %v1514, %v1604
    %v1615 = vadd.f32 %v1515, %v1606
    %v1616 = vadd.f32 %v1516, %v1608
    %v1617 = vstv %s346
    %v1618 = vmul.f32 %v1617, %v1452
    %v1619 = vmul.f32 %v1617, %v1453
    %v1620 = vmul.f32 %v1617, %v1454
    %v1621 = vmul.f32 %v1617, %v1455
    %1626 = vrot.lane.b32.xlu0 %v1618, 126
    %v1627 = vpop.permute.xlu0 %1626
    %1628 = vrot.lane.b32.xlu0 %v1619, 126
    %v1629 = vpop.permute.xlu0 %1628
    %1630 = vrot.lane.b32.xlu0 %v1620, 126
    %v1631 = vpop.permute.xlu0 %1630
    %1632 = vrot.lane.b32.xlu0 %v1621, 126
    %v1633 = vpop.permute.xlu0 %1632
    %v1638 = vadd.f32 %v1538, %v1627
    %v1639 = vadd.f32 %v1539, %v1629
    %v1640 = vadd.f32 %v1540, %v1631
    %v1641 = vadd.f32 %v1541, %v1633
    %v1642 = vstv %s348
    %v1643 = vmul.f32 %v1642, %v1452
    %v1644 = vmul.f32 %v1642, %v1453
    %v1645 = vmul.f32 %v1642, %v1454
    %v1646 = vmul.f32 %v1642, %v1455
    %1651 = vrot.lane.b32.xlu0 %v1643, 126
    %v1652 = vpop.permute.xlu0 %1651
    %1653 = vrot.lane.b32.xlu0 %v1644, 126
    %v1654 = vpop.permute.xlu0 %1653
    %1655 = vrot.lane.b32.xlu0 %v1645, 126
    %v1656 = vpop.permute.xlu0 %1655
    %1657 = vrot.lane.b32.xlu0 %v1646, 126
    %v1658 = vpop.permute.xlu0 %1657
    %v1663 = vadd.f32 %v1563, %v1652
    %v1664 = vadd.f32 %v1564, %v1654
    %v1665 = vadd.f32 %v1565, %v1656
    %v1666 = vadd.f32 %v1566, %v1658
    %v1667 = vstv %s350
    %v1668 = vmul.f32 %v1667, %v1452
    %v1669 = vmul.f32 %v1667, %v1453
    %v1670 = vmul.f32 %v1667, %v1454
    %v1671 = vmul.f32 %v1667, %v1455
    %1676 = vrot.lane.b32.xlu0 %v1668, 126
    %v1677 = vpop.permute.xlu0 %1676
    %1678 = vrot.lane.b32.xlu0 %v1669, 126
    %v1679 = vpop.permute.xlu0 %1678
    %1680 = vrot.lane.b32.xlu0 %v1670, 126
    %v1681 = vpop.permute.xlu0 %1680
    %1682 = vrot.lane.b32.xlu0 %v1671, 126
    %v1683 = vpop.permute.xlu0 %1682
    %v1688 = vadd.f32 %v1588, %v1677
    %v1689 = vadd.f32 %v1589, %v1679
    %v1690 = vadd.f32 %v1590, %v1681
    %v1691 = vadd.f32 %v1591, %v1683
    %v1692 = vld [vmem:[%s1211 + $0x2] sm:$0xff]
    %v1693 = vld [vmem:[%s1211 + $0xa] sm:$0xff]
    %v1694 = vld [vmem:[%s1211 + $0x62] sm:$0xff]
    %v1695 = vld [vmem:[%s1211 + $0x6a] sm:$0xff]
    %v1696 = vstv %s376
    %v1697 = vmul.f32 %v1696, %v1692
    %v1698 = vmul.f32 %v1696, %v1693
    %v1699 = vmul.f32 %v1696, %v1694
    %v1700 = vmul.f32 %v1696, %v1695
    %v1701 = vadd.f32 %v1613, %v1697
    %v1702 = vadd.f32 %v1614, %v1698
    %v1703 = vadd.f32 %v1615, %v1699
    %v1704 = vadd.f32 %v1616, %v1700
    %v1705 = vstv %s378
    %v1706 = vmul.f32 %v1705, %v1692
    %v1707 = vmul.f32 %v1705, %v1693
    %v1708 = vmul.f32 %v1705, %v1694
    %v1709 = vmul.f32 %v1705, %v1695
    %v1710 = vadd.f32 %v1638, %v1706
    %v1711 = vadd.f32 %v1639, %v1707
    %v1712 = vadd.f32 %v1640, %v1708
    %v1713 = vadd.f32 %v1641, %v1709
    %v1714 = vstv %s380
    %v1715 = vmul.f32 %v1714, %v1692
    %v1716 = vmul.f32 %v1714, %v1693
    %v1717 = vmul.f32 %v1714, %v1694
    %v1718 = vmul.f32 %v1714, %v1695
    %v1719 = vadd.f32 %v1663, %v1715
    %v1720 = vadd.f32 %v1664, %v1716
    %v1721 = vadd.f32 %v1665, %v1717
    %v1722 = vadd.f32 %v1666, %v1718
    %v1723 = vstv %s382
    %v1724 = vmul.f32 %v1723, %v1692
    %v1725 = vmul.f32 %v1723, %v1693
    %v1726 = vmul.f32 %v1723, %v1694
    %v1727 = vmul.f32 %v1723, %v1695
    %v1728 = vadd.f32 %v1688, %v1724
    %v1729 = vadd.f32 %v1689, %v1725
    %v1730 = vadd.f32 %v1690, %v1726
    %v1731 = vadd.f32 %v1691, %v1727
    %v1732 = vstv %s408
    %v1733 = vmul.f32 %v1732, %v1692
    %v1734 = vmul.f32 %v1732, %v1693
    %v1735 = vmul.f32 %v1732, %v1694
    %v1736 = vmul.f32 %v1732, %v1695
    %1741 = vrot.lane.b32.xlu0 %v1733, 127
    %v1742 = vpop.permute.xlu0 %1741
    %1743 = vrot.lane.b32.xlu0 %v1734, 127
    %v1744 = vpop.permute.xlu0 %1743
    %1745 = vrot.lane.b32.xlu0 %v1735, 127
    %v1746 = vpop.permute.xlu0 %1745
    %1747 = vrot.lane.b32.xlu0 %v1736, 127
    %v1748 = vpop.permute.xlu0 %1747
    %v1753 = vadd.f32 %v1701, %v1742
    %v1754 = vadd.f32 %v1702, %v1744
    %v1755 = vadd.f32 %v1703, %v1746
    %v1756 = vadd.f32 %v1704, %v1748
    %v1757 = vstv %s410
    %v1758 = vmul.f32 %v1757, %v1692
    %v1759 = vmul.f32 %v1757, %v1693
    %v1760 = vmul.f32 %v1757, %v1694
    %v1761 = vmul.f32 %v1757, %v1695
    %1766 = vrot.lane.b32.xlu0 %v1758, 127
    %v1767 = vpop.permute.xlu0 %1766
    %1768 = vrot.lane.b32.xlu0 %v1759, 127
    %v1769 = vpop.permute.xlu0 %1768
    %1770 = vrot.lane.b32.xlu0 %v1760, 127
    %v1771 = vpop.permute.xlu0 %1770
    %1772 = vrot.lane.b32.xlu0 %v1761, 127
    %v1773 = vpop.permute.xlu0 %1772
    %v1778 = vadd.f32 %v1710, %v1767
    %v1779 = vadd.f32 %v1711, %v1769
    %v1780 = vadd.f32 %v1712, %v1771
    %v1781 = vadd.f32 %v1713, %v1773
    %v1782 = vstv %s412
    %v1783 = vmul.f32 %v1782, %v1692
    %v1784 = vmul.f32 %v1782, %v1693
    %v1785 = vmul.f32 %v1782, %v1694
    %v1786 = vmul.f32 %v1782, %v1695
    %1791 = vrot.lane.b32.xlu0 %v1783, 127
    %v1792 = vpop.permute.xlu0 %1791
    %1793 = vrot.lane.b32.xlu0 %v1784, 127
    %v1794 = vpop.permute.xlu0 %1793
    %1795 = vrot.lane.b32.xlu0 %v1785, 127
    %v1796 = vpop.permute.xlu0 %1795
    %1797 = vrot.lane.b32.xlu0 %v1786, 127
    %v1798 = vpop.permute.xlu0 %1797
    %v1803 = vadd.f32 %v1719, %v1792
    %v1804 = vadd.f32 %v1720, %v1794
    %v1805 = vadd.f32 %v1721, %v1796
    %v1806 = vadd.f32 %v1722, %v1798
    %v1807 = vstv %s414
    %v1808 = vmul.f32 %v1807, %v1692
    %v1809 = vmul.f32 %v1807, %v1693
    %v1810 = vmul.f32 %v1807, %v1694
    %v1811 = vmul.f32 %v1807, %v1695
    %1816 = vrot.lane.b32.xlu0 %v1808, 127
    %v1817 = vpop.permute.xlu0 %1816
    %1818 = vrot.lane.b32.xlu0 %v1809, 127
    %v1819 = vpop.permute.xlu0 %1818
    %1820 = vrot.lane.b32.xlu0 %v1810, 127
    %v1821 = vpop.permute.xlu0 %1820
    %1822 = vrot.lane.b32.xlu0 %v1811, 127
    %v1823 = vpop.permute.xlu0 %1822
    %v1828 = vadd.f32 %v1728, %v1817
    %v1829 = vadd.f32 %v1729, %v1819
    %v1830 = vadd.f32 %v1730, %v1821
    %v1831 = vadd.f32 %v1731, %v1823
    %v1832 = vstv %s440
    %v1833 = vmul.f32 %v1832, %v1692
    %v1834 = vmul.f32 %v1832, %v1693
    %v1835 = vmul.f32 %v1832, %v1694
    %v1836 = vmul.f32 %v1832, %v1695
    %1841 = vrot.lane.b32.xlu0 %v1833, 126
    %v1842 = vpop.permute.xlu0 %1841
    %1843 = vrot.lane.b32.xlu0 %v1834, 126
    %v1844 = vpop.permute.xlu0 %1843
    %1845 = vrot.lane.b32.xlu0 %v1835, 126
    %v1846 = vpop.permute.xlu0 %1845
    %1847 = vrot.lane.b32.xlu0 %v1836, 126
    %v1848 = vpop.permute.xlu0 %1847
    %v1853 = vadd.f32 %v1753, %v1842
    %v1854 = vadd.f32 %v1754, %v1844
    %v1855 = vadd.f32 %v1755, %v1846
    %v1856 = vadd.f32 %v1756, %v1848
    %v1857 = vstv %s442
    %v1858 = vmul.f32 %v1857, %v1692
    %v1859 = vmul.f32 %v1857, %v1693
    %v1860 = vmul.f32 %v1857, %v1694
    %v1861 = vmul.f32 %v1857, %v1695
    %1866 = vrot.lane.b32.xlu0 %v1858, 126
    %v1867 = vpop.permute.xlu0 %1866
    %1868 = vrot.lane.b32.xlu0 %v1859, 126
    %v1869 = vpop.permute.xlu0 %1868
    %1870 = vrot.lane.b32.xlu0 %v1860, 126
    %v1871 = vpop.permute.xlu0 %1870
    %1872 = vrot.lane.b32.xlu0 %v1861, 126
    %v1873 = vpop.permute.xlu0 %1872
    %v1878 = vadd.f32 %v1778, %v1867
    %v1879 = vadd.f32 %v1779, %v1869
    %v1880 = vadd.f32 %v1780, %v1871
    %v1881 = vadd.f32 %v1781, %v1873
    %v1882 = vstv %s444
    %v1883 = vmul.f32 %v1882, %v1692
    %v1884 = vmul.f32 %v1882, %v1693
    %v1885 = vmul.f32 %v1882, %v1694
    %v1886 = vmul.f32 %v1882, %v1695
    %1891 = vrot.lane.b32.xlu0 %v1883, 126
    %v1892 = vpop.permute.xlu0 %1891
    %1893 = vrot.lane.b32.xlu0 %v1884, 126
    %v1894 = vpop.permute.xlu0 %1893
    %1895 = vrot.lane.b32.xlu0 %v1885, 126
    %v1896 = vpop.permute.xlu0 %1895
    %1897 = vrot.lane.b32.xlu0 %v1886, 126
    %v1898 = vpop.permute.xlu0 %1897
    %v1903 = vadd.f32 %v1803, %v1892
    %v1904 = vadd.f32 %v1804, %v1894
    %v1905 = vadd.f32 %v1805, %v1896
    %v1906 = vadd.f32 %v1806, %v1898
    %v1907 = vstv %s446
    %v1908 = vmul.f32 %v1907, %v1692
    %v1909 = vmul.f32 %v1907, %v1693
    %v1910 = vmul.f32 %v1907, %v1694
    %v1911 = vmul.f32 %v1907, %v1695
    %1916 = vrot.lane.b32.xlu0 %v1908, 126
    %v1917 = vpop.permute.xlu0 %1916
    %1918 = vrot.lane.b32.xlu0 %v1909, 126
    %v1919 = vpop.permute.xlu0 %1918
    %1920 = vrot.lane.b32.xlu0 %v1910, 126
    %v1921 = vpop.permute.xlu0 %1920
    %1922 = vrot.lane.b32.xlu0 %v1911, 126
    %v1923 = vpop.permute.xlu0 %1922
    %v1928 = vadd.f32 %v1828, %v1917
    %v1929 = vadd.f32 %v1829, %v1919
    %v1930 = vadd.f32 %v1830, %v1921
    %v1931 = vadd.f32 %v1831, %v1923
    %s1932 = scalar_lea.vmem [#allocation2], 48
    %v1933 = vld [vmem:[%s1932] sm:$0xff]
    %v1934 = vld [vmem:[%s1932 + $0x8] sm:$0xff]
    %v1935 = vld [vmem:[%s1932 + $0x60] sm:$0xff]
    %v1936 = vld [vmem:[%s1932 + $0x68] sm:$0xff]
    %v1937 = vstv %s192
    %v1938 = vmul.f32 %v1937, %v1933
    %v1939 = vmul.f32 %v1937, %v1934
    %v1940 = vmul.f32 %v1937, %v1935
    %v1941 = vmul.f32 %v1937, %v1936
    %v1942 = vadd.f32 %v1853, %v1938
    %v1943 = vadd.f32 %v1854, %v1939
    %v1944 = vadd.f32 %v1855, %v1940
    %v1945 = vadd.f32 %v1856, %v1941
    %v1946 = vstv %s194
    %v1947 = vmul.f32 %v1946, %v1933
    %v1948 = vmul.f32 %v1946, %v1934
    %v1949 = vmul.f32 %v1946, %v1935
    %v1950 = vmul.f32 %v1946, %v1936
    %v1951 = vadd.f32 %v1878, %v1947
    %v1952 = vadd.f32 %v1879, %v1948
    %v1953 = vadd.f32 %v1880, %v1949
    %v1954 = vadd.f32 %v1881, %v1950
    %v1955 = vstv %s196
    %v1956 = vmul.f32 %v1955, %v1933
    %v1957 = vmul.f32 %v1955, %v1934
    %v1958 = vmul.f32 %v1955, %v1935
    %v1959 = vmul.f32 %v1955, %v1936
    %v1960 = vadd.f32 %v1903, %v1956
    %v1961 = vadd.f32 %v1904, %v1957
    %v1962 = vadd.f32 %v1905, %v1958
    %v1963 = vadd.f32 %v1906, %v1959
    %v1964 = vstv %s198
    %v1965 = vmul.f32 %v1964, %v1933
    %v1966 = vmul.f32 %v1964, %v1934
    %v1967 = vmul.f32 %v1964, %v1935
    %v1968 = vmul.f32 %v1964, %v1936
    %v1969 = vadd.f32 %v1928, %v1965
    %v1970 = vadd.f32 %v1929, %v1966
    %v1971 = vadd.f32 %v1930, %v1967
    %v1972 = vadd.f32 %v1931, %v1968
    %v1973 = vstv %s224
    %v1974 = vmul.f32 %v1973, %v1933
    %v1975 = vmul.f32 %v1973, %v1934
    %v1976 = vmul.f32 %v1973, %v1935
    %v1977 = vmul.f32 %v1973, %v1936
    %1982 = vrot.lane.b32.xlu0 %v1974, 127
    %v1983 = vpop.permute.xlu0 %1982
    %1984 = vrot.lane.b32.xlu0 %v1975, 127
    %v1985 = vpop.permute.xlu0 %1984
    %1986 = vrot.lane.b32.xlu0 %v1976, 127
    %v1987 = vpop.permute.xlu0 %1986
    %1988 = vrot.lane.b32.xlu0 %v1977, 127
    %v1989 = vpop.permute.xlu0 %1988
    %v1994 = vadd.f32 %v1942, %v1983
    %v1995 = vadd.f32 %v1943, %v1985
    %v1996 = vadd.f32 %v1944, %v1987
    %v1997 = vadd.f32 %v1945, %v1989
    %v1998 = vstv %s226
    %v1999 = vmul.f32 %v1998, %v1933
    %v2000 = vmul.f32 %v1998, %v1934
    %v2001 = vmul.f32 %v1998, %v1935
    %v2002 = vmul.f32 %v1998, %v1936
    %2007 = vrot.lane.b32.xlu0 %v1999, 127
    %v2008 = vpop.permute.xlu0 %2007
    %2009 = vrot.lane.b32.xlu0 %v2000, 127
    %v2010 = vpop.permute.xlu0 %2009
    %2011 = vrot.lane.b32.xlu0 %v2001, 127
    %v2012 = vpop.permute.xlu0 %2011
    %2013 = vrot.lane.b32.xlu0 %v2002, 127
    %v2014 = vpop.permute.xlu0 %2013
    %v2019 = vadd.f32 %v1951, %v2008
    %v2020 = vadd.f32 %v1952, %v2010
    %v2021 = vadd.f32 %v1953, %v2012
    %v2022 = vadd.f32 %v1954, %v2014
    %v2023 = vstv %s228
    %v2024 = vmul.f32 %v2023, %v1933
    %v2025 = vmul.f32 %v2023, %v1934
    %v2026 = vmul.f32 %v2023, %v1935
    %v2027 = vmul.f32 %v2023, %v1936
    %2032 = vrot.lane.b32.xlu0 %v2024, 127
    %v2033 = vpop.permute.xlu0 %2032
    %2034 = vrot.lane.b32.xlu0 %v2025, 127
    %v2035 = vpop.permute.xlu0 %2034
    %2036 = vrot.lane.b32.xlu0 %v2026, 127
    %v2037 = vpop.permute.xlu0 %2036
    %2038 = vrot.lane.b32.xlu0 %v2027, 127
    %v2039 = vpop.permute.xlu0 %2038
    %v2044 = vadd.f32 %v1960, %v2033
    %v2045 = vadd.f32 %v1961, %v2035
    %v2046 = vadd.f32 %v1962, %v2037
    %v2047 = vadd.f32 %v1963, %v2039
    %v2048 = vstv %s230
    %v2049 = vmul.f32 %v2048, %v1933
    %v2050 = vmul.f32 %v2048, %v1934
    %v2051 = vmul.f32 %v2048, %v1935
    %v2052 = vmul.f32 %v2048, %v1936
    %2057 = vrot.lane.b32.xlu0 %v2049, 127
    %v2058 = vpop.permute.xlu0 %2057
    %2059 = vrot.lane.b32.xlu0 %v2050, 127
    %v2060 = vpop.permute.xlu0 %2059
    %2061 = vrot.lane.b32.xlu0 %v2051, 127
    %v2062 = vpop.permute.xlu0 %2061
    %2063 = vrot.lane.b32.xlu0 %v2052, 127
    %v2064 = vpop.permute.xlu0 %2063
    %v2069 = vadd.f32 %v1969, %v2058
    %v2070 = vadd.f32 %v1970, %v2060
    %v2071 = vadd.f32 %v1971, %v2062
    %v2072 = vadd.f32 %v1972, %v2064
    %v2073 = vstv %s256
    %v2074 = vmul.f32 %v2073, %v1933
    %v2075 = vmul.f32 %v2073, %v1934
    %v2076 = vmul.f32 %v2073, %v1935
    %v2077 = vmul.f32 %v2073, %v1936
    %2082 = vrot.lane.b32.xlu0 %v2074, 126
    %v2083 = vpop.permute.xlu0 %2082
    %2084 = vrot.lane.b32.xlu0 %v2075, 126
    %v2085 = vpop.permute.xlu0 %2084
    %2086 = vrot.lane.b32.xlu0 %v2076, 126
    %v2087 = vpop.permute.xlu0 %2086
    %2088 = vrot.lane.b32.xlu0 %v2077, 126
    %v2089 = vpop.permute.xlu0 %2088
    %v2094 = vadd.f32 %v1994, %v2083
    %v2095 = vadd.f32 %v1995, %v2085
    %v2096 = vadd.f32 %v1996, %v2087
    %v2097 = vadd.f32 %v1997, %v2089
    %v2098 = vstv %s258
    %v2099 = vmul.f32 %v2098, %v1933
    %v2100 = vmul.f32 %v2098, %v1934
    %v2101 = vmul.f32 %v2098, %v1935
    %v2102 = vmul.f32 %v2098, %v1936
    %2107 = vrot.lane.b32.xlu0 %v2099, 126
    %v2108 = vpop.permute.xlu0 %2107
    %2109 = vrot.lane.b32.xlu0 %v2100, 126
    %v2110 = vpop.permute.xlu0 %2109
    %2111 = vrot.lane.b32.xlu0 %v2101, 126
    %v2112 = vpop.permute.xlu0 %2111
    %2113 = vrot.lane.b32.xlu0 %v2102, 126
    %v2114 = vpop.permute.xlu0 %2113
    %v2119 = vadd.f32 %v2019, %v2108
    %v2120 = vadd.f32 %v2020, %v2110
    %v2121 = vadd.f32 %v2021, %v2112
    %v2122 = vadd.f32 %v2022, %v2114
    %v2123 = vstv %s260
    %v2124 = vmul.f32 %v2123, %v1933
    %v2125 = vmul.f32 %v2123, %v1934
    %v2126 = vmul.f32 %v2123, %v1935
    %v2127 = vmul.f32 %v2123, %v1936
    %2132 = vrot.lane.b32.xlu0 %v2124, 126
    %v2133 = vpop.permute.xlu0 %2132
    %2134 = vrot.lane.b32.xlu0 %v2125, 126
    %v2135 = vpop.permute.xlu0 %2134
    %2136 = vrot.lane.b32.xlu0 %v2126, 126
    %v2137 = vpop.permute.xlu0 %2136
    %2138 = vrot.lane.b32.xlu0 %v2127, 126
    %v2139 = vpop.permute.xlu0 %2138
    %v2144 = vadd.f32 %v2044, %v2133
    %v2145 = vadd.f32 %v2045, %v2135
    %v2146 = vadd.f32 %v2046, %v2137
    %v2147 = vadd.f32 %v2047, %v2139
    %v2148 = vstv %s262
    %v2149 = vmul.f32 %v2148, %v1933
    %v2150 = vmul.f32 %v2148, %v1934
    %v2151 = vmul.f32 %v2148, %v1935
    %v2152 = vmul.f32 %v2148, %v1936
    %2157 = vrot.lane.b32.xlu0 %v2149, 126
    %v2158 = vpop.permute.xlu0 %2157
    %2159 = vrot.lane.b32.xlu0 %v2150, 126
    %v2160 = vpop.permute.xlu0 %2159
    %2161 = vrot.lane.b32.xlu0 %v2151, 126
    %v2162 = vpop.permute.xlu0 %2161
    %2163 = vrot.lane.b32.xlu0 %v2152, 126
    %v2164 = vpop.permute.xlu0 %2163
    %v2169 = vadd.f32 %v2069, %v2158
    %v2170 = vadd.f32 %v2070, %v2160
    %v2171 = vadd.f32 %v2071, %v2162
    %v2172 = vadd.f32 %v2072, %v2164
    %v2173 = vld [vmem:[%s1932 + $0x1] sm:$0xff]
    %v2174 = vld [vmem:[%s1932 + $0x9] sm:$0xff]
    %v2175 = vld [vmem:[%s1932 + $0x61] sm:$0xff]
    %v2176 = vld [vmem:[%s1932 + $0x69] sm:$0xff]
    %v2177 = vstv %s288
    %v2178 = vmul.f32 %v2177, %v2173
    %v2179 = vmul.f32 %v2177, %v2174
    %v2180 = vmul.f32 %v2177, %v2175
    %v2181 = vmul.f32 %v2177, %v2176
    %v2182 = vadd.f32 %v2094, %v2178
    %v2183 = vadd.f32 %v2095, %v2179
    %v2184 = vadd.f32 %v2096, %v2180
    %v2185 = vadd.f32 %v2097, %v2181
    %v2186 = vstv %s290
    %v2187 = vmul.f32 %v2186, %v2173
    %v2188 = vmul.f32 %v2186, %v2174
    %v2189 = vmul.f32 %v2186, %v2175
    %v2190 = vmul.f32 %v2186, %v2176
    %v2191 = vadd.f32 %v2119, %v2187
    %v2192 = vadd.f32 %v2120, %v2188
    %v2193 = vadd.f32 %v2121, %v2189
    %v2194 = vadd.f32 %v2122, %v2190
    %v2195 = vstv %s292
    %v2196 = vmul.f32 %v2195, %v2173
    %v2197 = vmul.f32 %v2195, %v2174
    %v2198 = vmul.f32 %v2195, %v2175
    %v2199 = vmul.f32 %v2195, %v2176
    %v2200 = vadd.f32 %v2144, %v2196
    %v2201 = vadd.f32 %v2145, %v2197
    %v2202 = vadd.f32 %v2146, %v2198
    %v2203 = vadd.f32 %v2147, %v2199
    %v2204 = vstv %s294
    %v2205 = vmul.f32 %v2204, %v2173
    %v2206 = vmul.f32 %v2204, %v2174
    %v2207 = vmul.f32 %v2204, %v2175
    %v2208 = vmul.f32 %v2204, %v2176
    %v2209 = vadd.f32 %v2169, %v2205
    %v2210 = vadd.f32 %v2170, %v2206
    %v2211 = vadd.f32 %v2171, %v2207
    %v2212 = vadd.f32 %v2172, %v2208
    %v2213 = vstv %s320
    %v2214 = vmul.f32 %v2213, %v2173
    %v2215 = vmul.f32 %v2213, %v2174
    %v2216 = vmul.f32 %v2213, %v2175
    %v2217 = vmul.f32 %v2213, %v2176
    %2222 = vrot.lane.b32.xlu0 %v2214, 127
    %v2223 = vpop.permute.xlu0 %2222
    %2224 = vrot.lane.b32.xlu0 %v2215, 127
    %v2225 = vpop.permute.xlu0 %2224
    %2226 = vrot.lane.b32.xlu0 %v2216, 127
    %v2227 = vpop.permute.xlu0 %2226
    %2228 = vrot.lane.b32.xlu0 %v2217, 127
    %v2229 = vpop.permute.xlu0 %2228
    %v2234 = vadd.f32 %v2182, %v2223
    %v2235 = vadd.f32 %v2183, %v2225
    %v2236 = vadd.f32 %v2184, %v2227
    %v2237 = vadd.f32 %v2185, %v2229
    %v2238 = vstv %s322
    %v2239 = vmul.f32 %v2238, %v2173
    %v2240 = vmul.f32 %v2238, %v2174
    %v2241 = vmul.f32 %v2238, %v2175
    %v2242 = vmul.f32 %v2238, %v2176
    %2247 = vrot.lane.b32.xlu0 %v2239, 127
    %v2248 = vpop.permute.xlu0 %2247
    %2249 = vrot.lane.b32.xlu0 %v2240, 127
    %v2250 = vpop.permute.xlu0 %2249
    %2251 = vrot.lane.b32.xlu0 %v2241, 127
    %v2252 = vpop.permute.xlu0 %2251
    %2253 = vrot.lane.b32.xlu0 %v2242, 127
    %v2254 = vpop.permute.xlu0 %2253
    %v2259 = vadd.f32 %v2191, %v2248
    %v2260 = vadd.f32 %v2192, %v2250
    %v2261 = vadd.f32 %v2193, %v2252
    %v2262 = vadd.f32 %v2194, %v2254
    %v2263 = vstv %s324
    %v2264 = vmul.f32 %v2263, %v2173
    %v2265 = vmul.f32 %v2263, %v2174
    %v2266 = vmul.f32 %v2263, %v2175
    %v2267 = vmul.f32 %v2263, %v2176
    %2272 = vrot.lane.b32.xlu0 %v2264, 127
    %v2273 = vpop.permute.xlu0 %2272
    %2274 = vrot.lane.b32.xlu0 %v2265, 127
    %v2275 = vpop.permute.xlu0 %2274
    %2276 = vrot.lane.b32.xlu0 %v2266, 127
    %v2277 = vpop.permute.xlu0 %2276
    %2278 = vrot.lane.b32.xlu0 %v2267, 127
    %v2279 = vpop.permute.xlu0 %2278
    %v2284 = vadd.f32 %v2200, %v2273
    %v2285 = vadd.f32 %v2201, %v2275
    %v2286 = vadd.f32 %v2202, %v2277
    %v2287 = vadd.f32 %v2203, %v2279
    %v2288 = vstv %s326
    %v2289 = vmul.f32 %v2288, %v2173
    %v2290 = vmul.f32 %v2288, %v2174
    %v2291 = vmul.f32 %v2288, %v2175
    %v2292 = vmul.f32 %v2288, %v2176
    %2297 = vrot.lane.b32.xlu0 %v2289, 127
    %v2298 = vpop.permute.xlu0 %2297
    %2299 = vrot.lane.b32.xlu0 %v2290, 127
    %v2300 = vpop.permute.xlu0 %2299
    %2301 = vrot.lane.b32.xlu0 %v2291, 127
    %v2302 = vpop.permute.xlu0 %2301
    %2303 = vrot.lane.b32.xlu0 %v2292, 127
    %v2304 = vpop.permute.xlu0 %2303
    %v2309 = vadd.f32 %v2209, %v2298
    %v2310 = vadd.f32 %v2210, %v2300
    %v2311 = vadd.f32 %v2211, %v2302
    %v2312 = vadd.f32 %v2212, %v2304
    %v2313 = vstv %s352
    %v2314 = vmul.f32 %v2313, %v2173
    %v2315 = vmul.f32 %v2313, %v2174
    %v2316 = vmul.f32 %v2313, %v2175
    %v2317 = vmul.f32 %v2313, %v2176
    %2322 = vrot.lane.b32.xlu0 %v2314, 126
    %v2323 = vpop.permute.xlu0 %2322
    %2324 = vrot.lane.b32.xlu0 %v2315, 126
    %v2325 = vpop.permute.xlu0 %2324
    %2326 = vrot.lane.b32.xlu0 %v2316, 126
    %v2327 = vpop.permute.xlu0 %2326
    %2328 = vrot.lane.b32.xlu0 %v2317, 126
    %v2329 = vpop.permute.xlu0 %2328
    %v2334 = vadd.f32 %v2234, %v2323
    %v2335 = vadd.f32 %v2235, %v2325
    %v2336 = vadd.f32 %v2236, %v2327
    %v2337 = vadd.f32 %v2237, %v2329
    %v2338 = vstv %s354
    %v2339 = vmul.f32 %v2338, %v2173
    %v2340 = vmul.f32 %v2338, %v2174
    %v2341 = vmul.f32 %v2338, %v2175
    %v2342 = vmul.f32 %v2338, %v2176
    %2347 = vrot.lane.b32.xlu0 %v2339, 126
    %v2348 = vpop.permute.xlu0 %2347
    %2349 = vrot.lane.b32.xlu0 %v2340, 126
    %v2350 = vpop.permute.xlu0 %2349
    %2351 = vrot.lane.b32.xlu0 %v2341, 126
    %v2352 = vpop.permute.xlu0 %2351
    %2353 = vrot.lane.b32.xlu0 %v2342, 126
    %v2354 = vpop.permute.xlu0 %2353
    %v2359 = vadd.f32 %v2259, %v2348
    %v2360 = vadd.f32 %v2260, %v2350
    %v2361 = vadd.f32 %v2261, %v2352
    %v2362 = vadd.f32 %v2262, %v2354
    %v2363 = vstv %s356
    %v2364 = vmul.f32 %v2363, %v2173
    %v2365 = vmul.f32 %v2363, %v2174
    %v2366 = vmul.f32 %v2363, %v2175
    %v2367 = vmul.f32 %v2363, %v2176
    %2372 = vrot.lane.b32.xlu0 %v2364, 126
    %v2373 = vpop.permute.xlu0 %2372
    %2374 = vrot.lane.b32.xlu0 %v2365, 126
    %v2375 = vpop.permute.xlu0 %2374
    %2376 = vrot.lane.b32.xlu0 %v2366, 126
    %v2377 = vpop.permute.xlu0 %2376
    %2378 = vrot.lane.b32.xlu0 %v2367, 126
    %v2379 = vpop.permute.xlu0 %2378
    %v2384 = vadd.f32 %v2284, %v2373
    %v2385 = vadd.f32 %v2285, %v2375
    %v2386 = vadd.f32 %v2286, %v2377
    %v2387 = vadd.f32 %v2287, %v2379
    %v2388 = vstv %s358
    %v2389 = vmul.f32 %v2388, %v2173
    %v2390 = vmul.f32 %v2388, %v2174
    %v2391 = vmul.f32 %v2388, %v2175
    %v2392 = vmul.f32 %v2388, %v2176
    %2397 = vrot.lane.b32.xlu0 %v2389, 126
    %v2398 = vpop.permute.xlu0 %2397
    %2399 = vrot.lane.b32.xlu0 %v2390, 126
    %v2400 = vpop.permute.xlu0 %2399
    %2401 = vrot.lane.b32.xlu0 %v2391, 126
    %v2402 = vpop.permute.xlu0 %2401
    %2403 = vrot.lane.b32.xlu0 %v2392, 126
    %v2404 = vpop.permute.xlu0 %2403
    %v2409 = vadd.f32 %v2309, %v2398
    %v2410 = vadd.f32 %v2310, %v2400
    %v2411 = vadd.f32 %v2311, %v2402
    %v2412 = vadd.f32 %v2312, %v2404
    %v2413 = vld [vmem:[%s1932 + $0x2] sm:$0xff]
    %v2414 = vld [vmem:[%s1932 + $0xa] sm:$0xff]
    %v2415 = vld [vmem:[%s1932 + $0x62] sm:$0xff]
    %v2416 = vld [vmem:[%s1932 + $0x6a] sm:$0xff]
    %v2417 = vstv %s384
    %v2418 = vmul.f32 %v2417, %v2413
    %v2419 = vmul.f32 %v2417, %v2414
    %v2420 = vmul.f32 %v2417, %v2415
    %v2421 = vmul.f32 %v2417, %v2416
    %v2422 = vadd.f32 %v2334, %v2418
    %v2423 = vadd.f32 %v2335, %v2419
    %v2424 = vadd.f32 %v2336, %v2420
    %v2425 = vadd.f32 %v2337, %v2421
    %v2426 = vstv %s386
    %v2427 = vmul.f32 %v2426, %v2413
    %v2428 = vmul.f32 %v2426, %v2414
    %v2429 = vmul.f32 %v2426, %v2415
    %v2430 = vmul.f32 %v2426, %v2416
    %v2431 = vadd.f32 %v2359, %v2427
    %v2432 = vadd.f32 %v2360, %v2428
    %v2433 = vadd.f32 %v2361, %v2429
    %v2434 = vadd.f32 %v2362, %v2430
    %v2435 = vstv %s388
    %v2436 = vmul.f32 %v2435, %v2413
    %v2437 = vmul.f32 %v2435, %v2414
    %v2438 = vmul.f32 %v2435, %v2415
    %v2439 = vmul.f32 %v2435, %v2416
    %v2440 = vadd.f32 %v2384, %v2436
    %v2441 = vadd.f32 %v2385, %v2437
    %v2442 = vadd.f32 %v2386, %v2438
    %v2443 = vadd.f32 %v2387, %v2439
    %v2444 = vstv %s390
    %v2445 = vmul.f32 %v2444, %v2413
    %v2446 = vmul.f32 %v2444, %v2414
    %v2447 = vmul.f32 %v2444, %v2415
    %v2448 = vmul.f32 %v2444, %v2416
    %v2449 = vadd.f32 %v2409, %v2445
    %v2450 = vadd.f32 %v2410, %v2446
    %v2451 = vadd.f32 %v2411, %v2447
    %v2452 = vadd.f32 %v2412, %v2448
    %v2453 = vstv %s416
    %v2454 = vmul.f32 %v2453, %v2413
    %v2455 = vmul.f32 %v2453, %v2414
    %v2456 = vmul.f32 %v2453, %v2415
    %v2457 = vmul.f32 %v2453, %v2416
    %2462 = vrot.lane.b32.xlu0 %v2454, 127
    %v2463 = vpop.permute.xlu0 %2462
    %2464 = vrot.lane.b32.xlu0 %v2455, 127
    %v2465 = vpop.permute.xlu0 %2464
    %2466 = vrot.lane.b32.xlu0 %v2456, 127
    %v2467 = vpop.permute.xlu0 %2466
    %2468 = vrot.lane.b32.xlu0 %v2457, 127
    %v2469 = vpop.permute.xlu0 %2468
    %v2474 = vadd.f32 %v2422, %v2463
    %v2475 = vadd.f32 %v2423, %v2465
    %v2476 = vadd.f32 %v2424, %v2467
    %v2477 = vadd.f32 %v2425, %v2469
    %v2478 = vstv %s418
    %v2479 = vmul.f32 %v2478, %v2413
    %v2480 = vmul.f32 %v2478, %v2414
    %v2481 = vmul.f32 %v2478, %v2415
    %v2482 = vmul.f32 %v2478, %v2416
    %2487 = vrot.lane.b32.xlu0 %v2479, 127
    %v2488 = vpop.permute.xlu0 %2487
    %2489 = vrot.lane.b32.xlu0 %v2480, 127
    %v2490 = vpop.permute.xlu0 %2489
    %2491 = vrot.lane.b32.xlu0 %v2481, 127
    %v2492 = vpop.permute.xlu0 %2491
    %2493 = vrot.lane.b32.xlu0 %v2482, 127
    %v2494 = vpop.permute.xlu0 %2493
    %v2499 = vadd.f32 %v2431, %v2488
    %v2500 = vadd.f32 %v2432, %v2490
    %v2501 = vadd.f32 %v2433, %v2492
    %v2502 = vadd.f32 %v2434, %v2494
    %v2503 = vstv %s420
    %v2504 = vmul.f32 %v2503, %v2413
    %v2505 = vmul.f32 %v2503, %v2414
    %v2506 = vmul.f32 %v2503, %v2415
    %v2507 = vmul.f32 %v2503, %v2416
    %2512 = vrot.lane.b32.xlu0 %v2504, 127
    %v2513 = vpop.permute.xlu0 %2512
    %2514 = vrot.lane.b32.xlu0 %v2505, 127
    %v2515 = vpop.permute.xlu0 %2514
    %2516 = vrot.lane.b32.xlu0 %v2506, 127
    %v2517 = vpop.permute.xlu0 %2516
    %2518 = vrot.lane.b32.xlu0 %v2507, 127
    %v2519 = vpop.permute.xlu0 %2518
    %v2524 = vadd.f32 %v2440, %v2513
    %v2525 = vadd.f32 %v2441, %v2515
    %v2526 = vadd.f32 %v2442, %v2517
    %v2527 = vadd.f32 %v2443, %v2519
    %v2528 = vstv %s422
    %v2529 = vmul.f32 %v2528, %v2413
    %v2530 = vmul.f32 %v2528, %v2414
    %v2531 = vmul.f32 %v2528, %v2415
    %v2532 = vmul.f32 %v2528, %v2416
    %2537 = vrot.lane.b32.xlu0 %v2529, 127
    %v2538 = vpop.permute.xlu0 %2537
    %2539 = vrot.lane.b32.xlu0 %v2530, 127
    %v2540 = vpop.permute.xlu0 %2539
    %2541 = vrot.lane.b32.xlu0 %v2531, 127
    %v2542 = vpop.permute.xlu0 %2541
    %2543 = vrot.lane.b32.xlu0 %v2532, 127
    %v2544 = vpop.permute.xlu0 %2543
    %v2549 = vadd.f32 %v2449, %v2538
    %v2550 = vadd.f32 %v2450, %v2540
    %v2551 = vadd.f32 %v2451, %v2542
    %v2552 = vadd.f32 %v2452, %v2544
    %v2553 = vstv %s448
    %v2554 = vmul.f32 %v2553, %v2413
    %v2555 = vmul.f32 %v2553, %v2414
    %v2556 = vmul.f32 %v2553, %v2415
    %v2557 = vmul.f32 %v2553, %v2416
    %2562 = vrot.lane.b32.xlu0 %v2554, 126
    %v2563 = vpop.permute.xlu0 %2562
    %2564 = vrot.lane.b32.xlu0 %v2555, 126
    %v2565 = vpop.permute.xlu0 %2564
    %2566 = vrot.lane.b32.xlu0 %v2556, 126
    %v2567 = vpop.permute.xlu0 %2566
    %2568 = vrot.lane.b32.xlu0 %v2557, 126
    %v2569 = vpop.permute.xlu0 %2568
    %v2574 = vadd.f32 %v2474, %v2563
    %v2575 = vadd.f32 %v2475, %v2565
    %v2576 = vadd.f32 %v2476, %v2567
    %v2577 = vadd.f32 %v2477, %v2569
    %v2578 = vstv %s450
    %v2579 = vmul.f32 %v2578, %v2413
    %v2580 = vmul.f32 %v2578, %v2414
    %v2581 = vmul.f32 %v2578, %v2415
    %v2582 = vmul.f32 %v2578, %v2416
    %2587 = vrot.lane.b32.xlu0 %v2579, 126
    %v2588 = vpop.permute.xlu0 %2587
    %2589 = vrot.lane.b32.xlu0 %v2580, 126
    %v2590 = vpop.permute.xlu0 %2589
    %2591 = vrot.lane.b32.xlu0 %v2581, 126
    %v2592 = vpop.permute.xlu0 %2591
    %2593 = vrot.lane.b32.xlu0 %v2582, 126
    %v2594 = vpop.permute.xlu0 %2593
    %v2599 = vadd.f32 %v2499, %v2588
    %v2600 = vadd.f32 %v2500, %v2590
    %v2601 = vadd.f32 %v2501, %v2592
    %v2602 = vadd.f32 %v2502, %v2594
    %v2603 = vstv %s452
    %v2604 = vmul.f32 %v2603, %v2413
    %v2605 = vmul.f32 %v2603, %v2414
    %v2606 = vmul.f32 %v2603, %v2415
    %v2607 = vmul.f32 %v2603, %v2416
    %2612 = vrot.lane.b32.xlu0 %v2604, 126
    %v2613 = vpop.permute.xlu0 %2612
    %2614 = vrot.lane.b32.xlu0 %v2605, 126
    %v2615 = vpop.permute.xlu0 %2614
    %2616 = vrot.lane.b32.xlu0 %v2606, 126
    %v2617 = vpop.permute.xlu0 %2616
    %2618 = vrot.lane.b32.xlu0 %v2607, 126
    %v2619 = vpop.permute.xlu0 %2618
    %v2624 = vadd.f32 %v2524, %v2613
    %v2625 = vadd.f32 %v2525, %v2615
    %v2626 = vadd.f32 %v2526, %v2617
    %v2627 = vadd.f32 %v2527, %v2619
    %v2628 = vstv %s454
    %v2629 = vmul.f32 %v2628, %v2413
    %v2630 = vmul.f32 %v2628, %v2414
    %v2631 = vmul.f32 %v2628, %v2415
    %v2632 = vmul.f32 %v2628, %v2416
    %2637 = vrot.lane.b32.xlu0 %v2629, 126
    %v2638 = vpop.permute.xlu0 %2637
    %2639 = vrot.lane.b32.xlu0 %v2630, 126
    %v2640 = vpop.permute.xlu0 %2639
    %2641 = vrot.lane.b32.xlu0 %v2631, 126
    %v2642 = vpop.permute.xlu0 %2641
    %2643 = vrot.lane.b32.xlu0 %v2632, 126
    %v2644 = vpop.permute.xlu0 %2643
    %v2649 = vadd.f32 %v2549, %v2638
    %v2650 = vadd.f32 %v2550, %v2640
    %v2651 = vadd.f32 %v2551, %v2642
    %v2652 = vadd.f32 %v2552, %v2644
    %s2653 = scalar_lea.vmem [#allocation2], 72
    %v2654 = vld [vmem:[%s2653] sm:$0xff]
    %v2655 = vld [vmem:[%s2653 + $0x8] sm:$0xff]
    %v2656 = vld [vmem:[%s2653 + $0x60] sm:$0xff]
    %v2657 = vld [vmem:[%s2653 + $0x68] sm:$0xff]
    %v2658 = vstv %s200
    %v2659 = vmul.f32 %v2658, %v2654
    %v2660 = vmul.f32 %v2658, %v2655
    %v2661 = vmul.f32 %v2658, %v2656
    %v2662 = vmul.f32 %v2658, %v2657
    %v2663 = vadd.f32 %v2574, %v2659
    %v2664 = vadd.f32 %v2575, %v2660
    %v2665 = vadd.f32 %v2576, %v2661
    %v2666 = vadd.f32 %v2577, %v2662
    %v2667 = vstv %s202
    %v2668 = vmul.f32 %v2667, %v2654
    %v2669 = vmul.f32 %v2667, %v2655
    %v2670 = vmul.f32 %v2667, %v2656
    %v2671 = vmul.f32 %v2667, %v2657
    %v2672 = vadd.f32 %v2599, %v2668
    %v2673 = vadd.f32 %v2600, %v2669
    %v2674 = vadd.f32 %v2601, %v2670
    %v2675 = vadd.f32 %v2602, %v2671
    %v2676 = vstv %s204
    %v2677 = vmul.f32 %v2676, %v2654
    %v2678 = vmul.f32 %v2676, %v2655
    %v2679 = vmul.f32 %v2676, %v2656
    %v2680 = vmul.f32 %v2676, %v2657
    %v2681 = vadd.f32 %v2624, %v2677
    %v2682 = vadd.f32 %v2625, %v2678
    %v2683 = vadd.f32 %v2626, %v2679
    %v2684 = vadd.f32 %v2627, %v2680
    %v2685 = vstv %s206
    %v2686 = vmul.f32 %v2685, %v2654
    %v2687 = vmul.f32 %v2685, %v2655
    %v2688 = vmul.f32 %v2685, %v2656
    %v2689 = vmul.f32 %v2685, %v2657
    %v2690 = vadd.f32 %v2649, %v2686
    %v2691 = vadd.f32 %v2650, %v2687
    %v2692 = vadd.f32 %v2651, %v2688
    %v2693 = vadd.f32 %v2652, %v2689
    %v2694 = vstv %s232
    %v2695 = vmul.f32 %v2694, %v2654
    %v2696 = vmul.f32 %v2694, %v2655
    %v2697 = vmul.f32 %v2694, %v2656
    %v2698 = vmul.f32 %v2694, %v2657
    %2703 = vrot.lane.b32.xlu0 %v2695, 127
    %v2704 = vpop.permute.xlu0 %2703
    %2705 = vrot.lane.b32.xlu0 %v2696, 127
    %v2706 = vpop.permute.xlu0 %2705
    %2707 = vrot.lane.b32.xlu0 %v2697, 127
    %v2708 = vpop.permute.xlu0 %2707
    %2709 = vrot.lane.b32.xlu0 %v2698, 127
    %v2710 = vpop.permute.xlu0 %2709
    %v2715 = vadd.f32 %v2663, %v2704
    %v2716 = vadd.f32 %v2664, %v2706
    %v2717 = vadd.f32 %v2665, %v2708
    %v2718 = vadd.f32 %v2666, %v2710
    %v2719 = vstv %s234
    %v2720 = vmul.f32 %v2719, %v2654
    %v2721 = vmul.f32 %v2719, %v2655
    %v2722 = vmul.f32 %v2719, %v2656
    %v2723 = vmul.f32 %v2719, %v2657
    %2728 = vrot.lane.b32.xlu0 %v2720, 127
    %v2729 = vpop.permute.xlu0 %2728
    %2730 = vrot.lane.b32.xlu0 %v2721, 127
    %v2731 = vpop.permute.xlu0 %2730
    %2732 = vrot.lane.b32.xlu0 %v2722, 127
    %v2733 = vpop.permute.xlu0 %2732
    %2734 = vrot.lane.b32.xlu0 %v2723, 127
    %v2735 = vpop.permute.xlu0 %2734
    %v2740 = vadd.f32 %v2672, %v2729
    %v2741 = vadd.f32 %v2673, %v2731
    %v2742 = vadd.f32 %v2674, %v2733
    %v2743 = vadd.f32 %v2675, %v2735
    %v2744 = vstv %s236
    %v2745 = vmul.f32 %v2744, %v2654
    %v2746 = vmul.f32 %v2744, %v2655
    %v2747 = vmul.f32 %v2744, %v2656
    %v2748 = vmul.f32 %v2744, %v2657
    %2753 = vrot.lane.b32.xlu0 %v2745, 127
    %v2754 = vpop.permute.xlu0 %2753
    %2755 = vrot.lane.b32.xlu0 %v2746, 127
    %v2756 = vpop.permute.xlu0 %2755
    %2757 = vrot.lane.b32.xlu0 %v2747, 127
    %v2758 = vpop.permute.xlu0 %2757
    %2759 = vrot.lane.b32.xlu0 %v2748, 127
    %v2760 = vpop.permute.xlu0 %2759
    %v2765 = vadd.f32 %v2681, %v2754
    %v2766 = vadd.f32 %v2682, %v2756
    %v2767 = vadd.f32 %v2683, %v2758
    %v2768 = vadd.f32 %v2684, %v2760
    %v2769 = vstv %s238
    %v2770 = vmul.f32 %v2769, %v2654
    %v2771 = vmul.f32 %v2769, %v2655
    %v2772 = vmul.f32 %v2769, %v2656
    %v2773 = vmul.f32 %v2769, %v2657
    %2778 = vrot.lane.b32.xlu0 %v2770, 127
    %v2779 = vpop.permute.xlu0 %2778
    %2780 = vrot.lane.b32.xlu0 %v2771, 127
    %v2781 = vpop.permute.xlu0 %2780
    %2782 = vrot.lane.b32.xlu0 %v2772, 127
    %v2783 = vpop.permute.xlu0 %2782
    %2784 = vrot.lane.b32.xlu0 %v2773, 127
    %v2785 = vpop.permute.xlu0 %2784
    %v2790 = vadd.f32 %v2690, %v2779
    %v2791 = vadd.f32 %v2691, %v2781
    %v2792 = vadd.f32 %v2692, %v2783
    %v2793 = vadd.f32 %v2693, %v2785
    %v2794 = vstv %s264
    %v2795 = vmul.f32 %v2794, %v2654
    %v2796 = vmul.f32 %v2794, %v2655
    %v2797 = vmul.f32 %v2794, %v2656
    %v2798 = vmul.f32 %v2794, %v2657
    %2803 = vrot.lane.b32.xlu0 %v2795, 126
    %v2804 = vpop.permute.xlu0 %2803
    %2805 = vrot.lane.b32.xlu0 %v2796, 126
    %v2806 = vpop.permute.xlu0 %2805
    %2807 = vrot.lane.b32.xlu0 %v2797, 126
    %v2808 = vpop.permute.xlu0 %2807
    %2809 = vrot.lane.b32.xlu0 %v2798, 126
    %v2810 = vpop.permute.xlu0 %2809
    %v2815 = vadd.f32 %v2715, %v2804
    %v2816 = vadd.f32 %v2716, %v2806
    %v2817 = vadd.f32 %v2717, %v2808
    %v2818 = vadd.f32 %v2718, %v2810
    %v2819 = vstv %s266
    %v2820 = vmul.f32 %v2819, %v2654
    %v2821 = vmul.f32 %v2819, %v2655
    %v2822 = vmul.f32 %v2819, %v2656
    %v2823 = vmul.f32 %v2819, %v2657
    %2828 = vrot.lane.b32.xlu0 %v2820, 126
    %v2829 = vpop.permute.xlu0 %2828
    %2830 = vrot.lane.b32.xlu0 %v2821, 126
    %v2831 = vpop.permute.xlu0 %2830
    %2832 = vrot.lane.b32.xlu0 %v2822, 126
    %v2833 = vpop.permute.xlu0 %2832
    %2834 = vrot.lane.b32.xlu0 %v2823, 126
    %v2835 = vpop.permute.xlu0 %2834
    %v2840 = vadd.f32 %v2740, %v2829
    %v2841 = vadd.f32 %v2741, %v2831
    %v2842 = vadd.f32 %v2742, %v2833
    %v2843 = vadd.f32 %v2743, %v2835
    %v2844 = vstv %s268
    %v2845 = vmul.f32 %v2844, %v2654
    %v2846 = vmul.f32 %v2844, %v2655
    %v2847 = vmul.f32 %v2844, %v2656
    %v2848 = vmul.f32 %v2844, %v2657
    %2853 = vrot.lane.b32.xlu0 %v2845, 126
    %v2854 = vpop.permute.xlu0 %2853
    %2855 = vrot.lane.b32.xlu0 %v2846, 126
    %v2856 = vpop.permute.xlu0 %2855
    %2857 = vrot.lane.b32.xlu0 %v2847, 126
    %v2858 = vpop.permute.xlu0 %2857
    %2859 = vrot.lane.b32.xlu0 %v2848, 126
    %v2860 = vpop.permute.xlu0 %2859
    %v2865 = vadd.f32 %v2765, %v2854
    %v2866 = vadd.f32 %v2766, %v2856
    %v2867 = vadd.f32 %v2767, %v2858
    %v2868 = vadd.f32 %v2768, %v2860
    %v2869 = vstv %s270
    %v2870 = vmul.f32 %v2869, %v2654
    %v2871 = vmul.f32 %v2869, %v2655
    %v2872 = vmul.f32 %v2869, %v2656
    %v2873 = vmul.f32 %v2869, %v2657
    %2878 = vrot.lane.b32.xlu0 %v2870, 126
    %v2879 = vpop.permute.xlu0 %2878
    %2880 = vrot.lane.b32.xlu0 %v2871, 126
    %v2881 = vpop.permute.xlu0 %2880
    %2882 = vrot.lane.b32.xlu0 %v2872, 126
    %v2883 = vpop.permute.xlu0 %2882
    %2884 = vrot.lane.b32.xlu0 %v2873, 126
    %v2885 = vpop.permute.xlu0 %2884
    %v2890 = vadd.f32 %v2790, %v2879
    %v2891 = vadd.f32 %v2791, %v2881
    %v2892 = vadd.f32 %v2792, %v2883
    %v2893 = vadd.f32 %v2793, %v2885
    %v2894 = vld [vmem:[%s2653 + $0x1] sm:$0xff]
    %v2895 = vld [vmem:[%s2653 + $0x9] sm:$0xff]
    %v2896 = vld [vmem:[%s2653 + $0x61] sm:$0xff]
    %v2897 = vld [vmem:[%s2653 + $0x69] sm:$0xff]
    %v2898 = vstv %s296
    %v2899 = vmul.f32 %v2898, %v2894
    %v2900 = vmul.f32 %v2898, %v2895
    %v2901 = vmul.f32 %v2898, %v2896
    %v2902 = vmul.f32 %v2898, %v2897
    %v2903 = vadd.f32 %v2815, %v2899
    %v2904 = vadd.f32 %v2816, %v2900
    %v2905 = vadd.f32 %v2817, %v2901
    %v2906 = vadd.f32 %v2818, %v2902
    %v2907 = vstv %s298
    %v2908 = vmul.f32 %v2907, %v2894
    %v2909 = vmul.f32 %v2907, %v2895
    %v2910 = vmul.f32 %v2907, %v2896
    %v2911 = vmul.f32 %v2907, %v2897
    %v2912 = vadd.f32 %v2840, %v2908
    %v2913 = vadd.f32 %v2841, %v2909
    %v2914 = vadd.f32 %v2842, %v2910
    %v2915 = vadd.f32 %v2843, %v2911
    %v2916 = vstv %s300
    %v2917 = vmul.f32 %v2916, %v2894
    %v2918 = vmul.f32 %v2916, %v2895
    %v2919 = vmul.f32 %v2916, %v2896
    %v2920 = vmul.f32 %v2916, %v2897
    %v2921 = vadd.f32 %v2865, %v2917
    %v2922 = vadd.f32 %v2866, %v2918
    %v2923 = vadd.f32 %v2867, %v2919
    %v2924 = vadd.f32 %v2868, %v2920
    %v2925 = vstv %s302
    %v2926 = vmul.f32 %v2925, %v2894
    %v2927 = vmul.f32 %v2925, %v2895
    %v2928 = vmul.f32 %v2925, %v2896
    %v2929 = vmul.f32 %v2925, %v2897
    %v2930 = vadd.f32 %v2890, %v2926
    %v2931 = vadd.f32 %v2891, %v2927
    %v2932 = vadd.f32 %v2892, %v2928
    %v2933 = vadd.f32 %v2893, %v2929
    %v2934 = vstv %s328
    %v2935 = vmul.f32 %v2934, %v2894
    %v2936 = vmul.f32 %v2934, %v2895
    %v2937 = vmul.f32 %v2934, %v2896
    %v2938 = vmul.f32 %v2934, %v2897
    %2943 = vrot.lane.b32.xlu0 %v2935, 127
    %v2944 = vpop.permute.xlu0 %2943
    %2945 = vrot.lane.b32.xlu0 %v2936, 127
    %v2946 = vpop.permute.xlu0 %2945
    %2947 = vrot.lane.b32.xlu0 %v2937, 127
    %v2948 = vpop.permute.xlu0 %2947
    %2949 = vrot.lane.b32.xlu0 %v2938, 127
    %v2950 = vpop.permute.xlu0 %2949
    %v2955 = vadd.f32 %v2903, %v2944
    %v2956 = vadd.f32 %v2904, %v2946
    %v2957 = vadd.f32 %v2905, %v2948
    %v2958 = vadd.f32 %v2906, %v2950
    %v2959 = vstv %s330
    %v2960 = vmul.f32 %v2959, %v2894
    %v2961 = vmul.f32 %v2959, %v2895
    %v2962 = vmul.f32 %v2959, %v2896
    %v2963 = vmul.f32 %v2959, %v2897
    %2968 = vrot.lane.b32.xlu0 %v2960, 127
    %v2969 = vpop.permute.xlu0 %2968
    %2970 = vrot.lane.b32.xlu0 %v2961, 127
    %v2971 = vpop.permute.xlu0 %2970
    %2972 = vrot.lane.b32.xlu0 %v2962, 127
    %v2973 = vpop.permute.xlu0 %2972
    %2974 = vrot.lane.b32.xlu0 %v2963, 127
    %v2975 = vpop.permute.xlu0 %2974
    %v2980 = vadd.f32 %v2912, %v2969
    %v2981 = vadd.f32 %v2913, %v2971
    %v2982 = vadd.f32 %v2914, %v2973
    %v2983 = vadd.f32 %v2915, %v2975
    %v2984 = vstv %s332
    %v2985 = vmul.f32 %v2984, %v2894
    %v2986 = vmul.f32 %v2984, %v2895
    %v2987 = vmul.f32 %v2984, %v2896
    %v2988 = vmul.f32 %v2984, %v2897
    %2993 = vrot.lane.b32.xlu0 %v2985, 127
    %v2994 = vpop.permute.xlu0 %2993
    %2995 = vrot.lane.b32.xlu0 %v2986, 127
    %v2996 = vpop.permute.xlu0 %2995
    %2997 = vrot.lane.b32.xlu0 %v2987, 127
    %v2998 = vpop.permute.xlu0 %2997
    %2999 = vrot.lane.b32.xlu0 %v2988, 127
    %v3000 = vpop.permute.xlu0 %2999
    %v3005 = vadd.f32 %v2921, %v2994
    %v3006 = vadd.f32 %v2922, %v2996
    %v3007 = vadd.f32 %v2923, %v2998
    %v3008 = vadd.f32 %v2924, %v3000
    %v3009 = vstv %s334
    %v3010 = vmul.f32 %v3009, %v2894
    %v3011 = vmul.f32 %v3009, %v2895
    %v3012 = vmul.f32 %v3009, %v2896
    %v3013 = vmul.f32 %v3009, %v2897
    %3018 = vrot.lane.b32.xlu0 %v3010, 127
    %v3019 = vpop.permute.xlu0 %3018
    %3020 = vrot.lane.b32.xlu0 %v3011, 127
    %v3021 = vpop.permute.xlu0 %3020
    %3022 = vrot.lane.b32.xlu0 %v3012, 127
    %v3023 = vpop.permute.xlu0 %3022
    %3024 = vrot.lane.b32.xlu0 %v3013, 127
    %v3025 = vpop.permute.xlu0 %3024
    %v3030 = vadd.f32 %v2930, %v3019
    %v3031 = vadd.f32 %v2931, %v3021
    %v3032 = vadd.f32 %v2932, %v3023
    %v3033 = vadd.f32 %v2933, %v3025
    %v3034 = vstv %s360
    %v3035 = vmul.f32 %v3034, %v2894
    %v3036 = vmul.f32 %v3034, %v2895
    %v3037 = vmul.f32 %v3034, %v2896
    %v3038 = vmul.f32 %v3034, %v2897
    %3043 = vrot.lane.b32.xlu0 %v3035, 126
    %v3044 = vpop.permute.xlu0 %3043
    %3045 = vrot.lane.b32.xlu0 %v3036, 126
    %v3046 = vpop.permute.xlu0 %3045
    %3047 = vrot.lane.b32.xlu0 %v3037, 126
    %v3048 = vpop.permute.xlu0 %3047
    %3049 = vrot.lane.b32.xlu0 %v3038, 126
    %v3050 = vpop.permute.xlu0 %3049
    %v3055 = vadd.f32 %v2955, %v3044
    %v3056 = vadd.f32 %v2956, %v3046
    %v3057 = vadd.f32 %v2957, %v3048
    %v3058 = vadd.f32 %v2958, %v3050
    %v3059 = vstv %s362
    %v3060 = vmul.f32 %v3059, %v2894
    %v3061 = vmul.f32 %v3059, %v2895
    %v3062 = vmul.f32 %v3059, %v2896
    %v3063 = vmul.f32 %v3059, %v2897
    %3068 = vrot.lane.b32.xlu0 %v3060, 126
    %v3069 = vpop.permute.xlu0 %3068
    %3070 = vrot.lane.b32.xlu0 %v3061, 126
    %v3071 = vpop.permute.xlu0 %3070
    %3072 = vrot.lane.b32.xlu0 %v3062, 126
    %v3073 = vpop.permute.xlu0 %3072
    %3074 = vrot.lane.b32.xlu0 %v3063, 126
    %v3075 = vpop.permute.xlu0 %3074
    %v3080 = vadd.f32 %v2980, %v3069
    %v3081 = vadd.f32 %v2981, %v3071
    %v3082 = vadd.f32 %v2982, %v3073
    %v3083 = vadd.f32 %v2983, %v3075
    %v3084 = vstv %s364
    %v3085 = vmul.f32 %v3084, %v2894
    %v3086 = vmul.f32 %v3084, %v2895
    %v3087 = vmul.f32 %v3084, %v2896
    %v3088 = vmul.f32 %v3084, %v2897
    %3093 = vrot.lane.b32.xlu0 %v3085, 126
    %v3094 = vpop.permute.xlu0 %3093
    %3095 = vrot.lane.b32.xlu0 %v3086, 126
    %v3096 = vpop.permute.xlu0 %3095
    %3097 = vrot.lane.b32.xlu0 %v3087, 126
    %v3098 = vpop.permute.xlu0 %3097
    %3099 = vrot.lane.b32.xlu0 %v3088, 126
    %v3100 = vpop.permute.xlu0 %3099
    %v3105 = vadd.f32 %v3005, %v3094
    %v3106 = vadd.f32 %v3006, %v3096
    %v3107 = vadd.f32 %v3007, %v3098
    %v3108 = vadd.f32 %v3008, %v3100
    %v3109 = vstv %s366
    %v3110 = vmul.f32 %v3109, %v2894
    %v3111 = vmul.f32 %v3109, %v2895
    %v3112 = vmul.f32 %v3109, %v2896
    %v3113 = vmul.f32 %v3109, %v2897
    %3118 = vrot.lane.b32.xlu0 %v3110, 126
    %v3119 = vpop.permute.xlu0 %3118
    %3120 = vrot.lane.b32.xlu0 %v3111, 126
    %v3121 = vpop.permute.xlu0 %3120
    %3122 = vrot.lane.b32.xlu0 %v3112, 126
    %v3123 = vpop.permute.xlu0 %3122
    %3124 = vrot.lane.b32.xlu0 %v3113, 126
    %v3125 = vpop.permute.xlu0 %3124
    %v3130 = vadd.f32 %v3030, %v3119
    %v3131 = vadd.f32 %v3031, %v3121
    %v3132 = vadd.f32 %v3032, %v3123
    %v3133 = vadd.f32 %v3033, %v3125
    %v3134 = vld [vmem:[%s2653 + $0x2] sm:$0xff]
    %v3135 = vld [vmem:[%s2653 + $0xa] sm:$0xff]
    %v3136 = vld [vmem:[%s2653 + $0x62] sm:$0xff]
    %v3137 = vld [vmem:[%s2653 + $0x6a] sm:$0xff]
    %v3138 = vstv %s392
    %v3139 = vmul.f32 %v3138, %v3134
    %v3140 = vmul.f32 %v3138, %v3135
    %v3141 = vmul.f32 %v3138, %v3136
    %v3142 = vmul.f32 %v3138, %v3137
    %v3143 = vadd.f32 %v3055, %v3139
    %v3144 = vadd.f32 %v3056, %v3140
    %v3145 = vadd.f32 %v3057, %v3141
    %v3146 = vadd.f32 %v3058, %v3142
    %v3147 = vstv %s394
    %v3148 = vmul.f32 %v3147, %v3134
    %v3149 = vmul.f32 %v3147, %v3135
    %v3150 = vmul.f32 %v3147, %v3136
    %v3151 = vmul.f32 %v3147, %v3137
    %v3152 = vadd.f32 %v3080, %v3148
    %v3153 = vadd.f32 %v3081, %v3149
    %v3154 = vadd.f32 %v3082, %v3150
    %v3155 = vadd.f32 %v3083, %v3151
    %v3156 = vstv %s396
    %v3157 = vmul.f32 %v3156, %v3134
    %v3158 = vmul.f32 %v3156, %v3135
    %v3159 = vmul.f32 %v3156, %v3136
    %v3160 = vmul.f32 %v3156, %v3137
    %v3161 = vadd.f32 %v3105, %v3157
    %v3162 = vadd.f32 %v3106, %v3158
    %v3163 = vadd.f32 %v3107, %v3159
    %v3164 = vadd.f32 %v3108, %v3160
    %v3165 = vstv %s398
    %v3166 = vmul.f32 %v3165, %v3134
    %v3167 = vmul.f32 %v3165, %v3135
    %v3168 = vmul.f32 %v3165, %v3136
    %v3169 = vmul.f32 %v3165, %v3137
    %v3170 = vadd.f32 %v3130, %v3166
    %v3171 = vadd.f32 %v3131, %v3167
    %v3172 = vadd.f32 %v3132, %v3168
    %v3173 = vadd.f32 %v3133, %v3169
    %v3174 = vstv %s424
    %v3175 = vmul.f32 %v3174, %v3134
    %v3176 = vmul.f32 %v3174, %v3135
    %v3177 = vmul.f32 %v3174, %v3136
    %v3178 = vmul.f32 %v3174, %v3137
    %3183 = vrot.lane.b32.xlu0 %v3175, 127
    %v3184 = vpop.permute.xlu0 %3183
    %3185 = vrot.lane.b32.xlu0 %v3176, 127
    %v3186 = vpop.permute.xlu0 %3185
    %3187 = vrot.lane.b32.xlu0 %v3177, 127
    %v3188 = vpop.permute.xlu0 %3187
    %3189 = vrot.lane.b32.xlu0 %v3178, 127
    %v3190 = vpop.permute.xlu0 %3189
    %v3195 = vadd.f32 %v3143, %v3184
    %v3196 = vadd.f32 %v3144, %v3186
    %v3197 = vadd.f32 %v3145, %v3188
    %v3198 = vadd.f32 %v3146, %v3190
    %v3199 = vstv %s426
    %v3200 = vmul.f32 %v3199, %v3134
    %v3201 = vmul.f32 %v3199, %v3135
    %v3202 = vmul.f32 %v3199, %v3136
    %v3203 = vmul.f32 %v3199, %v3137
    %3208 = vrot.lane.b32.xlu0 %v3200, 127
    %v3209 = vpop.permute.xlu0 %3208
    %3210 = vrot.lane.b32.xlu0 %v3201, 127
    %v3211 = vpop.permute.xlu0 %3210
    %3212 = vrot.lane.b32.xlu0 %v3202, 127
    %v3213 = vpop.permute.xlu0 %3212
    %3214 = vrot.lane.b32.xlu0 %v3203, 127
    %v3215 = vpop.permute.xlu0 %3214
    %v3220 = vadd.f32 %v3152, %v3209
    %v3221 = vadd.f32 %v3153, %v3211
    %v3222 = vadd.f32 %v3154, %v3213
    %v3223 = vadd.f32 %v3155, %v3215
    %v3224 = vstv %s428
    %v3225 = vmul.f32 %v3224, %v3134
    %v3226 = vmul.f32 %v3224, %v3135
    %v3227 = vmul.f32 %v3224, %v3136
    %v3228 = vmul.f32 %v3224, %v3137
    %3233 = vrot.lane.b32.xlu0 %v3225, 127
    %v3234 = vpop.permute.xlu0 %3233
    %3235 = vrot.lane.b32.xlu0 %v3226, 127
    %v3236 = vpop.permute.xlu0 %3235
    %3237 = vrot.lane.b32.xlu0 %v3227, 127
    %v3238 = vpop.permute.xlu0 %3237
    %3239 = vrot.lane.b32.xlu0 %v3228, 127
    %v3240 = vpop.permute.xlu0 %3239
    %v3245 = vadd.f32 %v3161, %v3234
    %v3246 = vadd.f32 %v3162, %v3236
    %v3247 = vadd.f32 %v3163, %v3238
    %v3248 = vadd.f32 %v3164, %v3240
    %v3249 = vstv %s430
    %v3250 = vmul.f32 %v3249, %v3134
    %v3251 = vmul.f32 %v3249, %v3135
    %v3252 = vmul.f32 %v3249, %v3136
    %v3253 = vmul.f32 %v3249, %v3137
    %3258 = vrot.lane.b32.xlu0 %v3250, 127
    %v3259 = vpop.permute.xlu0 %3258
    %3260 = vrot.lane.b32.xlu0 %v3251, 127
    %v3261 = vpop.permute.xlu0 %3260
    %3262 = vrot.lane.b32.xlu0 %v3252, 127
    %v3263 = vpop.permute.xlu0 %3262
    %3264 = vrot.lane.b32.xlu0 %v3253, 127
    %v3265 = vpop.permute.xlu0 %3264
    %v3270 = vadd.f32 %v3170, %v3259
    %v3271 = vadd.f32 %v3171, %v3261
    %v3272 = vadd.f32 %v3172, %v3263
    %v3273 = vadd.f32 %v3173, %v3265
    %v3274 = vstv %s456
    %v3275 = vmul.f32 %v3274, %v3134
    %v3276 = vmul.f32 %v3274, %v3135
    %v3277 = vmul.f32 %v3274, %v3136
    %v3278 = vmul.f32 %v3274, %v3137
    %3283 = vrot.lane.b32.xlu0 %v3275, 126
    %v3284 = vpop.permute.xlu0 %3283
    %3285 = vrot.lane.b32.xlu0 %v3276, 126
    %v3286 = vpop.permute.xlu0 %3285
    %3287 = vrot.lane.b32.xlu0 %v3277, 126
    %v3288 = vpop.permute.xlu0 %3287
    %3289 = vrot.lane.b32.xlu0 %v3278, 126
    %v3290 = vpop.permute.xlu0 %3289
    %v3295 = vadd.f32 %v3195, %v3284
    %v3296 = vadd.f32 %v3196, %v3286
    %v3297 = vadd.f32 %v3197, %v3288
    %v3298 = vadd.f32 %v3198, %v3290
    %v3299 = vstv %s458
    %v3300 = vmul.f32 %v3299, %v3134
    %v3301 = vmul.f32 %v3299, %v3135
    %v3302 = vmul.f32 %v3299, %v3136
    %v3303 = vmul.f32 %v3299, %v3137
    %3308 = vrot.lane.b32.xlu0 %v3300, 126
    %v3309 = vpop.permute.xlu0 %3308
    %3310 = vrot.lane.b32.xlu0 %v3301, 126
    %v3311 = vpop.permute.xlu0 %3310
    %3312 = vrot.lane.b32.xlu0 %v3302, 126
    %v3313 = vpop.permute.xlu0 %3312
    %3314 = vrot.lane.b32.xlu0 %v3303, 126
    %v3315 = vpop.permute.xlu0 %3314
    %v3320 = vadd.f32 %v3220, %v3309
    %v3321 = vadd.f32 %v3221, %v3311
    %v3322 = vadd.f32 %v3222, %v3313
    %v3323 = vadd.f32 %v3223, %v3315
    %v3324 = vstv %s460
    %v3325 = vmul.f32 %v3324, %v3134
    %v3326 = vmul.f32 %v3324, %v3135
    %v3327 = vmul.f32 %v3324, %v3136
    %v3328 = vmul.f32 %v3324, %v3137
    %3333 = vrot.lane.b32.xlu0 %v3325, 126
    %v3334 = vpop.permute.xlu0 %3333
    %3335 = vrot.lane.b32.xlu0 %v3326, 126
    %v3336 = vpop.permute.xlu0 %3335
    %3337 = vrot.lane.b32.xlu0 %v3327, 126
    %v3338 = vpop.permute.xlu0 %3337
    %3339 = vrot.lane.b32.xlu0 %v3328, 126
    %v3340 = vpop.permute.xlu0 %3339
    %v3345 = vadd.f32 %v3245, %v3334
    %v3346 = vadd.f32 %v3246, %v3336
    %v3347 = vadd.f32 %v3247, %v3338
    %v3348 = vadd.f32 %v3248, %v3340
    %v3349 = vstv %s462
    %v3350 = vmul.f32 %v3349, %v3134
    %v3351 = vmul.f32 %v3349, %v3135
    %v3352 = vmul.f32 %v3349, %v3136
    %v3353 = vmul.f32 %v3349, %v3137
    %3358 = vrot.lane.b32.xlu0 %v3350, 126
    %v3359 = vpop.permute.xlu0 %3358
    %3360 = vrot.lane.b32.xlu0 %v3351, 126
    %v3361 = vpop.permute.xlu0 %3360
    %3362 = vrot.lane.b32.xlu0 %v3352, 126
    %v3363 = vpop.permute.xlu0 %3362
    %3364 = vrot.lane.b32.xlu0 %v3353, 126
    %v3365 = vpop.permute.xlu0 %3364
    %v3370 = vadd.f32 %v3270, %v3359
    %v3371 = vadd.f32 %v3271, %v3361
    %v3372 = vadd.f32 %v3272, %v3363
    %v3373 = vadd.f32 %v3273, %v3365
    %3390 = vrot.lane.b32.xlu0 %v3295, 1
    %v3391 = vpop.permute.xlu0 %3390
    %3392 = vrot.lane.b32.xlu0 %v3296, 1
    %v3393 = vpop.permute.xlu0 %3392
    %3394 = vrot.lane.b32.xlu0 %v3320, 1
    %v3395 = vpop.permute.xlu0 %3394
    %3396 = vrot.lane.b32.xlu0 %v3321, 1
    %v3397 = vpop.permute.xlu0 %3396
    %3398 = vrot.lane.b32.xlu0 %v3345, 1
    %v3399 = vpop.permute.xlu0 %3398
    %3400 = vrot.lane.b32.xlu0 %v3346, 1
    %v3401 = vpop.permute.xlu0 %3400
    %3402 = vrot.lane.b32.xlu0 %v3370, 1
    %v3403 = vpop.permute.xlu0 %3402
    %3404 = vrot.lane.b32.xlu0 %v3371, 1
    %v3405 = vpop.permute.xlu0 %3404
    %3406 = vrot.lane.b32.xlu0 %v3297, 1
    %v3407 = vpop.permute.xlu0 %3406
    %3408 = vrot.lane.b32.xlu0 %v3298, 1
    %v3409 = vpop.permute.xlu0 %3408
    %3410 = vrot.lane.b32.xlu0 %v3322, 1
    %v3411 = vpop.permute.xlu0 %3410
    %3412 = vrot.lane.b32.xlu0 %v3323, 1
    %v3413 = vpop.permute.xlu0 %3412
    %3414 = vrot.lane.b32.xlu0 %v3347, 1
    %v3415 = vpop.permute.xlu0 %3414
    %3416 = vrot.lane.b32.xlu0 %v3348, 1
    %v3417 = vpop.permute.xlu0 %3416
    %3418 = vrot.lane.b32.xlu0 %v3372, 1
    %v3419 = vpop.permute.xlu0 %3418
    %3420 = vrot.lane.b32.xlu0 %v3373, 1
    %v3421 = vpop.permute.xlu0 %3420
    %3438 = vst.msk [vmem:[#allocation2 + $0x1] sm:$0xff] %vm158, %v3391
    %3439 = vst.msk [vmem:[#allocation2 + $0x9] sm:$0xff] %vm158, %v3393
    %3440 = vst.msk [vmem:[#allocation2 + $0x19] sm:$0xff] %vm158, %v3395
    %3441 = vst.msk [vmem:[#allocation2 + $0x21] sm:$0xff] %vm158, %v3397
    %3442 = vst.msk [vmem:[#allocation2 + $0x31] sm:$0xff] %vm158, %v3399
    %3443 = vst.msk [vmem:[#allocation2 + $0x39] sm:$0xff] %vm158, %v3401
    %3444 = vst.msk [vmem:[#allocation2 + $0x49] sm:$0xff] %vm158, %v3403
    %3445 = vst.msk [vmem:[#allocation2 + $0x51] sm:$0xff] %vm158, %v3405
    %3446 = vst.msk [vmem:[#allocation2 + $0x61] sm:$0xff] %vm158, %v3407
    %3447 = vst.msk [vmem:[#allocation2 + $0x69] sm:$0xff] %vm158, %v3409
    %3448 = vst.msk [vmem:[#allocation2 + $0x79] sm:$0xff] %vm158, %v3411
    %3449 = vst.msk [vmem:[#allocation2 + $0x81] sm:$0xff] %vm158, %v3413
    %3450 = vst.msk [vmem:[#allocation2 + $0x91] sm:$0xff] %vm158, %v3415
    %3451 = vst.msk [vmem:[#allocation2 + $0x99] sm:$0xff] %vm158, %v3417
    %3452 = vst.msk [vmem:[#allocation2 + $0xa9] sm:$0xff] %vm158, %v3419
    %3453 = vst.msk [vmem:[#allocation2 + $0xb1] sm:$0xff] %vm158, %v3421
    %v3454 = vadd.f32 %v3295, %v471
    %v3455 = vadd.f32 %v3296, %v471
    %v3456 = vadd.f32 %v3297, %v471
    %v3457 = vadd.f32 %v3298, %v471
    %v3458 = vadd.f32 %v3320, %v476
    %v3459 = vadd.f32 %v3321, %v476
    %v3460 = vadd.f32 %v3322, %v476
    %v3461 = vadd.f32 %v3323, %v476
    %v3462 = vadd.f32 %v3345, %v481
    %v3463 = vadd.f32 %v3346, %v481
    %v3464 = vadd.f32 %v3347, %v481
    %v3465 = vadd.f32 %v3348, %v481
    %v3466 = vadd.f32 %v3370, %v486
    %v3467 = vadd.f32 %v3371, %v486
    %v3468 = vadd.f32 %v3372, %v486
    %v3469 = vadd.f32 %v3373, %v486
    %v3470 = vld [vmem:[#allocation2] sm:$0xff]
    %v3471 = vld [vmem:[#allocation2 + $0x8] sm:$0xff]
    %v3472 = vld [vmem:[#allocation2 + $0x60] sm:$0xff]
    %v3473 = vld [vmem:[#allocation2 + $0x68] sm:$0xff]
    %v3474 = vmul.f32 %v495, %v3470
    %v3475 = vmul.f32 %v495, %v3471
    %v3476 = vmul.f32 %v495, %v3472
    %v3477 = vmul.f32 %v495, %v3473
    %v3478 = vadd.f32 %v3454, %v3474
    %v3479 = vadd.f32 %v3455, %v3475
    %v3480 = vadd.f32 %v3456, %v3476
    %v3481 = vadd.f32 %v3457, %v3477
    %v3482 = vmul.f32 %v504, %v3470
    %v3483 = vmul.f32 %v504, %v3471
    %v3484 = vmul.f32 %v504, %v3472
    %v3485 = vmul.f32 %v504, %v3473
    %v3486 = vadd.f32 %v3458, %v3482
    %v3487 = vadd.f32 %v3459, %v3483
    %v3488 = vadd.f32 %v3460, %v3484
    %v3489 = vadd.f32 %v3461, %v3485
    %v3490 = vmul.f32 %v513, %v3470
    %v3491 = vmul.f32 %v513, %v3471
    %v3492 = vmul.f32 %v513, %v3472
    %v3493 = vmul.f32 %v513, %v3473
    %v3494 = vadd.f32 %v3462, %v3490
    %v3495 = vadd.f32 %v3463, %v3491
    %v3496 = vadd.f32 %v3464, %v3492
    %v3497 = vadd.f32 %v3465, %v3493
    %v3498 = vmul.f32 %v522, %v3470
    %v3499 = vmul.f32 %v522, %v3471
    %v3500 = vmul.f32 %v522, %v3472
    %v3501 = vmul.f32 %v522, %v3473
    %v3502 = vadd.f32 %v3466, %v3498
    %v3503 = vadd.f32 %v3467, %v3499
    %v3504 = vadd.f32 %v3468, %v3500
    %v3505 = vadd.f32 %v3469, %v3501
    %v3506 = vmul.f32 %v531, %v3470
    %v3507 = vmul.f32 %v531, %v3471
    %v3508 = vmul.f32 %v531, %v3472
    %v3509 = vmul.f32 %v531, %v3473
    %3514 = vrot.lane.b32.xlu0 %v3506, 127
    %v3515 = vpop.permute.xlu0 %3514
    %3516 = vrot.lane.b32.xlu0 %v3507, 127
    %v3517 = vpop.permute.xlu0 %3516
    %3518 = vrot.lane.b32.xlu0 %v3508, 127
    %v3519 = vpop.permute.xlu0 %3518
    %3520 = vrot.lane.b32.xlu0 %v3509, 127
    %v3521 = vpop.permute.xlu0 %3520
    %v3526 = vadd.f32 %v3478, %v3515
    %v3527 = vadd.f32 %v3479, %v3517
    %v3528 = vadd.f32 %v3480, %v3519
    %v3529 = vadd.f32 %v3481, %v3521
    %v3530 = vmul.f32 %v556, %v3470
    %v3531 = vmul.f32 %v556, %v3471
    %v3532 = vmul.f32 %v556, %v3472
    %v3533 = vmul.f32 %v556, %v3473
    %3538 = vrot.lane.b32.xlu0 %v3530, 127
    %v3539 = vpop.permute.xlu0 %3538
    %3540 = vrot.lane.b32.xlu0 %v3531, 127
    %v3541 = vpop.permute.xlu0 %3540
    %3542 = vrot.lane.b32.xlu0 %v3532, 127
    %v3543 = vpop.permute.xlu0 %3542
    %3544 = vrot.lane.b32.xlu0 %v3533, 127
    %v3545 = vpop.permute.xlu0 %3544
    %v3550 = vadd.f32 %v3486, %v3539
    %v3551 = vadd.f32 %v3487, %v3541
    %v3552 = vadd.f32 %v3488, %v3543
    %v3553 = vadd.f32 %v3489, %v3545
    %v3554 = vmul.f32 %v581, %v3470
    %v3555 = vmul.f32 %v581, %v3471
    %v3556 = vmul.f32 %v581, %v3472
    %v3557 = vmul.f32 %v581, %v3473
    %3562 = vrot.lane.b32.xlu0 %v3554, 127
    %v3563 = vpop.permute.xlu0 %3562
    %3564 = vrot.lane.b32.xlu0 %v3555, 127
    %v3565 = vpop.permute.xlu0 %3564
    %3566 = vrot.lane.b32.xlu0 %v3556, 127
    %v3567 = vpop.permute.xlu0 %3566
    %3568 = vrot.lane.b32.xlu0 %v3557, 127
    %v3569 = vpop.permute.xlu0 %3568
    %v3574 = vadd.f32 %v3494, %v3563
    %v3575 = vadd.f32 %v3495, %v3565
    %v3576 = vadd.f32 %v3496, %v3567
    %v3577 = vadd.f32 %v3497, %v3569
    %v3578 = vmul.f32 %v606, %v3470
    %v3579 = vmul.f32 %v606, %v3471
    %v3580 = vmul.f32 %v606, %v3472
    %v3581 = vmul.f32 %v606, %v3473
    %3586 = vrot.lane.b32.xlu0 %v3578, 127
    %v3587 = vpop.permute.xlu0 %3586
    %3588 = vrot.lane.b32.xlu0 %v3579, 127
    %v3589 = vpop.permute.xlu0 %3588
    %3590 = vrot.lane.b32.xlu0 %v3580, 127
    %v3591 = vpop.permute.xlu0 %3590
    %3592 = vrot.lane.b32.xlu0 %v3581, 127
    %v3593 = vpop.permute.xlu0 %3592
    %v3598 = vadd.f32 %v3502, %v3587
    %v3599 = vadd.f32 %v3503, %v3589
    %v3600 = vadd.f32 %v3504, %v3591
    %v3601 = vadd.f32 %v3505, %v3593
    %v3602 = vmul.f32 %v631, %v3470
    %v3603 = vmul.f32 %v631, %v3471
    %v3604 = vmul.f32 %v631, %v3472
    %v3605 = vmul.f32 %v631, %v3473
    %3610 = vrot.lane.b32.xlu0 %v3602, 126
    %v3611 = vpop.permute.xlu0 %3610
    %3612 = vrot.lane.b32.xlu0 %v3603, 126
    %v3613 = vpop.permute.xlu0 %3612
    %3614 = vrot.lane.b32.xlu0 %v3604, 126
    %v3615 = vpop.permute.xlu0 %3614
    %3616 = vrot.lane.b32.xlu0 %v3605, 126
    %v3617 = vpop.permute.xlu0 %3616
    %v3622 = vadd.f32 %v3526, %v3611
    %v3623 = vadd.f32 %v3527, %v3613
    %v3624 = vadd.f32 %v3528, %v3615
    %v3625 = vadd.f32 %v3529, %v3617
    %v3626 = vmul.f32 %v656, %v3470
    %v3627 = vmul.f32 %v656, %v3471
    %v3628 = vmul.f32 %v656, %v3472
    %v3629 = vmul.f32 %v656, %v3473
    %3634 = vrot.lane.b32.xlu0 %v3626, 126
    %v3635 = vpop.permute.xlu0 %3634
    %3636 = vrot.lane.b32.xlu0 %v3627, 126
    %v3637 = vpop.permute.xlu0 %3636
    %3638 = vrot.lane.b32.xlu0 %v3628, 126
    %v3639 = vpop.permute.xlu0 %3638
    %3640 = vrot.lane.b32.xlu0 %v3629, 126
    %v3641 = vpop.permute.xlu0 %3640
    %v3646 = vadd.f32 %v3550, %v3635
    %v3647 = vadd.f32 %v3551, %v3637
    %v3648 = vadd.f32 %v3552, %v3639
    %v3649 = vadd.f32 %v3553, %v3641
    %v3650 = vmul.f32 %v681, %v3470
    %v3651 = vmul.f32 %v681, %v3471
    %v3652 = vmul.f32 %v681, %v3472
    %v3653 = vmul.f32 %v681, %v3473
    %3658 = vrot.lane.b32.xlu0 %v3650, 126
    %v3659 = vpop.permute.xlu0 %3658
    %3660 = vrot.lane.b32.xlu0 %v3651, 126
    %v3661 = vpop.permute.xlu0 %3660
    %3662 = vrot.lane.b32.xlu0 %v3652, 126
    %v3663 = vpop.permute.xlu0 %3662
    %3664 = vrot.lane.b32.xlu0 %v3653, 126
    %v3665 = vpop.permute.xlu0 %3664
    %v3670 = vadd.f32 %v3574, %v3659
    %v3671 = vadd.f32 %v3575, %v3661
    %v3672 = vadd.f32 %v3576, %v3663
    %v3673 = vadd.f32 %v3577, %v3665
    %v3674 = vmul.f32 %v706, %v3470
    %v3675 = vmul.f32 %v706, %v3471
    %v3676 = vmul.f32 %v706, %v3472
    %v3677 = vmul.f32 %v706, %v3473
    %3682 = vrot.lane.b32.xlu0 %v3674, 126
    %v3683 = vpop.permute.xlu0 %3682
    %3684 = vrot.lane.b32.xlu0 %v3675, 126
    %v3685 = vpop.permute.xlu0 %3684
    %3686 = vrot.lane.b32.xlu0 %v3676, 126
    %v3687 = vpop.permute.xlu0 %3686
    %3688 = vrot.lane.b32.xlu0 %v3677, 126
    %v3689 = vpop.permute.xlu0 %3688
    %v3694 = vadd.f32 %v3598, %v3683
    %v3695 = vadd.f32 %v3599, %v3685
    %v3696 = vadd.f32 %v3600, %v3687
    %v3697 = vadd.f32 %v3601, %v3689
    %v3698 = vld [vmem:[#allocation2 + $0x1] sm:$0xff]
    %v3699 = vld [vmem:[#allocation2 + $0x9] sm:$0xff]
    %v3700 = vld [vmem:[#allocation2 + $0x61] sm:$0xff]
    %v3701 = vld [vmem:[#allocation2 + $0x69] sm:$0xff]
    %v3702 = vmul.f32 %v735, %v3698
    %v3703 = vmul.f32 %v735, %v3699
    %v3704 = vmul.f32 %v735, %v3700
    %v3705 = vmul.f32 %v735, %v3701
    %v3706 = vadd.f32 %v3622, %v3702
    %v3707 = vadd.f32 %v3623, %v3703
    %v3708 = vadd.f32 %v3624, %v3704
    %v3709 = vadd.f32 %v3625, %v3705
    %v3710 = vmul.f32 %v744, %v3698
    %v3711 = vmul.f32 %v744, %v3699
    %v3712 = vmul.f32 %v744, %v3700
    %v3713 = vmul.f32 %v744, %v3701
    %v3714 = vadd.f32 %v3646, %v3710
    %v3715 = vadd.f32 %v3647, %v3711
    %v3716 = vadd.f32 %v3648, %v3712
    %v3717 = vadd.f32 %v3649, %v3713
    %v3718 = vmul.f32 %v753, %v3698
    %v3719 = vmul.f32 %v753, %v3699
    %v3720 = vmul.f32 %v753, %v3700
    %v3721 = vmul.f32 %v753, %v3701
    %v3722 = vadd.f32 %v3670, %v3718
    %v3723 = vadd.f32 %v3671, %v3719
    %v3724 = vadd.f32 %v3672, %v3720
    %v3725 = vadd.f32 %v3673, %v3721
    %v3726 = vmul.f32 %v762, %v3698
    %v3727 = vmul.f32 %v762, %v3699
    %v3728 = vmul.f32 %v762, %v3700
    %v3729 = vmul.f32 %v762, %v3701
    %v3730 = vadd.f32 %v3694, %v3726
    %v3731 = vadd.f32 %v3695, %v3727
    %v3732 = vadd.f32 %v3696, %v3728
    %v3733 = vadd.f32 %v3697, %v3729
    %v3734 = vmul.f32 %v771, %v3698
    %v3735 = vmul.f32 %v771, %v3699
    %v3736 = vmul.f32 %v771, %v3700
    %v3737 = vmul.f32 %v771, %v3701
    %3742 = vrot.lane.b32.xlu0 %v3734, 127
    %v3743 = vpop.permute.xlu0 %3742
    %3744 = vrot.lane.b32.xlu0 %v3735, 127
    %v3745 = vpop.permute.xlu0 %3744
    %3746 = vrot.lane.b32.xlu0 %v3736, 127
    %v3747 = vpop.permute.xlu0 %3746
    %3748 = vrot.lane.b32.xlu0 %v3737, 127
    %v3749 = vpop.permute.xlu0 %3748
    %v3754 = vadd.f32 %v3706, %v3743
    %v3755 = vadd.f32 %v3707, %v3745
    %v3756 = vadd.f32 %v3708, %v3747
    %v3757 = vadd.f32 %v3709, %v3749
    %v3758 = vmul.f32 %v796, %v3698
    %v3759 = vmul.f32 %v796, %v3699
    %v3760 = vmul.f32 %v796, %v3700
    %v3761 = vmul.f32 %v796, %v3701
    %3766 = vrot.lane.b32.xlu0 %v3758, 127
    %v3767 = vpop.permute.xlu0 %3766
    %3768 = vrot.lane.b32.xlu0 %v3759, 127
    %v3769 = vpop.permute.xlu0 %3768
    %3770 = vrot.lane.b32.xlu0 %v3760, 127
    %v3771 = vpop.permute.xlu0 %3770
    %3772 = vrot.lane.b32.xlu0 %v3761, 127
    %v3773 = vpop.permute.xlu0 %3772
    %v3778 = vadd.f32 %v3714, %v3767
    %v3779 = vadd.f32 %v3715, %v3769
    %v3780 = vadd.f32 %v3716, %v3771
    %v3781 = vadd.f32 %v3717, %v3773
    %v3782 = vmul.f32 %v821, %v3698
    %v3783 = vmul.f32 %v821, %v3699
    %v3784 = vmul.f32 %v821, %v3700
    %v3785 = vmul.f32 %v821, %v3701
    %3790 = vrot.lane.b32.xlu0 %v3782, 127
    %v3791 = vpop.permute.xlu0 %3790
    %3792 = vrot.lane.b32.xlu0 %v3783, 127
    %v3793 = vpop.permute.xlu0 %3792
    %3794 = vrot.lane.b32.xlu0 %v3784, 127
    %v3795 = vpop.permute.xlu0 %3794
    %3796 = vrot.lane.b32.xlu0 %v3785, 127
    %v3797 = vpop.permute.xlu0 %3796
    %v3802 = vadd.f32 %v3722, %v3791
    %v3803 = vadd.f32 %v3723, %v3793
    %v3804 = vadd.f32 %v3724, %v3795
    %v3805 = vadd.f32 %v3725, %v3797
    %v3806 = vmul.f32 %v846, %v3698
    %v3807 = vmul.f32 %v846, %v3699
    %v3808 = vmul.f32 %v846, %v3700
    %v3809 = vmul.f32 %v846, %v3701
    %3814 = vrot.lane.b32.xlu0 %v3806, 127
    %v3815 = vpop.permute.xlu0 %3814
    %3816 = vrot.lane.b32.xlu0 %v3807, 127
    %v3817 = vpop.permute.xlu0 %3816
    %3818 = vrot.lane.b32.xlu0 %v3808, 127
    %v3819 = vpop.permute.xlu0 %3818
    %3820 = vrot.lane.b32.xlu0 %v3809, 127
    %v3821 = vpop.permute.xlu0 %3820
    %v3826 = vadd.f32 %v3730, %v3815
    %v3827 = vadd.f32 %v3731, %v3817
    %v3828 = vadd.f32 %v3732, %v3819
    %v3829 = vadd.f32 %v3733, %v3821
    %v3830 = vmul.f32 %v871, %v3698
    %v3831 = vmul.f32 %v871, %v3699
    %v3832 = vmul.f32 %v871, %v3700
    %v3833 = vmul.f32 %v871, %v3701
    %3838 = vrot.lane.b32.xlu0 %v3830, 126
    %v3839 = vpop.permute.xlu0 %3838
    %3840 = vrot.lane.b32.xlu0 %v3831, 126
    %v3841 = vpop.permute.xlu0 %3840
    %3842 = vrot.lane.b32.xlu0 %v3832, 126
    %v3843 = vpop.permute.xlu0 %3842
    %3844 = vrot.lane.b32.xlu0 %v3833, 126
    %v3845 = vpop.permute.xlu0 %3844
    %v3850 = vadd.f32 %v3754, %v3839
    %v3851 = vadd.f32 %v3755, %v3841
    %v3852 = vadd.f32 %v3756, %v3843
    %v3853 = vadd.f32 %v3757, %v3845
    %v3854 = vmul.f32 %v896, %v3698
    %v3855 = vmul.f32 %v896, %v3699
    %v3856 = vmul.f32 %v896, %v3700
    %v3857 = vmul.f32 %v896, %v3701
    %3862 = vrot.lane.b32.xlu0 %v3854, 126
    %v3863 = vpop.permute.xlu0 %3862
    %3864 = vrot.lane.b32.xlu0 %v3855, 126
    %v3865 = vpop.permute.xlu0 %3864
    %3866 = vrot.lane.b32.xlu0 %v3856, 126
    %v3867 = vpop.permute.xlu0 %3866
    %3868 = vrot.lane.b32.xlu0 %v3857, 126
    %v3869 = vpop.permute.xlu0 %3868
    %v3874 = vadd.f32 %v3778, %v3863
    %v3875 = vadd.f32 %v3779, %v3865
    %v3876 = vadd.f32 %v3780, %v3867
    %v3877 = vadd.f32 %v3781, %v3869
    %v3878 = vmul.f32 %v921, %v3698
    %v3879 = vmul.f32 %v921, %v3699
    %v3880 = vmul.f32 %v921, %v3700
    %v3881 = vmul.f32 %v921, %v3701
    %3886 = vrot.lane.b32.xlu0 %v3878, 126
    %v3887 = vpop.permute.xlu0 %3886
    %3888 = vrot.lane.b32.xlu0 %v3879, 126
    %v3889 = vpop.permute.xlu0 %3888
    %3890 = vrot.lane.b32.xlu0 %v3880, 126
    %v3891 = vpop.permute.xlu0 %3890
    %3892 = vrot.lane.b32.xlu0 %v3881, 126
    %v3893 = vpop.permute.xlu0 %3892
    %v3898 = vadd.f32 %v3802, %v3887
    %v3899 = vadd.f32 %v3803, %v3889
    %v3900 = vadd.f32 %v3804, %v3891
    %v3901 = vadd.f32 %v3805, %v3893
    %v3902 = vmul.f32 %v946, %v3698
    %v3903 = vmul.f32 %v946, %v3699
    %v3904 = vmul.f32 %v946, %v3700
    %v3905 = vmul.f32 %v946, %v3701
    %3910 = vrot.lane.b32.xlu0 %v3902, 126
    %v3911 = vpop.permute.xlu0 %3910
    %3912 = vrot.lane.b32.xlu0 %v3903, 126
    %v3913 = vpop.permute.xlu0 %3912
    %3914 = vrot.lane.b32.xlu0 %v3904, 126
    %v3915 = vpop.permute.xlu0 %3914
    %3916 = vrot.lane.b32.xlu0 %v3905, 126
    %v3917 = vpop.permute.xlu0 %3916
    %v3922 = vadd.f32 %v3826, %v3911
    %v3923 = vadd.f32 %v3827, %v3913
    %v3924 = vadd.f32 %v3828, %v3915
    %v3925 = vadd.f32 %v3829, %v3917
    %v3926 = vld [vmem:[#allocation2 + $0x2] sm:$0xff]
    %v3927 = vld [vmem:[#allocation2 + $0xa] sm:$0xff]
    %v3928 = vld [vmem:[#allocation2 + $0x62] sm:$0xff]
    %v3929 = vld [vmem:[#allocation2 + $0x6a] sm:$0xff]
    %v3930 = vmul.f32 %v975, %v3926
    %v3931 = vmul.f32 %v975, %v3927
    %v3932 = vmul.f32 %v975, %v3928
    %v3933 = vmul.f32 %v975, %v3929
    %v3934 = vadd.f32 %v3850, %v3930
    %v3935 = vadd.f32 %v3851, %v3931
    %v3936 = vadd.f32 %v3852, %v3932
    %v3937 = vadd.f32 %v3853, %v3933
    %v3938 = vmul.f32 %v984, %v3926
    %v3939 = vmul.f32 %v984, %v3927
    %v3940 = vmul.f32 %v984, %v3928
    %v3941 = vmul.f32 %v984, %v3929
    %v3942 = vadd.f32 %v3874, %v3938
    %v3943 = vadd.f32 %v3875, %v3939
    %v3944 = vadd.f32 %v3876, %v3940
    %v3945 = vadd.f32 %v3877, %v3941
    %v3946 = vmul.f32 %v993, %v3926
    %v3947 = vmul.f32 %v993, %v3927
    %v3948 = vmul.f32 %v993, %v3928
    %v3949 = vmul.f32 %v993, %v3929
    %v3950 = vadd.f32 %v3898, %v3946
    %v3951 = vadd.f32 %v3899, %v3947
    %v3952 = vadd.f32 %v3900, %v3948
    %v3953 = vadd.f32 %v3901, %v3949
    %v3954 = vmul.f32 %v1002, %v3926
    %v3955 = vmul.f32 %v1002, %v3927
    %v3956 = vmul.f32 %v1002, %v3928
    %v3957 = vmul.f32 %v1002, %v3929
    %v3958 = vadd.f32 %v3922, %v3954
    %v3959 = vadd.f32 %v3923, %v3955
    %v3960 = vadd.f32 %v3924, %v3956
    %v3961 = vadd.f32 %v3925, %v3957
    %v3962 = vmul.f32 %v1011, %v3926
    %v3963 = vmul.f32 %v1011, %v3927
    %v3964 = vmul.f32 %v1011, %v3928
    %v3965 = vmul.f32 %v1011, %v3929
    %3970 = vrot.lane.b32.xlu0 %v3962, 127
    %v3971 = vpop.permute.xlu0 %3970
    %3972 = vrot.lane.b32.xlu0 %v3963, 127
    %v3973 = vpop.permute.xlu0 %3972
    %3974 = vrot.lane.b32.xlu0 %v3964, 127
    %v3975 = vpop.permute.xlu0 %3974
    %3976 = vrot.lane.b32.xlu0 %v3965, 127
    %v3977 = vpop.permute.xlu0 %3976
    %v3982 = vadd.f32 %v3934, %v3971
    %v3983 = vadd.f32 %v3935, %v3973
    %v3984 = vadd.f32 %v3936, %v3975
    %v3985 = vadd.f32 %v3937, %v3977
    %v3986 = vmul.f32 %v1036, %v3926
    %v3987 = vmul.f32 %v1036, %v3927
    %v3988 = vmul.f32 %v1036, %v3928
    %v3989 = vmul.f32 %v1036, %v3929
    %3994 = vrot.lane.b32.xlu0 %v3986, 127
    %v3995 = vpop.permute.xlu0 %3994
    %3996 = vrot.lane.b32.xlu0 %v3987, 127
    %v3997 = vpop.permute.xlu0 %3996
    %3998 = vrot.lane.b32.xlu0 %v3988, 127
    %v3999 = vpop.permute.xlu0 %3998
    %4000 = vrot.lane.b32.xlu0 %v3989, 127
    %v4001 = vpop.permute.xlu0 %4000
    %v4006 = vadd.f32 %v3942, %v3995
    %v4007 = vadd.f32 %v3943, %v3997
    %v4008 = vadd.f32 %v3944, %v3999
    %v4009 = vadd.f32 %v3945, %v4001
    %v4010 = vmul.f32 %v1061, %v3926
    %v4011 = vmul.f32 %v1061, %v3927
    %v4012 = vmul.f32 %v1061, %v3928
    %v4013 = vmul.f32 %v1061, %v3929
    %4018 = vrot.lane.b32.xlu0 %v4010, 127
    %v4019 = vpop.permute.xlu0 %4018
    %4020 = vrot.lane.b32.xlu0 %v4011, 127
    %v4021 = vpop.permute.xlu0 %4020
    %4022 = vrot.lane.b32.xlu0 %v4012, 127
    %v4023 = vpop.permute.xlu0 %4022
    %4024 = vrot.lane.b32.xlu0 %v4013, 127
    %v4025 = vpop.permute.xlu0 %4024
    %v4030 = vadd.f32 %v3950, %v4019
    %v4031 = vadd.f32 %v3951, %v4021
    %v4032 = vadd.f32 %v3952, %v4023
    %v4033 = vadd.f32 %v3953, %v4025
    %v4034 = vmul.f32 %v1086, %v3926
    %v4035 = vmul.f32 %v1086, %v3927
    %v4036 = vmul.f32 %v1086, %v3928
    %v4037 = vmul.f32 %v1086, %v3929
    %4042 = vrot.lane.b32.xlu0 %v4034, 127
    %v4043 = vpop.permute.xlu0 %4042
    %4044 = vrot.lane.b32.xlu0 %v4035, 127
    %v4045 = vpop.permute.xlu0 %4044
    %4046 = vrot.lane.b32.xlu0 %v4036, 127
    %v4047 = vpop.permute.xlu0 %4046
    %4048 = vrot.lane.b32.xlu0 %v4037, 127
    %v4049 = vpop.permute.xlu0 %4048
    %v4054 = vadd.f32 %v3958, %v4043
    %v4055 = vadd.f32 %v3959, %v4045
    %v4056 = vadd.f32 %v3960, %v4047
    %v4057 = vadd.f32 %v3961, %v4049
    %v4058 = vmul.f32 %v1111, %v3926
    %v4059 = vmul.f32 %v1111, %v3927
    %v4060 = vmul.f32 %v1111, %v3928
    %v4061 = vmul.f32 %v1111, %v3929
    %4066 = vrot.lane.b32.xlu0 %v4058, 126
    %v4067 = vpop.permute.xlu0 %4066
    %4068 = vrot.lane.b32.xlu0 %v4059, 126
    %v4069 = vpop.permute.xlu0 %4068
    %4070 = vrot.lane.b32.xlu0 %v4060, 126
    %v4071 = vpop.permute.xlu0 %4070
    %4072 = vrot.lane.b32.xlu0 %v4061, 126
    %v4073 = vpop.permute.xlu0 %4072
    %v4078 = vadd.f32 %v3982, %v4067
    %v4079 = vadd.f32 %v3983, %v4069
    %v4080 = vadd.f32 %v3984, %v4071
    %v4081 = vadd.f32 %v3985, %v4073
    %v4082 = vmul.f32 %v1136, %v3926
    %v4083 = vmul.f32 %v1136, %v3927
    %v4084 = vmul.f32 %v1136, %v3928
    %v4085 = vmul.f32 %v1136, %v3929
    %4090 = vrot.lane.b32.xlu0 %v4082, 126
    %v4091 = vpop.permute.xlu0 %4090
    %4092 = vrot.lane.b32.xlu0 %v4083, 126
    %v4093 = vpop.permute.xlu0 %4092
    %4094 = vrot.lane.b32.xlu0 %v4084, 126
    %v4095 = vpop.permute.xlu0 %4094
    %4096 = vrot.lane.b32.xlu0 %v4085, 126
    %v4097 = vpop.permute.xlu0 %4096
    %v4102 = vadd.f32 %v4006, %v4091
    %v4103 = vadd.f32 %v4007, %v4093
    %v4104 = vadd.f32 %v4008, %v4095
    %v4105 = vadd.f32 %v4009, %v4097
    %v4106 = vmul.f32 %v1161, %v3926
    %v4107 = vmul.f32 %v1161, %v3927
    %v4108 = vmul.f32 %v1161, %v3928
    %v4109 = vmul.f32 %v1161, %v3929
    %4114 = vrot.lane.b32.xlu0 %v4106, 126
    %v4115 = vpop.permute.xlu0 %4114
    %4116 = vrot.lane.b32.xlu0 %v4107, 126
    %v4117 = vpop.permute.xlu0 %4116
    %4118 = vrot.lane.b32.xlu0 %v4108, 126
    %v4119 = vpop.permute.xlu0 %4118
    %4120 = vrot.lane.b32.xlu0 %v4109, 126
    %v4121 = vpop.permute.xlu0 %4120
    %v4126 = vadd.f32 %v4030, %v4115
    %v4127 = vadd.f32 %v4031, %v4117
    %v4128 = vadd.f32 %v4032, %v4119
    %v4129 = vadd.f32 %v4033, %v4121
    %v4130 = vmul.f32 %v1186, %v3926
    %v4131 = vmul.f32 %v1186, %v3927
    %v4132 = vmul.f32 %v1186, %v3928
    %v4133 = vmul.f32 %v1186, %v3929
    %4138 = vrot.lane.b32.xlu0 %v4130, 126
    %v4139 = vpop.permute.xlu0 %4138
    %4140 = vrot.lane.b32.xlu0 %v4131, 126
    %v4141 = vpop.permute.xlu0 %4140
    %4142 = vrot.lane.b32.xlu0 %v4132, 126
    %v4143 = vpop.permute.xlu0 %4142
    %4144 = vrot.lane.b32.xlu0 %v4133, 126
    %v4145 = vpop.permute.xlu0 %4144
    %v4150 = vadd.f32 %v4054, %v4139
    %v4151 = vadd.f32 %v4055, %v4141
    %v4152 = vadd.f32 %v4056, %v4143
    %v4153 = vadd.f32 %v4057, %v4145
    %v4154 = vld [vmem:[%s1211] sm:$0xff]
    %v4155 = vld [vmem:[%s1211 + $0x8] sm:$0xff]
    %v4156 = vld [vmem:[%s1211 + $0x60] sm:$0xff]
    %v4157 = vld [vmem:[%s1211 + $0x68] sm:$0xff]
    %v4158 = vmul.f32 %v1216, %v4154
    %v4159 = vmul.f32 %v1216, %v4155
    %v4160 = vmul.f32 %v1216, %v4156
    %v4161 = vmul.f32 %v1216, %v4157
    %v4162 = vadd.f32 %v4078, %v4158
    %v4163 = vadd.f32 %v4079, %v4159
    %v4164 = vadd.f32 %v4080, %v4160
    %v4165 = vadd.f32 %v4081, %v4161
    %v4166 = vmul.f32 %v1225, %v4154
    %v4167 = vmul.f32 %v1225, %v4155
    %v4168 = vmul.f32 %v1225, %v4156
    %v4169 = vmul.f32 %v1225, %v4157
    %v4170 = vadd.f32 %v4102, %v4166
    %v4171 = vadd.f32 %v4103, %v4167
    %v4172 = vadd.f32 %v4104, %v4168
    %v4173 = vadd.f32 %v4105, %v4169
    %v4174 = vmul.f32 %v1234, %v4154
    %v4175 = vmul.f32 %v1234, %v4155
    %v4176 = vmul.f32 %v1234, %v4156
    %v4177 = vmul.f32 %v1234, %v4157
    %v4178 = vadd.f32 %v4126, %v4174
    %v4179 = vadd.f32 %v4127, %v4175
    %v4180 = vadd.f32 %v4128, %v4176
    %v4181 = vadd.f32 %v4129, %v4177
    %v4182 = vmul.f32 %v1243, %v4154
    %v4183 = vmul.f32 %v1243, %v4155
    %v4184 = vmul.f32 %v1243, %v4156
    %v4185 = vmul.f32 %v1243, %v4157
    %v4186 = vadd.f32 %v4150, %v4182
    %v4187 = vadd.f32 %v4151, %v4183
    %v4188 = vadd.f32 %v4152, %v4184
    %v4189 = vadd.f32 %v4153, %v4185
    %v4190 = vmul.f32 %v1252, %v4154
    %v4191 = vmul.f32 %v1252, %v4155
    %v4192 = vmul.f32 %v1252, %v4156
    %v4193 = vmul.f32 %v1252, %v4157
    %4198 = vrot.lane.b32.xlu0 %v4190, 127
    %v4199 = vpop.permute.xlu0 %4198
    %4200 = vrot.lane.b32.xlu0 %v4191, 127
    %v4201 = vpop.permute.xlu0 %4200
    %4202 = vrot.lane.b32.xlu0 %v4192, 127
    %v4203 = vpop.permute.xlu0 %4202
    %4204 = vrot.lane.b32.xlu0 %v4193, 127
    %v4205 = vpop.permute.xlu0 %4204
    %v4210 = vadd.f32 %v4162, %v4199
    %v4211 = vadd.f32 %v4163, %v4201
    %v4212 = vadd.f32 %v4164, %v4203
    %v4213 = vadd.f32 %v4165, %v4205
    %v4214 = vmul.f32 %v1277, %v4154
    %v4215 = vmul.f32 %v1277, %v4155
    %v4216 = vmul.f32 %v1277, %v4156
    %v4217 = vmul.f32 %v1277, %v4157
    %4222 = vrot.lane.b32.xlu0 %v4214, 127
    %v4223 = vpop.permute.xlu0 %4222
    %4224 = vrot.lane.b32.xlu0 %v4215, 127
    %v4225 = vpop.permute.xlu0 %4224
    %4226 = vrot.lane.b32.xlu0 %v4216, 127
    %v4227 = vpop.permute.xlu0 %4226
    %4228 = vrot.lane.b32.xlu0 %v4217, 127
    %v4229 = vpop.permute.xlu0 %4228
    %v4234 = vadd.f32 %v4170, %v4223
    %v4235 = vadd.f32 %v4171, %v4225
    %v4236 = vadd.f32 %v4172, %v4227
    %v4237 = vadd.f32 %v4173, %v4229
    %v4238 = vmul.f32 %v1302, %v4154
    %v4239 = vmul.f32 %v1302, %v4155
    %v4240 = vmul.f32 %v1302, %v4156
    %v4241 = vmul.f32 %v1302, %v4157
    %4246 = vrot.lane.b32.xlu0 %v4238, 127
    %v4247 = vpop.permute.xlu0 %4246
    %4248 = vrot.lane.b32.xlu0 %v4239, 127
    %v4249 = vpop.permute.xlu0 %4248
    %4250 = vrot.lane.b32.xlu0 %v4240, 127
    %v4251 = vpop.permute.xlu0 %4250
    %4252 = vrot.lane.b32.xlu0 %v4241, 127
    %v4253 = vpop.permute.xlu0 %4252
    %v4258 = vadd.f32 %v4178, %v4247
    %v4259 = vadd.f32 %v4179, %v4249
    %v4260 = vadd.f32 %v4180, %v4251
    %v4261 = vadd.f32 %v4181, %v4253
    %v4262 = vmul.f32 %v1327, %v4154
    %v4263 = vmul.f32 %v1327, %v4155
    %v4264 = vmul.f32 %v1327, %v4156
    %v4265 = vmul.f32 %v1327, %v4157
    %4270 = vrot.lane.b32.xlu0 %v4262, 127
    %v4271 = vpop.permute.xlu0 %4270
    %4272 = vrot.lane.b32.xlu0 %v4263, 127
    %v4273 = vpop.permute.xlu0 %4272
    %4274 = vrot.lane.b32.xlu0 %v4264, 127
    %v4275 = vpop.permute.xlu0 %4274
    %4276 = vrot.lane.b32.xlu0 %v4265, 127
    %v4277 = vpop.permute.xlu0 %4276
    %v4282 = vadd.f32 %v4186, %v4271
    %v4283 = vadd.f32 %v4187, %v4273
    %v4284 = vadd.f32 %v4188, %v4275
    %v4285 = vadd.f32 %v4189, %v4277
    %v4286 = vmul.f32 %v1352, %v4154
    %v4287 = vmul.f32 %v1352, %v4155
    %v4288 = vmul.f32 %v1352, %v4156
    %v4289 = vmul.f32 %v1352, %v4157
    %4294 = vrot.lane.b32.xlu0 %v4286, 126
    %v4295 = vpop.permute.xlu0 %4294
    %4296 = vrot.lane.b32.xlu0 %v4287, 126
    %v4297 = vpop.permute.xlu0 %4296
    %4298 = vrot.lane.b32.xlu0 %v4288, 126
    %v4299 = vpop.permute.xlu0 %4298
    %4300 = vrot.lane.b32.xlu0 %v4289, 126
    %v4301 = vpop.permute.xlu0 %4300
    %v4306 = vadd.f32 %v4210, %v4295
    %v4307 = vadd.f32 %v4211, %v4297
    %v4308 = vadd.f32 %v4212, %v4299
    %v4309 = vadd.f32 %v4213, %v4301
    %v4310 = vmul.f32 %v1377, %v4154
    %v4311 = vmul.f32 %v1377, %v4155
    %v4312 = vmul.f32 %v1377, %v4156
    %v4313 = vmul.f32 %v1377, %v4157
    %4318 = vrot.lane.b32.xlu0 %v4310, 126
    %v4319 = vpop.permute.xlu0 %4318
    %4320 = vrot.lane.b32.xlu0 %v4311, 126
    %v4321 = vpop.permute.xlu0 %4320
    %4322 = vrot.lane.b32.xlu0 %v4312, 126
    %v4323 = vpop.permute.xlu0 %4322
    %4324 = vrot.lane.b32.xlu0 %v4313, 126
    %v4325 = vpop.permute.xlu0 %4324
    %v4330 = vadd.f32 %v4234, %v4319
    %v4331 = vadd.f32 %v4235, %v4321
    %v4332 = vadd.f32 %v4236, %v4323
    %v4333 = vadd.f32 %v4237, %v4325
    %v4334 = vmul.f32 %v1402, %v4154
    %v4335 = vmul.f32 %v1402, %v4155
    %v4336 = vmul.f32 %v1402, %v4156
    %v4337 = vmul.f32 %v1402, %v4157
    %4342 = vrot.lane.b32.xlu0 %v4334, 126
    %v4343 = vpop.permute.xlu0 %4342
    %4344 = vrot.lane.b32.xlu0 %v4335, 126
    %v4345 = vpop.permute.xlu0 %4344
    %4346 = vrot.lane.b32.xlu0 %v4336, 126
    %v4347 = vpop.permute.xlu0 %4346
    %4348 = vrot.lane.b32.xlu0 %v4337, 126
    %v4349 = vpop.permute.xlu0 %4348
    %v4354 = vadd.f32 %v4258, %v4343
    %v4355 = vadd.f32 %v4259, %v4345
    %v4356 = vadd.f32 %v4260, %v4347
    %v4357 = vadd.f32 %v4261, %v4349
    %v4358 = vmul.f32 %v1427, %v4154
    %v4359 = vmul.f32 %v1427, %v4155
    %v4360 = vmul.f32 %v1427, %v4156
    %v4361 = vmul.f32 %v1427, %v4157
    %4366 = vrot.lane.b32.xlu0 %v4358, 126
    %v4367 = vpop.permute.xlu0 %4366
    %4368 = vrot.lane.b32.xlu0 %v4359, 126
    %v4369 = vpop.permute.xlu0 %4368
    %4370 = vrot.lane.b32.xlu0 %v4360, 126
    %v4371 = vpop.permute.xlu0 %4370
    %4372 = vrot.lane.b32.xlu0 %v4361, 126
    %v4373 = vpop.permute.xlu0 %4372
    %v4378 = vadd.f32 %v4282, %v4367
    %v4379 = vadd.f32 %v4283, %v4369
    %v4380 = vadd.f32 %v4284, %v4371
    %v4381 = vadd.f32 %v4285, %v4373
    %v4382 = vld [vmem:[%s1211 + $0x1] sm:$0xff]
    %v4383 = vld [vmem:[%s1211 + $0x9] sm:$0xff]
    %v4384 = vld [vmem:[%s1211 + $0x61] sm:$0xff]
    %v4385 = vld [vmem:[%s1211 + $0x69] sm:$0xff]
    %v4386 = vmul.f32 %v1456, %v4382
    %v4387 = vmul.f32 %v1456, %v4383
    %v4388 = vmul.f32 %v1456, %v4384
    %v4389 = vmul.f32 %v1456, %v4385
    %v4390 = vadd.f32 %v4306, %v4386
    %v4391 = vadd.f32 %v4307, %v4387
    %v4392 = vadd.f32 %v4308, %v4388
    %v4393 = vadd.f32 %v4309, %v4389
    %v4394 = vmul.f32 %v1465, %v4382
    %v4395 = vmul.f32 %v1465, %v4383
    %v4396 = vmul.f32 %v1465, %v4384
    %v4397 = vmul.f32 %v1465, %v4385
    %v4398 = vadd.f32 %v4330, %v4394
    %v4399 = vadd.f32 %v4331, %v4395
    %v4400 = vadd.f32 %v4332, %v4396
    %v4401 = vadd.f32 %v4333, %v4397
    %v4402 = vmul.f32 %v1474, %v4382
    %v4403 = vmul.f32 %v1474, %v4383
    %v4404 = vmul.f32 %v1474, %v4384
    %v4405 = vmul.f32 %v1474, %v4385
    %v4406 = vadd.f32 %v4354, %v4402
    %v4407 = vadd.f32 %v4355, %v4403
    %v4408 = vadd.f32 %v4356, %v4404
    %v4409 = vadd.f32 %v4357, %v4405
    %v4410 = vmul.f32 %v1483, %v4382
    %v4411 = vmul.f32 %v1483, %v4383
    %v4412 = vmul.f32 %v1483, %v4384
    %v4413 = vmul.f32 %v1483, %v4385
    %v4414 = vadd.f32 %v4378, %v4410
    %v4415 = vadd.f32 %v4379, %v4411
    %v4416 = vadd.f32 %v4380, %v4412
    %v4417 = vadd.f32 %v4381, %v4413
    %v4418 = vmul.f32 %v1492, %v4382
    %v4419 = vmul.f32 %v1492, %v4383
    %v4420 = vmul.f32 %v1492, %v4384
    %v4421 = vmul.f32 %v1492, %v4385
    %4426 = vrot.lane.b32.xlu0 %v4418, 127
    %v4427 = vpop.permute.xlu0 %4426
    %4428 = vrot.lane.b32.xlu0 %v4419, 127
    %v4429 = vpop.permute.xlu0 %4428
    %4430 = vrot.lane.b32.xlu0 %v4420, 127
    %v4431 = vpop.permute.xlu0 %4430
    %4432 = vrot.lane.b32.xlu0 %v4421, 127
    %v4433 = vpop.permute.xlu0 %4432
    %v4438 = vadd.f32 %v4390, %v4427
    %v4439 = vadd.f32 %v4391, %v4429
    %v4440 = vadd.f32 %v4392, %v4431
    %v4441 = vadd.f32 %v4393, %v4433
    %v4442 = vmul.f32 %v1517, %v4382
    %v4443 = vmul.f32 %v1517, %v4383
    %v4444 = vmul.f32 %v1517, %v4384
    %v4445 = vmul.f32 %v1517, %v4385
    %4450 = vrot.lane.b32.xlu0 %v4442, 127
    %v4451 = vpop.permute.xlu0 %4450
    %4452 = vrot.lane.b32.xlu0 %v4443, 127
    %v4453 = vpop.permute.xlu0 %4452
    %4454 = vrot.lane.b32.xlu0 %v4444, 127
    %v4455 = vpop.permute.xlu0 %4454
    %4456 = vrot.lane.b32.xlu0 %v4445, 127
    %v4457 = vpop.permute.xlu0 %4456
    %v4462 = vadd.f32 %v4398, %v4451
    %v4463 = vadd.f32 %v4399, %v4453
    %v4464 = vadd.f32 %v4400, %v4455
    %v4465 = vadd.f32 %v4401, %v4457
    %v4466 = vmul.f32 %v1542, %v4382
    %v4467 = vmul.f32 %v1542, %v4383
    %v4468 = vmul.f32 %v1542, %v4384
    %v4469 = vmul.f32 %v1542, %v4385
    %4474 = vrot.lane.b32.xlu0 %v4466, 127
    %v4475 = vpop.permute.xlu0 %4474
    %4476 = vrot.lane.b32.xlu0 %v4467, 127
    %v4477 = vpop.permute.xlu0 %4476
    %4478 = vrot.lane.b32.xlu0 %v4468, 127
    %v4479 = vpop.permute.xlu0 %4478
    %4480 = vrot.lane.b32.xlu0 %v4469, 127
    %v4481 = vpop.permute.xlu0 %4480
    %v4486 = vadd.f32 %v4406, %v4475
    %v4487 = vadd.f32 %v4407, %v4477
    %v4488 = vadd.f32 %v4408, %v4479
    %v4489 = vadd.f32 %v4409, %v4481
    %v4490 = vmul.f32 %v1567, %v4382
    %v4491 = vmul.f32 %v1567, %v4383
    %v4492 = vmul.f32 %v1567, %v4384
    %v4493 = vmul.f32 %v1567, %v4385
    %4498 = vrot.lane.b32.xlu0 %v4490, 127
    %v4499 = vpop.permute.xlu0 %4498
    %4500 = vrot.lane.b32.xlu0 %v4491, 127
    %v4501 = vpop.permute.xlu0 %4500
    %4502 = vrot.lane.b32.xlu0 %v4492, 127
    %v4503 = vpop.permute.xlu0 %4502
    %4504 = vrot.lane.b32.xlu0 %v4493, 127
    %v4505 = vpop.permute.xlu0 %4504
    %v4510 = vadd.f32 %v4414, %v4499
    %v4511 = vadd.f32 %v4415, %v4501
    %v4512 = vadd.f32 %v4416, %v4503
    %v4513 = vadd.f32 %v4417, %v4505
    %v4514 = vmul.f32 %v1592, %v4382
    %v4515 = vmul.f32 %v1592, %v4383
    %v4516 = vmul.f32 %v1592, %v4384
    %v4517 = vmul.f32 %v1592, %v4385
    %4522 = vrot.lane.b32.xlu0 %v4514, 126
    %v4523 = vpop.permute.xlu0 %4522
    %4524 = vrot.lane.b32.xlu0 %v4515, 126
    %v4525 = vpop.permute.xlu0 %4524
    %4526 = vrot.lane.b32.xlu0 %v4516, 126
    %v4527 = vpop.permute.xlu0 %4526
    %4528 = vrot.lane.b32.xlu0 %v4517, 126
    %v4529 = vpop.permute.xlu0 %4528
    %v4534 = vadd.f32 %v4438, %v4523
    %v4535 = vadd.f32 %v4439, %v4525
    %v4536 = vadd.f32 %v4440, %v4527
    %v4537 = vadd.f32 %v4441, %v4529
    %v4538 = vmul.f32 %v1617, %v4382
    %v4539 = vmul.f32 %v1617, %v4383
    %v4540 = vmul.f32 %v1617, %v4384
    %v4541 = vmul.f32 %v1617, %v4385
    %4546 = vrot.lane.b32.xlu0 %v4538, 126
    %v4547 = vpop.permute.xlu0 %4546
    %4548 = vrot.lane.b32.xlu0 %v4539, 126
    %v4549 = vpop.permute.xlu0 %4548
    %4550 = vrot.lane.b32.xlu0 %v4540, 126
    %v4551 = vpop.permute.xlu0 %4550
    %4552 = vrot.lane.b32.xlu0 %v4541, 126
    %v4553 = vpop.permute.xlu0 %4552
    %v4558 = vadd.f32 %v4462, %v4547
    %v4559 = vadd.f32 %v4463, %v4549
    %v4560 = vadd.f32 %v4464, %v4551
    %v4561 = vadd.f32 %v4465, %v4553
    %v4562 = vmul.f32 %v1642, %v4382
    %v4563 = vmul.f32 %v1642, %v4383
    %v4564 = vmul.f32 %v1642, %v4384
    %v4565 = vmul.f32 %v1642, %v4385
    %4570 = vrot.lane.b32.xlu0 %v4562, 126
    %v4571 = vpop.permute.xlu0 %4570
    %4572 = vrot.lane.b32.xlu0 %v4563, 126
    %v4573 = vpop.permute.xlu0 %4572
    %4574 = vrot.lane.b32.xlu0 %v4564, 126
    %v4575 = vpop.permute.xlu0 %4574
    %4576 = vrot.lane.b32.xlu0 %v4565, 126
    %v4577 = vpop.permute.xlu0 %4576
    %v4582 = vadd.f32 %v4486, %v4571
    %v4583 = vadd.f32 %v4487, %v4573
    %v4584 = vadd.f32 %v4488, %v4575
    %v4585 = vadd.f32 %v4489, %v4577
    %v4586 = vmul.f32 %v1667, %v4382
    %v4587 = vmul.f32 %v1667, %v4383
    %v4588 = vmul.f32 %v1667, %v4384
    %v4589 = vmul.f32 %v1667, %v4385
    %4594 = vrot.lane.b32.xlu0 %v4586, 126
    %v4595 = vpop.permute.xlu0 %4594
    %4596 = vrot.lane.b32.xlu0 %v4587, 126
    %v4597 = vpop.permute.xlu0 %4596
    %4598 = vrot.lane.b32.xlu0 %v4588, 126
    %v4599 = vpop.permute.xlu0 %4598
    %4600 = vrot.lane.b32.xlu0 %v4589, 126
    %v4601 = vpop.permute.xlu0 %4600
    %v4606 = vadd.f32 %v4510, %v4595
    %v4607 = vadd.f32 %v4511, %v4597
    %v4608 = vadd.f32 %v4512, %v4599
    %v4609 = vadd.f32 %v4513, %v4601
    %v4610 = vld [vmem:[%s1211 + $0x2] sm:$0xff]
    %v4611 = vld [vmem:[%s1211 + $0xa] sm:$0xff]
    %v4612 = vld [vmem:[%s1211 + $0x62] sm:$0xff]
    %v4613 = vld [vmem:[%s1211 + $0x6a] sm:$0xff]
    %v4614 = vmul.f32 %v1696, %v4610
    %v4615 = vmul.f32 %v1696, %v4611
    %v4616 = vmul.f32 %v1696, %v4612
    %v4617 = vmul.f32 %v1696, %v4613
    %v4618 = vadd.f32 %v4534, %v4614
    %v4619 = vadd.f32 %v4535, %v4615
    %v4620 = vadd.f32 %v4536, %v4616
    %v4621 = vadd.f32 %v4537, %v4617
    %v4622 = vmul.f32 %v1705, %v4610
    %v4623 = vmul.f32 %v1705, %v4611
    %v4624 = vmul.f32 %v1705, %v4612
    %v4625 = vmul.f32 %v1705, %v4613
    %v4626 = vadd.f32 %v4558, %v4622
    %v4627 = vadd.f32 %v4559, %v4623
    %v4628 = vadd.f32 %v4560, %v4624
    %v4629 = vadd.f32 %v4561, %v4625
    %v4630 = vmul.f32 %v1714, %v4610
    %v4631 = vmul.f32 %v1714, %v4611
    %v4632 = vmul.f32 %v1714, %v4612
    %v4633 = vmul.f32 %v1714, %v4613
    %v4634 = vadd.f32 %v4582, %v4630
    %v4635 = vadd.f32 %v4583, %v4631
    %v4636 = vadd.f32 %v4584, %v4632
    %v4637 = vadd.f32 %v4585, %v4633
    %v4638 = vmul.f32 %v1723, %v4610
    %v4639 = vmul.f32 %v1723, %v4611
    %v4640 = vmul.f32 %v1723, %v4612
    %v4641 = vmul.f32 %v1723, %v4613
    %v4642 = vadd.f32 %v4606, %v4638
    %v4643 = vadd.f32 %v4607, %v4639
    %v4644 = vadd.f32 %v4608, %v4640
    %v4645 = vadd.f32 %v4609, %v4641
    %v4646 = vmul.f32 %v1732, %v4610
    %v4647 = vmul.f32 %v1732, %v4611
    %v4648 = vmul.f32 %v1732, %v4612
    %v4649 = vmul.f32 %v1732, %v4613
    %4654 = vrot.lane.b32.xlu0 %v4646, 127
    %v4655 = vpop.permute.xlu0 %4654
    %4656 = vrot.lane.b32.xlu0 %v4647, 127
    %v4657 = vpop.permute.xlu0 %4656
    %4658 = vrot.lane.b32.xlu0 %v4648, 127
    %v4659 = vpop.permute.xlu0 %4658
    %4660 = vrot.lane.b32.xlu0 %v4649, 127
    %v4661 = vpop.permute.xlu0 %4660
    %v4666 = vadd.f32 %v4618, %v4655
    %v4667 = vadd.f32 %v4619, %v4657
    %v4668 = vadd.f32 %v4620, %v4659
    %v4669 = vadd.f32 %v4621, %v4661
    %v4670 = vmul.f32 %v1757, %v4610
    %v4671 = vmul.f32 %v1757, %v4611
    %v4672 = vmul.f32 %v1757, %v4612
    %v4673 = vmul.f32 %v1757, %v4613
    %4678 = vrot.lane.b32.xlu0 %v4670, 127
    %v4679 = vpop.permute.xlu0 %4678
    %4680 = vrot.lane.b32.xlu0 %v4671, 127
    %v4681 = vpop.permute.xlu0 %4680
    %4682 = vrot.lane.b32.xlu0 %v4672, 127
    %v4683 = vpop.permute.xlu0 %4682
    %4684 = vrot.lane.b32.xlu0 %v4673, 127
    %v4685 = vpop.permute.xlu0 %4684
    %v4690 = vadd.f32 %v4626, %v4679
    %v4691 = vadd.f32 %v4627, %v4681
    %v4692 = vadd.f32 %v4628, %v4683
    %v4693 = vadd.f32 %v4629, %v4685
    %v4694 = vmul.f32 %v1782, %v4610
    %v4695 = vmul.f32 %v1782, %v4611
    %v4696 = vmul.f32 %v1782, %v4612
    %v4697 = vmul.f32 %v1782, %v4613
    %4702 = vrot.lane.b32.xlu0 %v4694, 127
    %v4703 = vpop.permute.xlu0 %4702
    %4704 = vrot.lane.b32.xlu0 %v4695, 127
    %v4705 = vpop.permute.xlu0 %4704
    %4706 = vrot.lane.b32.xlu0 %v4696, 127
    %v4707 = vpop.permute.xlu0 %4706
    %4708 = vrot.lane.b32.xlu0 %v4697, 127
    %v4709 = vpop.permute.xlu0 %4708
    %v4714 = vadd.f32 %v4634, %v4703
    %v4715 = vadd.f32 %v4635, %v4705
    %v4716 = vadd.f32 %v4636, %v4707
    %v4717 = vadd.f32 %v4637, %v4709
    %v4718 = vmul.f32 %v1807, %v4610
    %v4719 = vmul.f32 %v1807, %v4611
    %v4720 = vmul.f32 %v1807, %v4612
    %v4721 = vmul.f32 %v1807, %v4613
    %4726 = vrot.lane.b32.xlu0 %v4718, 127
    %v4727 = vpop.permute.xlu0 %4726
    %4728 = vrot.lane.b32.xlu0 %v4719, 127
    %v4729 = vpop.permute.xlu0 %4728
    %4730 = vrot.lane.b32.xlu0 %v4720, 127
    %v4731 = vpop.permute.xlu0 %4730
    %4732 = vrot.lane.b32.xlu0 %v4721, 127
    %v4733 = vpop.permute.xlu0 %4732
    %v4738 = vadd.f32 %v4642, %v4727
    %v4739 = vadd.f32 %v4643, %v4729
    %v4740 = vadd.f32 %v4644, %v4731
    %v4741 = vadd.f32 %v4645, %v4733
    %v4742 = vmul.f32 %v1832, %v4610
    %v4743 = vmul.f32 %v1832, %v4611
    %v4744 = vmul.f32 %v1832, %v4612
    %v4745 = vmul.f32 %v1832, %v4613
    %4750 = vrot.lane.b32.xlu0 %v4742, 126
    %v4751 = vpop.permute.xlu0 %4750
    %4752 = vrot.lane.b32.xlu0 %v4743, 126
    %v4753 = vpop.permute.xlu0 %4752
    %4754 = vrot.lane.b32.xlu0 %v4744, 126
    %v4755 = vpop.permute.xlu0 %4754
    %4756 = vrot.lane.b32.xlu0 %v4745, 126
    %v4757 = vpop.permute.xlu0 %4756
    %v4762 = vadd.f32 %v4666, %v4751
    %v4763 = vadd.f32 %v4667, %v4753
    %v4764 = vadd.f32 %v4668, %v4755
    %v4765 = vadd.f32 %v4669, %v4757
    %v4766 = vmul.f32 %v1857, %v4610
    %v4767 = vmul.f32 %v1857, %v4611
    %v4768 = vmul.f32 %v1857, %v4612
    %v4769 = vmul.f32 %v1857, %v4613
    %4774 = vrot.lane.b32.xlu0 %v4766, 126
    %v4775 = vpop.permute.xlu0 %4774
    %4776 = vrot.lane.b32.xlu0 %v4767, 126
    %v4777 = vpop.permute.xlu0 %4776
    %4778 = vrot.lane.b32.xlu0 %v4768, 126
    %v4779 = vpop.permute.xlu0 %4778
    %4780 = vrot.lane.b32.xlu0 %v4769, 126
    %v4781 = vpop.permute.xlu0 %4780
    %v4786 = vadd.f32 %v4690, %v4775
    %v4787 = vadd.f32 %v4691, %v4777
    %v4788 = vadd.f32 %v4692, %v4779
    %v4789 = vadd.f32 %v4693, %v4781
    %v4790 = vmul.f32 %v1882, %v4610
    %v4791 = vmul.f32 %v1882, %v4611
    %v4792 = vmul.f32 %v1882, %v4612
    %v4793 = vmul.f32 %v1882, %v4613
    %4798 = vrot.lane.b32.xlu0 %v4790, 126
    %v4799 = vpop.permute.xlu0 %4798
    %4800 = vrot.lane.b32.xlu0 %v4791, 126
    %v4801 = vpop.permute.xlu0 %4800
    %4802 = vrot.lane.b32.xlu0 %v4792, 126
    %v4803 = vpop.permute.xlu0 %4802
    %4804 = vrot.lane.b32.xlu0 %v4793, 126
    %v4805 = vpop.permute.xlu0 %4804
    %v4810 = vadd.f32 %v4714, %v4799
    %v4811 = vadd.f32 %v4715, %v4801
    %v4812 = vadd.f32 %v4716, %v4803
    %v4813 = vadd.f32 %v4717, %v4805
    %v4814 = vmul.f32 %v1907, %v4610
    %v4815 = vmul.f32 %v1907, %v4611
    %v4816 = vmul.f32 %v1907, %v4612
    %v4817 = vmul.f32 %v1907, %v4613
    %4822 = vrot.lane.b32.xlu0 %v4814, 126
    %v4823 = vpop.permute.xlu0 %4822
    %4824 = vrot.lane.b32.xlu0 %v4815, 126
    %v4825 = vpop.permute.xlu0 %4824
    %4826 = vrot.lane.b32.xlu0 %v4816, 126
    %v4827 = vpop.permute.xlu0 %4826
    %4828 = vrot.lane.b32.xlu0 %v4817, 126
    %v4829 = vpop.permute.xlu0 %4828
    %v4834 = vadd.f32 %v4738, %v4823
    %v4835 = vadd.f32 %v4739, %v4825
    %v4836 = vadd.f32 %v4740, %v4827
    %v4837 = vadd.f32 %v4741, %v4829
    %v4838 = vld [vmem:[%s1932] sm:$0xff]
    %v4839 = vld [vmem:[%s1932 + $0x8] sm:$0xff]
    %v4840 = vld [vmem:[%s1932 + $0x60] sm:$0xff]
    %v4841 = vld [vmem:[%s1932 + $0x68] sm:$0xff]
    %v4842 = vmul.f32 %v1937, %v4838
    %v4843 = vmul.f32 %v1937, %v4839
    %v4844 = vmul.f32 %v1937, %v4840
    %v4845 = vmul.f32 %v1937, %v4841
    %v4846 = vadd.f32 %v4762, %v4842
    %v4847 = vadd.f32 %v4763, %v4843
    %v4848 = vadd.f32 %v4764, %v4844
    %v4849 = vadd.f32 %v4765, %v4845
    %v4850 = vmul.f32 %v1946, %v4838
    %v4851 = vmul.f32 %v1946, %v4839
    %v4852 = vmul.f32 %v1946, %v4840
    %v4853 = vmul.f32 %v1946, %v4841
    %v4854 = vadd.f32 %v4786, %v4850
    %v4855 = vadd.f32 %v4787, %v4851
    %v4856 = vadd.f32 %v4788, %v4852
    %v4857 = vadd.f32 %v4789, %v4853
    %v4858 = vmul.f32 %v1955, %v4838
    %v4859 = vmul.f32 %v1955, %v4839
    %v4860 = vmul.f32 %v1955, %v4840
    %v4861 = vmul.f32 %v1955, %v4841
    %v4862 = vadd.f32 %v4810, %v4858
    %v4863 = vadd.f32 %v4811, %v4859
    %v4864 = vadd.f32 %v4812, %v4860
    %v4865 = vadd.f32 %v4813, %v4861
    %v4866 = vmul.f32 %v1964, %v4838
    %v4867 = vmul.f32 %v1964, %v4839
    %v4868 = vmul.f32 %v1964, %v4840
    %v4869 = vmul.f32 %v1964, %v4841
    %v4870 = vadd.f32 %v4834, %v4866
    %v4871 = vadd.f32 %v4835, %v4867
    %v4872 = vadd.f32 %v4836, %v4868
    %v4873 = vadd.f32 %v4837, %v4869
    %v4874 = vmul.f32 %v1973, %v4838
    %v4875 = vmul.f32 %v1973, %v4839
    %v4876 = vmul.f32 %v1973, %v4840
    %v4877 = vmul.f32 %v1973, %v4841
    %4882 = vrot.lane.b32.xlu0 %v4874, 127
    %v4883 = vpop.permute.xlu0 %4882
    %4884 = vrot.lane.b32.xlu0 %v4875, 127
    %v4885 = vpop.permute.xlu0 %4884
    %4886 = vrot.lane.b32.xlu0 %v4876, 127
    %v4887 = vpop.permute.xlu0 %4886
    %4888 = vrot.lane.b32.xlu0 %v4877, 127
    %v4889 = vpop.permute.xlu0 %4888
    %v4894 = vadd.f32 %v4846, %v4883
    %v4895 = vadd.f32 %v4847, %v4885
    %v4896 = vadd.f32 %v4848, %v4887
    %v4897 = vadd.f32 %v4849, %v4889
    %v4898 = vmul.f32 %v1998, %v4838
    %v4899 = vmul.f32 %v1998, %v4839
    %v4900 = vmul.f32 %v1998, %v4840
    %v4901 = vmul.f32 %v1998, %v4841
    %4906 = vrot.lane.b32.xlu0 %v4898, 127
    %v4907 = vpop.permute.xlu0 %4906
    %4908 = vrot.lane.b32.xlu0 %v4899, 127
    %v4909 = vpop.permute.xlu0 %4908
    %4910 = vrot.lane.b32.xlu0 %v4900, 127
    %v4911 = vpop.permute.xlu0 %4910
    %4912 = vrot.lane.b32.xlu0 %v4901, 127
    %v4913 = vpop.permute.xlu0 %4912
    %v4918 = vadd.f32 %v4854, %v4907
    %v4919 = vadd.f32 %v4855, %v4909
    %v4920 = vadd.f32 %v4856, %v4911
    %v4921 = vadd.f32 %v4857, %v4913
    %v4922 = vmul.f32 %v2023, %v4838
    %v4923 = vmul.f32 %v2023, %v4839
    %v4924 = vmul.f32 %v2023, %v4840
    %v4925 = vmul.f32 %v2023, %v4841
    %4930 = vrot.lane.b32.xlu0 %v4922, 127
    %v4931 = vpop.permute.xlu0 %4930
    %4932 = vrot.lane.b32.xlu0 %v4923, 127
    %v4933 = vpop.permute.xlu0 %4932
    %4934 = vrot.lane.b32.xlu0 %v4924, 127
    %v4935 = vpop.permute.xlu0 %4934
    %4936 = vrot.lane.b32.xlu0 %v4925, 127
    %v4937 = vpop.permute.xlu0 %4936
    %v4942 = vadd.f32 %v4862, %v4931
    %v4943 = vadd.f32 %v4863, %v4933
    %v4944 = vadd.f32 %v4864, %v4935
    %v4945 = vadd.f32 %v4865, %v4937
    %v4946 = vmul.f32 %v2048, %v4838
    %v4947 = vmul.f32 %v2048, %v4839
    %v4948 = vmul.f32 %v2048, %v4840
    %v4949 = vmul.f32 %v2048, %v4841
    %4954 = vrot.lane.b32.xlu0 %v4946, 127
    %v4955 = vpop.permute.xlu0 %4954
    %4956 = vrot.lane.b32.xlu0 %v4947, 127
    %v4957 = vpop.permute.xlu0 %4956
    %4958 = vrot.lane.b32.xlu0 %v4948, 127
    %v4959 = vpop.permute.xlu0 %4958
    %4960 = vrot.lane.b32.xlu0 %v4949, 127
    %v4961 = vpop.permute.xlu0 %4960
    %v4966 = vadd.f32 %v4870, %v4955
    %v4967 = vadd.f32 %v4871, %v4957
    %v4968 = vadd.f32 %v4872, %v4959
    %v4969 = vadd.f32 %v4873, %v4961
    %v4970 = vmul.f32 %v2073, %v4838
    %v4971 = vmul.f32 %v2073, %v4839
    %v4972 = vmul.f32 %v2073, %v4840
    %v4973 = vmul.f32 %v2073, %v4841
    %4978 = vrot.lane.b32.xlu0 %v4970, 126
    %v4979 = vpop.permute.xlu0 %4978
    %4980 = vrot.lane.b32.xlu0 %v4971, 126
    %v4981 = vpop.permute.xlu0 %4980
    %4982 = vrot.lane.b32.xlu0 %v4972, 126
    %v4983 = vpop.permute.xlu0 %4982
    %4984 = vrot.lane.b32.xlu0 %v4973, 126
    %v4985 = vpop.permute.xlu0 %4984
    %v4990 = vadd.f32 %v4894, %v4979
    %v4991 = vadd.f32 %v4895, %v4981
    %v4992 = vadd.f32 %v4896, %v4983
    %v4993 = vadd.f32 %v4897, %v4985
    %v4994 = vmul.f32 %v2098, %v4838
    %v4995 = vmul.f32 %v2098, %v4839
    %v4996 = vmul.f32 %v2098, %v4840
    %v4997 = vmul.f32 %v2098, %v4841
    %5002 = vrot.lane.b32.xlu0 %v4994, 126
    %v5003 = vpop.permute.xlu0 %5002
    %5004 = vrot.lane.b32.xlu0 %v4995, 126
    %v5005 = vpop.permute.xlu0 %5004
    %5006 = vrot.lane.b32.xlu0 %v4996, 126
    %v5007 = vpop.permute.xlu0 %5006
    %5008 = vrot.lane.b32.xlu0 %v4997, 126
    %v5009 = vpop.permute.xlu0 %5008
    %v5014 = vadd.f32 %v4918, %v5003
    %v5015 = vadd.f32 %v4919, %v5005
    %v5016 = vadd.f32 %v4920, %v5007
    %v5017 = vadd.f32 %v4921, %v5009
    %v5018 = vmul.f32 %v2123, %v4838
    %v5019 = vmul.f32 %v2123, %v4839
    %v5020 = vmul.f32 %v2123, %v4840
    %v5021 = vmul.f32 %v2123, %v4841
    %5026 = vrot.lane.b32.xlu0 %v5018, 126
    %v5027 = vpop.permute.xlu0 %5026
    %5028 = vrot.lane.b32.xlu0 %v5019, 126
    %v5029 = vpop.permute.xlu0 %5028
    %5030 = vrot.lane.b32.xlu0 %v5020, 126
    %v5031 = vpop.permute.xlu0 %5030
    %5032 = vrot.lane.b32.xlu0 %v5021, 126
    %v5033 = vpop.permute.xlu0 %5032
    %v5038 = vadd.f32 %v4942, %v5027
    %v5039 = vadd.f32 %v4943, %v5029
    %v5040 = vadd.f32 %v4944, %v5031
    %v5041 = vadd.f32 %v4945, %v5033
    %v5042 = vmul.f32 %v2148, %v4838
    %v5043 = vmul.f32 %v2148, %v4839
    %v5044 = vmul.f32 %v2148, %v4840
    %v5045 = vmul.f32 %v2148, %v4841
    %5050 = vrot.lane.b32.xlu0 %v5042, 126
    %v5051 = vpop.permute.xlu0 %5050
    %5052 = vrot.lane.b32.xlu0 %v5043, 126
    %v5053 = vpop.permute.xlu0 %5052
    %5054 = vrot.lane.b32.xlu0 %v5044, 126
    %v5055 = vpop.permute.xlu0 %5054
    %5056 = vrot.lane.b32.xlu0 %v5045, 126
    %v5057 = vpop.permute.xlu0 %5056
    %v5062 = vadd.f32 %v4966, %v5051
    %v5063 = vadd.f32 %v4967, %v5053
    %v5064 = vadd.f32 %v4968, %v5055
    %v5065 = vadd.f32 %v4969, %v5057
    %v5066 = vld [vmem:[%s1932 + $0x1] sm:$0xff]
    %v5067 = vld [vmem:[%s1932 + $0x9] sm:$0xff]
    %v5068 = vld [vmem:[%s1932 + $0x61] sm:$0xff]
    %v5069 = vld [vmem:[%s1932 + $0x69] sm:$0xff]
    %v5070 = vmul.f32 %v2177, %v5066
    %v5071 = vmul.f32 %v2177, %v5067
    %v5072 = vmul.f32 %v2177, %v5068
    %v5073 = vmul.f32 %v2177, %v5069
    %v5074 = vadd.f32 %v4990, %v5070
    %v5075 = vadd.f32 %v4991, %v5071
    %v5076 = vadd.f32 %v4992, %v5072
    %v5077 = vadd.f32 %v4993, %v5073
    %v5078 = vmul.f32 %v2186, %v5066
    %v5079 = vmul.f32 %v2186, %v5067
    %v5080 = vmul.f32 %v2186, %v5068
    %v5081 = vmul.f32 %v2186, %v5069
    %v5082 = vadd.f32 %v5014, %v5078
    %v5083 = vadd.f32 %v5015, %v5079
    %v5084 = vadd.f32 %v5016, %v5080
    %v5085 = vadd.f32 %v5017, %v5081
    %v5086 = vmul.f32 %v2195, %v5066
    %v5087 = vmul.f32 %v2195, %v5067
    %v5088 = vmul.f32 %v2195, %v5068
    %v5089 = vmul.f32 %v2195, %v5069
    %v5090 = vadd.f32 %v5038, %v5086
    %v5091 = vadd.f32 %v5039, %v5087
    %v5092 = vadd.f32 %v5040, %v5088
    %v5093 = vadd.f32 %v5041, %v5089
    %v5094 = vmul.f32 %v2204, %v5066
    %v5095 = vmul.f32 %v2204, %v5067
    %v5096 = vmul.f32 %v2204, %v5068
    %v5097 = vmul.f32 %v2204, %v5069
    %v5098 = vadd.f32 %v5062, %v5094
    %v5099 = vadd.f32 %v5063, %v5095
    %v5100 = vadd.f32 %v5064, %v5096
    %v5101 = vadd.f32 %v5065, %v5097
    %v5102 = vmul.f32 %v2213, %v5066
    %v5103 = vmul.f32 %v2213, %v5067
    %v5104 = vmul.f32 %v2213, %v5068
    %v5105 = vmul.f32 %v2213, %v5069
    %5110 = vrot.lane.b32.xlu0 %v5102, 127
    %v5111 = vpop.permute.xlu0 %5110
    %5112 = vrot.lane.b32.xlu0 %v5103, 127
    %v5113 = vpop.permute.xlu0 %5112
    %5114 = vrot.lane.b32.xlu0 %v5104, 127
    %v5115 = vpop.permute.xlu0 %5114
    %5116 = vrot.lane.b32.xlu0 %v5105, 127
    %v5117 = vpop.permute.xlu0 %5116
    %v5122 = vadd.f32 %v5074, %v5111
    %v5123 = vadd.f32 %v5075, %v5113
    %v5124 = vadd.f32 %v5076, %v5115
    %v5125 = vadd.f32 %v5077, %v5117
    %v5126 = vmul.f32 %v2238, %v5066
    %v5127 = vmul.f32 %v2238, %v5067
    %v5128 = vmul.f32 %v2238, %v5068
    %v5129 = vmul.f32 %v2238, %v5069
    %5134 = vrot.lane.b32.xlu0 %v5126, 127
    %v5135 = vpop.permute.xlu0 %5134
    %5136 = vrot.lane.b32.xlu0 %v5127, 127
    %v5137 = vpop.permute.xlu0 %5136
    %5138 = vrot.lane.b32.xlu0 %v5128, 127
    %v5139 = vpop.permute.xlu0 %5138
    %5140 = vrot.lane.b32.xlu0 %v5129, 127
    %v5141 = vpop.permute.xlu0 %5140
    %v5146 = vadd.f32 %v5082, %v5135
    %v5147 = vadd.f32 %v5083, %v5137
    %v5148 = vadd.f32 %v5084, %v5139
    %v5149 = vadd.f32 %v5085, %v5141
    %v5150 = vmul.f32 %v2263, %v5066
    %v5151 = vmul.f32 %v2263, %v5067
    %v5152 = vmul.f32 %v2263, %v5068
    %v5153 = vmul.f32 %v2263, %v5069
    %5158 = vrot.lane.b32.xlu0 %v5150, 127
    %v5159 = vpop.permute.xlu0 %5158
    %5160 = vrot.lane.b32.xlu0 %v5151, 127
    %v5161 = vpop.permute.xlu0 %5160
    %5162 = vrot.lane.b32.xlu0 %v5152, 127
    %v5163 = vpop.permute.xlu0 %5162
    %5164 = vrot.lane.b32.xlu0 %v5153, 127
    %v5165 = vpop.permute.xlu0 %5164
    %v5170 = vadd.f32 %v5090, %v5159
    %v5171 = vadd.f32 %v5091, %v5161
    %v5172 = vadd.f32 %v5092, %v5163
    %v5173 = vadd.f32 %v5093, %v5165
    %v5174 = vmul.f32 %v2288, %v5066
    %v5175 = vmul.f32 %v2288, %v5067
    %v5176 = vmul.f32 %v2288, %v5068
    %v5177 = vmul.f32 %v2288, %v5069
    %5182 = vrot.lane.b32.xlu0 %v5174, 127
    %v5183 = vpop.permute.xlu0 %5182
    %5184 = vrot.lane.b32.xlu0 %v5175, 127
    %v5185 = vpop.permute.xlu0 %5184
    %5186 = vrot.lane.b32.xlu0 %v5176, 127
    %v5187 = vpop.permute.xlu0 %5186
    %5188 = vrot.lane.b32.xlu0 %v5177, 127
    %v5189 = vpop.permute.xlu0 %5188
    %v5194 = vadd.f32 %v5098, %v5183
    %v5195 = vadd.f32 %v5099, %v5185
    %v5196 = vadd.f32 %v5100, %v5187
    %v5197 = vadd.f32 %v5101, %v5189
    %v5198 = vmul.f32 %v2313, %v5066
    %v5199 = vmul.f32 %v2313, %v5067
    %v5200 = vmul.f32 %v2313, %v5068
    %v5201 = vmul.f32 %v2313, %v5069
    %5206 = vrot.lane.b32.xlu0 %v5198, 126
    %v5207 = vpop.permute.xlu0 %5206
    %5208 = vrot.lane.b32.xlu0 %v5199, 126
    %v5209 = vpop.permute.xlu0 %5208
    %5210 = vrot.lane.b32.xlu0 %v5200, 126
    %v5211 = vpop.permute.xlu0 %5210
    %5212 = vrot.lane.b32.xlu0 %v5201, 126
    %v5213 = vpop.permute.xlu0 %5212
    %v5218 = vadd.f32 %v5122, %v5207
    %v5219 = vadd.f32 %v5123, %v5209
    %v5220 = vadd.f32 %v5124, %v5211
    %v5221 = vadd.f32 %v5125, %v5213
    %v5222 = vmul.f32 %v2338, %v5066
    %v5223 = vmul.f32 %v2338, %v5067
    %v5224 = vmul.f32 %v2338, %v5068
    %v5225 = vmul.f32 %v2338, %v5069
    %5230 = vrot.lane.b32.xlu0 %v5222, 126
    %v5231 = vpop.permute.xlu0 %5230
    %5232 = vrot.lane.b32.xlu0 %v5223, 126
    %v5233 = vpop.permute.xlu0 %5232
    %5234 = vrot.lane.b32.xlu0 %v5224, 126
    %v5235 = vpop.permute.xlu0 %5234
    %5236 = vrot.lane.b32.xlu0 %v5225, 126
    %v5237 = vpop.permute.xlu0 %5236
    %v5242 = vadd.f32 %v5146, %v5231
    %v5243 = vadd.f32 %v5147, %v5233
    %v5244 = vadd.f32 %v5148, %v5235
    %v5245 = vadd.f32 %v5149, %v5237
    %v5246 = vmul.f32 %v2363, %v5066
    %v5247 = vmul.f32 %v2363, %v5067
    %v5248 = vmul.f32 %v2363, %v5068
    %v5249 = vmul.f32 %v2363, %v5069
    %5254 = vrot.lane.b32.xlu0 %v5246, 126
    %v5255 = vpop.permute.xlu0 %5254
    %5256 = vrot.lane.b32.xlu0 %v5247, 126
    %v5257 = vpop.permute.xlu0 %5256
    %5258 = vrot.lane.b32.xlu0 %v5248, 126
    %v5259 = vpop.permute.xlu0 %5258
    %5260 = vrot.lane.b32.xlu0 %v5249, 126
    %v5261 = vpop.permute.xlu0 %5260
    %v5266 = vadd.f32 %v5170, %v5255
    %v5267 = vadd.f32 %v5171, %v5257
    %v5268 = vadd.f32 %v5172, %v5259
    %v5269 = vadd.f32 %v5173, %v5261
    %v5270 = vmul.f32 %v2388, %v5066
    %v5271 = vmul.f32 %v2388, %v5067
    %v5272 = vmul.f32 %v2388, %v5068
    %v5273 = vmul.f32 %v2388, %v5069
    %5278 = vrot.lane.b32.xlu0 %v5270, 126
    %v5279 = vpop.permute.xlu0 %5278
    %5280 = vrot.lane.b32.xlu0 %v5271, 126
    %v5281 = vpop.permute.xlu0 %5280
    %5282 = vrot.lane.b32.xlu0 %v5272, 126
    %v5283 = vpop.permute.xlu0 %5282
    %5284 = vrot.lane.b32.xlu0 %v5273, 126
    %v5285 = vpop.permute.xlu0 %5284
    %v5290 = vadd.f32 %v5194, %v5279
    %v5291 = vadd.f32 %v5195, %v5281
    %v5292 = vadd.f32 %v5196, %v5283
    %v5293 = vadd.f32 %v5197, %v5285
    %v5294 = vld [vmem:[%s1932 + $0x2] sm:$0xff]
    %v5295 = vld [vmem:[%s1932 + $0xa] sm:$0xff]
    %v5296 = vld [vmem:[%s1932 + $0x62] sm:$0xff]
    %v5297 = vld [vmem:[%s1932 + $0x6a] sm:$0xff]
    %v5298 = vmul.f32 %v2417, %v5294
    %v5299 = vmul.f32 %v2417, %v5295
    %v5300 = vmul.f32 %v2417, %v5296
    %v5301 = vmul.f32 %v2417, %v5297
    %v5302 = vadd.f32 %v5218, %v5298
    %v5303 = vadd.f32 %v5219, %v5299
    %v5304 = vadd.f32 %v5220, %v5300
    %v5305 = vadd.f32 %v5221, %v5301
    %v5306 = vmul.f32 %v2426, %v5294
    %v5307 = vmul.f32 %v2426, %v5295
    %v5308 = vmul.f32 %v2426, %v5296
    %v5309 = vmul.f32 %v2426, %v5297
    %v5310 = vadd.f32 %v5242, %v5306
    %v5311 = vadd.f32 %v5243, %v5307
    %v5312 = vadd.f32 %v5244, %v5308
    %v5313 = vadd.f32 %v5245, %v5309
    %v5314 = vmul.f32 %v2435, %v5294
    %v5315 = vmul.f32 %v2435, %v5295
    %v5316 = vmul.f32 %v2435, %v5296
    %v5317 = vmul.f32 %v2435, %v5297
    %v5318 = vadd.f32 %v5266, %v5314
    %v5319 = vadd.f32 %v5267, %v5315
    %v5320 = vadd.f32 %v5268, %v5316
    %v5321 = vadd.f32 %v5269, %v5317
    %v5322 = vmul.f32 %v2444, %v5294
    %v5323 = vmul.f32 %v2444, %v5295
    %v5324 = vmul.f32 %v2444, %v5296
    %v5325 = vmul.f32 %v2444, %v5297
    %v5326 = vadd.f32 %v5290, %v5322
    %v5327 = vadd.f32 %v5291, %v5323
    %v5328 = vadd.f32 %v5292, %v5324
    %v5329 = vadd.f32 %v5293, %v5325
    %v5330 = vmul.f32 %v2453, %v5294
    %v5331 = vmul.f32 %v2453, %v5295
    %v5332 = vmul.f32 %v2453, %v5296
    %v5333 = vmul.f32 %v2453, %v5297
    %5338 = vrot.lane.b32.xlu0 %v5330, 127
    %v5339 = vpop.permute.xlu0 %5338
    %5340 = vrot.lane.b32.xlu0 %v5331, 127
    %v5341 = vpop.permute.xlu0 %5340
    %5342 = vrot.lane.b32.xlu0 %v5332, 127
    %v5343 = vpop.permute.xlu0 %5342
    %5344 = vrot.lane.b32.xlu0 %v5333, 127
    %v5345 = vpop.permute.xlu0 %5344
    %v5350 = vadd.f32 %v5302, %v5339
    %v5351 = vadd.f32 %v5303, %v5341
    %v5352 = vadd.f32 %v5304, %v5343
    %v5353 = vadd.f32 %v5305, %v5345
    %v5354 = vmul.f32 %v2478, %v5294
    %v5355 = vmul.f32 %v2478, %v5295
    %v5356 = vmul.f32 %v2478, %v5296
    %v5357 = vmul.f32 %v2478, %v5297
    %5362 = vrot.lane.b32.xlu0 %v5354, 127
    %v5363 = vpop.permute.xlu0 %5362
    %5364 = vrot.lane.b32.xlu0 %v5355, 127
    %v5365 = vpop.permute.xlu0 %5364
    %5366 = vrot.lane.b32.xlu0 %v5356, 127
    %v5367 = vpop.permute.xlu0 %5366
    %5368 = vrot.lane.b32.xlu0 %v5357, 127
    %v5369 = vpop.permute.xlu0 %5368
    %v5374 = vadd.f32 %v5310, %v5363
    %v5375 = vadd.f32 %v5311, %v5365
    %v5376 = vadd.f32 %v5312, %v5367
    %v5377 = vadd.f32 %v5313, %v5369
    %v5378 = vmul.f32 %v2503, %v5294
    %v5379 = vmul.f32 %v2503, %v5295
    %v5380 = vmul.f32 %v2503, %v5296
    %v5381 = vmul.f32 %v2503, %v5297
    %5386 = vrot.lane.b32.xlu0 %v5378, 127
    %v5387 = vpop.permute.xlu0 %5386
    %5388 = vrot.lane.b32.xlu0 %v5379, 127
    %v5389 = vpop.permute.xlu0 %5388
    %5390 = vrot.lane.b32.xlu0 %v5380, 127
    %v5391 = vpop.permute.xlu0 %5390
    %5392 = vrot.lane.b32.xlu0 %v5381, 127
    %v5393 = vpop.permute.xlu0 %5392
    %v5398 = vadd.f32 %v5318, %v5387
    %v5399 = vadd.f32 %v5319, %v5389
    %v5400 = vadd.f32 %v5320, %v5391
    %v5401 = vadd.f32 %v5321, %v5393
    %v5402 = vmul.f32 %v2528, %v5294
    %v5403 = vmul.f32 %v2528, %v5295
    %v5404 = vmul.f32 %v2528, %v5296
    %v5405 = vmul.f32 %v2528, %v5297
    %5410 = vrot.lane.b32.xlu0 %v5402, 127
    %v5411 = vpop.permute.xlu0 %5410
    %5412 = vrot.lane.b32.xlu0 %v5403, 127
    %v5413 = vpop.permute.xlu0 %5412
    %5414 = vrot.lane.b32.xlu0 %v5404, 127
    %v5415 = vpop.permute.xlu0 %5414
    %5416 = vrot.lane.b32.xlu0 %v5405, 127
    %v5417 = vpop.permute.xlu0 %5416
    %v5422 = vadd.f32 %v5326, %v5411
    %v5423 = vadd.f32 %v5327, %v5413
    %v5424 = vadd.f32 %v5328, %v5415
    %v5425 = vadd.f32 %v5329, %v5417
    %v5426 = vmul.f32 %v2553, %v5294
    %v5427 = vmul.f32 %v2553, %v5295
    %v5428 = vmul.f32 %v2553, %v5296
    %v5429 = vmul.f32 %v2553, %v5297
    %5434 = vrot.lane.b32.xlu0 %v5426, 126
    %v5435 = vpop.permute.xlu0 %5434
    %5436 = vrot.lane.b32.xlu0 %v5427, 126
    %v5437 = vpop.permute.xlu0 %5436
    %5438 = vrot.lane.b32.xlu0 %v5428, 126
    %v5439 = vpop.permute.xlu0 %5438
    %5440 = vrot.lane.b32.xlu0 %v5429, 126
    %v5441 = vpop.permute.xlu0 %5440
    %v5446 = vadd.f32 %v5350, %v5435
    %v5447 = vadd.f32 %v5351, %v5437
    %v5448 = vadd.f32 %v5352, %v5439
    %v5449 = vadd.f32 %v5353, %v5441
    %v5450 = vmul.f32 %v2578, %v5294
    %v5451 = vmul.f32 %v2578, %v5295
    %v5452 = vmul.f32 %v2578, %v5296
    %v5453 = vmul.f32 %v2578, %v5297
    %5458 = vrot.lane.b32.xlu0 %v5450, 126
    %v5459 = vpop.permute.xlu0 %5458
    %5460 = vrot.lane.b32.xlu0 %v5451, 126
    %v5461 = vpop.permute.xlu0 %5460
    %5462 = vrot.lane.b32.xlu0 %v5452, 126
    %v5463 = vpop.permute.xlu0 %5462
    %5464 = vrot.lane.b32.xlu0 %v5453, 126
    %v5465 = vpop.permute.xlu0 %5464
    %v5470 = vadd.f32 %v5374, %v5459
    %v5471 = vadd.f32 %v5375, %v5461
    %v5472 = vadd.f32 %v5376, %v5463
    %v5473 = vadd.f32 %v5377, %v5465
    %v5474 = vmul.f32 %v2603, %v5294
    %v5475 = vmul.f32 %v2603, %v5295
    %v5476 = vmul.f32 %v2603, %v5296
    %v5477 = vmul.f32 %v2603, %v5297
    %5482 = vrot.lane.b32.xlu0 %v5474, 126
    %v5483 = vpop.permute.xlu0 %5482
    %5484 = vrot.lane.b32.xlu0 %v5475, 126
    %v5485 = vpop.permute.xlu0 %5484
    %5486 = vrot.lane.b32.xlu0 %v5476, 126
    %v5487 = vpop.permute.xlu0 %5486
    %5488 = vrot.lane.b32.xlu0 %v5477, 126
    %v5489 = vpop.permute.xlu0 %5488
    %v5494 = vadd.f32 %v5398, %v5483
    %v5495 = vadd.f32 %v5399, %v5485
    %v5496 = vadd.f32 %v5400, %v5487
    %v5497 = vadd.f32 %v5401, %v5489
    %v5498 = vmul.f32 %v2628, %v5294
    %v5499 = vmul.f32 %v2628, %v5295
    %v5500 = vmul.f32 %v2628, %v5296
    %v5501 = vmul.f32 %v2628, %v5297
    %5506 = vrot.lane.b32.xlu0 %v5498, 126
    %v5507 = vpop.permute.xlu0 %5506
    %5508 = vrot.lane.b32.xlu0 %v5499, 126
    %v5509 = vpop.permute.xlu0 %5508
    %5510 = vrot.lane.b32.xlu0 %v5500, 126
    %v5511 = vpop.permute.xlu0 %5510
    %5512 = vrot.lane.b32.xlu0 %v5501, 126
    %v5513 = vpop.permute.xlu0 %5512
    %v5518 = vadd.f32 %v5422, %v5507
    %v5519 = vadd.f32 %v5423, %v5509
    %v5520 = vadd.f32 %v5424, %v5511
    %v5521 = vadd.f32 %v5425, %v5513
    %v5522 = vld [vmem:[%s2653] sm:$0xff]
    %v5523 = vld [vmem:[%s2653 + $0x8] sm:$0xff]
    %v5524 = vld [vmem:[%s2653 + $0x60] sm:$0xff]
    %v5525 = vld [vmem:[%s2653 + $0x68] sm:$0xff]
    %v5526 = vmul.f32 %v2658, %v5522
    %v5527 = vmul.f32 %v2658, %v5523
    %v5528 = vmul.f32 %v2658, %v5524
    %v5529 = vmul.f32 %v2658, %v5525
    %v5530 = vadd.f32 %v5446, %v5526
    %v5531 = vadd.f32 %v5447, %v5527
    %v5532 = vadd.f32 %v5448, %v5528
    %v5533 = vadd.f32 %v5449, %v5529
    %v5534 = vmul.f32 %v2667, %v5522
    %v5535 = vmul.f32 %v2667, %v5523
    %v5536 = vmul.f32 %v2667, %v5524
    %v5537 = vmul.f32 %v2667, %v5525
    %v5538 = vadd.f32 %v5470, %v5534
    %v5539 = vadd.f32 %v5471, %v5535
    %v5540 = vadd.f32 %v5472, %v5536
    %v5541 = vadd.f32 %v5473, %v5537
    %v5542 = vmul.f32 %v2676, %v5522
    %v5543 = vmul.f32 %v2676, %v5523
    %v5544 = vmul.f32 %v2676, %v5524
    %v5545 = vmul.f32 %v2676, %v5525
    %v5546 = vadd.f32 %v5494, %v5542
    %v5547 = vadd.f32 %v5495, %v5543
    %v5548 = vadd.f32 %v5496, %v5544
    %v5549 = vadd.f32 %v5497, %v5545
    %v5550 = vmul.f32 %v2685, %v5522
    %v5551 = vmul.f32 %v2685, %v5523
    %v5552 = vmul.f32 %v2685, %v5524
    %v5553 = vmul.f32 %v2685, %v5525
    %v5554 = vadd.f32 %v5518, %v5550
    %v5555 = vadd.f32 %v5519, %v5551
    %v5556 = vadd.f32 %v5520, %v5552
    %v5557 = vadd.f32 %v5521, %v5553
    %v5558 = vmul.f32 %v2694, %v5522
    %v5559 = vmul.f32 %v2694, %v5523
    %v5560 = vmul.f32 %v2694, %v5524
    %v5561 = vmul.f32 %v2694, %v5525
    %5566 = vrot.lane.b32.xlu0 %v5558, 127
    %v5567 = vpop.permute.xlu0 %5566
    %5568 = vrot.lane.b32.xlu0 %v5559, 127
    %v5569 = vpop.permute.xlu0 %5568
    %5570 = vrot.lane.b32.xlu0 %v5560, 127
    %v5571 = vpop.permute.xlu0 %5570
    %5572 = vrot.lane.b32.xlu0 %v5561, 127
    %v5573 = vpop.permute.xlu0 %5572
    %v5578 = vadd.f32 %v5530, %v5567
    %v5579 = vadd.f32 %v5531, %v5569
    %v5580 = vadd.f32 %v5532, %v5571
    %v5581 = vadd.f32 %v5533, %v5573
    %v5582 = vmul.f32 %v2719, %v5522
    %v5583 = vmul.f32 %v2719, %v5523
    %v5584 = vmul.f32 %v2719, %v5524
    %v5585 = vmul.f32 %v2719, %v5525
    %5590 = vrot.lane.b32.xlu0 %v5582, 127
    %v5591 = vpop.permute.xlu0 %5590
    %5592 = vrot.lane.b32.xlu0 %v5583, 127
    %v5593 = vpop.permute.xlu0 %5592
    %5594 = vrot.lane.b32.xlu0 %v5584, 127
    %v5595 = vpop.permute.xlu0 %5594
    %5596 = vrot.lane.b32.xlu0 %v5585, 127
    %v5597 = vpop.permute.xlu0 %5596
    %v5602 = vadd.f32 %v5538, %v5591
    %v5603 = vadd.f32 %v5539, %v5593
    %v5604 = vadd.f32 %v5540, %v5595
    %v5605 = vadd.f32 %v5541, %v5597
    %v5606 = vmul.f32 %v2744, %v5522
    %v5607 = vmul.f32 %v2744, %v5523
    %v5608 = vmul.f32 %v2744, %v5524
    %v5609 = vmul.f32 %v2744, %v5525
    %5614 = vrot.lane.b32.xlu0 %v5606, 127
    %v5615 = vpop.permute.xlu0 %5614
    %5616 = vrot.lane.b32.xlu0 %v5607, 127
    %v5617 = vpop.permute.xlu0 %5616
    %5618 = vrot.lane.b32.xlu0 %v5608, 127
    %v5619 = vpop.permute.xlu0 %5618
    %5620 = vrot.lane.b32.xlu0 %v5609, 127
    %v5621 = vpop.permute.xlu0 %5620
    %v5626 = vadd.f32 %v5546, %v5615
    %v5627 = vadd.f32 %v5547, %v5617
    %v5628 = vadd.f32 %v5548, %v5619
    %v5629 = vadd.f32 %v5549, %v5621
    %v5630 = vmul.f32 %v2769, %v5522
    %v5631 = vmul.f32 %v2769, %v5523
    %v5632 = vmul.f32 %v2769, %v5524
    %v5633 = vmul.f32 %v2769, %v5525
    %5638 = vrot.lane.b32.xlu0 %v5630, 127
    %v5639 = vpop.permute.xlu0 %5638
    %5640 = vrot.lane.b32.xlu0 %v5631, 127
    %v5641 = vpop.permute.xlu0 %5640
    %5642 = vrot.lane.b32.xlu0 %v5632, 127
    %v5643 = vpop.permute.xlu0 %5642
    %5644 = vrot.lane.b32.xlu0 %v5633, 127
    %v5645 = vpop.permute.xlu0 %5644
    %v5650 = vadd.f32 %v5554, %v5639
    %v5651 = vadd.f32 %v5555, %v5641
    %v5652 = vadd.f32 %v5556, %v5643
    %v5653 = vadd.f32 %v5557, %v5645
    %v5654 = vmul.f32 %v2794, %v5522
    %v5655 = vmul.f32 %v2794, %v5523
    %v5656 = vmul.f32 %v2794, %v5524
    %v5657 = vmul.f32 %v2794, %v5525
    %5662 = vrot.lane.b32.xlu0 %v5654, 126
    %v5663 = vpop.permute.xlu0 %5662
    %5664 = vrot.lane.b32.xlu0 %v5655, 126
    %v5665 = vpop.permute.xlu0 %5664
    %5666 = vrot.lane.b32.xlu0 %v5656, 126
    %v5667 = vpop.permute.xlu0 %5666
    %5668 = vrot.lane.b32.xlu0 %v5657, 126
    %v5669 = vpop.permute.xlu0 %5668
    %v5674 = vadd.f32 %v5578, %v5663
    %v5675 = vadd.f32 %v5579, %v5665
    %v5676 = vadd.f32 %v5580, %v5667
    %v5677 = vadd.f32 %v5581, %v5669
    %v5678 = vmul.f32 %v2819, %v5522
    %v5679 = vmul.f32 %v2819, %v5523
    %v5680 = vmul.f32 %v2819, %v5524
    %v5681 = vmul.f32 %v2819, %v5525
    %5686 = vrot.lane.b32.xlu0 %v5678, 126
    %v5687 = vpop.permute.xlu0 %5686
    %5688 = vrot.lane.b32.xlu0 %v5679, 126
    %v5689 = vpop.permute.xlu0 %5688
    %5690 = vrot.lane.b32.xlu0 %v5680, 126
    %v5691 = vpop.permute.xlu0 %5690
    %5692 = vrot.lane.b32.xlu0 %v5681, 126
    %v5693 = vpop.permute.xlu0 %5692
    %v5698 = vadd.f32 %v5602, %v5687
    %v5699 = vadd.f32 %v5603, %v5689
    %v5700 = vadd.f32 %v5604, %v5691
    %v5701 = vadd.f32 %v5605, %v5693
    %v5702 = vmul.f32 %v2844, %v5522
    %v5703 = vmul.f32 %v2844, %v5523
    %v5704 = vmul.f32 %v2844, %v5524
    %v5705 = vmul.f32 %v2844, %v5525
    %5710 = vrot.lane.b32.xlu0 %v5702, 126
    %v5711 = vpop.permute.xlu0 %5710
    %5712 = vrot.lane.b32.xlu0 %v5703, 126
    %v5713 = vpop.permute.xlu0 %5712
    %5714 = vrot.lane.b32.xlu0 %v5704, 126
    %v5715 = vpop.permute.xlu0 %5714
    %5716 = vrot.lane.b32.xlu0 %v5705, 126
    %v5717 = vpop.permute.xlu0 %5716
    %v5722 = vadd.f32 %v5626, %v5711
    %v5723 = vadd.f32 %v5627, %v5713
    %v5724 = vadd.f32 %v5628, %v5715
    %v5725 = vadd.f32 %v5629, %v5717
    %v5726 = vmul.f32 %v2869, %v5522
    %v5727 = vmul.f32 %v2869, %v5523
    %v5728 = vmul.f32 %v2869, %v5524
    %v5729 = vmul.f32 %v2869, %v5525
    %5734 = vrot.lane.b32.xlu0 %v5726, 126
    %v5735 = vpop.permute.xlu0 %5734
    %5736 = vrot.lane.b32.xlu0 %v5727, 126
    %v5737 = vpop.permute.xlu0 %5736
    %5738 = vrot.lane.b32.xlu0 %v5728, 126
    %v5739 = vpop.permute.xlu0 %5738
    %5740 = vrot.lane.b32.xlu0 %v5729, 126
    %v5741 = vpop.permute.xlu0 %5740
    %v5746 = vadd.f32 %v5650, %v5735
    %v5747 = vadd.f32 %v5651, %v5737
    %v5748 = vadd.f32 %v5652, %v5739
    %v5749 = vadd.f32 %v5653, %v5741
    %v5750 = vld [vmem:[%s2653 + $0x1] sm:$0xff]
    %v5751 = vld [vmem:[%s2653 + $0x9] sm:$0xff]
    %v5752 = vld [vmem:[%s2653 + $0x61] sm:$0xff]
    %v5753 = vld [vmem:[%s2653 + $0x69] sm:$0xff]
    %v5754 = vmul.f32 %v2898, %v5750
    %v5755 = vmul.f32 %v2898, %v5751
    %v5756 = vmul.f32 %v2898, %v5752
    %v5757 = vmul.f32 %v2898, %v5753
    %v5758 = vadd.f32 %v5674, %v5754
    %v5759 = vadd.f32 %v5675, %v5755
    %v5760 = vadd.f32 %v5676, %v5756
    %v5761 = vadd.f32 %v5677, %v5757
    %v5762 = vmul.f32 %v2907, %v5750
    %v5763 = vmul.f32 %v2907, %v5751
    %v5764 = vmul.f32 %v2907, %v5752
    %v5765 = vmul.f32 %v2907, %v5753
    %v5766 = vadd.f32 %v5698, %v5762
    %v5767 = vadd.f32 %v5699, %v5763
    %v5768 = vadd.f32 %v5700, %v5764
    %v5769 = vadd.f32 %v5701, %v5765
    %v5770 = vmul.f32 %v2916, %v5750
    %v5771 = vmul.f32 %v2916, %v5751
    %v5772 = vmul.f32 %v2916, %v5752
    %v5773 = vmul.f32 %v2916, %v5753
    %v5774 = vadd.f32 %v5722, %v5770
    %v5775 = vadd.f32 %v5723, %v5771
    %v5776 = vadd.f32 %v5724, %v5772
    %v5777 = vadd.f32 %v5725, %v5773
    %v5778 = vmul.f32 %v2925, %v5750
    %v5779 = vmul.f32 %v2925, %v5751
    %v5780 = vmul.f32 %v2925, %v5752
    %v5781 = vmul.f32 %v2925, %v5753
    %v5782 = vadd.f32 %v5746, %v5778
    %v5783 = vadd.f32 %v5747, %v5779
    %v5784 = vadd.f32 %v5748, %v5780
    %v5785 = vadd.f32 %v5749, %v5781
    %v5786 = vmul.f32 %v2934, %v5750
    %v5787 = vmul.f32 %v2934, %v5751
    %v5788 = vmul.f32 %v2934, %v5752
    %v5789 = vmul.f32 %v2934, %v5753
    %5794 = vrot.lane.b32.xlu0 %v5786, 127
    %v5795 = vpop.permute.xlu0 %5794
    %5796 = vrot.lane.b32.xlu0 %v5787, 127
    %v5797 = vpop.permute.xlu0 %5796
    %5798 = vrot.lane.b32.xlu0 %v5788, 127
    %v5799 = vpop.permute.xlu0 %5798
    %5800 = vrot.lane.b32.xlu0 %v5789, 127
    %v5801 = vpop.permute.xlu0 %5800
    %v5806 = vadd.f32 %v5758, %v5795
    %v5807 = vadd.f32 %v5759, %v5797
    %v5808 = vadd.f32 %v5760, %v5799
    %v5809 = vadd.f32 %v5761, %v5801
    %v5810 = vmul.f32 %v2959, %v5750
    %v5811 = vmul.f32 %v2959, %v5751
    %v5812 = vmul.f32 %v2959, %v5752
    %v5813 = vmul.f32 %v2959, %v5753
    %5818 = vrot.lane.b32.xlu0 %v5810, 127
    %v5819 = vpop.permute.xlu0 %5818
    %5820 = vrot.lane.b32.xlu0 %v5811, 127
    %v5821 = vpop.permute.xlu0 %5820
    %5822 = vrot.lane.b32.xlu0 %v5812, 127
    %v5823 = vpop.permute.xlu0 %5822
    %5824 = vrot.lane.b32.xlu0 %v5813, 127
    %v5825 = vpop.permute.xlu0 %5824
    %v5830 = vadd.f32 %v5766, %v5819
    %v5831 = vadd.f32 %v5767, %v5821
    %v5832 = vadd.f32 %v5768, %v5823
    %v5833 = vadd.f32 %v5769, %v5825
    %v5834 = vmul.f32 %v2984, %v5750
    %v5835 = vmul.f32 %v2984, %v5751
    %v5836 = vmul.f32 %v2984, %v5752
    %v5837 = vmul.f32 %v2984, %v5753
    %5842 = vrot.lane.b32.xlu0 %v5834, 127
    %v5843 = vpop.permute.xlu0 %5842
    %5844 = vrot.lane.b32.xlu0 %v5835, 127
    %v5845 = vpop.permute.xlu0 %5844
    %5846 = vrot.lane.b32.xlu0 %v5836, 127
    %v5847 = vpop.permute.xlu0 %5846
    %5848 = vrot.lane.b32.xlu0 %v5837, 127
    %v5849 = vpop.permute.xlu0 %5848
    %v5854 = vadd.f32 %v5774, %v5843
    %v5855 = vadd.f32 %v5775, %v5845
    %v5856 = vadd.f32 %v5776, %v5847
    %v5857 = vadd.f32 %v5777, %v5849
    %v5858 = vmul.f32 %v3009, %v5750
    %v5859 = vmul.f32 %v3009, %v5751
    %v5860 = vmul.f32 %v3009, %v5752
    %v5861 = vmul.f32 %v3009, %v5753
    %5866 = vrot.lane.b32.xlu0 %v5858, 127
    %v5867 = vpop.permute.xlu0 %5866
    %5868 = vrot.lane.b32.xlu0 %v5859, 127
    %v5869 = vpop.permute.xlu0 %5868
    %5870 = vrot.lane.b32.xlu0 %v5860, 127
    %v5871 = vpop.permute.xlu0 %5870
    %5872 = vrot.lane.b32.xlu0 %v5861, 127
    %v5873 = vpop.permute.xlu0 %5872
    %v5878 = vadd.f32 %v5782, %v5867
    %v5879 = vadd.f32 %v5783, %v5869
    %v5880 = vadd.f32 %v5784, %v5871
    %v5881 = vadd.f32 %v5785, %v5873
    %v5882 = vmul.f32 %v3034, %v5750
    %v5883 = vmul.f32 %v3034, %v5751
    %v5884 = vmul.f32 %v3034, %v5752
    %v5885 = vmul.f32 %v3034, %v5753
    %5890 = vrot.lane.b32.xlu0 %v5882, 126
    %v5891 = vpop.permute.xlu0 %5890
    %5892 = vrot.lane.b32.xlu0 %v5883, 126
    %v5893 = vpop.permute.xlu0 %5892
    %5894 = vrot.lane.b32.xlu0 %v5884, 126
    %v5895 = vpop.permute.xlu0 %5894
    %5896 = vrot.lane.b32.xlu0 %v5885, 126
    %v5897 = vpop.permute.xlu0 %5896
    %v5902 = vadd.f32 %v5806, %v5891
    %v5903 = vadd.f32 %v5807, %v5893
    %v5904 = vadd.f32 %v5808, %v5895
    %v5905 = vadd.f32 %v5809, %v5897
    %v5906 = vmul.f32 %v3059, %v5750
    %v5907 = vmul.f32 %v3059, %v5751
    %v5908 = vmul.f32 %v3059, %v5752
    %v5909 = vmul.f32 %v3059, %v5753
    %5914 = vrot.lane.b32.xlu0 %v5906, 126
    %v5915 = vpop.permute.xlu0 %5914
    %5916 = vrot.lane.b32.xlu0 %v5907, 126
    %v5917 = vpop.permute.xlu0 %5916
    %5918 = vrot.lane.b32.xlu0 %v5908, 126
    %v5919 = vpop.permute.xlu0 %5918
    %5920 = vrot.lane.b32.xlu0 %v5909, 126
    %v5921 = vpop.permute.xlu0 %5920
    %v5926 = vadd.f32 %v5830, %v5915
    %v5927 = vadd.f32 %v5831, %v5917
    %v5928 = vadd.f32 %v5832, %v5919
    %v5929 = vadd.f32 %v5833, %v5921
    %v5930 = vmul.f32 %v3084, %v5750
    %v5931 = vmul.f32 %v3084, %v5751
    %v5932 = vmul.f32 %v3084, %v5752
    %v5933 = vmul.f32 %v3084, %v5753
    %5938 = vrot.lane.b32.xlu0 %v5930, 126
    %v5939 = vpop.permute.xlu0 %5938
    %5940 = vrot.lane.b32.xlu0 %v5931, 126
    %v5941 = vpop.permute.xlu0 %5940
    %5942 = vrot.lane.b32.xlu0 %v5932, 126
    %v5943 = vpop.permute.xlu0 %5942
    %5944 = vrot.lane.b32.xlu0 %v5933, 126
    %v5945 = vpop.permute.xlu0 %5944
    %v5950 = vadd.f32 %v5854, %v5939
    %v5951 = vadd.f32 %v5855, %v5941
    %v5952 = vadd.f32 %v5856, %v5943
    %v5953 = vadd.f32 %v5857, %v5945
    %v5954 = vmul.f32 %v3109, %v5750
    %v5955 = vmul.f32 %v3109, %v5751
    %v5956 = vmul.f32 %v3109, %v5752
    %v5957 = vmul.f32 %v3109, %v5753
    %5962 = vrot.lane.b32.xlu0 %v5954, 126
    %v5963 = vpop.permute.xlu0 %5962
    %5964 = vrot.lane.b32.xlu0 %v5955, 126
    %v5965 = vpop.permute.xlu0 %5964
    %5966 = vrot.lane.b32.xlu0 %v5956, 126
    %v5967 = vpop.permute.xlu0 %5966
    %5968 = vrot.lane.b32.xlu0 %v5957, 126
    %v5969 = vpop.permute.xlu0 %5968
    %v5974 = vadd.f32 %v5878, %v5963
    %v5975 = vadd.f32 %v5879, %v5965
    %v5976 = vadd.f32 %v5880, %v5967
    %v5977 = vadd.f32 %v5881, %v5969
    %v5978 = vld [vmem:[%s2653 + $0x2] sm:$0xff]
    %v5979 = vld [vmem:[%s2653 + $0xa] sm:$0xff]
    %v5980 = vld [vmem:[%s2653 + $0x62] sm:$0xff]
    %v5981 = vld [vmem:[%s2653 + $0x6a] sm:$0xff]
    %v5982 = vmul.f32 %v3138, %v5978
    %v5983 = vmul.f32 %v3138, %v5979
    %v5984 = vmul.f32 %v3138, %v5980
    %v5985 = vmul.f32 %v3138, %v5981
    %v5986 = vadd.f32 %v5902, %v5982
    %v5987 = vadd.f32 %v5903, %v5983
    %v5988 = vadd.f32 %v5904, %v5984
    %v5989 = vadd.f32 %v5905, %v5985
    %v5990 = vmul.f32 %v3147, %v5978
    %v5991 = vmul.f32 %v3147, %v5979
    %v5992 = vmul.f32 %v3147, %v5980
    %v5993 = vmul.f32 %v3147, %v5981
    %v5994 = vadd.f32 %v5926, %v5990
    %v5995 = vadd.f32 %v5927, %v5991
    %v5996 = vadd.f32 %v5928, %v5992
    %v5997 = vadd.f32 %v5929, %v5993
    %v5998 = vmul.f32 %v3156, %v5978
    %v5999 = vmul.f32 %v3156, %v5979
    %v6000 = vmul.f32 %v3156, %v5980
    %v6001 = vmul.f32 %v3156, %v5981
    %v6002 = vadd.f32 %v5950, %v5998
    %v6003 = vadd.f32 %v5951, %v5999
    %v6004 = vadd.f32 %v5952, %v6000
    %v6005 = vadd.f32 %v5953, %v6001
    %v6006 = vmul.f32 %v3165, %v5978
    %v6007 = vmul.f32 %v3165, %v5979
    %v6008 = vmul.f32 %v3165, %v5980
    %v6009 = vmul.f32 %v3165, %v5981
    %v6010 = vadd.f32 %v5974, %v6006
    %v6011 = vadd.f32 %v5975, %v6007
    %v6012 = vadd.f32 %v5976, %v6008
    %v6013 = vadd.f32 %v5977, %v6009
    %v6014 = vmul.f32 %v3174, %v5978
    %v6015 = vmul.f32 %v3174, %v5979
    %v6016 = vmul.f32 %v3174, %v5980
    %v6017 = vmul.f32 %v3174, %v5981
    %6022 = vrot.lane.b32.xlu0 %v6014, 127
    %v6023 = vpop.permute.xlu0 %6022
    %6024 = vrot.lane.b32.xlu0 %v6015, 127
    %v6025 = vpop.permute.xlu0 %6024
    %6026 = vrot.lane.b32.xlu0 %v6016, 127
    %v6027 = vpop.permute.xlu0 %6026
    %6028 = vrot.lane.b32.xlu0 %v6017, 127
    %v6029 = vpop.permute.xlu0 %6028
    %v6034 = vadd.f32 %v5986, %v6023
    %v6035 = vadd.f32 %v5987, %v6025
    %v6036 = vadd.f32 %v5988, %v6027
    %v6037 = vadd.f32 %v5989, %v6029
    %v6038 = vmul.f32 %v3199, %v5978
    %v6039 = vmul.f32 %v3199, %v5979
    %v6040 = vmul.f32 %v3199, %v5980
    %v6041 = vmul.f32 %v3199, %v5981
    %6046 = vrot.lane.b32.xlu0 %v6038, 127
    %v6047 = vpop.permute.xlu0 %6046
    %6048 = vrot.lane.b32.xlu0 %v6039, 127
    %v6049 = vpop.permute.xlu0 %6048
    %6050 = vrot.lane.b32.xlu0 %v6040, 127
    %v6051 = vpop.permute.xlu0 %6050
    %6052 = vrot.lane.b32.xlu0 %v6041, 127
    %v6053 = vpop.permute.xlu0 %6052
    %v6058 = vadd.f32 %v5994, %v6047
    %v6059 = vadd.f32 %v5995, %v6049
    %v6060 = vadd.f32 %v5996, %v6051
    %v6061 = vadd.f32 %v5997, %v6053
    %v6062 = vmul.f32 %v3224, %v5978
    %v6063 = vmul.f32 %v3224, %v5979
    %v6064 = vmul.f32 %v3224, %v5980
    %v6065 = vmul.f32 %v3224, %v5981
    %6070 = vrot.lane.b32.xlu0 %v6062, 127
    %v6071 = vpop.permute.xlu0 %6070
    %6072 = vrot.lane.b32.xlu0 %v6063, 127
    %v6073 = vpop.permute.xlu0 %6072
    %6074 = vrot.lane.b32.xlu0 %v6064, 127
    %v6075 = vpop.permute.xlu0 %6074
    %6076 = vrot.lane.b32.xlu0 %v6065, 127
    %v6077 = vpop.permute.xlu0 %6076
    %v6082 = vadd.f32 %v6002, %v6071
    %v6083 = vadd.f32 %v6003, %v6073
    %v6084 = vadd.f32 %v6004, %v6075
    %v6085 = vadd.f32 %v6005, %v6077
    %v6086 = vmul.f32 %v3249, %v5978
    %v6087 = vmul.f32 %v3249, %v5979
    %v6088 = vmul.f32 %v3249, %v5980
    %v6089 = vmul.f32 %v3249, %v5981
    %6094 = vrot.lane.b32.xlu0 %v6086, 127
    %v6095 = vpop.permute.xlu0 %6094
    %6096 = vrot.lane.b32.xlu0 %v6087, 127
    %v6097 = vpop.permute.xlu0 %6096
    %6098 = vrot.lane.b32.xlu0 %v6088, 127
    %v6099 = vpop.permute.xlu0 %6098
    %6100 = vrot.lane.b32.xlu0 %v6089, 127
    %v6101 = vpop.permute.xlu0 %6100
    %v6106 = vadd.f32 %v6010, %v6095
    %v6107 = vadd.f32 %v6011, %v6097
    %v6108 = vadd.f32 %v6012, %v6099
    %v6109 = vadd.f32 %v6013, %v6101
    %v6110 = vmul.f32 %v3274, %v5978
    %v6111 = vmul.f32 %v3274, %v5979
    %v6112 = vmul.f32 %v3274, %v5980
    %v6113 = vmul.f32 %v3274, %v5981
    %6118 = vrot.lane.b32.xlu0 %v6110, 126
    %v6119 = vpop.permute.xlu0 %6118
    %6120 = vrot.lane.b32.xlu0 %v6111, 126
    %v6121 = vpop.permute.xlu0 %6120
    %6122 = vrot.lane.b32.xlu0 %v6112, 126
    %v6123 = vpop.permute.xlu0 %6122
    %6124 = vrot.lane.b32.xlu0 %v6113, 126
    %v6125 = vpop.permute.xlu0 %6124
    %v6130 = vadd.f32 %v6034, %v6119
    %v6131 = vadd.f32 %v6035, %v6121
    %v6132 = vadd.f32 %v6036, %v6123
    %v6133 = vadd.f32 %v6037, %v6125
    %v6134 = vmul.f32 %v3299, %v5978
    %v6135 = vmul.f32 %v3299, %v5979
    %v6136 = vmul.f32 %v3299, %v5980
    %v6137 = vmul.f32 %v3299, %v5981
    %6142 = vrot.lane.b32.xlu0 %v6134, 126
    %v6143 = vpop.permute.xlu0 %6142
    %6144 = vrot.lane.b32.xlu0 %v6135, 126
    %v6145 = vpop.permute.xlu0 %6144
    %6146 = vrot.lane.b32.xlu0 %v6136, 126
    %v6147 = vpop.permute.xlu0 %6146
    %6148 = vrot.lane.b32.xlu0 %v6137, 126
    %v6149 = vpop.permute.xlu0 %6148
    %v6154 = vadd.f32 %v6058, %v6143
    %v6155 = vadd.f32 %v6059, %v6145
    %v6156 = vadd.f32 %v6060, %v6147
    %v6157 = vadd.f32 %v6061, %v6149
    %v6158 = vmul.f32 %v3324, %v5978
    %v6159 = vmul.f32 %v3324, %v5979
    %v6160 = vmul.f32 %v3324, %v5980
    %v6161 = vmul.f32 %v3324, %v5981
    %6166 = vrot.lane.b32.xlu0 %v6158, 126
    %v6167 = vpop.permute.xlu0 %6166
    %6168 = vrot.lane.b32.xlu0 %v6159, 126
    %v6169 = vpop.permute.xlu0 %6168
    %6170 = vrot.lane.b32.xlu0 %v6160, 126
    %v6171 = vpop.permute.xlu0 %6170
    %6172 = vrot.lane.b32.xlu0 %v6161, 126
    %v6173 = vpop.permute.xlu0 %6172
    %v6178 = vadd.f32 %v6082, %v6167
    %v6179 = vadd.f32 %v6083, %v6169
    %v6180 = vadd.f32 %v6084, %v6171
    %v6181 = vadd.f32 %v6085, %v6173
    %v6182 = vmul.f32 %v3349, %v5978
    %v6183 = vmul.f32 %v3349, %v5979
    %v6184 = vmul.f32 %v3349, %v5980
    %v6185 = vmul.f32 %v3349, %v5981
    %6190 = vrot.lane.b32.xlu0 %v6182, 126
    %v6191 = vpop.permute.xlu0 %6190
    %6192 = vrot.lane.b32.xlu0 %v6183, 126
    %v6193 = vpop.permute.xlu0 %6192
    %6194 = vrot.lane.b32.xlu0 %v6184, 126
    %v6195 = vpop.permute.xlu0 %6194
    %6196 = vrot.lane.b32.xlu0 %v6185, 126
    %v6197 = vpop.permute.xlu0 %6196
    %v6202 = vadd.f32 %v6106, %v6191
    %v6203 = vadd.f32 %v6107, %v6193
    %v6204 = vadd.f32 %v6108, %v6195
    %v6205 = vadd.f32 %v6109, %v6197
    %vm6206 = vcmask 130048
    %6207 = vst.msk [vmem:[#allocation10] sm:$0xff] %vm6206, %v6130
    %6208 = vst.msk [vmem:[#allocation10 + $0x8] sm:$0xff] %vm6206, %v6131
    %6209 = vst.msk [vmem:[#allocation10 + $0x10] sm:$0xff] %vm6206, %v6154
    %6210 = vst.msk [vmem:[#allocation10 + $0x18] sm:$0xff] %vm6206, %v6155
    %6211 = vst.msk [vmem:[#allocation10 + $0x20] sm:$0xff] %vm6206, %v6178
    %6212 = vst.msk [vmem:[#allocation10 + $0x28] sm:$0xff] %vm6206, %v6179
    %6213 = vst.msk [vmem:[#allocation10 + $0x30] sm:$0xff] %vm6206, %v6202
    %6214 = vst.msk [vmem:[#allocation10 + $0x38] sm:$0xff] %vm6206, %v6203
    %6215 = vst.msk [vmem:[#allocation10 + $0x40] sm:$0xff] %vm6206, %v6132
    %6216 = vst.msk [vmem:[#allocation10 + $0x48] sm:$0xff] %vm6206, %v6133
    %6217 = vst.msk [vmem:[#allocation10 + $0x50] sm:$0xff] %vm6206, %v6156
    %6218 = vst.msk [vmem:[#allocation10 + $0x58] sm:$0xff] %vm6206, %v6157
    %6219 = vst.msk [vmem:[#allocation10 + $0x60] sm:$0xff] %vm6206, %v6180
    %6220 = vst.msk [vmem:[#allocation10 + $0x68] sm:$0xff] %vm6206, %v6181
    %6221 = vst.msk [vmem:[#allocation10 + $0x70] sm:$0xff] %vm6206, %v6204
    %6222 = vst.msk [vmem:[#allocation10 + $0x78] sm:$0xff] %vm6206, %v6205
    // Predicated region
    $region26: #{tpu_custom_call.1} parent=1 // pred_check
      _
    $region27: #{tpu_custom_call.1} parent=1 // pred_check_branch
      %6224 = sbr.rel (0) target = $region29
    $region28: #{tpu_custom_call.1} parent=1 // pred_region
      %s6226 = ssub.s32 2048, 2048
      %6227 = vsyncadd [#allocation5], %s6226
      %s6228 = sshll.u32 [#allocation10], 4
      %s6229 = int_to_ptr.vmem [resolvable:$true] %s6228
      %6234 = dma.vmem_to_hbm [thread:$0]  %s6229, 2048, %s3, [#allocation5], 128, 128, 8
    $region29: #{tpu_custom_call.1} parent=1 // pred_fallthru
      _
    // Predicated region
    $region30: #{tpu_custom_call.1} parent=1 // pred_check
      _
    $region31: #{tpu_custom_call.1} parent=1 // pred_check_branch
      %6236 = sbr.rel (0) target = $region33
    $region32: #{tpu_custom_call.1} parent=1 // pred_region
      %6237 = dma.done [#allocation5], 2048
    $region33: #{tpu_custom_call.1} parent=1 // pred_fallthru
      _
    %6238 = vsyncpa [#allocation4], 1
    %6239 = vsyncpa [#allocation5], 1
    %6240 = vsyncpa [#allocation6], 1
    %6241 = vsyncpa [#allocation7], 1

</llo_original>
